<compile_context>
chip_gen: v6e
topology: v6e:2x2x1
jax: 0.10.0
libtpu: 0.0.40
codegen_flags: <defaults>
</compile_context>

<pallas_src>
import jax
import jax.numpy as jnp
from jax import lax
from jax.experimental import pallas as pl
from jax.experimental.pallas import tpu as pltpu

# --- problem sizes (small, consistent with the module) -----------------------
N = 2                      # batch
C = 4                      # in_channels == out_channels (needed by dense concat)
H = W = 16                 # spatial
NUM_LAYERS = 6
# dilation_rates = (3, 2, 1): padding of each conv equals its dilation, so the
# spatial size is preserved (otherwise torch.cat in the reference would fail).
DILATIONS = (3, 2, 1, 1, 1, 1)
PAD = max(DILATIONS)                 # slab halo
SLAB_C = NUM_LAYERS * C              # channels ever read back as conv input (24)
COUT_TOTAL = (NUM_LAYERS + 1) * C    # final concat: x + 6 layer outputs (28)


def pyramid_kernel(x_ref, w1, w2, w3, w4, w5, w6, b_ref, o_ref, feat_ref):
    # x_ref:    (1, H, W, C)                      VMEM
    # w_i:      (9*(i+1)*C, C)                    VMEM (im2col-flattened HWIO)
    # b_ref:    (6, C)                            VMEM
    # o_ref:    (1, H, W, 7*C)                    VMEM
    # feat_ref: (H+2*PAD, W+2*PAD, 6*C) scratch   VMEM (zero-halo feature slab)

    # Zero only the halo ring.  Interior channels are always written before
    # they are read (x first, then each layer's output before the next layer),
    # and no layer ever writes the halo, so this is sufficient every step.
    zero_tb = jnp.zeros((PAD, W + 2 * PAD, SLAB_C), jnp.float32)
    zero_lr = jnp.zeros((H, PAD, SLAB_C), jnp.float32)
    feat_ref[0:PAD, :, :] = zero_tb
    feat_ref[PAD + H:, :, :] = zero_tb
    feat_ref[PAD:PAD + H, 0:PAD, :] = zero_lr
    feat_ref[PAD:PAD + H, PAD + W:, :] = zero_lr

    x = x_ref[0]                                           # (H, W, C)
    feat_ref[PAD:PAD + H, PAD:PAD + W, 0:C] = x
    o_ref[0, :, :, 0:C] = x                                # concat slot 0 = x

    w_refs = (w1, w2, w3, w4, w5, w6)
    b_all = b_ref[...]                                     # (6, C)

    for i, d in enumerate(DILATIONS):                      # static unroll: 6 layers
        cin = (i + 1) * C
        # im2col: 9 dilated taps over the layer's true input channels, fused
        # into one (H*W, 9*cin) operand -> a single MXU matmul per layer.
        taps = []
        for ky in range(3):
            for kx in range(3):
                r0 = PAD + (ky - 1) * d
                c0 = PAD + (kx - 1) * d
                taps.append(feat_ref[r0:r0 + H, c0:c0 + W, 0:cin])
        patch = jnp.concatenate(taps, axis=-1)             # (H, W, 9*cin)
        patch = patch.reshape(H * W, 9 * cin)              # (256, K)
        acc = jnp.dot(patch, w_refs[i][...],
                      preferred_element_type=jnp.float32)  # (256, C)
        out = jnp.maximum(acc + b_all[i:i + 1, :], 0.0).reshape(H, W, C)
        # dense concat: write the layer output straight into its output slot
        o_ref[0, :, :, (i + 1) * C:(i + 2) * C] = out
        # ... and into the slab only if a later layer reads it back
        if i + 1 < NUM_LAYERS:
            feat_ref[PAD:PAD + H, PAD:PAD + W, (i + 1) * C:(i + 2) * C] = out


def pyramid_cell_pallas(x_nhwc, weights_hwio, biases):
    """x_nhwc: (N,H,W,C); weights_hwio[i]: (3,3,(i+1)*C,C); biases[i]: (C,)."""
    # Pre-flatten each layer's HWIO weight to im2col form (ky,kx,cin)-major:
    w_flats = [w.astype(jnp.float32).reshape(9 * w.shape[2], C)
               for w in weights_hwio]
    b_stack = jnp.stack(biases).astype(jnp.float32)        # (6, C)

    in_specs = [pl.BlockSpec((1, H, W, C), lambda n: (n, 0, 0, 0))]
    in_specs += [pl.BlockSpec((9 * (i + 1) * C, C), lambda n: (0, 0))
                 for i in range(NUM_LAYERS)]
    in_specs += [pl.BlockSpec((NUM_LAYERS, C), lambda n: (0, 0))]

    return pl.pallas_call(
        pyramid_kernel,
        out_shape=jax.ShapeDtypeStruct((N, H, W, COUT_TOTAL), jnp.float32),
        grid_spec=pltpu.PrefetchScalarGridSpec(
            num_scalar_prefetch=0,
            grid=(N,),
            in_specs=in_specs,
            out_specs=pl.BlockSpec((1, H, W, COUT_TOTAL),
                                   lambda n: (n, 0, 0, 0)),
            scratch_shapes=[
                pltpu.VMEM((H + 2 * PAD, W + 2 * PAD, SLAB_C), jnp.float32)
            ],
        ),
        compiler_params=pltpu.CompilerParams(
            dimension_semantics=("parallel",)),
    )(x_nhwc, *w_flats, b_stack)


def pyramid_cell_reference(x_nhwc, weights_hwio, biases):
    """Pure-JAX reference mirroring the PyTorch forward (NHWC)."""
    feat = x_nhwc
    for i, d in enumerate(DILATIONS):
        t = lax.conv_general_dilated(
            feat, weights_hwio[i],
            window_strides=(1, 1),
            padding=[(d, d), (d, d)],
            rhs_dilation=(d, d),
            dimension_numbers=("NHWC", "HWIO", "NHWC"))
        t = jnp.maximum(t + biases[i][None, None, None, :], 0.0)
        feat = jnp.concatenate([feat, t], axis=-1)
    return feat


if __name__ == "__main__":
    key = jax.random.PRNGKey(0)

    # deterministic synthetic parameters (shapes from PyramidCell.__init__)
    weights, biases = [], []
    for i in range(NUM_LAYERS):
        cin = (i + 1) * C
        kw, kb, key = jax.random.split(key, 3)
        weights.append(0.1 * jax.random.normal(kw, (3, 3, cin, C), jnp.float32))
        biases.append(0.05 * jax.random.normal(kb, (C,), jnp.float32))

    # input (PyTorch would be NCHW (N, C, H, W); we work in NHWC)
    kx, key = jax.random.split(key)
    x_nchw = jax.random.normal(kx, (N, C, H, W), jnp.float32)
    x_nhwc = jnp.transpose(x_nchw, (0, 2, 3, 1))

    out = pyramid_cell_pallas(x_nhwc, weights, biases)
    out = jax.block_until_ready(out)

    ref = pyramid_cell_reference(x_nhwc, weights, biases)
    assert out.shape == (N, H, W, COUT_TOTAL), out.shape
    assert jnp.allclose(out, ref, atol=1e-4, rtol=1e-4), \
        float(jnp.max(jnp.abs(out - ref)))

    print("KERNEL_OK")
</pallas_src>

<mosaic_0001>
module attributes {stable_mosaic.version = 11 : i64} {
  func.func @pyramid_kernel(%arg0: i32, %arg1: memref<1x16x16x4xf32, #tpu.memory_space<vmem>>, %arg2: memref<36x4xf32, #tpu.memory_space<vmem>>, %arg3: memref<72x4xf32, #tpu.memory_space<vmem>>, %arg4: memref<108x4xf32, #tpu.memory_space<vmem>>, %arg5: memref<144x4xf32, #tpu.memory_space<vmem>>, %arg6: memref<180x4xf32, #tpu.memory_space<vmem>>, %arg7: memref<216x4xf32, #tpu.memory_space<vmem>>, %arg8: memref<6x4xf32, #tpu.memory_space<vmem>>, %arg9: memref<1x16x16x28xf32, #tpu.memory_space<vmem>>, %arg10: memref<22x22x24xf32, #tpu.memory_space<vmem>>) attributes {dimension_semantics = [#tpu.dimension_semantics<parallel>], iteration_bounds = array<i64: 2>, scalar_prefetch = 0 : i64, scratch_operands = 1 : i64, tpu.core_type = #tpu.core_type<tc>, window_params = [{transform_indices = @transform_0, window_bounds = array<i64: 1, 16, 16, 4>}, {pipeline_mode = #tpu.pipeline_mode<synchronous>, transform_indices = @transform_1, window_bounds = array<i64: 36, 4>}, {pipeline_mode = #tpu.pipeline_mode<synchronous>, transform_indices = @transform_2, window_bounds = array<i64: 72, 4>}, {pipeline_mode = #tpu.pipeline_mode<synchronous>, transform_indices = @transform_3, window_bounds = array<i64: 108, 4>}, {pipeline_mode = #tpu.pipeline_mode<synchronous>, transform_indices = @transform_4, window_bounds = array<i64: 144, 4>}, {pipeline_mode = #tpu.pipeline_mode<synchronous>, transform_indices = @transform_5, window_bounds = array<i64: 180, 4>}, {pipeline_mode = #tpu.pipeline_mode<synchronous>, transform_indices = @transform_6, window_bounds = array<i64: 216, 4>}, {pipeline_mode = #tpu.pipeline_mode<synchronous>, transform_indices = @transform_7, window_bounds = array<i64: 6, 4>}, {transform_indices = @transform_8, window_bounds = array<i64: 1, 16, 16, 28>}]} {
    %cst = arith.constant 0.000000e+00 : f32
    %0 = vector.broadcast %cst : f32 to vector<3x22x24xf32>
    %cst_0 = arith.constant 0.000000e+00 : f32
    %1 = vector.broadcast %cst_0 : f32 to vector<16x3x24xf32>
    %c0 = arith.constant 0 : index
    %c0_1 = arith.constant 0 : index
    %c0_2 = arith.constant 0 : index
    %2 = vector.load %arg10[%c0, %c0_1, %c0_2] : memref<22x22x24xf32, #tpu.memory_space<vmem>>, vector<3x22x24xf32>
    tpu.vector_store %arg10[%c0, %c0_1, %c0_2], %0 {strides = array<i32>} : memref<22x22x24xf32, #tpu.memory_space<vmem>>, vector<3x22x24xf32>,
    %c19 = arith.constant 19 : index
    %c0_3 = arith.constant 0 : index
    %c0_4 = arith.constant 0 : index
    %3 = vector.load %arg10[%c19, %c0_3, %c0_4] : memref<22x22x24xf32, #tpu.memory_space<vmem>>, vector<3x22x24xf32>
    tpu.vector_store %arg10[%c19, %c0_3, %c0_4], %0 {strides = array<i32>} : memref<22x22x24xf32, #tpu.memory_space<vmem>>, vector<3x22x24xf32>,
    %c3 = arith.constant 3 : index
    %c0_5 = arith.constant 0 : index
    %c0_6 = arith.constant 0 : index
    %4 = vector.load %arg10[%c3, %c0_5, %c0_6] : memref<22x22x24xf32, #tpu.memory_space<vmem>>, vector<16x3x24xf32>
    tpu.vector_store %arg10[%c3, %c0_5, %c0_6], %1 {strides = array<i32>} : memref<22x22x24xf32, #tpu.memory_space<vmem>>, vector<16x3x24xf32>,
    %c3_7 = arith.constant 3 : index
    %c19_8 = arith.constant 19 : index
    %c0_9 = arith.constant 0 : index
    %5 = vector.load %arg10[%c3_7, %c19_8, %c0_9] : memref<22x22x24xf32, #tpu.memory_space<vmem>>, vector<16x3x24xf32>
    tpu.vector_store %arg10[%c3_7, %c19_8, %c0_9], %1 {strides = array<i32>} : memref<22x22x24xf32, #tpu.memory_space<vmem>>, vector<16x3x24xf32>,
    %c0_10 = arith.constant 0 : index
    %c0_11 = arith.constant 0 : index
    %c0_12 = arith.constant 0 : index
    %c0_13 = arith.constant 0 : index
    %6 = vector.load %arg1[%c0_10, %c0_11, %c0_12, %c0_13] : memref<1x16x16x4xf32, #tpu.memory_space<vmem>>, vector<1x16x16x4xf32>
    %7 = vector.shape_cast %6 : vector<1x16x16x4xf32> to vector<16x16x4xf32>
    %c3_14 = arith.constant 3 : index
    %c3_15 = arith.constant 3 : index
    %c0_16 = arith.constant 0 : index
    %8 = vector.load %arg10[%c3_14, %c3_15, %c0_16] : memref<22x22x24xf32, #tpu.memory_space<vmem>>, vector<16x16x4xf32>
    tpu.vector_store %arg10[%c3_14, %c3_15, %c0_16], %7 {strides = array<i32>} : memref<22x22x24xf32, #tpu.memory_space<vmem>>, vector<16x16x4xf32>,
    %c0_17 = arith.constant 0 : index
    %c0_18 = arith.constant 0 : index
    %c0_19 = arith.constant 0 : index
    %c0_20 = arith.constant 0 : index
    %9 = vector.load %arg9[%c0_17, %c0_18, %c0_19, %c0_20] : memref<1x16x16x28xf32, #tpu.memory_space<vmem>>, vector<1x16x16x4xf32>
    %10 = vector.shape_cast %9 : vector<1x16x16x4xf32> to vector<16x16x4xf32>
    %11 = vector.shape_cast %7 : vector<16x16x4xf32> to vector<1x16x16x4xf32>
    tpu.vector_store %arg9[%c0_17, %c0_18, %c0_19, %c0_20], %11 {strides = array<i32>} : memref<1x16x16x28xf32, #tpu.memory_space<vmem>>, vector<1x16x16x4xf32>,
    %c0_21 = arith.constant 0 : index
    %c0_22 = arith.constant 0 : index
    %12 = vector.load %arg8[%c0_21, %c0_22] : memref<6x4xf32, #tpu.memory_space<vmem>>, vector<6x4xf32>
    %c0_23 = arith.constant 0 : index
    %c0_24 = arith.constant 0 : index
    %c0_25 = arith.constant 0 : index
    %13 = vector.load %arg10[%c0_23, %c0_24, %c0_25] : memref<22x22x24xf32, #tpu.memory_space<vmem>>, vector<16x16x4xf32>
    %c0_26 = arith.constant 0 : index
    %c3_27 = arith.constant 3 : index
    %c0_28 = arith.constant 0 : index
    %14 = vector.load %arg10[%c0_26, %c3_27, %c0_28] : memref<22x22x24xf32, #tpu.memory_space<vmem>>, vector<16x16x4xf32>
    %c0_29 = arith.constant 0 : index
    %c6 = arith.constant 6 : index
    %c0_30 = arith.constant 0 : index
    %15 = vector.load %arg10[%c0_29, %c6, %c0_30] : memref<22x22x24xf32, #tpu.memory_space<vmem>>, vector<16x16x4xf32>
    %c3_31 = arith.constant 3 : index
    %c0_32 = arith.constant 0 : index
    %c0_33 = arith.constant 0 : index
    %16 = vector.load %arg10[%c3_31, %c0_32, %c0_33] : memref<22x22x24xf32, #tpu.memory_space<vmem>>, vector<16x16x4xf32>
    %c3_34 = arith.constant 3 : index
    %c3_35 = arith.constant 3 : index
    %c0_36 = arith.constant 0 : index
    %17 = vector.load %arg10[%c3_34, %c3_35, %c0_36] : memref<22x22x24xf32, #tpu.memory_space<vmem>>, vector<16x16x4xf32>
    %c3_37 = arith.constant 3 : index
    %c6_38 = arith.constant 6 : index
    %c0_39 = arith.constant 0 : index
    %18 = vector.load %arg10[%c3_37, %c6_38, %c0_39] : memref<22x22x24xf32, #tpu.memory_space<vmem>>, vector<16x16x4xf32>
    %c6_40 = arith.constant 6 : index
    %c0_41 = arith.constant 0 : index
    %c0_42 = arith.constant 0 : index
    %19 = vector.load %arg10[%c6_40, %c0_41, %c0_42] : memref<22x22x24xf32, #tpu.memory_space<vmem>>, vector<16x16x4xf32>
    %c6_43 = arith.constant 6 : index
    %c3_44 = arith.constant 3 : index
    %c0_45 = arith.constant 0 : index
    %20 = vector.load %arg10[%c6_43, %c3_44, %c0_45] : memref<22x22x24xf32, #tpu.memory_space<vmem>>, vector<16x16x4xf32>
    %c6_46 = arith.constant 6 : index
    %c6_47 = arith.constant 6 : index
    %c0_48 = arith.constant 0 : index
    %21 = vector.load %arg10[%c6_46, %c6_47, %c0_48] : memref<22x22x24xf32, #tpu.memory_space<vmem>>, vector<16x16x4xf32>
    %22 = tpu.concatenate %13, %14, %15, %16, %17, %18, %19, %20, %21 in 2 : vector<16x16x4xf32>, vector<16x16x4xf32>, vector<16x16x4xf32>, vector<16x16x4xf32>, vector<16x16x4xf32>, vector<16x16x4xf32>, vector<16x16x4xf32>, vector<16x16x4xf32>, vector<16x16x4xf32> -> vector<16x16x36xf32>
    %23 = vector.shape_cast %22 : vector<16x16x36xf32> to vector<256x36xf32>
    %c0_49 = arith.constant 0 : index
    %c0_50 = arith.constant 0 : index
    %24 = vector.load %arg2[%c0_49, %c0_50] : memref<36x4xf32, #tpu.memory_space<vmem>>, vector<36x4xf32>
    %cst_51 = arith.constant dense<0.000000e+00> : vector<256x4xf32>
    %25 = tpu.matmul %23, %24, %cst_51 {dimension_numbers = #tpu.dot_dimension_numbers<[1], [0], [0], [1], [0, 0, 1, 1], [], []>} : vector<256x36xf32>, vector<36x4xf32>, vector<256x4xf32> -> vector<256x4xf32>
    %26 = vector.extract_strided_slice %12 {offsets = [0, 0], sizes = [1, 4], strides = [1, 1]} : vector<6x4xf32> to vector<1x4xf32>
    %27 = vector.broadcast %26 : vector<1x4xf32> to vector<256x4xf32>
    %28 = arith.addf %25, %27 : vector<256x4xf32>
    %cst_52 = arith.constant 0.000000e+00 : f32
    %29 = vector.broadcast %cst_52 : f32 to vector<256x4xf32>
    %30 = arith.maximumf %28, %29 : vector<256x4xf32>
    %31 = vector.shape_cast %30 : vector<256x4xf32> to vector<16x16x4xf32>
    %c0_53 = arith.constant 0 : index
    %c0_54 = arith.constant 0 : index
    %c0_55 = arith.constant 0 : index
    %c4 = arith.constant 4 : index
    %32 = vector.load %arg9[%c0_53, %c0_54, %c0_55, %c4] : memref<1x16x16x28xf32, #tpu.memory_space<vmem>>, vector<1x16x16x4xf32>
    %33 = vector.shape_cast %32 : vector<1x16x16x4xf32> to vector<16x16x4xf32>
    %34 = vector.shape_cast %31 : vector<16x16x4xf32> to vector<1x16x16x4xf32>
    tpu.vector_store %arg9[%c0_53, %c0_54, %c0_55, %c4], %34 {strides = array<i32>} : memref<1x16x16x28xf32, #tpu.memory_space<vmem>>, vector<1x16x16x4xf32>,
    %c3_56 = arith.constant 3 : index
    %c3_57 = arith.constant 3 : index
    %c4_58 = arith.constant 4 : index
    %35 = vector.load %arg10[%c3_56, %c3_57, %c4_58] : memref<22x22x24xf32, #tpu.memory_space<vmem>>, vector<16x16x4xf32>
    tpu.vector_store %arg10[%c3_56, %c3_57, %c4_58], %31 {strides = array<i32>} : memref<22x22x24xf32, #tpu.memory_space<vmem>>, vector<16x16x4xf32>,
    %c1 = arith.constant 1 : index
    %c1_59 = arith.constant 1 : index
    %c0_60 = arith.constant 0 : index
    %36 = vector.load %arg10[%c1, %c1_59, %c0_60] : memref<22x22x24xf32, #tpu.memory_space<vmem>>, vector<16x16x8xf32>
    %c1_61 = arith.constant 1 : index
    %c3_62 = arith.constant 3 : index
    %c0_63 = arith.constant 0 : index
    %37 = vector.load %arg10[%c1_61, %c3_62, %c0_63] : memref<22x22x24xf32, #tpu.memory_space<vmem>>, vector<16x16x8xf32>
    %c1_64 = arith.constant 1 : index
    %c5 = arith.constant 5 : index
    %c0_65 = arith.constant 0 : index
    %38 = vector.load %arg10[%c1_64, %c5, %c0_65] : memref<22x22x24xf32, #tpu.memory_space<vmem>>, vector<16x16x8xf32>
    %c3_66 = arith.constant 3 : index
    %c1_67 = arith.constant 1 : index
    %c0_68 = arith.constant 0 : index
    %39 = vector.load %arg10[%c3_66, %c1_67, %c0_68] : memref<22x22x24xf32, #tpu.memory_space<vmem>>, vector<16x16x8xf32>
    %c3_69 = arith.constant 3 : index
    %c3_70 = arith.constant 3 : index
    %c0_71 = arith.constant 0 : index
    %40 = vector.load %arg10[%c3_69, %c3_70, %c0_71] : memref<22x22x24xf32, #tpu.memory_space<vmem>>, vector<16x16x8xf32>
    %c3_72 = arith.constant 3 : index
    %c5_73 = arith.constant 5 : index
    %c0_74 = arith.constant 0 : index
    %41 = vector.load %arg10[%c3_72, %c5_73, %c0_74] : memref<22x22x24xf32, #tpu.memory_space<vmem>>, vector<16x16x8xf32>
    %c5_75 = arith.constant 5 : index
    %c1_76 = arith.constant 1 : index
    %c0_77 = arith.constant 0 : index
    %42 = vector.load %arg10[%c5_75, %c1_76, %c0_77] : memref<22x22x24xf32, #tpu.memory_space<vmem>>, vector<16x16x8xf32>
    %c5_78 = arith.constant 5 : index
    %c3_79 = arith.constant 3 : index
    %c0_80 = arith.constant 0 : index
    %43 = vector.load %arg10[%c5_78, %c3_79, %c0_80] : memref<22x22x24xf32, #tpu.memory_space<vmem>>, vector<16x16x8xf32>
    %c5_81 = arith.constant 5 : index
    %c5_82 = arith.constant 5 : index
    %c0_83 = arith.constant 0 : index
    %44 = vector.load %arg10[%c5_81, %c5_82, %c0_83] : memref<22x22x24xf32, #tpu.memory_space<vmem>>, vector<16x16x8xf32>
    %45 = tpu.concatenate %36, %37, %38, %39, %40, %41, %42, %43, %44 in 2 : vector<16x16x8xf32>, vector<16x16x8xf32>, vector<16x16x8xf32>, vector<16x16x8xf32>, vector<16x16x8xf32>, vector<16x16x8xf32>, vector<16x16x8xf32>, vector<16x16x8xf32>, vector<16x16x8xf32> -> vector<16x16x72xf32>
    %46 = vector.shape_cast %45 : vector<16x16x72xf32> to vector<256x72xf32>
    %c0_84 = arith.constant 0 : index
    %c0_85 = arith.constant 0 : index
    %47 = vector.load %arg3[%c0_84, %c0_85] : memref<72x4xf32, #tpu.memory_space<vmem>>, vector<72x4xf32>
    %cst_86 = arith.constant dense<0.000000e+00> : vector<256x4xf32>
    %48 = tpu.matmul %46, %47, %cst_86 {dimension_numbers = #tpu.dot_dimension_numbers<[1], [0], [0], [1], [0, 0, 1, 1], [], []>} : vector<256x72xf32>, vector<72x4xf32>, vector<256x4xf32> -> vector<256x4xf32>
    %49 = vector.extract_strided_slice %12 {offsets = [1, 0], sizes = [1, 4], strides = [1, 1]} : vector<6x4xf32> to vector<1x4xf32>
    %50 = vector.broadcast %49 : vector<1x4xf32> to vector<256x4xf32>
    %51 = arith.addf %48, %50 : vector<256x4xf32>
    %cst_87 = arith.constant 0.000000e+00 : f32
    %52 = vector.broadcast %cst_87 : f32 to vector<256x4xf32>
    %53 = arith.maximumf %51, %52 : vector<256x4xf32>
    %54 = vector.shape_cast %53 : vector<256x4xf32> to vector<16x16x4xf32>
    %c0_88 = arith.constant 0 : index
    %c0_89 = arith.constant 0 : index
    %c0_90 = arith.constant 0 : index
    %c8 = arith.constant 8 : index
    %55 = vector.load %arg9[%c0_88, %c0_89, %c0_90, %c8] : memref<1x16x16x28xf32, #tpu.memory_space<vmem>>, vector<1x16x16x4xf32>
    %56 = vector.shape_cast %55 : vector<1x16x16x4xf32> to vector<16x16x4xf32>
    %57 = vector.shape_cast %54 : vector<16x16x4xf32> to vector<1x16x16x4xf32>
    tpu.vector_store %arg9[%c0_88, %c0_89, %c0_90, %c8], %57 {strides = array<i32>} : memref<1x16x16x28xf32, #tpu.memory_space<vmem>>, vector<1x16x16x4xf32>,
    %c3_91 = arith.constant 3 : index
    %c3_92 = arith.constant 3 : index
    %c8_93 = arith.constant 8 : index
    %58 = vector.load %arg10[%c3_91, %c3_92, %c8_93] : memref<22x22x24xf32, #tpu.memory_space<vmem>>, vector<16x16x4xf32>
    tpu.vector_store %arg10[%c3_91, %c3_92, %c8_93], %54 {strides = array<i32>} : memref<22x22x24xf32, #tpu.memory_space<vmem>>, vector<16x16x4xf32>,
    %c2 = arith.constant 2 : index
    %c2_94 = arith.constant 2 : index
    %c0_95 = arith.constant 0 : index
    %59 = vector.load %arg10[%c2, %c2_94, %c0_95] : memref<22x22x24xf32, #tpu.memory_space<vmem>>, vector<16x16x12xf32>
    %c2_96 = arith.constant 2 : index
    %c3_97 = arith.constant 3 : index
    %c0_98 = arith.constant 0 : index
    %60 = vector.load %arg10[%c2_96, %c3_97, %c0_98] : memref<22x22x24xf32, #tpu.memory_space<vmem>>, vector<16x16x12xf32>
    %c2_99 = arith.constant 2 : index
    %c4_100 = arith.constant 4 : index
    %c0_101 = arith.constant 0 : index
    %61 = vector.load %arg10[%c2_99, %c4_100, %c0_101] : memref<22x22x24xf32, #tpu.memory_space<vmem>>, vector<16x16x12xf32>
    %c3_102 = arith.constant 3 : index
    %c2_103 = arith.constant 2 : index
    %c0_104 = arith.constant 0 : index
    %62 = vector.load %arg10[%c3_102, %c2_103, %c0_104] : memref<22x22x24xf32, #tpu.memory_space<vmem>>, vector<16x16x12xf32>
    %c3_105 = arith.constant 3 : index
    %c3_106 = arith.constant 3 : index
    %c0_107 = arith.constant 0 : index
    %63 = vector.load %arg10[%c3_105, %c3_106, %c0_107] : memref<22x22x24xf32, #tpu.memory_space<vmem>>, vector<16x16x12xf32>
    %c3_108 = arith.constant 3 : index
    %c4_109 = arith.constant 4 : index
    %c0_110 = arith.constant 0 : index
    %64 = vector.load %arg10[%c3_108, %c4_109, %c0_110] : memref<22x22x24xf32, #tpu.memory_space<vmem>>, vector<16x16x12xf32>
    %c4_111 = arith.constant 4 : index
    %c2_112 = arith.constant 2 : index
    %c0_113 = arith.constant 0 : index
    %65 = vector.load %arg10[%c4_111, %c2_112, %c0_113] : memref<22x22x24xf32, #tpu.memory_space<vmem>>, vector<16x16x12xf32>
    %c4_114 = arith.constant 4 : index
    %c3_115 = arith.constant 3 : index
    %c0_116 = arith.constant 0 : index
    %66 = vector.load %arg10[%c4_114, %c3_115, %c0_116] : memref<22x22x24xf32, #tpu.memory_space<vmem>>, vector<16x16x12xf32>
    %c4_117 = arith.constant 4 : index
    %c4_118 = arith.constant 4 : index
    %c0_119 = arith.constant 0 : index
    %67 = vector.load %arg10[%c4_117, %c4_118, %c0_119] : memref<22x22x24xf32, #tpu.memory_space<vmem>>, vector<16x16x12xf32>
    %68 = tpu.concatenate %59, %60, %61, %62, %63, %64, %65, %66, %67 in 2 : vector<16x16x12xf32>, vector<16x16x12xf32>, vector<16x16x12xf32>, vector<16x16x12xf32>, vector<16x16x12xf32>, vector<16x16x12xf32>, vector<16x16x12xf32>, vector<16x16x12xf32>, vector<16x16x12xf32> -> vector<16x16x108xf32>
    %69 = vector.shape_cast %68 : vector<16x16x108xf32> to vector<256x108xf32>
    %c0_120 = arith.constant 0 : index
    %c0_121 = arith.constant 0 : index
    %70 = vector.load %arg4[%c0_120, %c0_121] : memref<108x4xf32, #tpu.memory_space<vmem>>, vector<108x4xf32>
    %cst_122 = arith.constant dense<0.000000e+00> : vector<256x4xf32>
    %71 = tpu.matmul %69, %70, %cst_122 {dimension_numbers = #tpu.dot_dimension_numbers<[1], [0], [0], [1], [0, 0, 1, 1], [], []>} : vector<256x108xf32>, vector<108x4xf32>, vector<256x4xf32> -> vector<256x4xf32>
    %72 = vector.extract_strided_slice %12 {offsets = [2, 0], sizes = [1, 4], strides = [1, 1]} : vector<6x4xf32> to vector<1x4xf32>
    %73 = vector.broadcast %72 : vector<1x4xf32> to vector<256x4xf32>
    %74 = arith.addf %71, %73 : vector<256x4xf32>
    %cst_123 = arith.constant 0.000000e+00 : f32
    %75 = vector.broadcast %cst_123 : f32 to vector<256x4xf32>
    %76 = arith.maximumf %74, %75 : vector<256x4xf32>
    %77 = vector.shape_cast %76 : vector<256x4xf32> to vector<16x16x4xf32>
    %c0_124 = arith.constant 0 : index
    %c0_125 = arith.constant 0 : index
    %c0_126 = arith.constant 0 : index
    %c12 = arith.constant 12 : index
    %78 = vector.load %arg9[%c0_124, %c0_125, %c0_126, %c12] : memref<1x16x16x28xf32, #tpu.memory_space<vmem>>, vector<1x16x16x4xf32>
    %79 = vector.shape_cast %78 : vector<1x16x16x4xf32> to vector<16x16x4xf32>
    %80 = vector.shape_cast %77 : vector<16x16x4xf32> to vector<1x16x16x4xf32>
    tpu.vector_store %arg9[%c0_124, %c0_125, %c0_126, %c12], %80 {strides = array<i32>} : memref<1x16x16x28xf32, #tpu.memory_space<vmem>>, vector<1x16x16x4xf32>,
    %c3_127 = arith.constant 3 : index
    %c3_128 = arith.constant 3 : index
    %c12_129 = arith.constant 12 : index
    %81 = vector.load %arg10[%c3_127, %c3_128, %c12_129] : memref<22x22x24xf32, #tpu.memory_space<vmem>>, vector<16x16x4xf32>
    tpu.vector_store %arg10[%c3_127, %c3_128, %c12_129], %77 {strides = array<i32>} : memref<22x22x24xf32, #tpu.memory_space<vmem>>, vector<16x16x4xf32>,
    %c2_130 = arith.constant 2 : index
    %c2_131 = arith.constant 2 : index
    %c0_132 = arith.constant 0 : index
    %82 = vector.load %arg10[%c2_130, %c2_131, %c0_132] : memref<22x22x24xf32, #tpu.memory_space<vmem>>, vector<16x16x16xf32>
    %c2_133 = arith.constant 2 : index
    %c3_134 = arith.constant 3 : index
    %c0_135 = arith.constant 0 : index
    %83 = vector.load %arg10[%c2_133, %c3_134, %c0_135] : memref<22x22x24xf32, #tpu.memory_space<vmem>>, vector<16x16x16xf32>
    %c2_136 = arith.constant 2 : index
    %c4_137 = arith.constant 4 : index
    %c0_138 = arith.constant 0 : index
    %84 = vector.load %arg10[%c2_136, %c4_137, %c0_138] : memref<22x22x24xf32, #tpu.memory_space<vmem>>, vector<16x16x16xf32>
    %c3_139 = arith.constant 3 : index
    %c2_140 = arith.constant 2 : index
    %c0_141 = arith.constant 0 : index
    %85 = vector.load %arg10[%c3_139, %c2_140, %c0_141] : memref<22x22x24xf32, #tpu.memory_space<vmem>>, vector<16x16x16xf32>
    %c3_142 = arith.constant 3 : index
    %c3_143 = arith.constant 3 : index
    %c0_144 = arith.constant 0 : index
    %86 = vector.load %arg10[%c3_142, %c3_143, %c0_144] : memref<22x22x24xf32, #tpu.memory_space<vmem>>, vector<16x16x16xf32>
    %c3_145 = arith.constant 3 : index
    %c4_146 = arith.constant 4 : index
    %c0_147 = arith.constant 0 : index
    %87 = vector.load %arg10[%c3_145, %c4_146, %c0_147] : memref<22x22x24xf32, #tpu.memory_space<vmem>>, vector<16x16x16xf32>
    %c4_148 = arith.constant 4 : index
    %c2_149 = arith.constant 2 : index
    %c0_150 = arith.constant 0 : index
    %88 = vector.load %arg10[%c4_148, %c2_149, %c0_150] : memref<22x22x24xf32, #tpu.memory_space<vmem>>, vector<16x16x16xf32>
    %c4_151 = arith.constant 4 : index
    %c3_152 = arith.constant 3 : index
    %c0_153 = arith.constant 0 : index
    %89 = vector.load %arg10[%c4_151, %c3_152, %c0_153] : memref<22x22x24xf32, #tpu.memory_space<vmem>>, vector<16x16x16xf32>
    %c4_154 = arith.constant 4 : index
    %c4_155 = arith.constant 4 : index
    %c0_156 = arith.constant 0 : index
    %90 = vector.load %arg10[%c4_154, %c4_155, %c0_156] : memref<22x22x24xf32, #tpu.memory_space<vmem>>, vector<16x16x16xf32>
    %91 = tpu.concatenate %82, %83, %84, %85, %86, %87, %88, %89, %90 in 2 : vector<16x16x16xf32>, vector<16x16x16xf32>, vector<16x16x16xf32>, vector<16x16x16xf32>, vector<16x16x16xf32>, vector<16x16x16xf32>, vector<16x16x16xf32>, vector<16x16x16xf32>, vector<16x16x16xf32> -> vector<16x16x144xf32>
    %92 = vector.shape_cast %91 : vector<16x16x144xf32> to vector<256x144xf32>
    %c0_157 = arith.constant 0 : index
    %c0_158 = arith.constant 0 : index
    %93 = vector.load %arg5[%c0_157, %c0_158] : memref<144x4xf32, #tpu.memory_space<vmem>>, vector<144x4xf32>
    %cst_159 = arith.constant dense<0.000000e+00> : vector<256x4xf32>
    %94 = tpu.matmul %92, %93, %cst_159 {dimension_numbers = #tpu.dot_dimension_numbers<[1], [0], [0], [1], [0, 0, 1, 1], [], []>} : vector<256x144xf32>, vector<144x4xf32>, vector<256x4xf32> -> vector<256x4xf32>
    %95 = vector.extract_strided_slice %12 {offsets = [3, 0], sizes = [1, 4], strides = [1, 1]} : vector<6x4xf32> to vector<1x4xf32>
    %96 = vector.broadcast %95 : vector<1x4xf32> to vector<256x4xf32>
    %97 = arith.addf %94, %96 : vector<256x4xf32>
    %cst_160 = arith.constant 0.000000e+00 : f32
    %98 = vector.broadcast %cst_160 : f32 to vector<256x4xf32>
    %99 = arith.maximumf %97, %98 : vector<256x4xf32>
    %100 = vector.shape_cast %99 : vector<256x4xf32> to vector<16x16x4xf32>
    %c0_161 = arith.constant 0 : index
    %c0_162 = arith.constant 0 : index
    %c0_163 = arith.constant 0 : index
    %c16 = arith.constant 16 : index
    %101 = vector.load %arg9[%c0_161, %c0_162, %c0_163, %c16] : memref<1x16x16x28xf32, #tpu.memory_space<vmem>>, vector<1x16x16x4xf32>
    %102 = vector.shape_cast %101 : vector<1x16x16x4xf32> to vector<16x16x4xf32>
    %103 = vector.shape_cast %100 : vector<16x16x4xf32> to vector<1x16x16x4xf32>
    tpu.vector_store %arg9[%c0_161, %c0_162, %c0_163, %c16], %103 {strides = array<i32>} : memref<1x16x16x28xf32, #tpu.memory_space<vmem>>, vector<1x16x16x4xf32>,
    %c3_164 = arith.constant 3 : index
    %c3_165 = arith.constant 3 : index
    %c16_166 = arith.constant 16 : index
    %104 = vector.load %arg10[%c3_164, %c3_165, %c16_166] : memref<22x22x24xf32, #tpu.memory_space<vmem>>, vector<16x16x4xf32>
    tpu.vector_store %arg10[%c3_164, %c3_165, %c16_166], %100 {strides = array<i32>} : memref<22x22x24xf32, #tpu.memory_space<vmem>>, vector<16x16x4xf32>,
    %c2_167 = arith.constant 2 : index
    %c2_168 = arith.constant 2 : index
    %c0_169 = arith.constant 0 : index
    %105 = vector.load %arg10[%c2_167, %c2_168, %c0_169] : memref<22x22x24xf32, #tpu.memory_space<vmem>>, vector<16x16x20xf32>
    %c2_170 = arith.constant 2 : index
    %c3_171 = arith.constant 3 : index
    %c0_172 = arith.constant 0 : index
    %106 = vector.load %arg10[%c2_170, %c3_171, %c0_172] : memref<22x22x24xf32, #tpu.memory_space<vmem>>, vector<16x16x20xf32>
    %c2_173 = arith.constant 2 : index
    %c4_174 = arith.constant 4 : index
    %c0_175 = arith.constant 0 : index
    %107 = vector.load %arg10[%c2_173, %c4_174, %c0_175] : memref<22x22x24xf32, #tpu.memory_space<vmem>>, vector<16x16x20xf32>
    %c3_176 = arith.constant 3 : index
    %c2_177 = arith.constant 2 : index
    %c0_178 = arith.constant 0 : index
    %108 = vector.load %arg10[%c3_176, %c2_177, %c0_178] : memref<22x22x24xf32, #tpu.memory_space<vmem>>, vector<16x16x20xf32>
    %c3_179 = arith.constant 3 : index
    %c3_180 = arith.constant 3 : index
    %c0_181 = arith.constant 0 : index
    %109 = vector.load %arg10[%c3_179, %c3_180, %c0_181] : memref<22x22x24xf32, #tpu.memory_space<vmem>>, vector<16x16x20xf32>
    %c3_182 = arith.constant 3 : index
    %c4_183 = arith.constant 4 : index
    %c0_184 = arith.constant 0 : index
    %110 = vector.load %arg10[%c3_182, %c4_183, %c0_184] : memref<22x22x24xf32, #tpu.memory_space<vmem>>, vector<16x16x20xf32>
    %c4_185 = arith.constant 4 : index
    %c2_186 = arith.constant 2 : index
    %c0_187 = arith.constant 0 : index
    %111 = vector.load %arg10[%c4_185, %c2_186, %c0_187] : memref<22x22x24xf32, #tpu.memory_space<vmem>>, vector<16x16x20xf32>
    %c4_188 = arith.constant 4 : index
    %c3_189 = arith.constant 3 : index
    %c0_190 = arith.constant 0 : index
    %112 = vector.load %arg10[%c4_188, %c3_189, %c0_190] : memref<22x22x24xf32, #tpu.memory_space<vmem>>, vector<16x16x20xf32>
    %c4_191 = arith.constant 4 : index
    %c4_192 = arith.constant 4 : index
    %c0_193 = arith.constant 0 : index
    %113 = vector.load %arg10[%c4_191, %c4_192, %c0_193] : memref<22x22x24xf32, #tpu.memory_space<vmem>>, vector<16x16x20xf32>
    %114 = tpu.concatenate %105, %106, %107, %108, %109, %110, %111, %112, %113 in 2 : vector<16x16x20xf32>, vector<16x16x20xf32>, vector<16x16x20xf32>, vector<16x16x20xf32>, vector<16x16x20xf32>, vector<16x16x20xf32>, vector<16x16x20xf32>, vector<16x16x20xf32>, vector<16x16x20xf32> -> vector<16x16x180xf32>
    %115 = vector.shape_cast %114 : vector<16x16x180xf32> to vector<256x180xf32>
    %c0_194 = arith.constant 0 : index
    %c0_195 = arith.constant 0 : index
    %116 = vector.load %arg6[%c0_194, %c0_195] : memref<180x4xf32, #tpu.memory_space<vmem>>, vector<180x4xf32>
    %cst_196 = arith.constant dense<0.000000e+00> : vector<256x4xf32>
    %117 = tpu.matmul %115, %116, %cst_196 {dimension_numbers = #tpu.dot_dimension_numbers<[1], [0], [0], [1], [0, 0, 1, 1], [], []>} : vector<256x180xf32>, vector<180x4xf32>, vector<256x4xf32> -> vector<256x4xf32>
    %118 = vector.extract_strided_slice %12 {offsets = [4, 0], sizes = [1, 4], strides = [1, 1]} : vector<6x4xf32> to vector<1x4xf32>
    %119 = vector.broadcast %118 : vector<1x4xf32> to vector<256x4xf32>
    %120 = arith.addf %117, %119 : vector<256x4xf32>
    %cst_197 = arith.constant 0.000000e+00 : f32
    %121 = vector.broadcast %cst_197 : f32 to vector<256x4xf32>
    %122 = arith.maximumf %120, %121 : vector<256x4xf32>
    %123 = vector.shape_cast %122 : vector<256x4xf32> to vector<16x16x4xf32>
    %c0_198 = arith.constant 0 : index
    %c0_199 = arith.constant 0 : index
    %c0_200 = arith.constant 0 : index
    %c20 = arith.constant 20 : index
    %124 = vector.load %arg9[%c0_198, %c0_199, %c0_200, %c20] : memref<1x16x16x28xf32, #tpu.memory_space<vmem>>, vector<1x16x16x4xf32>
    %125 = vector.shape_cast %124 : vector<1x16x16x4xf32> to vector<16x16x4xf32>
    %126 = vector.shape_cast %123 : vector<16x16x4xf32> to vector<1x16x16x4xf32>
    tpu.vector_store %arg9[%c0_198, %c0_199, %c0_200, %c20], %126 {strides = array<i32>} : memref<1x16x16x28xf32, #tpu.memory_space<vmem>>, vector<1x16x16x4xf32>,
    %c3_201 = arith.constant 3 : index
    %c3_202 = arith.constant 3 : index
    %c20_203 = arith.constant 20 : index
    %127 = vector.load %arg10[%c3_201, %c3_202, %c20_203] : memref<22x22x24xf32, #tpu.memory_space<vmem>>, vector<16x16x4xf32>
    tpu.vector_store %arg10[%c3_201, %c3_202, %c20_203], %123 {strides = array<i32>} : memref<22x22x24xf32, #tpu.memory_space<vmem>>, vector<16x16x4xf32>,
    %c2_204 = arith.constant 2 : index
    %c2_205 = arith.constant 2 : index
    %c0_206 = arith.constant 0 : index
    %128 = vector.load %arg10[%c2_204, %c2_205, %c0_206] : memref<22x22x24xf32, #tpu.memory_space<vmem>>, vector<16x16x24xf32>
    %c2_207 = arith.constant 2 : index
    %c3_208 = arith.constant 3 : index
    %c0_209 = arith.constant 0 : index
    %129 = vector.load %arg10[%c2_207, %c3_208, %c0_209] : memref<22x22x24xf32, #tpu.memory_space<vmem>>, vector<16x16x24xf32>
    %c2_210 = arith.constant 2 : index
    %c4_211 = arith.constant 4 : index
    %c0_212 = arith.constant 0 : index
    %130 = vector.load %arg10[%c2_210, %c4_211, %c0_212] : memref<22x22x24xf32, #tpu.memory_space<vmem>>, vector<16x16x24xf32>
    %c3_213 = arith.constant 3 : index
    %c2_214 = arith.constant 2 : index
    %c0_215 = arith.constant 0 : index
    %131 = vector.load %arg10[%c3_213, %c2_214, %c0_215] : memref<22x22x24xf32, #tpu.memory_space<vmem>>, vector<16x16x24xf32>
    %c3_216 = arith.constant 3 : index
    %c3_217 = arith.constant 3 : index
    %c0_218 = arith.constant 0 : index
    %132 = vector.load %arg10[%c3_216, %c3_217, %c0_218] : memref<22x22x24xf32, #tpu.memory_space<vmem>>, vector<16x16x24xf32>
    %c3_219 = arith.constant 3 : index
    %c4_220 = arith.constant 4 : index
    %c0_221 = arith.constant 0 : index
    %133 = vector.load %arg10[%c3_219, %c4_220, %c0_221] : memref<22x22x24xf32, #tpu.memory_space<vmem>>, vector<16x16x24xf32>
    %c4_222 = arith.constant 4 : index
    %c2_223 = arith.constant 2 : index
    %c0_224 = arith.constant 0 : index
    %134 = vector.load %arg10[%c4_222, %c2_223, %c0_224] : memref<22x22x24xf32, #tpu.memory_space<vmem>>, vector<16x16x24xf32>
    %c4_225 = arith.constant 4 : index
    %c3_226 = arith.constant 3 : index
    %c0_227 = arith.constant 0 : index
    %135 = vector.load %arg10[%c4_225, %c3_226, %c0_227] : memref<22x22x24xf32, #tpu.memory_space<vmem>>, vector<16x16x24xf32>
    %c4_228 = arith.constant 4 : index
    %c4_229 = arith.constant 4 : index
    %c0_230 = arith.constant 0 : index
    %136 = vector.load %arg10[%c4_228, %c4_229, %c0_230] : memref<22x22x24xf32, #tpu.memory_space<vmem>>, vector<16x16x24xf32>
    %137 = tpu.concatenate %128, %129, %130, %131, %132, %133, %134, %135, %136 in 2 : vector<16x16x24xf32>, vector<16x16x24xf32>, vector<16x16x24xf32>, vector<16x16x24xf32>, vector<16x16x24xf32>, vector<16x16x24xf32>, vector<16x16x24xf32>, vector<16x16x24xf32>, vector<16x16x24xf32> -> vector<16x16x216xf32>
    %138 = vector.shape_cast %137 : vector<16x16x216xf32> to vector<256x216xf32>
    %c0_231 = arith.constant 0 : index
    %c0_232 = arith.constant 0 : index
    %139 = vector.load %arg7[%c0_231, %c0_232] : memref<216x4xf32, #tpu.memory_space<vmem>>, vector<216x4xf32>
    %cst_233 = arith.constant dense<0.000000e+00> : vector<256x4xf32>
    %140 = tpu.matmul %138, %139, %cst_233 {dimension_numbers = #tpu.dot_dimension_numbers<[1], [0], [0], [1], [0, 0, 1, 1], [], []>} : vector<256x216xf32>, vector<216x4xf32>, vector<256x4xf32> -> vector<256x4xf32>
    %141 = vector.extract_strided_slice %12 {offsets = [5, 0], sizes = [1, 4], strides = [1, 1]} : vector<6x4xf32> to vector<1x4xf32>
    %142 = vector.broadcast %141 : vector<1x4xf32> to vector<256x4xf32>
    %143 = arith.addf %140, %142 : vector<256x4xf32>
    %cst_234 = arith.constant 0.000000e+00 : f32
    %144 = vector.broadcast %cst_234 : f32 to vector<256x4xf32>
    %145 = arith.maximumf %143, %144 : vector<256x4xf32>
    %146 = vector.shape_cast %145 : vector<256x4xf32> to vector<16x16x4xf32>
    %c0_235 = arith.constant 0 : index
    %c0_236 = arith.constant 0 : index
    %c0_237 = arith.constant 0 : index
    %c24 = arith.constant 24 : index
    %147 = vector.load %arg9[%c0_235, %c0_236, %c0_237, %c24] : memref<1x16x16x28xf32, #tpu.memory_space<vmem>>, vector<1x16x16x4xf32>
    %148 = vector.shape_cast %147 : vector<1x16x16x4xf32> to vector<16x16x4xf32>
    %149 = vector.shape_cast %146 : vector<16x16x4xf32> to vector<1x16x16x4xf32>
    tpu.vector_store %arg9[%c0_235, %c0_236, %c0_237, %c24], %149 {strides = array<i32>} : memref<1x16x16x28xf32, #tpu.memory_space<vmem>>, vector<1x16x16x4xf32>,
    return
  }
  func.func @transform_0(%arg0: i32) -> (i32, i32, i32, i32) {
    %c0_i32 = arith.constant 0 : i32
    %c0_i32_0 = arith.constant 0 : i32
    %c0_i32_1 = arith.constant 0 : i32
    %c0_i32_2 = arith.constant 0 : i32
    return %arg0, %c0_i32, %c0_i32_0, %c0_i32_1 : i32, i32, i32, i32
  }
  func.func @transform_1(%arg0: i32) -> (i32, i32) {
    %c0_i32 = arith.constant 0 : i32
    %c0_i32_0 = arith.constant 0 : i32
    %c0_i32_1 = arith.constant 0 : i32
    return %c0_i32, %c0_i32_0 : i32, i32
  }
  func.func @transform_2(%arg0: i32) -> (i32, i32) {
    %c0_i32 = arith.constant 0 : i32
    %c0_i32_0 = arith.constant 0 : i32
    %c0_i32_1 = arith.constant 0 : i32
    return %c0_i32, %c0_i32_0 : i32, i32
  }
  func.func @transform_3(%arg0: i32) -> (i32, i32) {
    %c0_i32 = arith.constant 0 : i32
    %c0_i32_0 = arith.constant 0 : i32
    %c0_i32_1 = arith.constant 0 : i32
    return %c0_i32, %c0_i32_0 : i32, i32
  }
  func.func @transform_4(%arg0: i32) -> (i32, i32) {
    %c0_i32 = arith.constant 0 : i32
    %c0_i32_0 = arith.constant 0 : i32
    %c0_i32_1 = arith.constant 0 : i32
    return %c0_i32, %c0_i32_0 : i32, i32
  }
  func.func @transform_5(%arg0: i32) -> (i32, i32) {
    %c0_i32 = arith.constant 0 : i32
    %c0_i32_0 = arith.constant 0 : i32
    %c0_i32_1 = arith.constant 0 : i32
    return %c0_i32, %c0_i32_0 : i32, i32
  }
  func.func @transform_6(%arg0: i32) -> (i32, i32) {
    %c0_i32 = arith.constant 0 : i32
    %c0_i32_0 = arith.constant 0 : i32
    %c0_i32_1 = arith.constant 0 : i32
    return %c0_i32, %c0_i32_0 : i32, i32
  }
  func.func @transform_7(%arg0: i32) -> (i32, i32) {
    %c0_i32 = arith.constant 0 : i32
    %c0_i32_0 = arith.constant 0 : i32
    %c0_i32_1 = arith.constant 0 : i32
    return %c0_i32, %c0_i32_0 : i32, i32
  }
  func.func @transform_8(%arg0: i32) -> (i32, i32, i32, i32) {
    %c0_i32 = arith.constant 0 : i32
    %c0_i32_0 = arith.constant 0 : i32
    %c0_i32_1 = arith.constant 0 : i32
    %c0_i32_2 = arith.constant 0 : i32
    return %arg0, %c0_i32, %c0_i32_0, %c0_i32_1 : i32, i32, i32, i32
  }
}

</mosaic_0001>

<llo_original>
// kernel: tpu_custom_call.1
$region0: #{tpu_custom_call.1}
  #allocation0 [shape = 'u32[]', space=smem, size = 0x4, offset = 0x4, fixed_abs, tag = 'smem constant byte address 0x4 - core index']
  #allocation1 [shape = 'u32[144,128]{1,0:T(1,128)}', space=vmem, size = 0x12000, scoped, tag = 'internal scratch']
  #allocation2 [shape = 'f32[22,22,24]{2,1,0:T(8,128)}', space=vmem, size = 0x42000, scoped, tag = 'scratch operand']
  %s0 = inlined_call_operand.vmem [shape: f32[2,16,16,4], index: 0, kind: input, shape index: {}]
  %s1 = inlined_call_operand.vmem [shape: f32[36,4], index: 1, kind: input, shape index: {}]
  %s2 = inlined_call_operand.vmem [shape: f32[72,4], index: 2, kind: input, shape index: {}]
  %s3 = inlined_call_operand.vmem [shape: f32[108,4], index: 3, kind: input, shape index: {}]
  %s4 = inlined_call_operand.vmem [shape: f32[144,4], index: 4, kind: input, shape index: {}]
  %s5 = inlined_call_operand.vmem [shape: f32[180,4], index: 5, kind: input, shape index: {}]
  %s6 = inlined_call_operand.vmem [shape: f32[216,4], index: 6, kind: input, shape index: {}]
  %s7 = inlined_call_operand.vmem [shape: f32[6,4], index: 7, kind: input, shape index: {}]
  %s8 = inlined_call_operand.hbm [shape: f32[2,16,16,28], index: 8, kind: output, shape index: {}]
  %s9 = sld [smem:[#allocation0]]
  $region65: #{tpu_custom_call.1} parent=0
    _
  %s11 = ssub.s32 1, %s9
  %s12 = scalar_select 0, %s11, %s9
  $region1: #{tpu_custom_call.1} parent=0
    #allocation3 [shape = 'u8[262144]{0}', space=vmem, size = 0x40000, scoped, tag = 'output window, operand 0']
    #allocation4 [shape = 's32[2]{0}', space=sflag, size = 0x8, scoped, tag = 'scoped memory for tpu_custom_call.1']
    %13 = vsyncpa [#allocation4], 0
    %s14 = scalar_lea.sflag [#allocation4], 1
    %15 = vsyncpa %s14, 0
    loop: start=0, step=1, limit=4
    $region2: #{tpu_custom_call.1} parent=1 // loop_pre_header
      _
    $region3: #{tpu_custom_call.1} parent=1 // loop_header
      %s17 = sphi 0, %s21
      %p18 = scmp.ge.s32.totalorder %s17, 4
      %s27 = sphi 0, %s29
      %s30 = sphi 0, %s27
      %s31 = sphi 0, %s30
      %s47 = sphi 0, %s31
      %s51 = sphi 0, %s51
      %s53 = sphi 0, %s51
      %s54 = sphi 0, %s53
      %s68 = sphi 0, %s54
      %s72 = sphi 0, %s72
      %s74 = sphi 0, %s72
      %s75 = sphi 0, %s74
      %s89 = sphi 0, %s75
      %s93 = sphi 0, %s93
      %s95 = sphi 0, %s93
      %s96 = sphi 0, %s95
      %s110 = sphi 0, %s96
      %s114 = sphi 0, %s114
      %s116 = sphi 0, %s114
      %s117 = sphi 0, %s116
      %s131 = sphi 0, %s117
      %s135 = sphi 0, %s135
      %s137 = sphi 0, %s135
      %s138 = sphi 0, %s137
      %s152 = sphi 0, %s138
      %s156 = sphi 0, %s156
      %s158 = sphi 0, %s156
      %s159 = sphi 0, %s158
      %s173 = sphi 0, %s159
      %s177 = sphi 0, %s177
      %s179 = sphi 0, %s177
      %s180 = sphi 0, %s179
      %s194 = sphi 0, %s180
      %s200 = sphi 0, %s202
      %s203 = sphi 0, %s200
      %s204 = sphi 0, %s203
      %s220 = sphi 0, %s204
    $region4: #{tpu_custom_call.1} parent=1 // loop_header_branch
      %20 = sbr.rel (%p18) target = $region8
    $region5: #{tpu_custom_call.1} parent=1 // loop_body
      %s22 = ssub.s32 %s17, 1
      %s23 = ssub.s32 %s17, 2
      %s24 = sadd.s32 %s17, 1
      %s25 = ssub.s32 %s17, %s24
      %p26 = scmp.eq.s32.totalorder %s25, 0
      %s28 = sadd.s32 %s27, 1
      %s29 = scalar_select %p26, %s27, %s28
      %p32 = pneg %p26
      %p33 = scmp.eq.s32.totalorder %s17, 1
      %p34 = por %p32, %p33
      %p35 = scmp.ne.s32.totalorder %s27, %s30
      %p36 = scmp.eq.s32.totalorder %s17, 0
      %p37 = por %p35, %p36
      %p38 = scmp.ne.s32.totalorder %s27, %s30
      %p39 = scmp.eq.s32.totalorder %s22, 1
      %p40 = por %p38, %p39
      %p41 = scmp.ne.s32.totalorder %s30, %s31
      %p42 = scmp.eq.s32.totalorder %s22, 0
      %p43 = por %p41, %p42
      %p44 = scmp.ne.s32.totalorder %s30, %s31
      %p45 = scmp.eq.s32.totalorder %s23, 1
      %p46 = por %p44, %p45
      %p48 = scmp.ne.s32.totalorder %s31, %s47
      %p49 = scmp.eq.s32.totalorder %s23, 0
      %p50 = por %p48, %p49
      %s52 = sadd.s32 %s51, 1
      %p55 = scmp.eq.s32.totalorder %s17, 1
      %p56 = scmp.ne.s32.totalorder %s51, %s53
      %p57 = scmp.eq.s32.totalorder %s17, 0
      %p58 = por %p56, %p57
      %p59 = scmp.ne.s32.totalorder %s51, %s53
      %p60 = scmp.eq.s32.totalorder %s22, 1
      %p61 = por %p59, %p60
      %p62 = scmp.ne.s32.totalorder %s53, %s54
      %p63 = scmp.eq.s32.totalorder %s22, 0
      %p64 = por %p62, %p63
      %p65 = scmp.ne.s32.totalorder %s53, %s54
      %p66 = scmp.eq.s32.totalorder %s23, 1
      %p67 = por %p65, %p66
      %p69 = scmp.ne.s32.totalorder %s54, %s68
      %p70 = scmp.eq.s32.totalorder %s23, 0
      %p71 = por %p69, %p70
      %s73 = sadd.s32 %s72, 1
      %p76 = scmp.eq.s32.totalorder %s17, 1
      %p77 = scmp.ne.s32.totalorder %s72, %s74
      %p78 = scmp.eq.s32.totalorder %s17, 0
      %p79 = por %p77, %p78
      %p80 = scmp.ne.s32.totalorder %s72, %s74
      %p81 = scmp.eq.s32.totalorder %s22, 1
      %p82 = por %p80, %p81
      %p83 = scmp.ne.s32.totalorder %s74, %s75
      %p84 = scmp.eq.s32.totalorder %s22, 0
      %p85 = por %p83, %p84
      %p86 = scmp.ne.s32.totalorder %s74, %s75
      %p87 = scmp.eq.s32.totalorder %s23, 1
      %p88 = por %p86, %p87
      %p90 = scmp.ne.s32.totalorder %s75, %s89
      %p91 = scmp.eq.s32.totalorder %s23, 0
      %p92 = por %p90, %p91
      %s94 = sadd.s32 %s93, 1
      %p97 = scmp.eq.s32.totalorder %s17, 1
      %p98 = scmp.ne.s32.totalorder %s93, %s95
      %p99 = scmp.eq.s32.totalorder %s17, 0
      %p100 = por %p98, %p99
      %p101 = scmp.ne.s32.totalorder %s93, %s95
      %p102 = scmp.eq.s32.totalorder %s22, 1
      %p103 = por %p101, %p102
      %p104 = scmp.ne.s32.totalorder %s95, %s96
      %p105 = scmp.eq.s32.totalorder %s22, 0
      %p106 = por %p104, %p105
      %p107 = scmp.ne.s32.totalorder %s95, %s96
      %p108 = scmp.eq.s32.totalorder %s23, 1
      %p109 = por %p107, %p108
      %p111 = scmp.ne.s32.totalorder %s96, %s110
      %p112 = scmp.eq.s32.totalorder %s23, 0
      %p113 = por %p111, %p112
      %s115 = sadd.s32 %s114, 1
      %p118 = scmp.eq.s32.totalorder %s17, 1
      %p119 = scmp.ne.s32.totalorder %s114, %s116
      %p120 = scmp.eq.s32.totalorder %s17, 0
      %p121 = por %p119, %p120
      %p122 = scmp.ne.s32.totalorder %s114, %s116
      %p123 = scmp.eq.s32.totalorder %s22, 1
      %p124 = por %p122, %p123
      %p125 = scmp.ne.s32.totalorder %s116, %s117
      %p126 = scmp.eq.s32.totalorder %s22, 0
      %p127 = por %p125, %p126
      %p128 = scmp.ne.s32.totalorder %s116, %s117
      %p129 = scmp.eq.s32.totalorder %s23, 1
      %p130 = por %p128, %p129
      %p132 = scmp.ne.s32.totalorder %s117, %s131
      %p133 = scmp.eq.s32.totalorder %s23, 0
      %p134 = por %p132, %p133
      %s136 = sadd.s32 %s135, 1
      %p139 = scmp.eq.s32.totalorder %s17, 1
      %p140 = scmp.ne.s32.totalorder %s135, %s137
      %p141 = scmp.eq.s32.totalorder %s17, 0
      %p142 = por %p140, %p141
      %p143 = scmp.ne.s32.totalorder %s135, %s137
      %p144 = scmp.eq.s32.totalorder %s22, 1
      %p145 = por %p143, %p144
      %p146 = scmp.ne.s32.totalorder %s137, %s138
      %p147 = scmp.eq.s32.totalorder %s22, 0
      %p148 = por %p146, %p147
      %p149 = scmp.ne.s32.totalorder %s137, %s138
      %p150 = scmp.eq.s32.totalorder %s23, 1
      %p151 = por %p149, %p150
      %p153 = scmp.ne.s32.totalorder %s138, %s152
      %p154 = scmp.eq.s32.totalorder %s23, 0
      %p155 = por %p153, %p154
      %s157 = sadd.s32 %s156, 1
      %p160 = scmp.eq.s32.totalorder %s17, 1
      %p161 = scmp.ne.s32.totalorder %s156, %s158
      %p162 = scmp.eq.s32.totalorder %s17, 0
      %p163 = por %p161, %p162
      %p164 = scmp.ne.s32.totalorder %s156, %s158
      %p165 = scmp.eq.s32.totalorder %s22, 1
      %p166 = por %p164, %p165
      %p167 = scmp.ne.s32.totalorder %s158, %s159
      %p168 = scmp.eq.s32.totalorder %s22, 0
      %p169 = por %p167, %p168
      %p170 = scmp.ne.s32.totalorder %s158, %s159
      %p171 = scmp.eq.s32.totalorder %s23, 1
      %p172 = por %p170, %p171
      %p174 = scmp.ne.s32.totalorder %s159, %s173
      %p175 = scmp.eq.s32.totalorder %s23, 0
      %p176 = por %p174, %p175
      %s178 = sadd.s32 %s177, 1
      %p181 = scmp.eq.s32.totalorder %s17, 1
      %p182 = scmp.ne.s32.totalorder %s177, %s179
      %p183 = scmp.eq.s32.totalorder %s17, 0
      %p184 = por %p182, %p183
      %p185 = scmp.ne.s32.totalorder %s177, %s179
      %p186 = scmp.eq.s32.totalorder %s22, 1
      %p187 = por %p185, %p186
      %p188 = scmp.ne.s32.totalorder %s179, %s180
      %p189 = scmp.eq.s32.totalorder %s22, 0
      %p190 = por %p188, %p189
      %p191 = scmp.ne.s32.totalorder %s179, %s180
      %p192 = scmp.eq.s32.totalorder %s23, 1
      %p193 = por %p191, %p192
      %p195 = scmp.ne.s32.totalorder %s180, %s194
      %p196 = scmp.eq.s32.totalorder %s23, 0
      %p197 = por %p195, %p196
      %s198 = ssub.s32 %s17, %s24
      %p199 = scmp.eq.s32.totalorder %s198, 0
      %s201 = sadd.s32 %s200, 1
      %s202 = scalar_select %p199, %s200, %s201
      %p205 = pneg %p199
      %p206 = scmp.eq.s32.totalorder %s17, 1
      %p207 = por %p205, %p206
      %p208 = scmp.ne.s32.totalorder %s200, %s203
      %p209 = scmp.eq.s32.totalorder %s17, 0
      %p210 = por %p208, %p209
      %p211 = scmp.ne.s32.totalorder %s200, %s203
      %p212 = scmp.eq.s32.totalorder %s22, 1
      %p213 = por %p211, %p212
      %p214 = scmp.ne.s32.totalorder %s203, %s204
      %p215 = scmp.eq.s32.totalorder %s22, 0
      %p216 = por %p214, %p215
      %p217 = scmp.ne.s32.totalorder %s203, %s204
      %p218 = scmp.eq.s32.totalorder %s23, 1
      %p219 = por %p217, %p218
      %p221 = scmp.ne.s32.totalorder %s204, %s220
      %p222 = scmp.eq.s32.totalorder %s23, 0
      %p223 = por %p221, %p222
      %p224 = scmp.le.s32.totalorder 1, %s17
      %p225 = scmp.lt.s32.totalorder %s17, 3
      %p226 = pnand %p224, %p225
      %p227 = pneg %p226
      // Predicated region
      $region9: #{tpu_custom_call.1} parent=5 // pred_check
        _
      $region10: #{tpu_custom_call.1} parent=5 // pred_check_branch
        %229 = sbr.rel (%p226) target = $region12
      $region11: #{tpu_custom_call.1} parent=5 // pred_region
        %s230 = ssub.s32 %s17, 1
        // Predicated region
        $region13: #{tpu_custom_call.1} parent=11 // pred_check
          %p231 = pneg %p64
        $region14: #{tpu_custom_call.1} parent=11 // pred_check_branch
          %233 = sbr.rel (%p231) target = $region16
        $region15: #{tpu_custom_call.1} parent=11 // pred_region
          _
        $region16: #{tpu_custom_call.1} parent=11 // pred_fallthru
          _
        // Predicated region
        $region17: #{tpu_custom_call.1} parent=11 // pred_check
          %p234 = pneg %p85
        $region18: #{tpu_custom_call.1} parent=11 // pred_check_branch
          %236 = sbr.rel (%p234) target = $region20
        $region19: #{tpu_custom_call.1} parent=11 // pred_region
          _
        $region20: #{tpu_custom_call.1} parent=11 // pred_fallthru
          _
        // Predicated region
        $region21: #{tpu_custom_call.1} parent=11 // pred_check
          %p237 = pneg %p106
        $region22: #{tpu_custom_call.1} parent=11 // pred_check_branch
          %239 = sbr.rel (%p237) target = $region24
        $region23: #{tpu_custom_call.1} parent=11 // pred_region
          _
        $region24: #{tpu_custom_call.1} parent=11 // pred_fallthru
          _
        // Predicated region
        $region25: #{tpu_custom_call.1} parent=11 // pred_check
          %p240 = pneg %p127
        $region26: #{tpu_custom_call.1} parent=11 // pred_check_branch
          %242 = sbr.rel (%p240) target = $region28
        $region27: #{tpu_custom_call.1} parent=11 // pred_region
          _
        $region28: #{tpu_custom_call.1} parent=11 // pred_fallthru
          _
        // Predicated region
        $region29: #{tpu_custom_call.1} parent=11 // pred_check
          %p243 = pneg %p148
        $region30: #{tpu_custom_call.1} parent=11 // pred_check_branch
          %245 = sbr.rel (%p243) target = $region32
        $region31: #{tpu_custom_call.1} parent=11 // pred_region
          _
        $region32: #{tpu_custom_call.1} parent=11 // pred_fallthru
          _
        // Predicated region
        $region33: #{tpu_custom_call.1} parent=11 // pred_check
          %p246 = pneg %p169
        $region34: #{tpu_custom_call.1} parent=11 // pred_check_branch
          %248 = sbr.rel (%p246) target = $region36
        $region35: #{tpu_custom_call.1} parent=11 // pred_region
          _
        $region36: #{tpu_custom_call.1} parent=11 // pred_fallthru
          _
        // Predicated region
        $region37: #{tpu_custom_call.1} parent=11 // pred_check
          %p249 = pneg %p190
        $region38: #{tpu_custom_call.1} parent=11 // pred_check_branch
          %251 = sbr.rel (%p249) target = $region40
        $region39: #{tpu_custom_call.1} parent=11 // pred_region
          _
        $region40: #{tpu_custom_call.1} parent=11 // pred_fallthru
          _
      $region12: #{tpu_custom_call.1} parent=5 // pred_fallthru
        _
      %p252 = scmp.lt.s32.totalorder %s17, 2
      // Predicated region
      $region41: #{tpu_custom_call.1} parent=5 // pred_check
        %p253 = pneg %p252
      $region42: #{tpu_custom_call.1} parent=5 // pred_check_branch
        %255 = sbr.rel (%p253) target = $region44
      $region43: #{tpu_custom_call.1} parent=5 // pred_region
        // Predicated region
        $region45: #{tpu_custom_call.1} parent=43 // pred_check
          %p256 = pneg %p37
        $region46: #{tpu_custom_call.1} parent=43 // pred_check_branch
          %258 = sbr.rel (%p256) target = $region48
        $region47: #{tpu_custom_call.1} parent=43 // pred_region
          %p259 = scmp.lt.s32.totalorder %s17, 1
          %s260 = scalar_select %p259, %s17, 1
          %s261 = smul.addr %s260, 32
          %s262 = smul.addr %s261, 8
          %s263 = scalar_lea.vmem %s0, %s262
        $region48: #{tpu_custom_call.1} parent=43 // pred_fallthru
          _
      $region44: #{tpu_custom_call.1} parent=5 // pred_fallthru
        _
      %p264 = scmp.le.s32.totalorder 1, %s17
      %p265 = scmp.lt.s32.totalorder %s17, 3
      %p266 = pnand %p264, %p265
      %p267 = pneg %p266
      // Predicated region
      $region49: #{tpu_custom_call.1} parent=5 // pred_check
        _
      $region50: #{tpu_custom_call.1} parent=5 // pred_check_branch
        %269 = sbr.rel (%p266) target = $region52
      $region51: #{tpu_custom_call.1} parent=5 // pred_region
        %s270 = ssub.s32 %s17, 1
        %p271 = scmp.lt.s32.totalorder %s22, 1
        %s272 = scalar_select %p271, %s22, 1
        %s273 = smul.addr %s272, 32
        %s274 = smul.addr %s273, 8
        %s275 = scalar_lea.vmem %s0, %s274
        %p276 = pneg %p43
        %p277 = pneg %p40
        %p278 = pneg %p64
        %p279 = pneg %p61
        %p280 = pneg %p85
        %p281 = pneg %p82
        %p282 = pneg %p106
        %p283 = pneg %p103
        %p284 = pneg %p127
        %p285 = pneg %p124
        %p286 = pneg %p148
        %p287 = pneg %p145
        %p288 = pneg %p169
        %p289 = pneg %p166
        %p290 = pneg %p190
        %p291 = pneg %p187
        %p292 = pneg %p216
        %p293 = pneg %p213
        %s294 = sand.u32 %s203, 1
        %s295 = scalar_lea.sflag [#allocation4], %s294
        %s296 = sand.u32 %s203, 1
        %s297 = smul.addr %s296, 256
        %s298 = scalar_lea.vmem [#allocation3], %s297
        %p299 = scmp.lt.s32.totalorder %s22, 1
        %s300 = scalar_select %p299, %s22, 1
        %s301 = smul.addr %s300, 32
        %s302 = smul.addr %s301, 8
        %s303 = scalar_lea.vmem %s0, %s302
        %vm304 = vcmask 195584
        %305 = vst.msk [vmem:[#allocation2] sm:$0xff] %vm304, 0.0
        %306 = vst.msk [vmem:[#allocation2 + $0x8] sm:$0xff] %vm304, 0.0
        %vm307 = vcmask 193536
        %308 = vst.msk [vmem:[#allocation2 + $0x10] sm:$0x3f] %vm307, 0.0
        %309 = vst.msk [vmem:[#allocation2 + $0x18] sm:$0xff] %vm304, 0.0
        %310 = vst.msk [vmem:[#allocation2 + $0x20] sm:$0xff] %vm304, 0.0
        %311 = vst.msk [vmem:[#allocation2 + $0x28] sm:$0x3f] %vm307, 0.0
        %312 = vst.msk [vmem:[#allocation2 + $0x30] sm:$0xff] %vm304, 0.0
        %313 = vst.msk [vmem:[#allocation2 + $0x38] sm:$0xff] %vm304, 0.0
        %314 = vst.msk [vmem:[#allocation2 + $0x40] sm:$0x3f] %vm307, 0.0
        %s315 = scalar_lea.vmem [#allocation2], 456
        %316 = vst.msk [vmem:[%s315] sm:$0xff] %vm304, 0.0
        %317 = vst.msk [vmem:[%s315 + $0x8] sm:$0xff] %vm304, 0.0
        %318 = vst.msk [vmem:[%s315 + $0x10] sm:$0x3f] %vm307, 0.0
        %319 = vst.msk [vmem:[%s315 + $0x18] sm:$0xff] %vm304, 0.0
        %320 = vst.msk [vmem:[%s315 + $0x20] sm:$0xff] %vm304, 0.0
        %321 = vst.msk [vmem:[%s315 + $0x28] sm:$0x3f] %vm307, 0.0
        %322 = vst.msk [vmem:[%s315 + $0x30] sm:$0xff] %vm304, 0.0
        %323 = vst.msk [vmem:[%s315 + $0x38] sm:$0xff] %vm304, 0.0
        %324 = vst.msk [vmem:[%s315 + $0x40] sm:$0x3f] %vm307, 0.0
        %s325 = scalar_lea.vmem [#allocation2], 72
        %vm326 = vcmask 190464
        %327 = vst.msk [vmem:[%s325] sm:$0x7] %vm326, 0.0
        %328 = vst.msk [vmem:[%s325 + $0x18] sm:$0x7] %vm326, 0.0
        %329 = vst.msk [vmem:[%s325 + $0x30] sm:$0x7] %vm326, 0.0
        %330 = vst.msk [vmem:[%s325 + $0x48] sm:$0x7] %vm326, 0.0
        %331 = vst.msk [vmem:[%s325 + $0x60] sm:$0x7] %vm326, 0.0
        %332 = vst.msk [vmem:[%s325 + $0x78] sm:$0x7] %vm326, 0.0
        %333 = vst.msk [vmem:[%s325 + $0x90] sm:$0x7] %vm326, 0.0
        %334 = vst.msk [vmem:[%s325 + $0xa8] sm:$0x7] %vm326, 0.0
        %335 = vst.msk [vmem:[%s325 + $0xc0] sm:$0x7] %vm326, 0.0
        %336 = vst.msk [vmem:[%s325 + $0xd8] sm:$0x7] %vm326, 0.0
        %337 = vst.msk [vmem:[%s325 + $0xf0] sm:$0x7] %vm326, 0.0
        %338 = vst.msk [vmem:[%s325 + $0x108] sm:$0x7] %vm326, 0.0
        %339 = vst.msk [vmem:[%s325 + $0x120] sm:$0x7] %vm326, 0.0
        %340 = vst.msk [vmem:[%s325 + $0x138] sm:$0x7] %vm326, 0.0
        %341 = vst.msk [vmem:[%s325 + $0x150] sm:$0x7] %vm326, 0.0
        %342 = vst.msk [vmem:[%s325 + $0x168] sm:$0x7] %vm326, 0.0
        %343 = vst.msk [vmem:[%s325 + $0x13] sm:$0x7] %vm326, 0.0
        %344 = vst.msk [vmem:[%s325 + $0x2b] sm:$0x7] %vm326, 0.0
        %345 = vst.msk [vmem:[%s325 + $0x43] sm:$0x7] %vm326, 0.0
        %346 = vst.msk [vmem:[%s325 + $0x5b] sm:$0x7] %vm326, 0.0
        %347 = vst.msk [vmem:[%s325 + $0x73] sm:$0x7] %vm326, 0.0
        %348 = vst.msk [vmem:[%s325 + $0x8b] sm:$0x7] %vm326, 0.0
        %349 = vst.msk [vmem:[%s325 + $0xa3] sm:$0x7] %vm326, 0.0
        %350 = vst.msk [vmem:[%s325 + $0xbb] sm:$0x7] %vm326, 0.0
        %351 = vst.msk [vmem:[%s325 + $0xd3] sm:$0x7] %vm326, 0.0
        %352 = vst.msk [vmem:[%s325 + $0xeb] sm:$0x7] %vm326, 0.0
        %353 = vst.msk [vmem:[%s325 + $0x103] sm:$0x7] %vm326, 0.0
        %354 = vst.msk [vmem:[%s325 + $0x11b] sm:$0x7] %vm326, 0.0
        %355 = vst.msk [vmem:[%s325 + $0x133] sm:$0x7] %vm326, 0.0
        %356 = vst.msk [vmem:[%s325 + $0x14b] sm:$0x7] %vm326, 0.0
        %357 = vst.msk [vmem:[%s325 + $0x163] sm:$0x7] %vm326, 0.0
        %358 = vst.msk [vmem:[%s325 + $0x17b] sm:$0x7] %vm326, 0.0
        %v359 = vld [vmem:[%s303] sm:$0xff]
        %v360 = vld [vmem:[%s303 + $0x8] sm:$0xff]
        %v361 = vld [vmem:[%s303 + $0x10] sm:$0xff]
        %v362 = vld [vmem:[%s303 + $0x18] sm:$0xff]
        %v363 = vld [vmem:[%s303 + $0x20] sm:$0xff]
        %v364 = vld [vmem:[%s303 + $0x28] sm:$0xff]
        %v365 = vld [vmem:[%s303 + $0x30] sm:$0xff]
        %v366 = vld [vmem:[%s303 + $0x38] sm:$0xff]
        %v367 = vld [vmem:[%s303 + $0x40] sm:$0xff]
        %v368 = vld [vmem:[%s303 + $0x48] sm:$0xff]
        %v369 = vld [vmem:[%s303 + $0x50] sm:$0xff]
        %v370 = vld [vmem:[%s303 + $0x58] sm:$0xff]
        %v371 = vld [vmem:[%s303 + $0x60] sm:$0xff]
        %v372 = vld [vmem:[%s303 + $0x68] sm:$0xff]
        %v373 = vld [vmem:[%s303 + $0x70] sm:$0xff]
        %v374 = vld [vmem:[%s303 + $0x78] sm:$0xff]
        %v375 = vld [vmem:[%s303 + $0x80] sm:$0xff]
        %v376 = vld [vmem:[%s303 + $0x88] sm:$0xff]
        %v377 = vld [vmem:[%s303 + $0x90] sm:$0xff]
        %v378 = vld [vmem:[%s303 + $0x98] sm:$0xff]
        %v379 = vld [vmem:[%s303 + $0xa0] sm:$0xff]
        %v380 = vld [vmem:[%s303 + $0xa8] sm:$0xff]
        %v381 = vld [vmem:[%s303 + $0xb0] sm:$0xff]
        %v382 = vld [vmem:[%s303 + $0xb8] sm:$0xff]
        %v383 = vld [vmem:[%s303 + $0xc0] sm:$0xff]
        %v384 = vld [vmem:[%s303 + $0xc8] sm:$0xff]
        %v385 = vld [vmem:[%s303 + $0xd0] sm:$0xff]
        %v386 = vld [vmem:[%s303 + $0xd8] sm:$0xff]
        %v387 = vld [vmem:[%s303 + $0xe0] sm:$0xff]
        %v388 = vld [vmem:[%s303 + $0xe8] sm:$0xff]
        %v389 = vld [vmem:[%s303 + $0xf0] sm:$0xff]
        %v390 = vld [vmem:[%s303 + $0xf8] sm:$0xff]
        %vm391 = vcmask 31744
        %392 = vst.msk [vmem:[%s325 + $0x3] sm:$0xff] %vm391, %v359
        %393 = vst.msk [vmem:[%s325 + $0xb] sm:$0xff] %vm391, %v360
        %394 = vst.msk [vmem:[%s325 + $0x1b] sm:$0xff] %vm391, %v361
        %395 = vst.msk [vmem:[%s325 + $0x23] sm:$0xff] %vm391, %v362
        %396 = vst.msk [vmem:[%s325 + $0x33] sm:$0xff] %vm391, %v363
        %397 = vst.msk [vmem:[%s325 + $0x3b] sm:$0xff] %vm391, %v364
        %398 = vst.msk [vmem:[%s325 + $0x4b] sm:$0xff] %vm391, %v365
        %399 = vst.msk [vmem:[%s325 + $0x53] sm:$0xff] %vm391, %v366
        %400 = vst.msk [vmem:[%s325 + $0x63] sm:$0xff] %vm391, %v367
        %401 = vst.msk [vmem:[%s325 + $0x6b] sm:$0xff] %vm391, %v368
        %402 = vst.msk [vmem:[%s325 + $0x7b] sm:$0xff] %vm391, %v369
        %403 = vst.msk [vmem:[%s325 + $0x83] sm:$0xff] %vm391, %v370
        %404 = vst.msk [vmem:[%s325 + $0x93] sm:$0xff] %vm391, %v371
        %405 = vst.msk [vmem:[%s325 + $0x9b] sm:$0xff] %vm391, %v372
        %406 = vst.msk [vmem:[%s325 + $0xab] sm:$0xff] %vm391, %v373
        %407 = vst.msk [vmem:[%s325 + $0xb3] sm:$0xff] %vm391, %v374
        %408 = vst.msk [vmem:[%s325 + $0xc3] sm:$0xff] %vm391, %v375
        %409 = vst.msk [vmem:[%s325 + $0xcb] sm:$0xff] %vm391, %v376
        %410 = vst.msk [vmem:[%s325 + $0xdb] sm:$0xff] %vm391, %v377
        %411 = vst.msk [vmem:[%s325 + $0xe3] sm:$0xff] %vm391, %v378
        %412 = vst.msk [vmem:[%s325 + $0xf3] sm:$0xff] %vm391, %v379
        %413 = vst.msk [vmem:[%s325 + $0xfb] sm:$0xff] %vm391, %v380
        %414 = vst.msk [vmem:[%s325 + $0x10b] sm:$0xff] %vm391, %v381
        %415 = vst.msk [vmem:[%s325 + $0x113] sm:$0xff] %vm391, %v382
        %416 = vst.msk [vmem:[%s325 + $0x123] sm:$0xff] %vm391, %v383
        %417 = vst.msk [vmem:[%s325 + $0x12b] sm:$0xff] %vm391, %v384
        %418 = vst.msk [vmem:[%s325 + $0x13b] sm:$0xff] %vm391, %v385
        %419 = vst.msk [vmem:[%s325 + $0x143] sm:$0xff] %vm391, %v386
        %420 = vst.msk [vmem:[%s325 + $0x153] sm:$0xff] %vm391, %v387
        %421 = vst.msk [vmem:[%s325 + $0x15b] sm:$0xff] %vm391, %v388
        %422 = vst.msk [vmem:[%s325 + $0x16b] sm:$0xff] %vm391, %v389
        %423 = vst.msk [vmem:[%s325 + $0x173] sm:$0xff] %vm391, %v390
        %424 = vst.msk [vmem:[%s298] sm:$0xff] %vm391, %v359
        %425 = vst.msk [vmem:[%s298 + $0x8] sm:$0xff] %vm391, %v360
        %426 = vst.msk [vmem:[%s298 + $0x10] sm:$0xff] %vm391, %v361
        %427 = vst.msk [vmem:[%s298 + $0x18] sm:$0xff] %vm391, %v362
        %428 = vst.msk [vmem:[%s298 + $0x20] sm:$0xff] %vm391, %v363
        %429 = vst.msk [vmem:[%s298 + $0x28] sm:$0xff] %vm391, %v364
        %430 = vst.msk [vmem:[%s298 + $0x30] sm:$0xff] %vm391, %v365
        %431 = vst.msk [vmem:[%s298 + $0x38] sm:$0xff] %vm391, %v366
        %432 = vst.msk [vmem:[%s298 + $0x40] sm:$0xff] %vm391, %v367
        %433 = vst.msk [vmem:[%s298 + $0x48] sm:$0xff] %vm391, %v368
        %434 = vst.msk [vmem:[%s298 + $0x50] sm:$0xff] %vm391, %v369
        %435 = vst.msk [vmem:[%s298 + $0x58] sm:$0xff] %vm391, %v370
        %436 = vst.msk [vmem:[%s298 + $0x60] sm:$0xff] %vm391, %v371
        %437 = vst.msk [vmem:[%s298 + $0x68] sm:$0xff] %vm391, %v372
        %438 = vst.msk [vmem:[%s298 + $0x70] sm:$0xff] %vm391, %v373
        %439 = vst.msk [vmem:[%s298 + $0x78] sm:$0xff] %vm391, %v374
        %440 = vst.msk [vmem:[%s298 + $0x80] sm:$0xff] %vm391, %v375
        %441 = vst.msk [vmem:[%s298 + $0x88] sm:$0xff] %vm391, %v376
        %442 = vst.msk [vmem:[%s298 + $0x90] sm:$0xff] %vm391, %v377
        %443 = vst.msk [vmem:[%s298 + $0x98] sm:$0xff] %vm391, %v378
        %444 = vst.msk [vmem:[%s298 + $0xa0] sm:$0xff] %vm391, %v379
        %445 = vst.msk [vmem:[%s298 + $0xa8] sm:$0xff] %vm391, %v380
        %446 = vst.msk [vmem:[%s298 + $0xb0] sm:$0xff] %vm391, %v381
        %447 = vst.msk [vmem:[%s298 + $0xb8] sm:$0xff] %vm391, %v382
        %448 = vst.msk [vmem:[%s298 + $0xc0] sm:$0xff] %vm391, %v383
        %449 = vst.msk [vmem:[%s298 + $0xc8] sm:$0xff] %vm391, %v384
        %450 = vst.msk [vmem:[%s298 + $0xd0] sm:$0xff] %vm391, %v385
        %451 = vst.msk [vmem:[%s298 + $0xd8] sm:$0xff] %vm391, %v386
        %452 = vst.msk [vmem:[%s298 + $0xe0] sm:$0xff] %vm391, %v387
        %453 = vst.msk [vmem:[%s298 + $0xe8] sm:$0xff] %vm391, %v388
        %454 = vst.msk [vmem:[%s298 + $0xf0] sm:$0xff] %vm391, %v389
        %455 = vst.msk [vmem:[%s298 + $0xf8] sm:$0xff] %vm391, %v390
        %v456 = vld [vmem:[%s7] sm:$0x3f]
        %v457 = vld [vmem:[#allocation2] sm:$0xff]
        %v458 = vld [vmem:[#allocation2 + $0x8] sm:$0xff]
        %v459 = vld [vmem:[#allocation2 + $0x18] sm:$0xff]
        %v460 = vld [vmem:[#allocation2 + $0x20] sm:$0xff]
        %v461 = vld [vmem:[#allocation2 + $0x30] sm:$0xff]
        %v462 = vld [vmem:[#allocation2 + $0x38] sm:$0xff]
        %v463 = vld [vmem:[#allocation2 + $0x48] sm:$0xff]
        %v464 = vld [vmem:[#allocation2 + $0x50] sm:$0xff]
        %v465 = vld [vmem:[#allocation2 + $0x60] sm:$0xff]
        %v466 = vld [vmem:[#allocation2 + $0x68] sm:$0xff]
        %v467 = vld [vmem:[#allocation2 + $0x78] sm:$0xff]
        %v468 = vld [vmem:[#allocation2 + $0x80] sm:$0xff]
        %v469 = vld [vmem:[#allocation2 + $0x90] sm:$0xff]
        %v470 = vld [vmem:[#allocation2 + $0x98] sm:$0xff]
        %v471 = vld [vmem:[#allocation2 + $0xa8] sm:$0xff]
        %v472 = vld [vmem:[#allocation2 + $0xb0] sm:$0xff]
        %v473 = vld [vmem:[#allocation2 + $0xc0] sm:$0xff]
        %v474 = vld [vmem:[#allocation2 + $0xc8] sm:$0xff]
        %v475 = vld [vmem:[#allocation2 + $0xd8] sm:$0xff]
        %v476 = vld [vmem:[#allocation2 + $0xe0] sm:$0xff]
        %v477 = vld [vmem:[#allocation2 + $0xf0] sm:$0xff]
        %v478 = vld [vmem:[#allocation2 + $0xf8] sm:$0xff]
        %v479 = vld [vmem:[#allocation2 + $0x108] sm:$0xff]
        %v480 = vld [vmem:[#allocation2 + $0x110] sm:$0xff]
        %v481 = vld [vmem:[#allocation2 + $0x120] sm:$0xff]
        %v482 = vld [vmem:[#allocation2 + $0x128] sm:$0xff]
        %v483 = vld [vmem:[#allocation2 + $0x138] sm:$0xff]
        %v484 = vld [vmem:[#allocation2 + $0x140] sm:$0xff]
        %v485 = vld [vmem:[#allocation2 + $0x150] sm:$0xff]
        %v486 = vld [vmem:[#allocation2 + $0x158] sm:$0xff]
        %v487 = vld [vmem:[#allocation2 + $0x168] sm:$0xff]
        %v488 = vld [vmem:[#allocation2 + $0x170] sm:$0xff]
        %v489 = vld [vmem:[#allocation2 + $0x3] sm:$0xff]
        %v490 = vld [vmem:[#allocation2 + $0xb] sm:$0xff]
        %v491 = vld [vmem:[#allocation2 + $0x1b] sm:$0xff]
        %v492 = vld [vmem:[#allocation2 + $0x23] sm:$0xff]
        %v493 = vld [vmem:[#allocation2 + $0x33] sm:$0xff]
        %v494 = vld [vmem:[#allocation2 + $0x3b] sm:$0xff]
        %v495 = vld [vmem:[#allocation2 + $0x4b] sm:$0xff]
        %v496 = vld [vmem:[#allocation2 + $0x53] sm:$0xff]
        %v497 = vld [vmem:[#allocation2 + $0x63] sm:$0xff]
        %v498 = vld [vmem:[#allocation2 + $0x6b] sm:$0xff]
        %v499 = vld [vmem:[#allocation2 + $0x7b] sm:$0xff]
        %v500 = vld [vmem:[#allocation2 + $0x83] sm:$0xff]
        %v501 = vld [vmem:[#allocation2 + $0x93] sm:$0xff]
        %v502 = vld [vmem:[#allocation2 + $0x9b] sm:$0xff]
        %v503 = vld [vmem:[#allocation2 + $0xab] sm:$0xff]
        %v504 = vld [vmem:[#allocation2 + $0xb3] sm:$0xff]
        %v505 = vld [vmem:[#allocation2 + $0xc3] sm:$0xff]
        %v506 = vld [vmem:[#allocation2 + $0xcb] sm:$0xff]
        %v507 = vld [vmem:[#allocation2 + $0xdb] sm:$0xff]
        %v508 = vld [vmem:[#allocation2 + $0xe3] sm:$0xff]
        %v509 = vld [vmem:[#allocation2 + $0xf3] sm:$0xff]
        %v510 = vld [vmem:[#allocation2 + $0xfb] sm:$0xff]
        %v511 = vld [vmem:[#allocation2 + $0x10b] sm:$0xff]
        %v512 = vld [vmem:[#allocation2 + $0x113] sm:$0xff]
        %v513 = vld [vmem:[#allocation2 + $0x123] sm:$0xff]
        %v514 = vld [vmem:[#allocation2 + $0x12b] sm:$0xff]
        %v515 = vld [vmem:[#allocation2 + $0x13b] sm:$0xff]
        %v516 = vld [vmem:[#allocation2 + $0x143] sm:$0xff]
        %v517 = vld [vmem:[#allocation2 + $0x153] sm:$0xff]
        %v518 = vld [vmem:[#allocation2 + $0x15b] sm:$0xff]
        %v519 = vld [vmem:[#allocation2 + $0x16b] sm:$0xff]
        %v520 = vld [vmem:[#allocation2 + $0x173] sm:$0xff]
        %v521 = vld [vmem:[#allocation2 + $0x6] sm:$0xff]
        %v522 = vld [vmem:[#allocation2 + $0xe] sm:$0xff]
        %v523 = vld [vmem:[#allocation2 + $0x1e] sm:$0xff]
        %v524 = vld [vmem:[#allocation2 + $0x26] sm:$0xff]
        %v525 = vld [vmem:[#allocation2 + $0x36] sm:$0xff]
        %v526 = vld [vmem:[#allocation2 + $0x3e] sm:$0xff]
        %v527 = vld [vmem:[#allocation2 + $0x4e] sm:$0xff]
        %v528 = vld [vmem:[#allocation2 + $0x56] sm:$0xff]
        %v529 = vld [vmem:[#allocation2 + $0x66] sm:$0xff]
        %v530 = vld [vmem:[#allocation2 + $0x6e] sm:$0xff]
        %v531 = vld [vmem:[#allocation2 + $0x7e] sm:$0xff]
        %v532 = vld [vmem:[#allocation2 + $0x86] sm:$0xff]
        %v533 = vld [vmem:[#allocation2 + $0x96] sm:$0xff]
        %v534 = vld [vmem:[#allocation2 + $0x9e] sm:$0xff]
        %v535 = vld [vmem:[#allocation2 + $0xae] sm:$0xff]
        %v536 = vld [vmem:[#allocation2 + $0xb6] sm:$0xff]
        %v537 = vld [vmem:[#allocation2 + $0xc6] sm:$0xff]
        %v538 = vld [vmem:[#allocation2 + $0xce] sm:$0xff]
        %v539 = vld [vmem:[#allocation2 + $0xde] sm:$0xff]
        %v540 = vld [vmem:[#allocation2 + $0xe6] sm:$0xff]
        %v541 = vld [vmem:[#allocation2 + $0xf6] sm:$0xff]
        %v542 = vld [vmem:[#allocation2 + $0xfe] sm:$0xff]
        %v543 = vld [vmem:[#allocation2 + $0x10e] sm:$0xff]
        %v544 = vld [vmem:[#allocation2 + $0x116] sm:$0xff]
        %v545 = vld [vmem:[#allocation2 + $0x126] sm:$0xff]
        %v546 = vld [vmem:[#allocation2 + $0x12e] sm:$0xff]
        %v547 = vld [vmem:[#allocation2 + $0x13e] sm:$0xff]
        %v548 = vld [vmem:[#allocation2 + $0x146] sm:$0xff]
        %v549 = vld [vmem:[#allocation2 + $0x156] sm:$0xff]
        %v550 = vld [vmem:[#allocation2 + $0x15e] sm:$0xff]
        %v551 = vld [vmem:[#allocation2 + $0x16e] sm:$0xff]
        %v552 = vld [vmem:[#allocation2 + $0x176] sm:$0xff]
        %v553 = vld [vmem:[%s325] sm:$0xff]
        %v554 = vld [vmem:[%s325 + $0x8] sm:$0xff]
        %v555 = vld [vmem:[%s325 + $0x18] sm:$0xff]
        %v556 = vld [vmem:[%s325 + $0x20] sm:$0xff]
        %v557 = vld [vmem:[%s325 + $0x30] sm:$0xff]
        %v558 = vld [vmem:[%s325 + $0x38] sm:$0xff]
        %v559 = vld [vmem:[%s325 + $0x48] sm:$0xff]
        %v560 = vld [vmem:[%s325 + $0x50] sm:$0xff]
        %v561 = vld [vmem:[%s325 + $0x60] sm:$0xff]
        %v562 = vld [vmem:[%s325 + $0x68] sm:$0xff]
        %v563 = vld [vmem:[%s325 + $0x78] sm:$0xff]
        %v564 = vld [vmem:[%s325 + $0x80] sm:$0xff]
        %v565 = vld [vmem:[%s325 + $0x90] sm:$0xff]
        %v566 = vld [vmem:[%s325 + $0x98] sm:$0xff]
        %v567 = vld [vmem:[%s325 + $0xa8] sm:$0xff]
        %v568 = vld [vmem:[%s325 + $0xb0] sm:$0xff]
        %v569 = vld [vmem:[%s325 + $0xc0] sm:$0xff]
        %v570 = vld [vmem:[%s325 + $0xc8] sm:$0xff]
        %v571 = vld [vmem:[%s325 + $0xd8] sm:$0xff]
        %v572 = vld [vmem:[%s325 + $0xe0] sm:$0xff]
        %v573 = vld [vmem:[%s325 + $0xf0] sm:$0xff]
        %v574 = vld [vmem:[%s325 + $0xf8] sm:$0xff]
        %v575 = vld [vmem:[%s325 + $0x108] sm:$0xff]
        %v576 = vld [vmem:[%s325 + $0x110] sm:$0xff]
        %v577 = vld [vmem:[%s325 + $0x120] sm:$0xff]
        %v578 = vld [vmem:[%s325 + $0x128] sm:$0xff]
        %v579 = vld [vmem:[%s325 + $0x138] sm:$0xff]
        %v580 = vld [vmem:[%s325 + $0x140] sm:$0xff]
        %v581 = vld [vmem:[%s325 + $0x150] sm:$0xff]
        %v582 = vld [vmem:[%s325 + $0x158] sm:$0xff]
        %v583 = vld [vmem:[%s325 + $0x168] sm:$0xff]
        %v584 = vld [vmem:[%s325 + $0x170] sm:$0xff]
        %v585 = vld [vmem:[%s325 + $0x3] sm:$0xff]
        %v586 = vld [vmem:[%s325 + $0xb] sm:$0xff]
        %v587 = vld [vmem:[%s325 + $0x1b] sm:$0xff]
        %v588 = vld [vmem:[%s325 + $0x23] sm:$0xff]
        %v589 = vld [vmem:[%s325 + $0x33] sm:$0xff]
        %v590 = vld [vmem:[%s325 + $0x3b] sm:$0xff]
        %v591 = vld [vmem:[%s325 + $0x4b] sm:$0xff]
        %v592 = vld [vmem:[%s325 + $0x53] sm:$0xff]
        %v593 = vld [vmem:[%s325 + $0x63] sm:$0xff]
        %v594 = vld [vmem:[%s325 + $0x6b] sm:$0xff]
        %v595 = vld [vmem:[%s325 + $0x7b] sm:$0xff]
        %v596 = vld [vmem:[%s325 + $0x83] sm:$0xff]
        %v597 = vld [vmem:[%s325 + $0x93] sm:$0xff]
        %v598 = vld [vmem:[%s325 + $0x9b] sm:$0xff]
        %v599 = vld [vmem:[%s325 + $0xab] sm:$0xff]
        %v600 = vld [vmem:[%s325 + $0xb3] sm:$0xff]
        %v601 = vld [vmem:[%s325 + $0xc3] sm:$0xff]
        %v602 = vld [vmem:[%s325 + $0xcb] sm:$0xff]
        %v603 = vld [vmem:[%s325 + $0xdb] sm:$0xff]
        %v604 = vld [vmem:[%s325 + $0xe3] sm:$0xff]
        %v605 = vld [vmem:[%s325 + $0xf3] sm:$0xff]
        %v606 = vld [vmem:[%s325 + $0xfb] sm:$0xff]
        %v607 = vld [vmem:[%s325 + $0x10b] sm:$0xff]
        %v608 = vld [vmem:[%s325 + $0x113] sm:$0xff]
        %v609 = vld [vmem:[%s325 + $0x123] sm:$0xff]
        %v610 = vld [vmem:[%s325 + $0x12b] sm:$0xff]
        %v611 = vld [vmem:[%s325 + $0x13b] sm:$0xff]
        %v612 = vld [vmem:[%s325 + $0x143] sm:$0xff]
        %v613 = vld [vmem:[%s325 + $0x153] sm:$0xff]
        %v614 = vld [vmem:[%s325 + $0x15b] sm:$0xff]
        %v615 = vld [vmem:[%s325 + $0x16b] sm:$0xff]
        %v616 = vld [vmem:[%s325 + $0x173] sm:$0xff]
        %v617 = vld [vmem:[%s325 + $0x6] sm:$0xff]
        %v618 = vld [vmem:[%s325 + $0xe] sm:$0xff]
        %v619 = vld [vmem:[%s325 + $0x1e] sm:$0xff]
        %v620 = vld [vmem:[%s325 + $0x26] sm:$0xff]
        %v621 = vld [vmem:[%s325 + $0x36] sm:$0xff]
        %v622 = vld [vmem:[%s325 + $0x3e] sm:$0xff]
        %v623 = vld [vmem:[%s325 + $0x4e] sm:$0xff]
        %v624 = vld [vmem:[%s325 + $0x56] sm:$0xff]
        %v625 = vld [vmem:[%s325 + $0x66] sm:$0xff]
        %v626 = vld [vmem:[%s325 + $0x6e] sm:$0xff]
        %v627 = vld [vmem:[%s325 + $0x7e] sm:$0xff]
        %v628 = vld [vmem:[%s325 + $0x86] sm:$0xff]
        %v629 = vld [vmem:[%s325 + $0x96] sm:$0xff]
        %v630 = vld [vmem:[%s325 + $0x9e] sm:$0xff]
        %v631 = vld [vmem:[%s325 + $0xae] sm:$0xff]
        %v632 = vld [vmem:[%s325 + $0xb6] sm:$0xff]
        %v633 = vld [vmem:[%s325 + $0xc6] sm:$0xff]
        %v634 = vld [vmem:[%s325 + $0xce] sm:$0xff]
        %v635 = vld [vmem:[%s325 + $0xde] sm:$0xff]
        %v636 = vld [vmem:[%s325 + $0xe6] sm:$0xff]
        %v637 = vld [vmem:[%s325 + $0xf6] sm:$0xff]
        %v638 = vld [vmem:[%s325 + $0xfe] sm:$0xff]
        %v639 = vld [vmem:[%s325 + $0x10e] sm:$0xff]
        %v640 = vld [vmem:[%s325 + $0x116] sm:$0xff]
        %v641 = vld [vmem:[%s325 + $0x126] sm:$0xff]
        %v642 = vld [vmem:[%s325 + $0x12e] sm:$0xff]
        %v643 = vld [vmem:[%s325 + $0x13e] sm:$0xff]
        %v644 = vld [vmem:[%s325 + $0x146] sm:$0xff]
        %v645 = vld [vmem:[%s325 + $0x156] sm:$0xff]
        %v646 = vld [vmem:[%s325 + $0x15e] sm:$0xff]
        %v647 = vld [vmem:[%s325 + $0x16e] sm:$0xff]
        %v648 = vld [vmem:[%s325 + $0x176] sm:$0xff]
        %s649 = scalar_lea.vmem [#allocation2], 144
        %v650 = vld [vmem:[%s649] sm:$0xff]
        %v651 = vld [vmem:[%s649 + $0x8] sm:$0xff]
        %v652 = vld [vmem:[%s649 + $0x18] sm:$0xff]
        %v653 = vld [vmem:[%s649 + $0x20] sm:$0xff]
        %v654 = vld [vmem:[%s649 + $0x30] sm:$0xff]
        %v655 = vld [vmem:[%s649 + $0x38] sm:$0xff]
        %v656 = vld [vmem:[%s649 + $0x48] sm:$0xff]
        %v657 = vld [vmem:[%s649 + $0x50] sm:$0xff]
        %v658 = vld [vmem:[%s649 + $0x60] sm:$0xff]
        %v659 = vld [vmem:[%s649 + $0x68] sm:$0xff]
        %v660 = vld [vmem:[%s649 + $0x78] sm:$0xff]
        %v661 = vld [vmem:[%s649 + $0x80] sm:$0xff]
        %v662 = vld [vmem:[%s649 + $0x90] sm:$0xff]
        %v663 = vld [vmem:[%s649 + $0x98] sm:$0xff]
        %v664 = vld [vmem:[%s649 + $0xa8] sm:$0xff]
        %v665 = vld [vmem:[%s649 + $0xb0] sm:$0xff]
        %v666 = vld [vmem:[%s649 + $0xc0] sm:$0xff]
        %v667 = vld [vmem:[%s649 + $0xc8] sm:$0xff]
        %v668 = vld [vmem:[%s649 + $0xd8] sm:$0xff]
        %v669 = vld [vmem:[%s649 + $0xe0] sm:$0xff]
        %v670 = vld [vmem:[%s649 + $0xf0] sm:$0xff]
        %v671 = vld [vmem:[%s649 + $0xf8] sm:$0xff]
        %v672 = vld [vmem:[%s649 + $0x108] sm:$0xff]
        %v673 = vld [vmem:[%s649 + $0x110] sm:$0xff]
        %v674 = vld [vmem:[%s649 + $0x120] sm:$0xff]
        %v675 = vld [vmem:[%s649 + $0x128] sm:$0xff]
        %v676 = vld [vmem:[%s649 + $0x138] sm:$0xff]
        %v677 = vld [vmem:[%s649 + $0x140] sm:$0xff]
        %v678 = vld [vmem:[%s649 + $0x150] sm:$0xff]
        %v679 = vld [vmem:[%s649 + $0x158] sm:$0xff]
        %v680 = vld [vmem:[%s649 + $0x168] sm:$0xff]
        %v681 = vld [vmem:[%s649 + $0x170] sm:$0xff]
        %v682 = vld [vmem:[%s649 + $0x3] sm:$0xff]
        %v683 = vld [vmem:[%s649 + $0xb] sm:$0xff]
        %v684 = vld [vmem:[%s649 + $0x1b] sm:$0xff]
        %v685 = vld [vmem:[%s649 + $0x23] sm:$0xff]
        %v686 = vld [vmem:[%s649 + $0x33] sm:$0xff]
        %v687 = vld [vmem:[%s649 + $0x3b] sm:$0xff]
        %v688 = vld [vmem:[%s649 + $0x4b] sm:$0xff]
        %v689 = vld [vmem:[%s649 + $0x53] sm:$0xff]
        %v690 = vld [vmem:[%s649 + $0x63] sm:$0xff]
        %v691 = vld [vmem:[%s649 + $0x6b] sm:$0xff]
        %v692 = vld [vmem:[%s649 + $0x7b] sm:$0xff]
        %v693 = vld [vmem:[%s649 + $0x83] sm:$0xff]
        %v694 = vld [vmem:[%s649 + $0x93] sm:$0xff]
        %v695 = vld [vmem:[%s649 + $0x9b] sm:$0xff]
        %v696 = vld [vmem:[%s649 + $0xab] sm:$0xff]
        %v697 = vld [vmem:[%s649 + $0xb3] sm:$0xff]
        %v698 = vld [vmem:[%s649 + $0xc3] sm:$0xff]
        %v699 = vld [vmem:[%s649 + $0xcb] sm:$0xff]
        %v700 = vld [vmem:[%s649 + $0xdb] sm:$0xff]
        %v701 = vld [vmem:[%s649 + $0xe3] sm:$0xff]
        %v702 = vld [vmem:[%s649 + $0xf3] sm:$0xff]
        %v703 = vld [vmem:[%s649 + $0xfb] sm:$0xff]
        %v704 = vld [vmem:[%s649 + $0x10b] sm:$0xff]
        %v705 = vld [vmem:[%s649 + $0x113] sm:$0xff]
        %v706 = vld [vmem:[%s649 + $0x123] sm:$0xff]
        %v707 = vld [vmem:[%s649 + $0x12b] sm:$0xff]
        %v708 = vld [vmem:[%s649 + $0x13b] sm:$0xff]
        %v709 = vld [vmem:[%s649 + $0x143] sm:$0xff]
        %v710 = vld [vmem:[%s649 + $0x153] sm:$0xff]
        %v711 = vld [vmem:[%s649 + $0x15b] sm:$0xff]
        %v712 = vld [vmem:[%s649 + $0x16b] sm:$0xff]
        %v713 = vld [vmem:[%s649 + $0x173] sm:$0xff]
        %v714 = vld [vmem:[%s649 + $0x6] sm:$0xff]
        %v715 = vld [vmem:[%s649 + $0xe] sm:$0xff]
        %v716 = vld [vmem:[%s649 + $0x1e] sm:$0xff]
        %v717 = vld [vmem:[%s649 + $0x26] sm:$0xff]
        %v718 = vld [vmem:[%s649 + $0x36] sm:$0xff]
        %v719 = vld [vmem:[%s649 + $0x3e] sm:$0xff]
        %v720 = vld [vmem:[%s649 + $0x4e] sm:$0xff]
        %v721 = vld [vmem:[%s649 + $0x56] sm:$0xff]
        %v722 = vld [vmem:[%s649 + $0x66] sm:$0xff]
        %v723 = vld [vmem:[%s649 + $0x6e] sm:$0xff]
        %v724 = vld [vmem:[%s649 + $0x7e] sm:$0xff]
        %v725 = vld [vmem:[%s649 + $0x86] sm:$0xff]
        %v726 = vld [vmem:[%s649 + $0x96] sm:$0xff]
        %v727 = vld [vmem:[%s649 + $0x9e] sm:$0xff]
        %v728 = vld [vmem:[%s649 + $0xae] sm:$0xff]
        %v729 = vld [vmem:[%s649 + $0xb6] sm:$0xff]
        %v730 = vld [vmem:[%s649 + $0xc6] sm:$0xff]
        %v731 = vld [vmem:[%s649 + $0xce] sm:$0xff]
        %v732 = vld [vmem:[%s649 + $0xde] sm:$0xff]
        %v733 = vld [vmem:[%s649 + $0xe6] sm:$0xff]
        %v734 = vld [vmem:[%s649 + $0xf6] sm:$0xff]
        %v735 = vld [vmem:[%s649 + $0xfe] sm:$0xff]
        %v736 = vld [vmem:[%s649 + $0x10e] sm:$0xff]
        %v737 = vld [vmem:[%s649 + $0x116] sm:$0xff]
        %v738 = vld [vmem:[%s649 + $0x126] sm:$0xff]
        %v739 = vld [vmem:[%s649 + $0x12e] sm:$0xff]
        %v740 = vld [vmem:[%s649 + $0x13e] sm:$0xff]
        %v741 = vld [vmem:[%s649 + $0x146] sm:$0xff]
        %v742 = vld [vmem:[%s649 + $0x156] sm:$0xff]
        %v743 = vld [vmem:[%s649 + $0x15e] sm:$0xff]
        %v744 = vld [vmem:[%s649 + $0x16e] sm:$0xff]
        %v745 = vld [vmem:[%s649 + $0x176] sm:$0xff]
        %778 = vrot.lane.b32.xlu0 %v489, 4
        %v779 = vpop.permute.xlu0 %778
        %780 = vrot.lane.b32.xlu0 %v490, 4
        %v781 = vpop.permute.xlu0 %780
        %782 = vrot.lane.b32.xlu0 %v491, 4
        %v783 = vpop.permute.xlu0 %782
        %784 = vrot.lane.b32.xlu0 %v492, 4
        %v785 = vpop.permute.xlu0 %784
        %786 = vrot.lane.b32.xlu0 %v493, 4
        %v787 = vpop.permute.xlu0 %786
        %788 = vrot.lane.b32.xlu0 %v494, 4
        %v789 = vpop.permute.xlu0 %788
        %790 = vrot.lane.b32.xlu0 %v495, 4
        %v791 = vpop.permute.xlu0 %790
        %792 = vrot.lane.b32.xlu0 %v496, 4
        %v793 = vpop.permute.xlu0 %792
        %794 = vrot.lane.b32.xlu0 %v497, 4
        %v795 = vpop.permute.xlu0 %794
        %796 = vrot.lane.b32.xlu0 %v498, 4
        %v797 = vpop.permute.xlu0 %796
        %798 = vrot.lane.b32.xlu0 %v499, 4
        %v799 = vpop.permute.xlu0 %798
        %800 = vrot.lane.b32.xlu0 %v500, 4
        %v801 = vpop.permute.xlu0 %800
        %802 = vrot.lane.b32.xlu0 %v501, 4
        %v803 = vpop.permute.xlu0 %802
        %804 = vrot.lane.b32.xlu0 %v502, 4
        %v805 = vpop.permute.xlu0 %804
        %806 = vrot.lane.b32.xlu0 %v503, 4
        %v807 = vpop.permute.xlu0 %806
        %808 = vrot.lane.b32.xlu0 %v504, 4
        %v809 = vpop.permute.xlu0 %808
        %810 = vrot.lane.b32.xlu0 %v505, 4
        %v811 = vpop.permute.xlu0 %810
        %812 = vrot.lane.b32.xlu0 %v506, 4
        %v813 = vpop.permute.xlu0 %812
        %814 = vrot.lane.b32.xlu0 %v507, 4
        %v815 = vpop.permute.xlu0 %814
        %816 = vrot.lane.b32.xlu0 %v508, 4
        %v817 = vpop.permute.xlu0 %816
        %818 = vrot.lane.b32.xlu0 %v509, 4
        %v819 = vpop.permute.xlu0 %818
        %820 = vrot.lane.b32.xlu0 %v510, 4
        %v821 = vpop.permute.xlu0 %820
        %822 = vrot.lane.b32.xlu0 %v511, 4
        %v823 = vpop.permute.xlu0 %822
        %824 = vrot.lane.b32.xlu0 %v512, 4
        %v825 = vpop.permute.xlu0 %824
        %826 = vrot.lane.b32.xlu0 %v513, 4
        %v827 = vpop.permute.xlu0 %826
        %828 = vrot.lane.b32.xlu0 %v514, 4
        %v829 = vpop.permute.xlu0 %828
        %830 = vrot.lane.b32.xlu0 %v515, 4
        %v831 = vpop.permute.xlu0 %830
        %832 = vrot.lane.b32.xlu0 %v516, 4
        %v833 = vpop.permute.xlu0 %832
        %834 = vrot.lane.b32.xlu0 %v517, 4
        %v835 = vpop.permute.xlu0 %834
        %836 = vrot.lane.b32.xlu0 %v518, 4
        %v837 = vpop.permute.xlu0 %836
        %838 = vrot.lane.b32.xlu0 %v519, 4
        %v839 = vpop.permute.xlu0 %838
        %840 = vrot.lane.b32.xlu0 %v520, 4
        %v841 = vpop.permute.xlu0 %840
        %906 = vrot.lane.b32.xlu0 %v521, 8
        %v907 = vpop.permute.xlu0 %906
        %908 = vrot.lane.b32.xlu0 %v522, 8
        %v909 = vpop.permute.xlu0 %908
        %910 = vrot.lane.b32.xlu0 %v523, 8
        %v911 = vpop.permute.xlu0 %910
        %912 = vrot.lane.b32.xlu0 %v524, 8
        %v913 = vpop.permute.xlu0 %912
        %914 = vrot.lane.b32.xlu0 %v525, 8
        %v915 = vpop.permute.xlu0 %914
        %916 = vrot.lane.b32.xlu0 %v526, 8
        %v917 = vpop.permute.xlu0 %916
        %918 = vrot.lane.b32.xlu0 %v527, 8
        %v919 = vpop.permute.xlu0 %918
        %920 = vrot.lane.b32.xlu0 %v528, 8
        %v921 = vpop.permute.xlu0 %920
        %922 = vrot.lane.b32.xlu0 %v529, 8
        %v923 = vpop.permute.xlu0 %922
        %924 = vrot.lane.b32.xlu0 %v530, 8
        %v925 = vpop.permute.xlu0 %924
        %926 = vrot.lane.b32.xlu0 %v531, 8
        %v927 = vpop.permute.xlu0 %926
        %928 = vrot.lane.b32.xlu0 %v532, 8
        %v929 = vpop.permute.xlu0 %928
        %930 = vrot.lane.b32.xlu0 %v533, 8
        %v931 = vpop.permute.xlu0 %930
        %932 = vrot.lane.b32.xlu0 %v534, 8
        %v933 = vpop.permute.xlu0 %932
        %934 = vrot.lane.b32.xlu0 %v535, 8
        %v935 = vpop.permute.xlu0 %934
        %936 = vrot.lane.b32.xlu0 %v536, 8
        %v937 = vpop.permute.xlu0 %936
        %938 = vrot.lane.b32.xlu0 %v537, 8
        %v939 = vpop.permute.xlu0 %938
        %940 = vrot.lane.b32.xlu0 %v538, 8
        %v941 = vpop.permute.xlu0 %940
        %942 = vrot.lane.b32.xlu0 %v539, 8
        %v943 = vpop.permute.xlu0 %942
        %944 = vrot.lane.b32.xlu0 %v540, 8
        %v945 = vpop.permute.xlu0 %944
        %946 = vrot.lane.b32.xlu0 %v541, 8
        %v947 = vpop.permute.xlu0 %946
        %948 = vrot.lane.b32.xlu0 %v542, 8
        %v949 = vpop.permute.xlu0 %948
        %950 = vrot.lane.b32.xlu0 %v543, 8
        %v951 = vpop.permute.xlu0 %950
        %952 = vrot.lane.b32.xlu0 %v544, 8
        %v953 = vpop.permute.xlu0 %952
        %954 = vrot.lane.b32.xlu0 %v545, 8
        %v955 = vpop.permute.xlu0 %954
        %956 = vrot.lane.b32.xlu0 %v546, 8
        %v957 = vpop.permute.xlu0 %956
        %958 = vrot.lane.b32.xlu0 %v547, 8
        %v959 = vpop.permute.xlu0 %958
        %960 = vrot.lane.b32.xlu0 %v548, 8
        %v961 = vpop.permute.xlu0 %960
        %962 = vrot.lane.b32.xlu0 %v549, 8
        %v963 = vpop.permute.xlu0 %962
        %964 = vrot.lane.b32.xlu0 %v550, 8
        %v965 = vpop.permute.xlu0 %964
        %966 = vrot.lane.b32.xlu0 %v551, 8
        %v967 = vpop.permute.xlu0 %966
        %968 = vrot.lane.b32.xlu0 %v552, 8
        %v969 = vpop.permute.xlu0 %968
        %1034 = vrot.lane.b32.xlu0 %v553, 12
        %v1035 = vpop.permute.xlu0 %1034
        %1036 = vrot.lane.b32.xlu0 %v554, 12
        %v1037 = vpop.permute.xlu0 %1036
        %1038 = vrot.lane.b32.xlu0 %v555, 12
        %v1039 = vpop.permute.xlu0 %1038
        %1040 = vrot.lane.b32.xlu0 %v556, 12
        %v1041 = vpop.permute.xlu0 %1040
        %1042 = vrot.lane.b32.xlu0 %v557, 12
        %v1043 = vpop.permute.xlu0 %1042
        %1044 = vrot.lane.b32.xlu0 %v558, 12
        %v1045 = vpop.permute.xlu0 %1044
        %1046 = vrot.lane.b32.xlu0 %v559, 12
        %v1047 = vpop.permute.xlu0 %1046
        %1048 = vrot.lane.b32.xlu0 %v560, 12
        %v1049 = vpop.permute.xlu0 %1048
        %1050 = vrot.lane.b32.xlu0 %v561, 12
        %v1051 = vpop.permute.xlu0 %1050
        %1052 = vrot.lane.b32.xlu0 %v562, 12
        %v1053 = vpop.permute.xlu0 %1052
        %1054 = vrot.lane.b32.xlu0 %v563, 12
        %v1055 = vpop.permute.xlu0 %1054
        %1056 = vrot.lane.b32.xlu0 %v564, 12
        %v1057 = vpop.permute.xlu0 %1056
        %1058 = vrot.lane.b32.xlu0 %v565, 12
        %v1059 = vpop.permute.xlu0 %1058
        %1060 = vrot.lane.b32.xlu0 %v566, 12
        %v1061 = vpop.permute.xlu0 %1060
        %1062 = vrot.lane.b32.xlu0 %v567, 12
        %v1063 = vpop.permute.xlu0 %1062
        %1064 = vrot.lane.b32.xlu0 %v568, 12
        %v1065 = vpop.permute.xlu0 %1064
        %1066 = vrot.lane.b32.xlu0 %v569, 12
        %v1067 = vpop.permute.xlu0 %1066
        %1068 = vrot.lane.b32.xlu0 %v570, 12
        %v1069 = vpop.permute.xlu0 %1068
        %1070 = vrot.lane.b32.xlu0 %v571, 12
        %v1071 = vpop.permute.xlu0 %1070
        %1072 = vrot.lane.b32.xlu0 %v572, 12
        %v1073 = vpop.permute.xlu0 %1072
        %1074 = vrot.lane.b32.xlu0 %v573, 12
        %v1075 = vpop.permute.xlu0 %1074
        %1076 = vrot.lane.b32.xlu0 %v574, 12
        %v1077 = vpop.permute.xlu0 %1076
        %1078 = vrot.lane.b32.xlu0 %v575, 12
        %v1079 = vpop.permute.xlu0 %1078
        %1080 = vrot.lane.b32.xlu0 %v576, 12
        %v1081 = vpop.permute.xlu0 %1080
        %1082 = vrot.lane.b32.xlu0 %v577, 12
        %v1083 = vpop.permute.xlu0 %1082
        %1084 = vrot.lane.b32.xlu0 %v578, 12
        %v1085 = vpop.permute.xlu0 %1084
        %1086 = vrot.lane.b32.xlu0 %v579, 12
        %v1087 = vpop.permute.xlu0 %1086
        %1088 = vrot.lane.b32.xlu0 %v580, 12
        %v1089 = vpop.permute.xlu0 %1088
        %1090 = vrot.lane.b32.xlu0 %v581, 12
        %v1091 = vpop.permute.xlu0 %1090
        %1092 = vrot.lane.b32.xlu0 %v582, 12
        %v1093 = vpop.permute.xlu0 %1092
        %1094 = vrot.lane.b32.xlu0 %v583, 12
        %v1095 = vpop.permute.xlu0 %1094
        %1096 = vrot.lane.b32.xlu0 %v584, 12
        %v1097 = vpop.permute.xlu0 %1096
        %1162 = vrot.lane.b32.xlu0 %v585, 16
        %v1163 = vpop.permute.xlu0 %1162
        %1164 = vrot.lane.b32.xlu0 %v586, 16
        %v1165 = vpop.permute.xlu0 %1164
        %1166 = vrot.lane.b32.xlu0 %v587, 16
        %v1167 = vpop.permute.xlu0 %1166
        %1168 = vrot.lane.b32.xlu0 %v588, 16
        %v1169 = vpop.permute.xlu0 %1168
        %1170 = vrot.lane.b32.xlu0 %v589, 16
        %v1171 = vpop.permute.xlu0 %1170
        %1172 = vrot.lane.b32.xlu0 %v590, 16
        %v1173 = vpop.permute.xlu0 %1172
        %1174 = vrot.lane.b32.xlu0 %v591, 16
        %v1175 = vpop.permute.xlu0 %1174
        %1176 = vrot.lane.b32.xlu0 %v592, 16
        %v1177 = vpop.permute.xlu0 %1176
        %1178 = vrot.lane.b32.xlu0 %v593, 16
        %v1179 = vpop.permute.xlu0 %1178
        %1180 = vrot.lane.b32.xlu0 %v594, 16
        %v1181 = vpop.permute.xlu0 %1180
        %1182 = vrot.lane.b32.xlu0 %v595, 16
        %v1183 = vpop.permute.xlu0 %1182
        %1184 = vrot.lane.b32.xlu0 %v596, 16
        %v1185 = vpop.permute.xlu0 %1184
        %1186 = vrot.lane.b32.xlu0 %v597, 16
        %v1187 = vpop.permute.xlu0 %1186
        %1188 = vrot.lane.b32.xlu0 %v598, 16
        %v1189 = vpop.permute.xlu0 %1188
        %1190 = vrot.lane.b32.xlu0 %v599, 16
        %v1191 = vpop.permute.xlu0 %1190
        %1192 = vrot.lane.b32.xlu0 %v600, 16
        %v1193 = vpop.permute.xlu0 %1192
        %1194 = vrot.lane.b32.xlu0 %v601, 16
        %v1195 = vpop.permute.xlu0 %1194
        %1196 = vrot.lane.b32.xlu0 %v602, 16
        %v1197 = vpop.permute.xlu0 %1196
        %1198 = vrot.lane.b32.xlu0 %v603, 16
        %v1199 = vpop.permute.xlu0 %1198
        %1200 = vrot.lane.b32.xlu0 %v604, 16
        %v1201 = vpop.permute.xlu0 %1200
        %1202 = vrot.lane.b32.xlu0 %v605, 16
        %v1203 = vpop.permute.xlu0 %1202
        %1204 = vrot.lane.b32.xlu0 %v606, 16
        %v1205 = vpop.permute.xlu0 %1204
        %1206 = vrot.lane.b32.xlu0 %v607, 16
        %v1207 = vpop.permute.xlu0 %1206
        %1208 = vrot.lane.b32.xlu0 %v608, 16
        %v1209 = vpop.permute.xlu0 %1208
        %1210 = vrot.lane.b32.xlu0 %v609, 16
        %v1211 = vpop.permute.xlu0 %1210
        %1212 = vrot.lane.b32.xlu0 %v610, 16
        %v1213 = vpop.permute.xlu0 %1212
        %1214 = vrot.lane.b32.xlu0 %v611, 16
        %v1215 = vpop.permute.xlu0 %1214
        %1216 = vrot.lane.b32.xlu0 %v612, 16
        %v1217 = vpop.permute.xlu0 %1216
        %1218 = vrot.lane.b32.xlu0 %v613, 16
        %v1219 = vpop.permute.xlu0 %1218
        %1220 = vrot.lane.b32.xlu0 %v614, 16
        %v1221 = vpop.permute.xlu0 %1220
        %1222 = vrot.lane.b32.xlu0 %v615, 16
        %v1223 = vpop.permute.xlu0 %1222
        %1224 = vrot.lane.b32.xlu0 %v616, 16
        %v1225 = vpop.permute.xlu0 %1224
        %1290 = vrot.lane.b32.xlu0 %v617, 20
        %v1291 = vpop.permute.xlu0 %1290
        %1292 = vrot.lane.b32.xlu0 %v618, 20
        %v1293 = vpop.permute.xlu0 %1292
        %1294 = vrot.lane.b32.xlu0 %v619, 20
        %v1295 = vpop.permute.xlu0 %1294
        %1296 = vrot.lane.b32.xlu0 %v620, 20
        %v1297 = vpop.permute.xlu0 %1296
        %1298 = vrot.lane.b32.xlu0 %v621, 20
        %v1299 = vpop.permute.xlu0 %1298
        %1300 = vrot.lane.b32.xlu0 %v622, 20
        %v1301 = vpop.permute.xlu0 %1300
        %1302 = vrot.lane.b32.xlu0 %v623, 20
        %v1303 = vpop.permute.xlu0 %1302
        %1304 = vrot.lane.b32.xlu0 %v624, 20
        %v1305 = vpop.permute.xlu0 %1304
        %1306 = vrot.lane.b32.xlu0 %v625, 20
        %v1307 = vpop.permute.xlu0 %1306
        %1308 = vrot.lane.b32.xlu0 %v626, 20
        %v1309 = vpop.permute.xlu0 %1308
        %1310 = vrot.lane.b32.xlu0 %v627, 20
        %v1311 = vpop.permute.xlu0 %1310
        %1312 = vrot.lane.b32.xlu0 %v628, 20
        %v1313 = vpop.permute.xlu0 %1312
        %1314 = vrot.lane.b32.xlu0 %v629, 20
        %v1315 = vpop.permute.xlu0 %1314
        %1316 = vrot.lane.b32.xlu0 %v630, 20
        %v1317 = vpop.permute.xlu0 %1316
        %1318 = vrot.lane.b32.xlu0 %v631, 20
        %v1319 = vpop.permute.xlu0 %1318
        %1320 = vrot.lane.b32.xlu0 %v632, 20
        %v1321 = vpop.permute.xlu0 %1320
        %1322 = vrot.lane.b32.xlu0 %v633, 20
        %v1323 = vpop.permute.xlu0 %1322
        %1324 = vrot.lane.b32.xlu0 %v634, 20
        %v1325 = vpop.permute.xlu0 %1324
        %1326 = vrot.lane.b32.xlu0 %v635, 20
        %v1327 = vpop.permute.xlu0 %1326
        %1328 = vrot.lane.b32.xlu0 %v636, 20
        %v1329 = vpop.permute.xlu0 %1328
        %1330 = vrot.lane.b32.xlu0 %v637, 20
        %v1331 = vpop.permute.xlu0 %1330
        %1332 = vrot.lane.b32.xlu0 %v638, 20
        %v1333 = vpop.permute.xlu0 %1332
        %1334 = vrot.lane.b32.xlu0 %v639, 20
        %v1335 = vpop.permute.xlu0 %1334
        %1336 = vrot.lane.b32.xlu0 %v640, 20
        %v1337 = vpop.permute.xlu0 %1336
        %1338 = vrot.lane.b32.xlu0 %v641, 20
        %v1339 = vpop.permute.xlu0 %1338
        %1340 = vrot.lane.b32.xlu0 %v642, 20
        %v1341 = vpop.permute.xlu0 %1340
        %1342 = vrot.lane.b32.xlu0 %v643, 20
        %v1343 = vpop.permute.xlu0 %1342
        %1344 = vrot.lane.b32.xlu0 %v644, 20
        %v1345 = vpop.permute.xlu0 %1344
        %1346 = vrot.lane.b32.xlu0 %v645, 20
        %v1347 = vpop.permute.xlu0 %1346
        %1348 = vrot.lane.b32.xlu0 %v646, 20
        %v1349 = vpop.permute.xlu0 %1348
        %1350 = vrot.lane.b32.xlu0 %v647, 20
        %v1351 = vpop.permute.xlu0 %1350
        %1352 = vrot.lane.b32.xlu0 %v648, 20
        %v1353 = vpop.permute.xlu0 %1352
        %1418 = vrot.lane.b32.xlu0 %v650, 24
        %v1419 = vpop.permute.xlu0 %1418
        %1420 = vrot.lane.b32.xlu0 %v651, 24
        %v1421 = vpop.permute.xlu0 %1420
        %1422 = vrot.lane.b32.xlu0 %v652, 24
        %v1423 = vpop.permute.xlu0 %1422
        %1424 = vrot.lane.b32.xlu0 %v653, 24
        %v1425 = vpop.permute.xlu0 %1424
        %1426 = vrot.lane.b32.xlu0 %v654, 24
        %v1427 = vpop.permute.xlu0 %1426
        %1428 = vrot.lane.b32.xlu0 %v655, 24
        %v1429 = vpop.permute.xlu0 %1428
        %1430 = vrot.lane.b32.xlu0 %v656, 24
        %v1431 = vpop.permute.xlu0 %1430
        %1432 = vrot.lane.b32.xlu0 %v657, 24
        %v1433 = vpop.permute.xlu0 %1432
        %1434 = vrot.lane.b32.xlu0 %v658, 24
        %v1435 = vpop.permute.xlu0 %1434
        %1436 = vrot.lane.b32.xlu0 %v659, 24
        %v1437 = vpop.permute.xlu0 %1436
        %1438 = vrot.lane.b32.xlu0 %v660, 24
        %v1439 = vpop.permute.xlu0 %1438
        %1440 = vrot.lane.b32.xlu0 %v661, 24
        %v1441 = vpop.permute.xlu0 %1440
        %1442 = vrot.lane.b32.xlu0 %v662, 24
        %v1443 = vpop.permute.xlu0 %1442
        %1444 = vrot.lane.b32.xlu0 %v663, 24
        %v1445 = vpop.permute.xlu0 %1444
        %1446 = vrot.lane.b32.xlu0 %v664, 24
        %v1447 = vpop.permute.xlu0 %1446
        %1448 = vrot.lane.b32.xlu0 %v665, 24
        %v1449 = vpop.permute.xlu0 %1448
        %1450 = vrot.lane.b32.xlu0 %v666, 24
        %v1451 = vpop.permute.xlu0 %1450
        %1452 = vrot.lane.b32.xlu0 %v667, 24
        %v1453 = vpop.permute.xlu0 %1452
        %1454 = vrot.lane.b32.xlu0 %v668, 24
        %v1455 = vpop.permute.xlu0 %1454
        %1456 = vrot.lane.b32.xlu0 %v669, 24
        %v1457 = vpop.permute.xlu0 %1456
        %1458 = vrot.lane.b32.xlu0 %v670, 24
        %v1459 = vpop.permute.xlu0 %1458
        %1460 = vrot.lane.b32.xlu0 %v671, 24
        %v1461 = vpop.permute.xlu0 %1460
        %1462 = vrot.lane.b32.xlu0 %v672, 24
        %v1463 = vpop.permute.xlu0 %1462
        %1464 = vrot.lane.b32.xlu0 %v673, 24
        %v1465 = vpop.permute.xlu0 %1464
        %1466 = vrot.lane.b32.xlu0 %v674, 24
        %v1467 = vpop.permute.xlu0 %1466
        %1468 = vrot.lane.b32.xlu0 %v675, 24
        %v1469 = vpop.permute.xlu0 %1468
        %1470 = vrot.lane.b32.xlu0 %v676, 24
        %v1471 = vpop.permute.xlu0 %1470
        %1472 = vrot.lane.b32.xlu0 %v677, 24
        %v1473 = vpop.permute.xlu0 %1472
        %1474 = vrot.lane.b32.xlu0 %v678, 24
        %v1475 = vpop.permute.xlu0 %1474
        %1476 = vrot.lane.b32.xlu0 %v679, 24
        %v1477 = vpop.permute.xlu0 %1476
        %1478 = vrot.lane.b32.xlu0 %v680, 24
        %v1479 = vpop.permute.xlu0 %1478
        %1480 = vrot.lane.b32.xlu0 %v681, 24
        %v1481 = vpop.permute.xlu0 %1480
        %1546 = vrot.lane.b32.xlu0 %v682, 28
        %v1547 = vpop.permute.xlu0 %1546
        %1548 = vrot.lane.b32.xlu0 %v683, 28
        %v1549 = vpop.permute.xlu0 %1548
        %1550 = vrot.lane.b32.xlu0 %v684, 28
        %v1551 = vpop.permute.xlu0 %1550
        %1552 = vrot.lane.b32.xlu0 %v685, 28
        %v1553 = vpop.permute.xlu0 %1552
        %1554 = vrot.lane.b32.xlu0 %v686, 28
        %v1555 = vpop.permute.xlu0 %1554
        %1556 = vrot.lane.b32.xlu0 %v687, 28
        %v1557 = vpop.permute.xlu0 %1556
        %1558 = vrot.lane.b32.xlu0 %v688, 28
        %v1559 = vpop.permute.xlu0 %1558
        %1560 = vrot.lane.b32.xlu0 %v689, 28
        %v1561 = vpop.permute.xlu0 %1560
        %1562 = vrot.lane.b32.xlu0 %v690, 28
        %v1563 = vpop.permute.xlu0 %1562
        %1564 = vrot.lane.b32.xlu0 %v691, 28
        %v1565 = vpop.permute.xlu0 %1564
        %1566 = vrot.lane.b32.xlu0 %v692, 28
        %v1567 = vpop.permute.xlu0 %1566
        %1568 = vrot.lane.b32.xlu0 %v693, 28
        %v1569 = vpop.permute.xlu0 %1568
        %1570 = vrot.lane.b32.xlu0 %v694, 28
        %v1571 = vpop.permute.xlu0 %1570
        %1572 = vrot.lane.b32.xlu0 %v695, 28
        %v1573 = vpop.permute.xlu0 %1572
        %1574 = vrot.lane.b32.xlu0 %v696, 28
        %v1575 = vpop.permute.xlu0 %1574
        %1576 = vrot.lane.b32.xlu0 %v697, 28
        %v1577 = vpop.permute.xlu0 %1576
        %1578 = vrot.lane.b32.xlu0 %v698, 28
        %v1579 = vpop.permute.xlu0 %1578
        %1580 = vrot.lane.b32.xlu0 %v699, 28
        %v1581 = vpop.permute.xlu0 %1580
        %1582 = vrot.lane.b32.xlu0 %v700, 28
        %v1583 = vpop.permute.xlu0 %1582
        %1584 = vrot.lane.b32.xlu0 %v701, 28
        %v1585 = vpop.permute.xlu0 %1584
        %1586 = vrot.lane.b32.xlu0 %v702, 28
        %v1587 = vpop.permute.xlu0 %1586
        %1588 = vrot.lane.b32.xlu0 %v703, 28
        %v1589 = vpop.permute.xlu0 %1588
        %1590 = vrot.lane.b32.xlu0 %v704, 28
        %v1591 = vpop.permute.xlu0 %1590
        %1592 = vrot.lane.b32.xlu0 %v705, 28
        %v1593 = vpop.permute.xlu0 %1592
        %1594 = vrot.lane.b32.xlu0 %v706, 28
        %v1595 = vpop.permute.xlu0 %1594
        %1596 = vrot.lane.b32.xlu0 %v707, 28
        %v1597 = vpop.permute.xlu0 %1596
        %1598 = vrot.lane.b32.xlu0 %v708, 28
        %v1599 = vpop.permute.xlu0 %1598
        %1600 = vrot.lane.b32.xlu0 %v709, 28
        %v1601 = vpop.permute.xlu0 %1600
        %1602 = vrot.lane.b32.xlu0 %v710, 28
        %v1603 = vpop.permute.xlu0 %1602
        %1604 = vrot.lane.b32.xlu0 %v711, 28
        %v1605 = vpop.permute.xlu0 %1604
        %1606 = vrot.lane.b32.xlu0 %v712, 28
        %v1607 = vpop.permute.xlu0 %1606
        %1608 = vrot.lane.b32.xlu0 %v713, 28
        %v1609 = vpop.permute.xlu0 %1608
        %1674 = vrot.lane.b32.xlu0 %v714, 32
        %v1675 = vpop.permute.xlu0 %1674
        %1676 = vrot.lane.b32.xlu0 %v715, 32
        %v1677 = vpop.permute.xlu0 %1676
        %1678 = vrot.lane.b32.xlu0 %v716, 32
        %v1679 = vpop.permute.xlu0 %1678
        %1680 = vrot.lane.b32.xlu0 %v717, 32
        %v1681 = vpop.permute.xlu0 %1680
        %1682 = vrot.lane.b32.xlu0 %v718, 32
        %v1683 = vpop.permute.xlu0 %1682
        %1684 = vrot.lane.b32.xlu0 %v719, 32
        %v1685 = vpop.permute.xlu0 %1684
        %1686 = vrot.lane.b32.xlu0 %v720, 32
        %v1687 = vpop.permute.xlu0 %1686
        %1688 = vrot.lane.b32.xlu0 %v721, 32
        %v1689 = vpop.permute.xlu0 %1688
        %1690 = vrot.lane.b32.xlu0 %v722, 32
        %v1691 = vpop.permute.xlu0 %1690
        %1692 = vrot.lane.b32.xlu0 %v723, 32
        %v1693 = vpop.permute.xlu0 %1692
        %1694 = vrot.lane.b32.xlu0 %v724, 32
        %v1695 = vpop.permute.xlu0 %1694
        %1696 = vrot.lane.b32.xlu0 %v725, 32
        %v1697 = vpop.permute.xlu0 %1696
        %1698 = vrot.lane.b32.xlu0 %v726, 32
        %v1699 = vpop.permute.xlu0 %1698
        %1700 = vrot.lane.b32.xlu0 %v727, 32
        %v1701 = vpop.permute.xlu0 %1700
        %1702 = vrot.lane.b32.xlu0 %v728, 32
        %v1703 = vpop.permute.xlu0 %1702
        %1704 = vrot.lane.b32.xlu0 %v729, 32
        %v1705 = vpop.permute.xlu0 %1704
        %1706 = vrot.lane.b32.xlu0 %v730, 32
        %v1707 = vpop.permute.xlu0 %1706
        %1708 = vrot.lane.b32.xlu0 %v731, 32
        %v1709 = vpop.permute.xlu0 %1708
        %1710 = vrot.lane.b32.xlu0 %v732, 32
        %v1711 = vpop.permute.xlu0 %1710
        %1712 = vrot.lane.b32.xlu0 %v733, 32
        %v1713 = vpop.permute.xlu0 %1712
        %1714 = vrot.lane.b32.xlu0 %v734, 32
        %v1715 = vpop.permute.xlu0 %1714
        %1716 = vrot.lane.b32.xlu0 %v735, 32
        %v1717 = vpop.permute.xlu0 %1716
        %1718 = vrot.lane.b32.xlu0 %v736, 32
        %v1719 = vpop.permute.xlu0 %1718
        %1720 = vrot.lane.b32.xlu0 %v737, 32
        %v1721 = vpop.permute.xlu0 %1720
        %1722 = vrot.lane.b32.xlu0 %v738, 32
        %v1723 = vpop.permute.xlu0 %1722
        %1724 = vrot.lane.b32.xlu0 %v739, 32
        %v1725 = vpop.permute.xlu0 %1724
        %1726 = vrot.lane.b32.xlu0 %v740, 32
        %v1727 = vpop.permute.xlu0 %1726
        %1728 = vrot.lane.b32.xlu0 %v741, 32
        %v1729 = vpop.permute.xlu0 %1728
        %1730 = vrot.lane.b32.xlu0 %v742, 32
        %v1731 = vpop.permute.xlu0 %1730
        %1732 = vrot.lane.b32.xlu0 %v743, 32
        %v1733 = vpop.permute.xlu0 %1732
        %1734 = vrot.lane.b32.xlu0 %v744, 32
        %v1735 = vpop.permute.xlu0 %1734
        %1736 = vrot.lane.b32.xlu0 %v745, 32
        %v1737 = vpop.permute.xlu0 %1736
        %v1770 = vsel %vm391, %v457, %v779
        %v1771 = vsel %vm391, %v458, %v781
        %v1772 = vsel %vm391, %v459, %v783
        %v1773 = vsel %vm391, %v460, %v785
        %v1774 = vsel %vm391, %v461, %v787
        %v1775 = vsel %vm391, %v462, %v789
        %v1776 = vsel %vm391, %v463, %v791
        %v1777 = vsel %vm391, %v464, %v793
        %v1778 = vsel %vm391, %v465, %v795
        %v1779 = vsel %vm391, %v466, %v797
        %v1780 = vsel %vm391, %v467, %v799
        %v1781 = vsel %vm391, %v468, %v801
        %v1782 = vsel %vm391, %v469, %v803
        %v1783 = vsel %vm391, %v470, %v805
        %v1784 = vsel %vm391, %v471, %v807
        %v1785 = vsel %vm391, %v472, %v809
        %v1786 = vsel %vm391, %v473, %v811
        %v1787 = vsel %vm391, %v474, %v813
        %v1788 = vsel %vm391, %v475, %v815
        %v1789 = vsel %vm391, %v476, %v817
        %v1790 = vsel %vm391, %v477, %v819
        %v1791 = vsel %vm391, %v478, %v821
        %v1792 = vsel %vm391, %v479, %v823
        %v1793 = vsel %vm391, %v480, %v825
        %v1794 = vsel %vm391, %v481, %v827
        %v1795 = vsel %vm391, %v482, %v829
        %v1796 = vsel %vm391, %v483, %v831
        %v1797 = vsel %vm391, %v484, %v833
        %v1798 = vsel %vm391, %v485, %v835
        %v1799 = vsel %vm391, %v486, %v837
        %v1800 = vsel %vm391, %v487, %v839
        %v1801 = vsel %vm391, %v488, %v841
        %vm1802 = vcmask 64512
        %v1803 = vsel %vm1802, %v1770, %v907
        %v1804 = vsel %vm1802, %v1771, %v909
        %v1805 = vsel %vm1802, %v1772, %v911
        %v1806 = vsel %vm1802, %v1773, %v913
        %v1807 = vsel %vm1802, %v1774, %v915
        %v1808 = vsel %vm1802, %v1775, %v917
        %v1809 = vsel %vm1802, %v1776, %v919
        %v1810 = vsel %vm1802, %v1777, %v921
        %v1811 = vsel %vm1802, %v1778, %v923
        %v1812 = vsel %vm1802, %v1779, %v925
        %v1813 = vsel %vm1802, %v1780, %v927
        %v1814 = vsel %vm1802, %v1781, %v929
        %v1815 = vsel %vm1802, %v1782, %v931
        %v1816 = vsel %vm1802, %v1783, %v933
        %v1817 = vsel %vm1802, %v1784, %v935
        %v1818 = vsel %vm1802, %v1785, %v937
        %v1819 = vsel %vm1802, %v1786, %v939
        %v1820 = vsel %vm1802, %v1787, %v941
        %v1821 = vsel %vm1802, %v1788, %v943
        %v1822 = vsel %vm1802, %v1789, %v945
        %v1823 = vsel %vm1802, %v1790, %v947
        %v1824 = vsel %vm1802, %v1791, %v949
        %v1825 = vsel %vm1802, %v1792, %v951
        %v1826 = vsel %vm1802, %v1793, %v953
        %v1827 = vsel %vm1802, %v1794, %v955
        %v1828 = vsel %vm1802, %v1795, %v957
        %v1829 = vsel %vm1802, %v1796, %v959
        %v1830 = vsel %vm1802, %v1797, %v961
        %v1831 = vsel %vm1802, %v1798, %v963
        %v1832 = vsel %vm1802, %v1799, %v965
        %v1833 = vsel %vm1802, %v1800, %v967
        %v1834 = vsel %vm1802, %v1801, %v969
        %vm1835 = vcmask 97280
        %v1836 = vsel %vm1835, %v1803, %v1035
        %v1837 = vsel %vm1835, %v1804, %v1037
        %v1838 = vsel %vm1835, %v1805, %v1039
        %v1839 = vsel %vm1835, %v1806, %v1041
        %v1840 = vsel %vm1835, %v1807, %v1043
        %v1841 = vsel %vm1835, %v1808, %v1045
        %v1842 = vsel %vm1835, %v1809, %v1047
        %v1843 = vsel %vm1835, %v1810, %v1049
        %v1844 = vsel %vm1835, %v1811, %v1051
        %v1845 = vsel %vm1835, %v1812, %v1053
        %v1846 = vsel %vm1835, %v1813, %v1055
        %v1847 = vsel %vm1835, %v1814, %v1057
        %v1848 = vsel %vm1835, %v1815, %v1059
        %v1849 = vsel %vm1835, %v1816, %v1061
        %v1850 = vsel %vm1835, %v1817, %v1063
        %v1851 = vsel %vm1835, %v1818, %v1065
        %v1852 = vsel %vm1835, %v1819, %v1067
        %v1853 = vsel %vm1835, %v1820, %v1069
        %v1854 = vsel %vm1835, %v1821, %v1071
        %v1855 = vsel %vm1835, %v1822, %v1073
        %v1856 = vsel %vm1835, %v1823, %v1075
        %v1857 = vsel %vm1835, %v1824, %v1077
        %v1858 = vsel %vm1835, %v1825, %v1079
        %v1859 = vsel %vm1835, %v1826, %v1081
        %v1860 = vsel %vm1835, %v1827, %v1083
        %v1861 = vsel %vm1835, %v1828, %v1085
        %v1862 = vsel %vm1835, %v1829, %v1087
        %v1863 = vsel %vm1835, %v1830, %v1089
        %v1864 = vsel %vm1835, %v1831, %v1091
        %v1865 = vsel %vm1835, %v1832, %v1093
        %v1866 = vsel %vm1835, %v1833, %v1095
        %v1867 = vsel %vm1835, %v1834, %v1097
        %vm1868 = vcmask 130048
        %v1869 = vsel %vm1868, %v1836, %v1163
        %v1870 = vsel %vm1868, %v1837, %v1165
        %v1871 = vsel %vm1868, %v1838, %v1167
        %v1872 = vsel %vm1868, %v1839, %v1169
        %v1873 = vsel %vm1868, %v1840, %v1171
        %v1874 = vsel %vm1868, %v1841, %v1173
        %v1875 = vsel %vm1868, %v1842, %v1175
        %v1876 = vsel %vm1868, %v1843, %v1177
        %v1877 = vsel %vm1868, %v1844, %v1179
        %v1878 = vsel %vm1868, %v1845, %v1181
        %v1879 = vsel %vm1868, %v1846, %v1183
        %v1880 = vsel %vm1868, %v1847, %v1185
        %v1881 = vsel %vm1868, %v1848, %v1187
        %v1882 = vsel %vm1868, %v1849, %v1189
        %v1883 = vsel %vm1868, %v1850, %v1191
        %v1884 = vsel %vm1868, %v1851, %v1193
        %v1885 = vsel %vm1868, %v1852, %v1195
        %v1886 = vsel %vm1868, %v1853, %v1197
        %v1887 = vsel %vm1868, %v1854, %v1199
        %v1888 = vsel %vm1868, %v1855, %v1201
        %v1889 = vsel %vm1868, %v1856, %v1203
        %v1890 = vsel %vm1868, %v1857, %v1205
        %v1891 = vsel %vm1868, %v1858, %v1207
        %v1892 = vsel %vm1868, %v1859, %v1209
        %v1893 = vsel %vm1868, %v1860, %v1211
        %v1894 = vsel %vm1868, %v1861, %v1213
        %v1895 = vsel %vm1868, %v1862, %v1215
        %v1896 = vsel %vm1868, %v1863, %v1217
        %v1897 = vsel %vm1868, %v1864, %v1219
        %v1898 = vsel %vm1868, %v1865, %v1221
        %v1899 = vsel %vm1868, %v1866, %v1223
        %v1900 = vsel %vm1868, %v1867, %v1225
        %vm1901 = vcmask 162816
        %v1902 = vsel %vm1901, %v1869, %v1291
        %v1903 = vsel %vm1901, %v1870, %v1293
        %v1904 = vsel %vm1901, %v1871, %v1295
        %v1905 = vsel %vm1901, %v1872, %v1297
        %v1906 = vsel %vm1901, %v1873, %v1299
        %v1907 = vsel %vm1901, %v1874, %v1301
        %v1908 = vsel %vm1901, %v1875, %v1303
        %v1909 = vsel %vm1901, %v1876, %v1305
        %v1910 = vsel %vm1901, %v1877, %v1307
        %v1911 = vsel %vm1901, %v1878, %v1309
        %v1912 = vsel %vm1901, %v1879, %v1311
        %v1913 = vsel %vm1901, %v1880, %v1313
        %v1914 = vsel %vm1901, %v1881, %v1315
        %v1915 = vsel %vm1901, %v1882, %v1317
        %v1916 = vsel %vm1901, %v1883, %v1319
        %v1917 = vsel %vm1901, %v1884, %v1321
        %v1918 = vsel %vm1901, %v1885, %v1323
        %v1919 = vsel %vm1901, %v1886, %v1325
        %v1920 = vsel %vm1901, %v1887, %v1327
        %v1921 = vsel %vm1901, %v1888, %v1329
        %v1922 = vsel %vm1901, %v1889, %v1331
        %v1923 = vsel %vm1901, %v1890, %v1333
        %v1924 = vsel %vm1901, %v1891, %v1335
        %v1925 = vsel %vm1901, %v1892, %v1337
        %v1926 = vsel %vm1901, %v1893, %v1339
        %v1927 = vsel %vm1901, %v1894, %v1341
        %v1928 = vsel %vm1901, %v1895, %v1343
        %v1929 = vsel %vm1901, %v1896, %v1345
        %v1930 = vsel %vm1901, %v1897, %v1347
        %v1931 = vsel %vm1901, %v1898, %v1349
        %v1932 = vsel %vm1901, %v1899, %v1351
        %v1933 = vsel %vm1901, %v1900, %v1353
        %v1934 = vsel %vm304, %v1902, %v1419
        %v1935 = vsel %vm304, %v1903, %v1421
        %v1936 = vsel %vm304, %v1904, %v1423
        %v1937 = vsel %vm304, %v1905, %v1425
        %v1938 = vsel %vm304, %v1906, %v1427
        %v1939 = vsel %vm304, %v1907, %v1429
        %v1940 = vsel %vm304, %v1908, %v1431
        %v1941 = vsel %vm304, %v1909, %v1433
        %v1942 = vsel %vm304, %v1910, %v1435
        %v1943 = vsel %vm304, %v1911, %v1437
        %v1944 = vsel %vm304, %v1912, %v1439
        %v1945 = vsel %vm304, %v1913, %v1441
        %v1946 = vsel %vm304, %v1914, %v1443
        %v1947 = vsel %vm304, %v1915, %v1445
        %v1948 = vsel %vm304, %v1916, %v1447
        %v1949 = vsel %vm304, %v1917, %v1449
        %v1950 = vsel %vm304, %v1918, %v1451
        %v1951 = vsel %vm304, %v1919, %v1453
        %v1952 = vsel %vm304, %v1920, %v1455
        %v1953 = vsel %vm304, %v1921, %v1457
        %v1954 = vsel %vm304, %v1922, %v1459
        %v1955 = vsel %vm304, %v1923, %v1461
        %v1956 = vsel %vm304, %v1924, %v1463
        %v1957 = vsel %vm304, %v1925, %v1465
        %v1958 = vsel %vm304, %v1926, %v1467
        %v1959 = vsel %vm304, %v1927, %v1469
        %v1960 = vsel %vm304, %v1928, %v1471
        %v1961 = vsel %vm304, %v1929, %v1473
        %v1962 = vsel %vm304, %v1930, %v1475
        %v1963 = vsel %vm304, %v1931, %v1477
        %v1964 = vsel %vm304, %v1932, %v1479
        %v1965 = vsel %vm304, %v1933, %v1481
        %vm1966 = vcmask 228352
        %v1967 = vsel %vm1966, %v1934, %v1547
        %v1968 = vsel %vm1966, %v1935, %v1549
        %v1969 = vsel %vm1966, %v1936, %v1551
        %v1970 = vsel %vm1966, %v1937, %v1553
        %v1971 = vsel %vm1966, %v1938, %v1555
        %v1972 = vsel %vm1966, %v1939, %v1557
        %v1973 = vsel %vm1966, %v1940, %v1559
        %v1974 = vsel %vm1966, %v1941, %v1561
        %v1975 = vsel %vm1966, %v1942, %v1563
        %v1976 = vsel %vm1966, %v1943, %v1565
        %v1977 = vsel %vm1966, %v1944, %v1567
        %v1978 = vsel %vm1966, %v1945, %v1569
        %v1979 = vsel %vm1966, %v1946, %v1571
        %v1980 = vsel %vm1966, %v1947, %v1573
        %v1981 = vsel %vm1966, %v1948, %v1575
        %v1982 = vsel %vm1966, %v1949, %v1577
        %v1983 = vsel %vm1966, %v1950, %v1579
        %v1984 = vsel %vm1966, %v1951, %v1581
        %v1985 = vsel %vm1966, %v1952, %v1583
        %v1986 = vsel %vm1966, %v1953, %v1585
        %v1987 = vsel %vm1966, %v1954, %v1587
        %v1988 = vsel %vm1966, %v1955, %v1589
        %v1989 = vsel %vm1966, %v1956, %v1591
        %v1990 = vsel %vm1966, %v1957, %v1593
        %v1991 = vsel %vm1966, %v1958, %v1595
        %v1992 = vsel %vm1966, %v1959, %v1597
        %v1993 = vsel %vm1966, %v1960, %v1599
        %v1994 = vsel %vm1966, %v1961, %v1601
        %v1995 = vsel %vm1966, %v1962, %v1603
        %v1996 = vsel %vm1966, %v1963, %v1605
        %v1997 = vsel %vm1966, %v1964, %v1607
        %v1998 = vsel %vm1966, %v1965, %v1609
        %vm1999 = vcmask 261120
        %v2000 = vsel %vm1999, %v1967, %v1675
        %v2001 = vsel %vm1999, %v1968, %v1677
        %v2002 = vsel %vm1999, %v1969, %v1679
        %v2003 = vsel %vm1999, %v1970, %v1681
        %v2004 = vsel %vm1999, %v1971, %v1683
        %v2005 = vsel %vm1999, %v1972, %v1685
        %v2006 = vsel %vm1999, %v1973, %v1687
        %v2007 = vsel %vm1999, %v1974, %v1689
        %v2008 = vsel %vm1999, %v1975, %v1691
        %v2009 = vsel %vm1999, %v1976, %v1693
        %v2010 = vsel %vm1999, %v1977, %v1695
        %v2011 = vsel %vm1999, %v1978, %v1697
        %v2012 = vsel %vm1999, %v1979, %v1699
        %v2013 = vsel %vm1999, %v1980, %v1701
        %v2014 = vsel %vm1999, %v1981, %v1703
        %v2015 = vsel %vm1999, %v1982, %v1705
        %v2016 = vsel %vm1999, %v1983, %v1707
        %v2017 = vsel %vm1999, %v1984, %v1709
        %v2018 = vsel %vm1999, %v1985, %v1711
        %v2019 = vsel %vm1999, %v1986, %v1713
        %v2020 = vsel %vm1999, %v1987, %v1715
        %v2021 = vsel %vm1999, %v1988, %v1717
        %v2022 = vsel %vm1999, %v1989, %v1719
        %v2023 = vsel %vm1999, %v1990, %v1721
        %v2024 = vsel %vm1999, %v1991, %v1723
        %v2025 = vsel %vm1999, %v1992, %v1725
        %v2026 = vsel %vm1999, %v1993, %v1727
        %v2027 = vsel %vm1999, %v1994, %v1729
        %v2028 = vsel %vm1999, %v1995, %v1731
        %v2029 = vsel %vm1999, %v1996, %v1733
        %v2030 = vsel %vm1999, %v1997, %v1735
        %v2031 = vsel %vm1999, %v1998, %v1737
        %v2032 = vld [vmem:[%s1] sm:$0xff]
        %v2033 = vld [vmem:[%s1 + $0x8] sm:$0xff]
        %v2034 = vld [vmem:[%s1 + $0x10] sm:$0xff]
        %v2035 = vld [vmem:[%s1 + $0x18] sm:$0xff]
        %v2036 = vld [vmem:[%s1 + $0x20] sm:$0xf]
        %v2037 = vlaneseq
        %v2038 = vshrl.u32 %v2037, 7
        %v2039 = vsub.s32 0, %v2038
        %v2040 = vrot.slane %v456, %v2039
        %vm2041 = vcmask 293888
        %v2043 = vsel %vm2041, %v2000, 0
        %v2046 = vsel %vm2041, %v2001, 0
        %v2049 = vsel %vm2041, %v2002, 0
        %v2052 = vsel %vm2041, %v2003, 0
        %v2055 = vsel %vm2041, %v2004, 0
        %v2058 = vsel %vm2041, %v2005, 0
        %v2061 = vsel %vm2041, %v2006, 0
        %v2064 = vsel %vm2041, %v2007, 0
        %v2067 = vsel %vm2041, %v2008, 0
        %v2070 = vsel %vm2041, %v2009, 0
        %v2073 = vsel %vm2041, %v2010, 0
        %v2076 = vsel %vm2041, %v2011, 0
        %v2079 = vsel %vm2041, %v2012, 0
        %v2082 = vsel %vm2041, %v2013, 0
        %v2085 = vsel %vm2041, %v2014, 0
        %v2088 = vsel %vm2041, %v2015, 0
        %v2091 = vsel %vm2041, %v2016, 0
        %v2094 = vsel %vm2041, %v2017, 0
        %v2097 = vsel %vm2041, %v2018, 0
        %v2100 = vsel %vm2041, %v2019, 0
        %v2103 = vsel %vm2041, %v2020, 0
        %v2106 = vsel %vm2041, %v2021, 0
        %v2109 = vsel %vm2041, %v2022, 0
        %v2112 = vsel %vm2041, %v2023, 0
        %v2115 = vsel %vm2041, %v2024, 0
        %v2118 = vsel %vm2041, %v2025, 0
        %v2121 = vsel %vm2041, %v2026, 0
        %v2124 = vsel %vm2041, %v2027, 0
        %v2127 = vsel %vm2041, %v2028, 0
        %v2130 = vsel %vm2041, %v2029, 0
        %v2133 = vsel %vm2041, %v2030, 0
        %v2136 = vsel %vm2041, %v2031, 0
        %vm2138 = vcmask 1043456
        %v2140 = vsel %vm2138, %v2036, 0
        %2142 = vmatprep.subr.mxu0 0.0
        %2143 = vmatpush1.msra.mxu0 0.0
        %2144 = vmatprep.subr.mxu0 0.0
        %2145 = vmatpush1.msra.mxu0 0.0
        %2146 = vmatprep.subr.mxu0 0.0
        %2147 = vmatpush1.msra.mxu0 0.0
        %2148 = vmatprep.subr.mxu0 0.0
        %2149 = vmatpush1.msra.mxu0 0.0
        %2150 = vmatprep.subr.mxu0 0.0
        %2151 = vmatpush1.msra.mxu0 0.0
        %2152 = vmatprep.subr.mxu0 0.0
        %2153 = vmatpush1.msra.mxu0 0.0
        %2154 = vmatprep.subr.mxu0 0.0
        %2155 = vmatpush1.msra.mxu0 0.0
        %2156 = vmatprep.subr.mxu0 0.0
        %2157 = vmatpush1.msra.mxu0 0.0
        %2158 = vmatprep.subr.mxu0 0.0
        %2159 = vmatpush1.msra.mxu0 0.0
        %2160 = vmatprep.subr.mxu0 0.0
        %2161 = vmatpush1.msra.mxu0 0.0
        %2162 = vmatprep.subr.mxu0 0.0
        %2163 = vmatpush1.msra.mxu0 0.0
        %2164 = vmatprep.subr.mxu0 0.0
        %2165 = vmatpush1.msra.mxu0 %v2140
        %2166 = vmatprep.subr.mxu0 0.0
        %2167 = vmatpush1.msra.mxu0 %v2035
        %2168 = vmatprep.subr.mxu0 0.0
        %2169 = vmatpush1.msra.mxu0 %v2034
        %2170 = vmatprep.subr.mxu0 0.0
        %2171 = vmatpush1.msra.mxu0 %v2033
        %2172 = vmatprep.subr.mxu0 0.0
        %2173 = vmatpush1.msra.mxu0 %v2032
        %2174 = vmatprep.subr.mxu0 0.0
        %2175 = vmatpush2.msra.mxu0 0.0
        %2176 = vmatprep.subr.mxu0 0.0
        %2177 = vmatpush2.msra.mxu0 0.0
        %2178 = vmatprep.subr.mxu0 0.0
        %2179 = vmatpush2.msra.mxu0 0.0
        %2180 = vmatprep.subr.mxu0 0.0
        %2181 = vmatpush2.msra.mxu0 0.0
        %2182 = vmatprep.subr.mxu0 0.0
        %2183 = vmatpush2.msra.mxu0 0.0
        %2184 = vmatprep.subr.mxu0 0.0
        %2185 = vmatpush2.msra.mxu0 0.0
        %2186 = vmatprep.subr.mxu0 0.0
        %2187 = vmatpush2.msra.mxu0 0.0
        %2188 = vmatprep.subr.mxu0 0.0
        %2189 = vmatpush2.msra.mxu0 0.0
        %2190 = vmatprep.subr.mxu0 0.0
        %2191 = vmatpush2.msra.mxu0 0.0
        %2192 = vmatprep.subr.mxu0 0.0
        %2193 = vmatpush2.msra.mxu0 0.0
        %2194 = vmatprep.subr.mxu0 0.0
        %2195 = vmatpush2.msra.mxu0 0.0
        %2196 = vmatprep.subr.mxu0 0.0
        %2197 = vmatpush2.msra.mxu0 0.0
        %2198 = vmatprep.subr.mxu0 0.0
        %2199 = vmatpush2.msra.mxu0 0.0
        %2200 = vmatprep.subr.mxu0 0.0
        %2201 = vmatpush2.msra.mxu0 0.0
        %2202 = vmatprep.subr.mxu0 0.0
        %2203 = vmatpush2.msra.mxu0 0.0
        %2204 = vmatprep.subr.mxu0 0.0
        %2205 = vmatpush2.msra.mxu0 0.0
        %2206 = vmatprep.mubr.f32.mxu0 0.0
        %2207 = vmatmul.mubr.f32.gmra.mxu0 %v2043
        %v2208 = vpop.f32.mrf.mxu0
        %v2209 = vadd.f32 %v2040, %v2208
        %v2210 = vpop.f32.mrf.mxu0
        %2211 = vmatprep.mubr.f32.mxu0 0.0
        %2212 = vmatmul.mubr.f32.gmra.mxu0 %v2046
        %v2213 = vpop.f32.mrf.mxu0
        %v2214 = vadd.f32 %v2040, %v2213
        %v2215 = vpop.f32.mrf.mxu0
        %2216 = vmatprep.mubr.f32.mxu0 0.0
        %2217 = vmatmul.mubr.f32.gmra.mxu0 %v2049
        %v2218 = vpop.f32.mrf.mxu0
        %v2219 = vadd.f32 %v2040, %v2218
        %v2220 = vpop.f32.mrf.mxu0
        %2221 = vmatprep.mubr.f32.mxu0 0.0
        %2222 = vmatmul.mubr.f32.gmra.mxu0 %v2052
        %v2223 = vpop.f32.mrf.mxu0
        %v2224 = vadd.f32 %v2040, %v2223
        %v2225 = vpop.f32.mrf.mxu0
        %2226 = vmatprep.mubr.f32.mxu0 0.0
        %2227 = vmatmul.mubr.f32.gmra.mxu0 %v2055
        %v2228 = vpop.f32.mrf.mxu0
        %v2229 = vadd.f32 %v2040, %v2228
        %v2230 = vpop.f32.mrf.mxu0
        %2231 = vmatprep.mubr.f32.mxu0 0.0
        %2232 = vmatmul.mubr.f32.gmra.mxu0 %v2058
        %v2233 = vpop.f32.mrf.mxu0
        %v2234 = vadd.f32 %v2040, %v2233
        %v2235 = vpop.f32.mrf.mxu0
        %2236 = vmatprep.mubr.f32.mxu0 0.0
        %2237 = vmatmul.mubr.f32.gmra.mxu0 %v2061
        %v2238 = vpop.f32.mrf.mxu0
        %v2239 = vadd.f32 %v2040, %v2238
        %v2240 = vpop.f32.mrf.mxu0
        %2241 = vmatprep.mubr.f32.mxu0 0.0
        %2242 = vmatmul.mubr.f32.gmra.mxu0 %v2064
        %v2243 = vpop.f32.mrf.mxu0
        %v2244 = vadd.f32 %v2040, %v2243
        %v2245 = vpop.f32.mrf.mxu0
        %2246 = vmatprep.mubr.f32.mxu0 0.0
        %2247 = vmatmul.mubr.f32.gmra.mxu0 %v2067
        %v2248 = vpop.f32.mrf.mxu0
        %v2249 = vadd.f32 %v2040, %v2248
        %v2250 = vpop.f32.mrf.mxu0
        %2251 = vmatprep.mubr.f32.mxu0 0.0
        %2252 = vmatmul.mubr.f32.gmra.mxu0 %v2070
        %v2253 = vpop.f32.mrf.mxu0
        %v2254 = vadd.f32 %v2040, %v2253
        %v2255 = vpop.f32.mrf.mxu0
        %2256 = vmatprep.mubr.f32.mxu0 0.0
        %2257 = vmatmul.mubr.f32.gmra.mxu0 %v2073
        %v2258 = vpop.f32.mrf.mxu0
        %v2259 = vadd.f32 %v2040, %v2258
        %v2260 = vpop.f32.mrf.mxu0
        %2261 = vmatprep.mubr.f32.mxu0 0.0
        %2262 = vmatmul.mubr.f32.gmra.mxu0 %v2076
        %v2263 = vpop.f32.mrf.mxu0
        %v2264 = vadd.f32 %v2040, %v2263
        %v2265 = vpop.f32.mrf.mxu0
        %2266 = vmatprep.mubr.f32.mxu0 0.0
        %2267 = vmatmul.mubr.f32.gmra.mxu0 %v2079
        %v2268 = vpop.f32.mrf.mxu0
        %v2269 = vadd.f32 %v2040, %v2268
        %v2270 = vpop.f32.mrf.mxu0
        %2271 = vmatprep.mubr.f32.mxu0 0.0
        %2272 = vmatmul.mubr.f32.gmra.mxu0 %v2082
        %v2273 = vpop.f32.mrf.mxu0
        %v2274 = vadd.f32 %v2040, %v2273
        %v2275 = vpop.f32.mrf.mxu0
        %2276 = vmatprep.mubr.f32.mxu0 0.0
        %2277 = vmatmul.mubr.f32.gmra.mxu0 %v2085
        %v2278 = vpop.f32.mrf.mxu0
        %v2279 = vadd.f32 %v2040, %v2278
        %v2280 = vpop.f32.mrf.mxu0
        %2281 = vmatprep.mubr.f32.mxu0 0.0
        %2282 = vmatmul.mubr.f32.gmra.mxu0 %v2088
        %v2283 = vpop.f32.mrf.mxu0
        %v2284 = vadd.f32 %v2040, %v2283
        %v2285 = vpop.f32.mrf.mxu0
        %2286 = vmatprep.mubr.f32.mxu0 0.0
        %2287 = vmatmul.mubr.f32.gmra.mxu0 %v2091
        %v2288 = vpop.f32.mrf.mxu0
        %v2289 = vadd.f32 %v2040, %v2288
        %v2290 = vpop.f32.mrf.mxu0
        %2291 = vmatprep.mubr.f32.mxu0 0.0
        %2292 = vmatmul.mubr.f32.gmra.mxu0 %v2094
        %v2293 = vpop.f32.mrf.mxu0
        %v2294 = vadd.f32 %v2040, %v2293
        %v2295 = vpop.f32.mrf.mxu0
        %2296 = vmatprep.mubr.f32.mxu0 0.0
        %2297 = vmatmul.mubr.f32.gmra.mxu0 %v2097
        %v2298 = vpop.f32.mrf.mxu0
        %v2299 = vadd.f32 %v2040, %v2298
        %v2300 = vpop.f32.mrf.mxu0
        %2301 = vmatprep.mubr.f32.mxu0 0.0
        %2302 = vmatmul.mubr.f32.gmra.mxu0 %v2100
        %v2303 = vpop.f32.mrf.mxu0
        %v2304 = vadd.f32 %v2040, %v2303
        %v2305 = vpop.f32.mrf.mxu0
        %2306 = vmatprep.mubr.f32.mxu0 0.0
        %2307 = vmatmul.mubr.f32.gmra.mxu0 %v2103
        %v2308 = vpop.f32.mrf.mxu0
        %v2309 = vadd.f32 %v2040, %v2308
        %v2310 = vpop.f32.mrf.mxu0
        %2311 = vmatprep.mubr.f32.mxu0 0.0
        %2312 = vmatmul.mubr.f32.gmra.mxu0 %v2106
        %v2313 = vpop.f32.mrf.mxu0
        %v2314 = vadd.f32 %v2040, %v2313
        %v2315 = vpop.f32.mrf.mxu0
        %2316 = vmatprep.mubr.f32.mxu0 0.0
        %2317 = vmatmul.mubr.f32.gmra.mxu0 %v2109
        %v2318 = vpop.f32.mrf.mxu0
        %v2319 = vadd.f32 %v2040, %v2318
        %v2320 = vpop.f32.mrf.mxu0
        %2321 = vmatprep.mubr.f32.mxu0 0.0
        %2322 = vmatmul.mubr.f32.gmra.mxu0 %v2112
        %v2323 = vpop.f32.mrf.mxu0
        %v2324 = vadd.f32 %v2040, %v2323
        %v2325 = vpop.f32.mrf.mxu0
        %2326 = vmatprep.mubr.f32.mxu0 0.0
        %2327 = vmatmul.mubr.f32.gmra.mxu0 %v2115
        %v2328 = vpop.f32.mrf.mxu0
        %v2329 = vadd.f32 %v2040, %v2328
        %v2330 = vpop.f32.mrf.mxu0
        %2331 = vmatprep.mubr.f32.mxu0 0.0
        %2332 = vmatmul.mubr.f32.gmra.mxu0 %v2118
        %v2333 = vpop.f32.mrf.mxu0
        %v2334 = vadd.f32 %v2040, %v2333
        %v2335 = vpop.f32.mrf.mxu0
        %2336 = vmatprep.mubr.f32.mxu0 0.0
        %2337 = vmatmul.mubr.f32.gmra.mxu0 %v2121
        %v2338 = vpop.f32.mrf.mxu0
        %v2339 = vadd.f32 %v2040, %v2338
        %v2340 = vpop.f32.mrf.mxu0
        %2341 = vmatprep.mubr.f32.mxu0 0.0
        %2342 = vmatmul.mubr.f32.gmra.mxu0 %v2124
        %v2343 = vpop.f32.mrf.mxu0
        %v2344 = vadd.f32 %v2040, %v2343
        %v2345 = vpop.f32.mrf.mxu0
        %2346 = vmatprep.mubr.f32.mxu0 0.0
        %2347 = vmatmul.mubr.f32.gmra.mxu0 %v2127
        %v2348 = vpop.f32.mrf.mxu0
        %v2349 = vadd.f32 %v2040, %v2348
        %v2350 = vpop.f32.mrf.mxu0
        %2351 = vmatprep.mubr.f32.mxu0 0.0
        %2352 = vmatmul.mubr.f32.gmra.mxu0 %v2130
        %v2353 = vpop.f32.mrf.mxu0
        %v2354 = vadd.f32 %v2040, %v2353
        %v2355 = vpop.f32.mrf.mxu0
        %2356 = vmatprep.mubr.f32.mxu0 0.0
        %2357 = vmatmul.mubr.f32.gmra.mxu0 %v2133
        %v2358 = vpop.f32.mrf.mxu0
        %v2359 = vadd.f32 %v2040, %v2358
        %v2360 = vpop.f32.mrf.mxu0
        %2361 = vmatprep.mubr.f32.mxu0 0.0
        %2362 = vmatmul.mubr.f32.gmra.mxu0 %v2136
        %v2363 = vpop.f32.mrf.mxu0
        %v2364 = vadd.f32 %v2040, %v2363
        %v2365 = vpop.f32.mrf.mxu0
        %2366 = vdwg.mxu0
        %v2367 = vmax.f32 %v2209, 0.0
        %v2368 = vmax.f32 %v2214, 0.0
        %v2369 = vmax.f32 %v2219, 0.0
        %v2370 = vmax.f32 %v2224, 0.0
        %v2371 = vmax.f32 %v2229, 0.0
        %v2372 = vmax.f32 %v2234, 0.0
        %v2373 = vmax.f32 %v2239, 0.0
        %v2374 = vmax.f32 %v2244, 0.0
        %v2375 = vmax.f32 %v2249, 0.0
        %v2376 = vmax.f32 %v2254, 0.0
        %v2377 = vmax.f32 %v2259, 0.0
        %v2378 = vmax.f32 %v2264, 0.0
        %v2379 = vmax.f32 %v2269, 0.0
        %v2380 = vmax.f32 %v2274, 0.0
        %v2381 = vmax.f32 %v2279, 0.0
        %v2382 = vmax.f32 %v2284, 0.0
        %v2383 = vmax.f32 %v2289, 0.0
        %v2384 = vmax.f32 %v2294, 0.0
        %v2385 = vmax.f32 %v2299, 0.0
        %v2386 = vmax.f32 %v2304, 0.0
        %v2387 = vmax.f32 %v2309, 0.0
        %v2388 = vmax.f32 %v2314, 0.0
        %v2389 = vmax.f32 %v2319, 0.0
        %v2390 = vmax.f32 %v2324, 0.0
        %v2391 = vmax.f32 %v2329, 0.0
        %v2392 = vmax.f32 %v2334, 0.0
        %v2393 = vmax.f32 %v2339, 0.0
        %v2394 = vmax.f32 %v2344, 0.0
        %v2395 = vmax.f32 %v2349, 0.0
        %v2396 = vmax.f32 %v2354, 0.0
        %v2397 = vmax.f32 %v2359, 0.0
        %v2398 = vmax.f32 %v2364, 0.0
        %2431 = vrot.lane.b32.xlu0 %v2367, 4
        %v2432 = vpop.permute.xlu0 %2431
        %2433 = vrot.lane.b32.xlu0 %v2368, 4
        %v2434 = vpop.permute.xlu0 %2433
        %2435 = vrot.lane.b32.xlu0 %v2369, 4
        %v2436 = vpop.permute.xlu0 %2435
        %2437 = vrot.lane.b32.xlu0 %v2370, 4
        %v2438 = vpop.permute.xlu0 %2437
        %2439 = vrot.lane.b32.xlu0 %v2371, 4
        %v2440 = vpop.permute.xlu0 %2439
        %2441 = vrot.lane.b32.xlu0 %v2372, 4
        %v2442 = vpop.permute.xlu0 %2441
        %2443 = vrot.lane.b32.xlu0 %v2373, 4
        %v2444 = vpop.permute.xlu0 %2443
        %2445 = vrot.lane.b32.xlu0 %v2374, 4
        %v2446 = vpop.permute.xlu0 %2445
        %2447 = vrot.lane.b32.xlu0 %v2375, 4
        %v2448 = vpop.permute.xlu0 %2447
        %2449 = vrot.lane.b32.xlu0 %v2376, 4
        %v2450 = vpop.permute.xlu0 %2449
        %2451 = vrot.lane.b32.xlu0 %v2377, 4
        %v2452 = vpop.permute.xlu0 %2451
        %2453 = vrot.lane.b32.xlu0 %v2378, 4
        %v2454 = vpop.permute.xlu0 %2453
        %2455 = vrot.lane.b32.xlu0 %v2379, 4
        %v2456 = vpop.permute.xlu0 %2455
        %2457 = vrot.lane.b32.xlu0 %v2380, 4
        %v2458 = vpop.permute.xlu0 %2457
        %2459 = vrot.lane.b32.xlu0 %v2381, 4
        %v2460 = vpop.permute.xlu0 %2459
        %2461 = vrot.lane.b32.xlu0 %v2382, 4
        %v2462 = vpop.permute.xlu0 %2461
        %2463 = vrot.lane.b32.xlu0 %v2383, 4
        %v2464 = vpop.permute.xlu0 %2463
        %2465 = vrot.lane.b32.xlu0 %v2384, 4
        %v2466 = vpop.permute.xlu0 %2465
        %2467 = vrot.lane.b32.xlu0 %v2385, 4
        %v2468 = vpop.permute.xlu0 %2467
        %2469 = vrot.lane.b32.xlu0 %v2386, 4
        %v2470 = vpop.permute.xlu0 %2469
        %2471 = vrot.lane.b32.xlu0 %v2387, 4
        %v2472 = vpop.permute.xlu0 %2471
        %2473 = vrot.lane.b32.xlu0 %v2388, 4
        %v2474 = vpop.permute.xlu0 %2473
        %2475 = vrot.lane.b32.xlu0 %v2389, 4
        %v2476 = vpop.permute.xlu0 %2475
        %2477 = vrot.lane.b32.xlu0 %v2390, 4
        %v2478 = vpop.permute.xlu0 %2477
        %2479 = vrot.lane.b32.xlu0 %v2391, 4
        %v2480 = vpop.permute.xlu0 %2479
        %2481 = vrot.lane.b32.xlu0 %v2392, 4
        %v2482 = vpop.permute.xlu0 %2481
        %2483 = vrot.lane.b32.xlu0 %v2393, 4
        %v2484 = vpop.permute.xlu0 %2483
        %2485 = vrot.lane.b32.xlu0 %v2394, 4
        %v2486 = vpop.permute.xlu0 %2485
        %2487 = vrot.lane.b32.xlu0 %v2395, 4
        %v2488 = vpop.permute.xlu0 %2487
        %2489 = vrot.lane.b32.xlu0 %v2396, 4
        %v2490 = vpop.permute.xlu0 %2489
        %2491 = vrot.lane.b32.xlu0 %v2397, 4
        %v2492 = vpop.permute.xlu0 %2491
        %2493 = vrot.lane.b32.xlu0 %v2398, 4
        %v2494 = vpop.permute.xlu0 %2493
        %vm2527 = vcmask 64544
        %2528 = vst.msk [vmem:[%s298] sm:$0xff] %vm2527, %v2432
        %2529 = vst.msk [vmem:[%s298 + $0x8] sm:$0xff] %vm2527, %v2434
        %2530 = vst.msk [vmem:[%s298 + $0x10] sm:$0xff] %vm2527, %v2436
        %2531 = vst.msk [vmem:[%s298 + $0x18] sm:$0xff] %vm2527, %v2438
        %2532 = vst.msk [vmem:[%s298 + $0x20] sm:$0xff] %vm2527, %v2440
        %2533 = vst.msk [vmem:[%s298 + $0x28] sm:$0xff] %vm2527, %v2442
        %2534 = vst.msk [vmem:[%s298 + $0x30] sm:$0xff] %vm2527, %v2444
        %2535 = vst.msk [vmem:[%s298 + $0x38] sm:$0xff] %vm2527, %v2446
        %2536 = vst.msk [vmem:[%s298 + $0x40] sm:$0xff] %vm2527, %v2448
        %2537 = vst.msk [vmem:[%s298 + $0x48] sm:$0xff] %vm2527, %v2450
        %2538 = vst.msk [vmem:[%s298 + $0x50] sm:$0xff] %vm2527, %v2452
        %2539 = vst.msk [vmem:[%s298 + $0x58] sm:$0xff] %vm2527, %v2454
        %2540 = vst.msk [vmem:[%s298 + $0x60] sm:$0xff] %vm2527, %v2456
        %2541 = vst.msk [vmem:[%s298 + $0x68] sm:$0xff] %vm2527, %v2458
        %2542 = vst.msk [vmem:[%s298 + $0x70] sm:$0xff] %vm2527, %v2460
        %2543 = vst.msk [vmem:[%s298 + $0x78] sm:$0xff] %vm2527, %v2462
        %2544 = vst.msk [vmem:[%s298 + $0x80] sm:$0xff] %vm2527, %v2464
        %2545 = vst.msk [vmem:[%s298 + $0x88] sm:$0xff] %vm2527, %v2466
        %2546 = vst.msk [vmem:[%s298 + $0x90] sm:$0xff] %vm2527, %v2468
        %2547 = vst.msk [vmem:[%s298 + $0x98] sm:$0xff] %vm2527, %v2470
        %2548 = vst.msk [vmem:[%s298 + $0xa0] sm:$0xff] %vm2527, %v2472
        %2549 = vst.msk [vmem:[%s298 + $0xa8] sm:$0xff] %vm2527, %v2474
        %2550 = vst.msk [vmem:[%s298 + $0xb0] sm:$0xff] %vm2527, %v2476
        %2551 = vst.msk [vmem:[%s298 + $0xb8] sm:$0xff] %vm2527, %v2478
        %2552 = vst.msk [vmem:[%s298 + $0xc0] sm:$0xff] %vm2527, %v2480
        %2553 = vst.msk [vmem:[%s298 + $0xc8] sm:$0xff] %vm2527, %v2482
        %2554 = vst.msk [vmem:[%s298 + $0xd0] sm:$0xff] %vm2527, %v2484
        %2555 = vst.msk [vmem:[%s298 + $0xd8] sm:$0xff] %vm2527, %v2486
        %2556 = vst.msk [vmem:[%s298 + $0xe0] sm:$0xff] %vm2527, %v2488
        %2557 = vst.msk [vmem:[%s298 + $0xe8] sm:$0xff] %vm2527, %v2490
        %2558 = vst.msk [vmem:[%s298 + $0xf0] sm:$0xff] %vm2527, %v2492
        %2559 = vst.msk [vmem:[%s298 + $0xf8] sm:$0xff] %vm2527, %v2494
        %2560 = vst.msk [vmem:[%s325 + $0x3] sm:$0xff] %vm2527, %v2432
        %2561 = vst.msk [vmem:[%s325 + $0xb] sm:$0xff] %vm2527, %v2434
        %2562 = vst.msk [vmem:[%s325 + $0x1b] sm:$0xff] %vm2527, %v2436
        %2563 = vst.msk [vmem:[%s325 + $0x23] sm:$0xff] %vm2527, %v2438
        %2564 = vst.msk [vmem:[%s325 + $0x33] sm:$0xff] %vm2527, %v2440
        %2565 = vst.msk [vmem:[%s325 + $0x3b] sm:$0xff] %vm2527, %v2442
        %2566 = vst.msk [vmem:[%s325 + $0x4b] sm:$0xff] %vm2527, %v2444
        %2567 = vst.msk [vmem:[%s325 + $0x53] sm:$0xff] %vm2527, %v2446
        %2568 = vst.msk [vmem:[%s325 + $0x63] sm:$0xff] %vm2527, %v2448
        %2569 = vst.msk [vmem:[%s325 + $0x6b] sm:$0xff] %vm2527, %v2450
        %2570 = vst.msk [vmem:[%s325 + $0x7b] sm:$0xff] %vm2527, %v2452
        %2571 = vst.msk [vmem:[%s325 + $0x83] sm:$0xff] %vm2527, %v2454
        %2572 = vst.msk [vmem:[%s325 + $0x93] sm:$0xff] %vm2527, %v2456
        %2573 = vst.msk [vmem:[%s325 + $0x9b] sm:$0xff] %vm2527, %v2458
        %2574 = vst.msk [vmem:[%s325 + $0xab] sm:$0xff] %vm2527, %v2460
        %2575 = vst.msk [vmem:[%s325 + $0xb3] sm:$0xff] %vm2527, %v2462
        %2576 = vst.msk [vmem:[%s325 + $0xc3] sm:$0xff] %vm2527, %v2464
        %2577 = vst.msk [vmem:[%s325 + $0xcb] sm:$0xff] %vm2527, %v2466
        %2578 = vst.msk [vmem:[%s325 + $0xdb] sm:$0xff] %vm2527, %v2468
        %2579 = vst.msk [vmem:[%s325 + $0xe3] sm:$0xff] %vm2527, %v2470
        %2580 = vst.msk [vmem:[%s325 + $0xf3] sm:$0xff] %vm2527, %v2472
        %2581 = vst.msk [vmem:[%s325 + $0xfb] sm:$0xff] %vm2527, %v2474
        %2582 = vst.msk [vmem:[%s325 + $0x10b] sm:$0xff] %vm2527, %v2476
        %2583 = vst.msk [vmem:[%s325 + $0x113] sm:$0xff] %vm2527, %v2478
        %2584 = vst.msk [vmem:[%s325 + $0x123] sm:$0xff] %vm2527, %v2480
        %2585 = vst.msk [vmem:[%s325 + $0x12b] sm:$0xff] %vm2527, %v2482
        %2586 = vst.msk [vmem:[%s325 + $0x13b] sm:$0xff] %vm2527, %v2484
        %2587 = vst.msk [vmem:[%s325 + $0x143] sm:$0xff] %vm2527, %v2486
        %2588 = vst.msk [vmem:[%s325 + $0x153] sm:$0xff] %vm2527, %v2488
        %2589 = vst.msk [vmem:[%s325 + $0x15b] sm:$0xff] %vm2527, %v2490
        %2590 = vst.msk [vmem:[%s325 + $0x16b] sm:$0xff] %vm2527, %v2492
        %2591 = vst.msk [vmem:[%s325 + $0x173] sm:$0xff] %vm2527, %v2494
        %s2592 = scalar_lea.vmem [#allocation2], 24
        %v2593 = vld [vmem:[%s2592 + $0x1] sm:$0xff]
        %v2594 = vld [vmem:[%s2592 + $0x9] sm:$0xff]
        %v2595 = vld [vmem:[%s2592 + $0x19] sm:$0xff]
        %v2596 = vld [vmem:[%s2592 + $0x21] sm:$0xff]
        %v2597 = vld [vmem:[%s2592 + $0x31] sm:$0xff]
        %v2598 = vld [vmem:[%s2592 + $0x39] sm:$0xff]
        %v2599 = vld [vmem:[%s2592 + $0x49] sm:$0xff]
        %v2600 = vld [vmem:[%s2592 + $0x51] sm:$0xff]
        %v2601 = vld [vmem:[%s2592 + $0x61] sm:$0xff]
        %v2602 = vld [vmem:[%s2592 + $0x69] sm:$0xff]
        %v2603 = vld [vmem:[%s2592 + $0x79] sm:$0xff]
        %v2604 = vld [vmem:[%s2592 + $0x81] sm:$0xff]
        %v2605 = vld [vmem:[%s2592 + $0x91] sm:$0xff]
        %v2606 = vld [vmem:[%s2592 + $0x99] sm:$0xff]
        %v2607 = vld [vmem:[%s2592 + $0xa9] sm:$0xff]
        %v2608 = vld [vmem:[%s2592 + $0xb1] sm:$0xff]
        %v2609 = vld [vmem:[%s2592 + $0xc1] sm:$0xff]
        %v2610 = vld [vmem:[%s2592 + $0xc9] sm:$0xff]
        %v2611 = vld [vmem:[%s2592 + $0xd9] sm:$0xff]
        %v2612 = vld [vmem:[%s2592 + $0xe1] sm:$0xff]
        %v2613 = vld [vmem:[%s2592 + $0xf1] sm:$0xff]
        %v2614 = vld [vmem:[%s2592 + $0xf9] sm:$0xff]
        %v2615 = vld [vmem:[%s2592 + $0x109] sm:$0xff]
        %v2616 = vld [vmem:[%s2592 + $0x111] sm:$0xff]
        %v2617 = vld [vmem:[%s2592 + $0x121] sm:$0xff]
        %v2618 = vld [vmem:[%s2592 + $0x129] sm:$0xff]
        %v2619 = vld [vmem:[%s2592 + $0x139] sm:$0xff]
        %v2620 = vld [vmem:[%s2592 + $0x141] sm:$0xff]
        %v2621 = vld [vmem:[%s2592 + $0x151] sm:$0xff]
        %v2622 = vld [vmem:[%s2592 + $0x159] sm:$0xff]
        %v2623 = vld [vmem:[%s2592 + $0x169] sm:$0xff]
        %v2624 = vld [vmem:[%s2592 + $0x171] sm:$0xff]
        %v2625 = vld [vmem:[%s2592 + $0x3] sm:$0xff]
        %v2626 = vld [vmem:[%s2592 + $0xb] sm:$0xff]
        %v2627 = vld [vmem:[%s2592 + $0x1b] sm:$0xff]
        %v2628 = vld [vmem:[%s2592 + $0x23] sm:$0xff]
        %v2629 = vld [vmem:[%s2592 + $0x33] sm:$0xff]
        %v2630 = vld [vmem:[%s2592 + $0x3b] sm:$0xff]
        %v2631 = vld [vmem:[%s2592 + $0x4b] sm:$0xff]
        %v2632 = vld [vmem:[%s2592 + $0x53] sm:$0xff]
        %v2633 = vld [vmem:[%s2592 + $0x63] sm:$0xff]
        %v2634 = vld [vmem:[%s2592 + $0x6b] sm:$0xff]
        %v2635 = vld [vmem:[%s2592 + $0x7b] sm:$0xff]
        %v2636 = vld [vmem:[%s2592 + $0x83] sm:$0xff]
        %v2637 = vld [vmem:[%s2592 + $0x93] sm:$0xff]
        %v2638 = vld [vmem:[%s2592 + $0x9b] sm:$0xff]
        %v2639 = vld [vmem:[%s2592 + $0xab] sm:$0xff]
        %v2640 = vld [vmem:[%s2592 + $0xb3] sm:$0xff]
        %v2641 = vld [vmem:[%s2592 + $0xc3] sm:$0xff]
        %v2642 = vld [vmem:[%s2592 + $0xcb] sm:$0xff]
        %v2643 = vld [vmem:[%s2592 + $0xdb] sm:$0xff]
        %v2644 = vld [vmem:[%s2592 + $0xe3] sm:$0xff]
        %v2645 = vld [vmem:[%s2592 + $0xf3] sm:$0xff]
        %v2646 = vld [vmem:[%s2592 + $0xfb] sm:$0xff]
        %v2647 = vld [vmem:[%s2592 + $0x10b] sm:$0xff]
        %v2648 = vld [vmem:[%s2592 + $0x113] sm:$0xff]
        %v2649 = vld [vmem:[%s2592 + $0x123] sm:$0xff]
        %v2650 = vld [vmem:[%s2592 + $0x12b] sm:$0xff]
        %v2651 = vld [vmem:[%s2592 + $0x13b] sm:$0xff]
        %v2652 = vld [vmem:[%s2592 + $0x143] sm:$0xff]
        %v2653 = vld [vmem:[%s2592 + $0x153] sm:$0xff]
        %v2654 = vld [vmem:[%s2592 + $0x15b] sm:$0xff]
        %v2655 = vld [vmem:[%s2592 + $0x16b] sm:$0xff]
        %v2656 = vld [vmem:[%s2592 + $0x173] sm:$0xff]
        %v2657 = vld [vmem:[%s2592 + $0x5] sm:$0xff]
        %v2658 = vld [vmem:[%s2592 + $0xd] sm:$0xff]
        %v2659 = vld [vmem:[%s2592 + $0x1d] sm:$0xff]
        %v2660 = vld [vmem:[%s2592 + $0x25] sm:$0xff]
        %v2661 = vld [vmem:[%s2592 + $0x35] sm:$0xff]
        %v2662 = vld [vmem:[%s2592 + $0x3d] sm:$0xff]
        %v2663 = vld [vmem:[%s2592 + $0x4d] sm:$0xff]
        %v2664 = vld [vmem:[%s2592 + $0x55] sm:$0xff]
        %v2665 = vld [vmem:[%s2592 + $0x65] sm:$0xff]
        %v2666 = vld [vmem:[%s2592 + $0x6d] sm:$0xff]
        %v2667 = vld [vmem:[%s2592 + $0x7d] sm:$0xff]
        %v2668 = vld [vmem:[%s2592 + $0x85] sm:$0xff]
        %v2669 = vld [vmem:[%s2592 + $0x95] sm:$0xff]
        %v2670 = vld [vmem:[%s2592 + $0x9d] sm:$0xff]
        %v2671 = vld [vmem:[%s2592 + $0xad] sm:$0xff]
        %v2672 = vld [vmem:[%s2592 + $0xb5] sm:$0xff]
        %v2673 = vld [vmem:[%s2592 + $0xc5] sm:$0xff]
        %v2674 = vld [vmem:[%s2592 + $0xcd] sm:$0xff]
        %v2675 = vld [vmem:[%s2592 + $0xdd] sm:$0xff]
        %v2676 = vld [vmem:[%s2592 + $0xe5] sm:$0xff]
        %v2677 = vld [vmem:[%s2592 + $0xf5] sm:$0xff]
        %v2678 = vld [vmem:[%s2592 + $0xfd] sm:$0xff]
        %v2679 = vld [vmem:[%s2592 + $0x10d] sm:$0xff]
        %v2680 = vld [vmem:[%s2592 + $0x115] sm:$0xff]
        %v2681 = vld [vmem:[%s2592 + $0x125] sm:$0xff]
        %v2682 = vld [vmem:[%s2592 + $0x12d] sm:$0xff]
        %v2683 = vld [vmem:[%s2592 + $0x13d] sm:$0xff]
        %v2684 = vld [vmem:[%s2592 + $0x145] sm:$0xff]
        %v2685 = vld [vmem:[%s2592 + $0x155] sm:$0xff]
        %v2686 = vld [vmem:[%s2592 + $0x15d] sm:$0xff]
        %v2687 = vld [vmem:[%s2592 + $0x16d] sm:$0xff]
        %v2688 = vld [vmem:[%s2592 + $0x175] sm:$0xff]
        %v2689 = vld [vmem:[%s325 + $0x1] sm:$0xff]
        %v2690 = vld [vmem:[%s325 + $0x9] sm:$0xff]
        %v2691 = vld [vmem:[%s325 + $0x19] sm:$0xff]
        %v2692 = vld [vmem:[%s325 + $0x21] sm:$0xff]
        %v2693 = vld [vmem:[%s325 + $0x31] sm:$0xff]
        %v2694 = vld [vmem:[%s325 + $0x39] sm:$0xff]
        %v2695 = vld [vmem:[%s325 + $0x49] sm:$0xff]
        %v2696 = vld [vmem:[%s325 + $0x51] sm:$0xff]
        %v2697 = vld [vmem:[%s325 + $0x61] sm:$0xff]
        %v2698 = vld [vmem:[%s325 + $0x69] sm:$0xff]
        %v2699 = vld [vmem:[%s325 + $0x79] sm:$0xff]
        %v2700 = vld [vmem:[%s325 + $0x81] sm:$0xff]
        %v2701 = vld [vmem:[%s325 + $0x91] sm:$0xff]
        %v2702 = vld [vmem:[%s325 + $0x99] sm:$0xff]
        %v2703 = vld [vmem:[%s325 + $0xa9] sm:$0xff]
        %v2704 = vld [vmem:[%s325 + $0xb1] sm:$0xff]
        %v2705 = vld [vmem:[%s325 + $0xc1] sm:$0xff]
        %v2706 = vld [vmem:[%s325 + $0xc9] sm:$0xff]
        %v2707 = vld [vmem:[%s325 + $0xd9] sm:$0xff]
        %v2708 = vld [vmem:[%s325 + $0xe1] sm:$0xff]
        %v2709 = vld [vmem:[%s325 + $0xf1] sm:$0xff]
        %v2710 = vld [vmem:[%s325 + $0xf9] sm:$0xff]
        %v2711 = vld [vmem:[%s325 + $0x109] sm:$0xff]
        %v2712 = vld [vmem:[%s325 + $0x111] sm:$0xff]
        %v2713 = vld [vmem:[%s325 + $0x121] sm:$0xff]
        %v2714 = vld [vmem:[%s325 + $0x129] sm:$0xff]
        %v2715 = vld [vmem:[%s325 + $0x139] sm:$0xff]
        %v2716 = vld [vmem:[%s325 + $0x141] sm:$0xff]
        %v2717 = vld [vmem:[%s325 + $0x151] sm:$0xff]
        %v2718 = vld [vmem:[%s325 + $0x159] sm:$0xff]
        %v2719 = vld [vmem:[%s325 + $0x169] sm:$0xff]
        %v2720 = vld [vmem:[%s325 + $0x171] sm:$0xff]
        %v2721 = vld [vmem:[%s325 + $0x3] sm:$0xff]
        %v2722 = vld [vmem:[%s325 + $0xb] sm:$0xff]
        %v2723 = vld [vmem:[%s325 + $0x1b] sm:$0xff]
        %v2724 = vld [vmem:[%s325 + $0x23] sm:$0xff]
        %v2725 = vld [vmem:[%s325 + $0x33] sm:$0xff]
        %v2726 = vld [vmem:[%s325 + $0x3b] sm:$0xff]
        %v2727 = vld [vmem:[%s325 + $0x4b] sm:$0xff]
        %v2728 = vld [vmem:[%s325 + $0x53] sm:$0xff]
        %v2729 = vld [vmem:[%s325 + $0x63] sm:$0xff]
        %v2730 = vld [vmem:[%s325 + $0x6b] sm:$0xff]
        %v2731 = vld [vmem:[%s325 + $0x7b] sm:$0xff]
        %v2732 = vld [vmem:[%s325 + $0x83] sm:$0xff]
        %v2733 = vld [vmem:[%s325 + $0x93] sm:$0xff]
        %v2734 = vld [vmem:[%s325 + $0x9b] sm:$0xff]
        %v2735 = vld [vmem:[%s325 + $0xab] sm:$0xff]
        %v2736 = vld [vmem:[%s325 + $0xb3] sm:$0xff]
        %v2737 = vld [vmem:[%s325 + $0xc3] sm:$0xff]
        %v2738 = vld [vmem:[%s325 + $0xcb] sm:$0xff]
        %v2739 = vld [vmem:[%s325 + $0xdb] sm:$0xff]
        %v2740 = vld [vmem:[%s325 + $0xe3] sm:$0xff]
        %v2741 = vld [vmem:[%s325 + $0xf3] sm:$0xff]
        %v2742 = vld [vmem:[%s325 + $0xfb] sm:$0xff]
        %v2743 = vld [vmem:[%s325 + $0x10b] sm:$0xff]
        %v2744 = vld [vmem:[%s325 + $0x113] sm:$0xff]
        %v2745 = vld [vmem:[%s325 + $0x123] sm:$0xff]
        %v2746 = vld [vmem:[%s325 + $0x12b] sm:$0xff]
        %v2747 = vld [vmem:[%s325 + $0x13b] sm:$0xff]
        %v2748 = vld [vmem:[%s325 + $0x143] sm:$0xff]
        %v2749 = vld [vmem:[%s325 + $0x153] sm:$0xff]
        %v2750 = vld [vmem:[%s325 + $0x15b] sm:$0xff]
        %v2751 = vld [vmem:[%s325 + $0x16b] sm:$0xff]
        %v2752 = vld [vmem:[%s325 + $0x173] sm:$0xff]
        %v2753 = vld [vmem:[%s325 + $0x5] sm:$0xff]
        %v2754 = vld [vmem:[%s325 + $0xd] sm:$0xff]
        %v2755 = vld [vmem:[%s325 + $0x1d] sm:$0xff]
        %v2756 = vld [vmem:[%s325 + $0x25] sm:$0xff]
        %v2757 = vld [vmem:[%s325 + $0x35] sm:$0xff]
        %v2758 = vld [vmem:[%s325 + $0x3d] sm:$0xff]
        %v2759 = vld [vmem:[%s325 + $0x4d] sm:$0xff]
        %v2760 = vld [vmem:[%s325 + $0x55] sm:$0xff]
        %v2761 = vld [vmem:[%s325 + $0x65] sm:$0xff]
        %v2762 = vld [vmem:[%s325 + $0x6d] sm:$0xff]
        %v2763 = vld [vmem:[%s325 + $0x7d] sm:$0xff]
        %v2764 = vld [vmem:[%s325 + $0x85] sm:$0xff]
        %v2765 = vld [vmem:[%s325 + $0x95] sm:$0xff]
        %v2766 = vld [vmem:[%s325 + $0x9d] sm:$0xff]
        %v2767 = vld [vmem:[%s325 + $0xad] sm:$0xff]
        %v2768 = vld [vmem:[%s325 + $0xb5] sm:$0xff]
        %v2769 = vld [vmem:[%s325 + $0xc5] sm:$0xff]
        %v2770 = vld [vmem:[%s325 + $0xcd] sm:$0xff]
        %v2771 = vld [vmem:[%s325 + $0xdd] sm:$0xff]
        %v2772 = vld [vmem:[%s325 + $0xe5] sm:$0xff]
        %v2773 = vld [vmem:[%s325 + $0xf5] sm:$0xff]
        %v2774 = vld [vmem:[%s325 + $0xfd] sm:$0xff]
        %v2775 = vld [vmem:[%s325 + $0x10d] sm:$0xff]
        %v2776 = vld [vmem:[%s325 + $0x115] sm:$0xff]
        %v2777 = vld [vmem:[%s325 + $0x125] sm:$0xff]
        %v2778 = vld [vmem:[%s325 + $0x12d] sm:$0xff]
        %v2779 = vld [vmem:[%s325 + $0x13d] sm:$0xff]
        %v2780 = vld [vmem:[%s325 + $0x145] sm:$0xff]
        %v2781 = vld [vmem:[%s325 + $0x155] sm:$0xff]
        %v2782 = vld [vmem:[%s325 + $0x15d] sm:$0xff]
        %v2783 = vld [vmem:[%s325 + $0x16d] sm:$0xff]
        %v2784 = vld [vmem:[%s325 + $0x175] sm:$0xff]
        %s2785 = scalar_lea.vmem [#allocation2], 120
        %v2786 = vld [vmem:[%s2785 + $0x1] sm:$0xff]
        %v2787 = vld [vmem:[%s2785 + $0x9] sm:$0xff]
        %v2788 = vld [vmem:[%s2785 + $0x19] sm:$0xff]
        %v2789 = vld [vmem:[%s2785 + $0x21] sm:$0xff]
        %v2790 = vld [vmem:[%s2785 + $0x31] sm:$0xff]
        %v2791 = vld [vmem:[%s2785 + $0x39] sm:$0xff]
        %v2792 = vld [vmem:[%s2785 + $0x49] sm:$0xff]
        %v2793 = vld [vmem:[%s2785 + $0x51] sm:$0xff]
        %v2794 = vld [vmem:[%s2785 + $0x61] sm:$0xff]
        %v2795 = vld [vmem:[%s2785 + $0x69] sm:$0xff]
        %v2796 = vld [vmem:[%s2785 + $0x79] sm:$0xff]
        %v2797 = vld [vmem:[%s2785 + $0x81] sm:$0xff]
        %v2798 = vld [vmem:[%s2785 + $0x91] sm:$0xff]
        %v2799 = vld [vmem:[%s2785 + $0x99] sm:$0xff]
        %v2800 = vld [vmem:[%s2785 + $0xa9] sm:$0xff]
        %v2801 = vld [vmem:[%s2785 + $0xb1] sm:$0xff]
        %v2802 = vld [vmem:[%s2785 + $0xc1] sm:$0xff]
        %v2803 = vld [vmem:[%s2785 + $0xc9] sm:$0xff]
        %v2804 = vld [vmem:[%s2785 + $0xd9] sm:$0xff]
        %v2805 = vld [vmem:[%s2785 + $0xe1] sm:$0xff]
        %v2806 = vld [vmem:[%s2785 + $0xf1] sm:$0xff]
        %v2807 = vld [vmem:[%s2785 + $0xf9] sm:$0xff]
        %v2808 = vld [vmem:[%s2785 + $0x109] sm:$0xff]
        %v2809 = vld [vmem:[%s2785 + $0x111] sm:$0xff]
        %v2810 = vld [vmem:[%s2785 + $0x121] sm:$0xff]
        %v2811 = vld [vmem:[%s2785 + $0x129] sm:$0xff]
        %v2812 = vld [vmem:[%s2785 + $0x139] sm:$0xff]
        %v2813 = vld [vmem:[%s2785 + $0x141] sm:$0xff]
        %v2814 = vld [vmem:[%s2785 + $0x151] sm:$0xff]
        %v2815 = vld [vmem:[%s2785 + $0x159] sm:$0xff]
        %v2816 = vld [vmem:[%s2785 + $0x169] sm:$0xff]
        %v2817 = vld [vmem:[%s2785 + $0x171] sm:$0xff]
        %v2818 = vld [vmem:[%s2785 + $0x3] sm:$0xff]
        %v2819 = vld [vmem:[%s2785 + $0xb] sm:$0xff]
        %v2820 = vld [vmem:[%s2785 + $0x1b] sm:$0xff]
        %v2821 = vld [vmem:[%s2785 + $0x23] sm:$0xff]
        %v2822 = vld [vmem:[%s2785 + $0x33] sm:$0xff]
        %v2823 = vld [vmem:[%s2785 + $0x3b] sm:$0xff]
        %v2824 = vld [vmem:[%s2785 + $0x4b] sm:$0xff]
        %v2825 = vld [vmem:[%s2785 + $0x53] sm:$0xff]
        %v2826 = vld [vmem:[%s2785 + $0x63] sm:$0xff]
        %v2827 = vld [vmem:[%s2785 + $0x6b] sm:$0xff]
        %v2828 = vld [vmem:[%s2785 + $0x7b] sm:$0xff]
        %v2829 = vld [vmem:[%s2785 + $0x83] sm:$0xff]
        %v2830 = vld [vmem:[%s2785 + $0x93] sm:$0xff]
        %v2831 = vld [vmem:[%s2785 + $0x9b] sm:$0xff]
        %v2832 = vld [vmem:[%s2785 + $0xab] sm:$0xff]
        %v2833 = vld [vmem:[%s2785 + $0xb3] sm:$0xff]
        %v2834 = vld [vmem:[%s2785 + $0xc3] sm:$0xff]
        %v2835 = vld [vmem:[%s2785 + $0xcb] sm:$0xff]
        %v2836 = vld [vmem:[%s2785 + $0xdb] sm:$0xff]
        %v2837 = vld [vmem:[%s2785 + $0xe3] sm:$0xff]
        %v2838 = vld [vmem:[%s2785 + $0xf3] sm:$0xff]
        %v2839 = vld [vmem:[%s2785 + $0xfb] sm:$0xff]
        %v2840 = vld [vmem:[%s2785 + $0x10b] sm:$0xff]
        %v2841 = vld [vmem:[%s2785 + $0x113] sm:$0xff]
        %v2842 = vld [vmem:[%s2785 + $0x123] sm:$0xff]
        %v2843 = vld [vmem:[%s2785 + $0x12b] sm:$0xff]
        %v2844 = vld [vmem:[%s2785 + $0x13b] sm:$0xff]
        %v2845 = vld [vmem:[%s2785 + $0x143] sm:$0xff]
        %v2846 = vld [vmem:[%s2785 + $0x153] sm:$0xff]
        %v2847 = vld [vmem:[%s2785 + $0x15b] sm:$0xff]
        %v2848 = vld [vmem:[%s2785 + $0x16b] sm:$0xff]
        %v2849 = vld [vmem:[%s2785 + $0x173] sm:$0xff]
        %v2850 = vld [vmem:[%s2785 + $0x5] sm:$0xff]
        %v2851 = vld [vmem:[%s2785 + $0xd] sm:$0xff]
        %v2852 = vld [vmem:[%s2785 + $0x1d] sm:$0xff]
        %v2853 = vld [vmem:[%s2785 + $0x25] sm:$0xff]
        %v2854 = vld [vmem:[%s2785 + $0x35] sm:$0xff]
        %v2855 = vld [vmem:[%s2785 + $0x3d] sm:$0xff]
        %v2856 = vld [vmem:[%s2785 + $0x4d] sm:$0xff]
        %v2857 = vld [vmem:[%s2785 + $0x55] sm:$0xff]
        %v2858 = vld [vmem:[%s2785 + $0x65] sm:$0xff]
        %v2859 = vld [vmem:[%s2785 + $0x6d] sm:$0xff]
        %v2860 = vld [vmem:[%s2785 + $0x7d] sm:$0xff]
        %v2861 = vld [vmem:[%s2785 + $0x85] sm:$0xff]
        %v2862 = vld [vmem:[%s2785 + $0x95] sm:$0xff]
        %v2863 = vld [vmem:[%s2785 + $0x9d] sm:$0xff]
        %v2864 = vld [vmem:[%s2785 + $0xad] sm:$0xff]
        %v2865 = vld [vmem:[%s2785 + $0xb5] sm:$0xff]
        %v2866 = vld [vmem:[%s2785 + $0xc5] sm:$0xff]
        %v2867 = vld [vmem:[%s2785 + $0xcd] sm:$0xff]
        %v2868 = vld [vmem:[%s2785 + $0xdd] sm:$0xff]
        %v2869 = vld [vmem:[%s2785 + $0xe5] sm:$0xff]
        %v2870 = vld [vmem:[%s2785 + $0xf5] sm:$0xff]
        %v2871 = vld [vmem:[%s2785 + $0xfd] sm:$0xff]
        %v2872 = vld [vmem:[%s2785 + $0x10d] sm:$0xff]
        %v2873 = vld [vmem:[%s2785 + $0x115] sm:$0xff]
        %v2874 = vld [vmem:[%s2785 + $0x125] sm:$0xff]
        %v2875 = vld [vmem:[%s2785 + $0x12d] sm:$0xff]
        %v2876 = vld [vmem:[%s2785 + $0x13d] sm:$0xff]
        %v2877 = vld [vmem:[%s2785 + $0x145] sm:$0xff]
        %v2878 = vld [vmem:[%s2785 + $0x155] sm:$0xff]
        %v2879 = vld [vmem:[%s2785 + $0x15d] sm:$0xff]
        %v2880 = vld [vmem:[%s2785 + $0x16d] sm:$0xff]
        %v2881 = vld [vmem:[%s2785 + $0x175] sm:$0xff]
        %2914 = vrot.lane.b32.xlu0 %v2625, 8
        %v2915 = vpop.permute.xlu0 %2914
        %2916 = vrot.lane.b32.xlu0 %v2626, 8
        %v2917 = vpop.permute.xlu0 %2916
        %2918 = vrot.lane.b32.xlu0 %v2627, 8
        %v2919 = vpop.permute.xlu0 %2918
        %2920 = vrot.lane.b32.xlu0 %v2628, 8
        %v2921 = vpop.permute.xlu0 %2920
        %2922 = vrot.lane.b32.xlu0 %v2629, 8
        %v2923 = vpop.permute.xlu0 %2922
        %2924 = vrot.lane.b32.xlu0 %v2630, 8
        %v2925 = vpop.permute.xlu0 %2924
        %2926 = vrot.lane.b32.xlu0 %v2631, 8
        %v2927 = vpop.permute.xlu0 %2926
        %2928 = vrot.lane.b32.xlu0 %v2632, 8
        %v2929 = vpop.permute.xlu0 %2928
        %2930 = vrot.lane.b32.xlu0 %v2633, 8
        %v2931 = vpop.permute.xlu0 %2930
        %2932 = vrot.lane.b32.xlu0 %v2634, 8
        %v2933 = vpop.permute.xlu0 %2932
        %2934 = vrot.lane.b32.xlu0 %v2635, 8
        %v2935 = vpop.permute.xlu0 %2934
        %2936 = vrot.lane.b32.xlu0 %v2636, 8
        %v2937 = vpop.permute.xlu0 %2936
        %2938 = vrot.lane.b32.xlu0 %v2637, 8
        %v2939 = vpop.permute.xlu0 %2938
        %2940 = vrot.lane.b32.xlu0 %v2638, 8
        %v2941 = vpop.permute.xlu0 %2940
        %2942 = vrot.lane.b32.xlu0 %v2639, 8
        %v2943 = vpop.permute.xlu0 %2942
        %2944 = vrot.lane.b32.xlu0 %v2640, 8
        %v2945 = vpop.permute.xlu0 %2944
        %2946 = vrot.lane.b32.xlu0 %v2641, 8
        %v2947 = vpop.permute.xlu0 %2946
        %2948 = vrot.lane.b32.xlu0 %v2642, 8
        %v2949 = vpop.permute.xlu0 %2948
        %2950 = vrot.lane.b32.xlu0 %v2643, 8
        %v2951 = vpop.permute.xlu0 %2950
        %2952 = vrot.lane.b32.xlu0 %v2644, 8
        %v2953 = vpop.permute.xlu0 %2952
        %2954 = vrot.lane.b32.xlu0 %v2645, 8
        %v2955 = vpop.permute.xlu0 %2954
        %2956 = vrot.lane.b32.xlu0 %v2646, 8
        %v2957 = vpop.permute.xlu0 %2956
        %2958 = vrot.lane.b32.xlu0 %v2647, 8
        %v2959 = vpop.permute.xlu0 %2958
        %2960 = vrot.lane.b32.xlu0 %v2648, 8
        %v2961 = vpop.permute.xlu0 %2960
        %2962 = vrot.lane.b32.xlu0 %v2649, 8
        %v2963 = vpop.permute.xlu0 %2962
        %2964 = vrot.lane.b32.xlu0 %v2650, 8
        %v2965 = vpop.permute.xlu0 %2964
        %2966 = vrot.lane.b32.xlu0 %v2651, 8
        %v2967 = vpop.permute.xlu0 %2966
        %2968 = vrot.lane.b32.xlu0 %v2652, 8
        %v2969 = vpop.permute.xlu0 %2968
        %2970 = vrot.lane.b32.xlu0 %v2653, 8
        %v2971 = vpop.permute.xlu0 %2970
        %2972 = vrot.lane.b32.xlu0 %v2654, 8
        %v2973 = vpop.permute.xlu0 %2972
        %2974 = vrot.lane.b32.xlu0 %v2655, 8
        %v2975 = vpop.permute.xlu0 %2974
        %2976 = vrot.lane.b32.xlu0 %v2656, 8
        %v2977 = vpop.permute.xlu0 %2976
        %3042 = vrot.lane.b32.xlu0 %v2657, 16
        %v3043 = vpop.permute.xlu0 %3042
        %3044 = vrot.lane.b32.xlu0 %v2658, 16
        %v3045 = vpop.permute.xlu0 %3044
        %3046 = vrot.lane.b32.xlu0 %v2659, 16
        %v3047 = vpop.permute.xlu0 %3046
        %3048 = vrot.lane.b32.xlu0 %v2660, 16
        %v3049 = vpop.permute.xlu0 %3048
        %3050 = vrot.lane.b32.xlu0 %v2661, 16
        %v3051 = vpop.permute.xlu0 %3050
        %3052 = vrot.lane.b32.xlu0 %v2662, 16
        %v3053 = vpop.permute.xlu0 %3052
        %3054 = vrot.lane.b32.xlu0 %v2663, 16
        %v3055 = vpop.permute.xlu0 %3054
        %3056 = vrot.lane.b32.xlu0 %v2664, 16
        %v3057 = vpop.permute.xlu0 %3056
        %3058 = vrot.lane.b32.xlu0 %v2665, 16
        %v3059 = vpop.permute.xlu0 %3058
        %3060 = vrot.lane.b32.xlu0 %v2666, 16
        %v3061 = vpop.permute.xlu0 %3060
        %3062 = vrot.lane.b32.xlu0 %v2667, 16
        %v3063 = vpop.permute.xlu0 %3062
        %3064 = vrot.lane.b32.xlu0 %v2668, 16
        %v3065 = vpop.permute.xlu0 %3064
        %3066 = vrot.lane.b32.xlu0 %v2669, 16
        %v3067 = vpop.permute.xlu0 %3066
        %3068 = vrot.lane.b32.xlu0 %v2670, 16
        %v3069 = vpop.permute.xlu0 %3068
        %3070 = vrot.lane.b32.xlu0 %v2671, 16
        %v3071 = vpop.permute.xlu0 %3070
        %3072 = vrot.lane.b32.xlu0 %v2672, 16
        %v3073 = vpop.permute.xlu0 %3072
        %3074 = vrot.lane.b32.xlu0 %v2673, 16
        %v3075 = vpop.permute.xlu0 %3074
        %3076 = vrot.lane.b32.xlu0 %v2674, 16
        %v3077 = vpop.permute.xlu0 %3076
        %3078 = vrot.lane.b32.xlu0 %v2675, 16
        %v3079 = vpop.permute.xlu0 %3078
        %3080 = vrot.lane.b32.xlu0 %v2676, 16
        %v3081 = vpop.permute.xlu0 %3080
        %3082 = vrot.lane.b32.xlu0 %v2677, 16
        %v3083 = vpop.permute.xlu0 %3082
        %3084 = vrot.lane.b32.xlu0 %v2678, 16
        %v3085 = vpop.permute.xlu0 %3084
        %3086 = vrot.lane.b32.xlu0 %v2679, 16
        %v3087 = vpop.permute.xlu0 %3086
        %3088 = vrot.lane.b32.xlu0 %v2680, 16
        %v3089 = vpop.permute.xlu0 %3088
        %3090 = vrot.lane.b32.xlu0 %v2681, 16
        %v3091 = vpop.permute.xlu0 %3090
        %3092 = vrot.lane.b32.xlu0 %v2682, 16
        %v3093 = vpop.permute.xlu0 %3092
        %3094 = vrot.lane.b32.xlu0 %v2683, 16
        %v3095 = vpop.permute.xlu0 %3094
        %3096 = vrot.lane.b32.xlu0 %v2684, 16
        %v3097 = vpop.permute.xlu0 %3096
        %3098 = vrot.lane.b32.xlu0 %v2685, 16
        %v3099 = vpop.permute.xlu0 %3098
        %3100 = vrot.lane.b32.xlu0 %v2686, 16
        %v3101 = vpop.permute.xlu0 %3100
        %3102 = vrot.lane.b32.xlu0 %v2687, 16
        %v3103 = vpop.permute.xlu0 %3102
        %3104 = vrot.lane.b32.xlu0 %v2688, 16
        %v3105 = vpop.permute.xlu0 %3104
        %3170 = vrot.lane.b32.xlu0 %v2689, 24
        %v3171 = vpop.permute.xlu0 %3170
        %3172 = vrot.lane.b32.xlu0 %v2690, 24
        %v3173 = vpop.permute.xlu0 %3172
        %3174 = vrot.lane.b32.xlu0 %v2691, 24
        %v3175 = vpop.permute.xlu0 %3174
        %3176 = vrot.lane.b32.xlu0 %v2692, 24
        %v3177 = vpop.permute.xlu0 %3176
        %3178 = vrot.lane.b32.xlu0 %v2693, 24
        %v3179 = vpop.permute.xlu0 %3178
        %3180 = vrot.lane.b32.xlu0 %v2694, 24
        %v3181 = vpop.permute.xlu0 %3180
        %3182 = vrot.lane.b32.xlu0 %v2695, 24
        %v3183 = vpop.permute.xlu0 %3182
        %3184 = vrot.lane.b32.xlu0 %v2696, 24
        %v3185 = vpop.permute.xlu0 %3184
        %3186 = vrot.lane.b32.xlu0 %v2697, 24
        %v3187 = vpop.permute.xlu0 %3186
        %3188 = vrot.lane.b32.xlu0 %v2698, 24
        %v3189 = vpop.permute.xlu0 %3188
        %3190 = vrot.lane.b32.xlu0 %v2699, 24
        %v3191 = vpop.permute.xlu0 %3190
        %3192 = vrot.lane.b32.xlu0 %v2700, 24
        %v3193 = vpop.permute.xlu0 %3192
        %3194 = vrot.lane.b32.xlu0 %v2701, 24
        %v3195 = vpop.permute.xlu0 %3194
        %3196 = vrot.lane.b32.xlu0 %v2702, 24
        %v3197 = vpop.permute.xlu0 %3196
        %3198 = vrot.lane.b32.xlu0 %v2703, 24
        %v3199 = vpop.permute.xlu0 %3198
        %3200 = vrot.lane.b32.xlu0 %v2704, 24
        %v3201 = vpop.permute.xlu0 %3200
        %3202 = vrot.lane.b32.xlu0 %v2705, 24
        %v3203 = vpop.permute.xlu0 %3202
        %3204 = vrot.lane.b32.xlu0 %v2706, 24
        %v3205 = vpop.permute.xlu0 %3204
        %3206 = vrot.lane.b32.xlu0 %v2707, 24
        %v3207 = vpop.permute.xlu0 %3206
        %3208 = vrot.lane.b32.xlu0 %v2708, 24
        %v3209 = vpop.permute.xlu0 %3208
        %3210 = vrot.lane.b32.xlu0 %v2709, 24
        %v3211 = vpop.permute.xlu0 %3210
        %3212 = vrot.lane.b32.xlu0 %v2710, 24
        %v3213 = vpop.permute.xlu0 %3212
        %3214 = vrot.lane.b32.xlu0 %v2711, 24
        %v3215 = vpop.permute.xlu0 %3214
        %3216 = vrot.lane.b32.xlu0 %v2712, 24
        %v3217 = vpop.permute.xlu0 %3216
        %3218 = vrot.lane.b32.xlu0 %v2713, 24
        %v3219 = vpop.permute.xlu0 %3218
        %3220 = vrot.lane.b32.xlu0 %v2714, 24
        %v3221 = vpop.permute.xlu0 %3220
        %3222 = vrot.lane.b32.xlu0 %v2715, 24
        %v3223 = vpop.permute.xlu0 %3222
        %3224 = vrot.lane.b32.xlu0 %v2716, 24
        %v3225 = vpop.permute.xlu0 %3224
        %3226 = vrot.lane.b32.xlu0 %v2717, 24
        %v3227 = vpop.permute.xlu0 %3226
        %3228 = vrot.lane.b32.xlu0 %v2718, 24
        %v3229 = vpop.permute.xlu0 %3228
        %3230 = vrot.lane.b32.xlu0 %v2719, 24
        %v3231 = vpop.permute.xlu0 %3230
        %3232 = vrot.lane.b32.xlu0 %v2720, 24
        %v3233 = vpop.permute.xlu0 %3232
        %3298 = vrot.lane.b32.xlu0 %v2721, 32
        %v3299 = vpop.permute.xlu0 %3298
        %3300 = vrot.lane.b32.xlu0 %v2722, 32
        %v3301 = vpop.permute.xlu0 %3300
        %3302 = vrot.lane.b32.xlu0 %v2723, 32
        %v3303 = vpop.permute.xlu0 %3302
        %3304 = vrot.lane.b32.xlu0 %v2724, 32
        %v3305 = vpop.permute.xlu0 %3304
        %3306 = vrot.lane.b32.xlu0 %v2725, 32
        %v3307 = vpop.permute.xlu0 %3306
        %3308 = vrot.lane.b32.xlu0 %v2726, 32
        %v3309 = vpop.permute.xlu0 %3308
        %3310 = vrot.lane.b32.xlu0 %v2727, 32
        %v3311 = vpop.permute.xlu0 %3310
        %3312 = vrot.lane.b32.xlu0 %v2728, 32
        %v3313 = vpop.permute.xlu0 %3312
        %3314 = vrot.lane.b32.xlu0 %v2729, 32
        %v3315 = vpop.permute.xlu0 %3314
        %3316 = vrot.lane.b32.xlu0 %v2730, 32
        %v3317 = vpop.permute.xlu0 %3316
        %3318 = vrot.lane.b32.xlu0 %v2731, 32
        %v3319 = vpop.permute.xlu0 %3318
        %3320 = vrot.lane.b32.xlu0 %v2732, 32
        %v3321 = vpop.permute.xlu0 %3320
        %3322 = vrot.lane.b32.xlu0 %v2733, 32
        %v3323 = vpop.permute.xlu0 %3322
        %3324 = vrot.lane.b32.xlu0 %v2734, 32
        %v3325 = vpop.permute.xlu0 %3324
        %3326 = vrot.lane.b32.xlu0 %v2735, 32
        %v3327 = vpop.permute.xlu0 %3326
        %3328 = vrot.lane.b32.xlu0 %v2736, 32
        %v3329 = vpop.permute.xlu0 %3328
        %3330 = vrot.lane.b32.xlu0 %v2737, 32
        %v3331 = vpop.permute.xlu0 %3330
        %3332 = vrot.lane.b32.xlu0 %v2738, 32
        %v3333 = vpop.permute.xlu0 %3332
        %3334 = vrot.lane.b32.xlu0 %v2739, 32
        %v3335 = vpop.permute.xlu0 %3334
        %3336 = vrot.lane.b32.xlu0 %v2740, 32
        %v3337 = vpop.permute.xlu0 %3336
        %3338 = vrot.lane.b32.xlu0 %v2741, 32
        %v3339 = vpop.permute.xlu0 %3338
        %3340 = vrot.lane.b32.xlu0 %v2742, 32
        %v3341 = vpop.permute.xlu0 %3340
        %3342 = vrot.lane.b32.xlu0 %v2743, 32
        %v3343 = vpop.permute.xlu0 %3342
        %3344 = vrot.lane.b32.xlu0 %v2744, 32
        %v3345 = vpop.permute.xlu0 %3344
        %3346 = vrot.lane.b32.xlu0 %v2745, 32
        %v3347 = vpop.permute.xlu0 %3346
        %3348 = vrot.lane.b32.xlu0 %v2746, 32
        %v3349 = vpop.permute.xlu0 %3348
        %3350 = vrot.lane.b32.xlu0 %v2747, 32
        %v3351 = vpop.permute.xlu0 %3350
        %3352 = vrot.lane.b32.xlu0 %v2748, 32
        %v3353 = vpop.permute.xlu0 %3352
        %3354 = vrot.lane.b32.xlu0 %v2749, 32
        %v3355 = vpop.permute.xlu0 %3354
        %3356 = vrot.lane.b32.xlu0 %v2750, 32
        %v3357 = vpop.permute.xlu0 %3356
        %3358 = vrot.lane.b32.xlu0 %v2751, 32
        %v3359 = vpop.permute.xlu0 %3358
        %3360 = vrot.lane.b32.xlu0 %v2752, 32
        %v3361 = vpop.permute.xlu0 %3360
        %3426 = vrot.lane.b32.xlu0 %v2753, 40
        %v3427 = vpop.permute.xlu0 %3426
        %3428 = vrot.lane.b32.xlu0 %v2754, 40
        %v3429 = vpop.permute.xlu0 %3428
        %3430 = vrot.lane.b32.xlu0 %v2755, 40
        %v3431 = vpop.permute.xlu0 %3430
        %3432 = vrot.lane.b32.xlu0 %v2756, 40
        %v3433 = vpop.permute.xlu0 %3432
        %3434 = vrot.lane.b32.xlu0 %v2757, 40
        %v3435 = vpop.permute.xlu0 %3434
        %3436 = vrot.lane.b32.xlu0 %v2758, 40
        %v3437 = vpop.permute.xlu0 %3436
        %3438 = vrot.lane.b32.xlu0 %v2759, 40
        %v3439 = vpop.permute.xlu0 %3438
        %3440 = vrot.lane.b32.xlu0 %v2760, 40
        %v3441 = vpop.permute.xlu0 %3440
        %3442 = vrot.lane.b32.xlu0 %v2761, 40
        %v3443 = vpop.permute.xlu0 %3442
        %3444 = vrot.lane.b32.xlu0 %v2762, 40
        %v3445 = vpop.permute.xlu0 %3444
        %3446 = vrot.lane.b32.xlu0 %v2763, 40
        %v3447 = vpop.permute.xlu0 %3446
        %3448 = vrot.lane.b32.xlu0 %v2764, 40
        %v3449 = vpop.permute.xlu0 %3448
        %3450 = vrot.lane.b32.xlu0 %v2765, 40
        %v3451 = vpop.permute.xlu0 %3450
        %3452 = vrot.lane.b32.xlu0 %v2766, 40
        %v3453 = vpop.permute.xlu0 %3452
        %3454 = vrot.lane.b32.xlu0 %v2767, 40
        %v3455 = vpop.permute.xlu0 %3454
        %3456 = vrot.lane.b32.xlu0 %v2768, 40
        %v3457 = vpop.permute.xlu0 %3456
        %3458 = vrot.lane.b32.xlu0 %v2769, 40
        %v3459 = vpop.permute.xlu0 %3458
        %3460 = vrot.lane.b32.xlu0 %v2770, 40
        %v3461 = vpop.permute.xlu0 %3460
        %3462 = vrot.lane.b32.xlu0 %v2771, 40
        %v3463 = vpop.permute.xlu0 %3462
        %3464 = vrot.lane.b32.xlu0 %v2772, 40
        %v3465 = vpop.permute.xlu0 %3464
        %3466 = vrot.lane.b32.xlu0 %v2773, 40
        %v3467 = vpop.permute.xlu0 %3466
        %3468 = vrot.lane.b32.xlu0 %v2774, 40
        %v3469 = vpop.permute.xlu0 %3468
        %3470 = vrot.lane.b32.xlu0 %v2775, 40
        %v3471 = vpop.permute.xlu0 %3470
        %3472 = vrot.lane.b32.xlu0 %v2776, 40
        %v3473 = vpop.permute.xlu0 %3472
        %3474 = vrot.lane.b32.xlu0 %v2777, 40
        %v3475 = vpop.permute.xlu0 %3474
        %3476 = vrot.lane.b32.xlu0 %v2778, 40
        %v3477 = vpop.permute.xlu0 %3476
        %3478 = vrot.lane.b32.xlu0 %v2779, 40
        %v3479 = vpop.permute.xlu0 %3478
        %3480 = vrot.lane.b32.xlu0 %v2780, 40
        %v3481 = vpop.permute.xlu0 %3480
        %3482 = vrot.lane.b32.xlu0 %v2781, 40
        %v3483 = vpop.permute.xlu0 %3482
        %3484 = vrot.lane.b32.xlu0 %v2782, 40
        %v3485 = vpop.permute.xlu0 %3484
        %3486 = vrot.lane.b32.xlu0 %v2783, 40
        %v3487 = vpop.permute.xlu0 %3486
        %3488 = vrot.lane.b32.xlu0 %v2784, 40
        %v3489 = vpop.permute.xlu0 %3488
        %3554 = vrot.lane.b32.xlu0 %v2786, 48
        %v3555 = vpop.permute.xlu0 %3554
        %3556 = vrot.lane.b32.xlu0 %v2787, 48
        %v3557 = vpop.permute.xlu0 %3556
        %3558 = vrot.lane.b32.xlu0 %v2788, 48
        %v3559 = vpop.permute.xlu0 %3558
        %3560 = vrot.lane.b32.xlu0 %v2789, 48
        %v3561 = vpop.permute.xlu0 %3560
        %3562 = vrot.lane.b32.xlu0 %v2790, 48
        %v3563 = vpop.permute.xlu0 %3562
        %3564 = vrot.lane.b32.xlu0 %v2791, 48
        %v3565 = vpop.permute.xlu0 %3564
        %3566 = vrot.lane.b32.xlu0 %v2792, 48
        %v3567 = vpop.permute.xlu0 %3566
        %3568 = vrot.lane.b32.xlu0 %v2793, 48
        %v3569 = vpop.permute.xlu0 %3568
        %3570 = vrot.lane.b32.xlu0 %v2794, 48
        %v3571 = vpop.permute.xlu0 %3570
        %3572 = vrot.lane.b32.xlu0 %v2795, 48
        %v3573 = vpop.permute.xlu0 %3572
        %3574 = vrot.lane.b32.xlu0 %v2796, 48
        %v3575 = vpop.permute.xlu0 %3574
        %3576 = vrot.lane.b32.xlu0 %v2797, 48
        %v3577 = vpop.permute.xlu0 %3576
        %3578 = vrot.lane.b32.xlu0 %v2798, 48
        %v3579 = vpop.permute.xlu0 %3578
        %3580 = vrot.lane.b32.xlu0 %v2799, 48
        %v3581 = vpop.permute.xlu0 %3580
        %3582 = vrot.lane.b32.xlu0 %v2800, 48
        %v3583 = vpop.permute.xlu0 %3582
        %3584 = vrot.lane.b32.xlu0 %v2801, 48
        %v3585 = vpop.permute.xlu0 %3584
        %3586 = vrot.lane.b32.xlu0 %v2802, 48
        %v3587 = vpop.permute.xlu0 %3586
        %3588 = vrot.lane.b32.xlu0 %v2803, 48
        %v3589 = vpop.permute.xlu0 %3588
        %3590 = vrot.lane.b32.xlu0 %v2804, 48
        %v3591 = vpop.permute.xlu0 %3590
        %3592 = vrot.lane.b32.xlu0 %v2805, 48
        %v3593 = vpop.permute.xlu0 %3592
        %3594 = vrot.lane.b32.xlu0 %v2806, 48
        %v3595 = vpop.permute.xlu0 %3594
        %3596 = vrot.lane.b32.xlu0 %v2807, 48
        %v3597 = vpop.permute.xlu0 %3596
        %3598 = vrot.lane.b32.xlu0 %v2808, 48
        %v3599 = vpop.permute.xlu0 %3598
        %3600 = vrot.lane.b32.xlu0 %v2809, 48
        %v3601 = vpop.permute.xlu0 %3600
        %3602 = vrot.lane.b32.xlu0 %v2810, 48
        %v3603 = vpop.permute.xlu0 %3602
        %3604 = vrot.lane.b32.xlu0 %v2811, 48
        %v3605 = vpop.permute.xlu0 %3604
        %3606 = vrot.lane.b32.xlu0 %v2812, 48
        %v3607 = vpop.permute.xlu0 %3606
        %3608 = vrot.lane.b32.xlu0 %v2813, 48
        %v3609 = vpop.permute.xlu0 %3608
        %3610 = vrot.lane.b32.xlu0 %v2814, 48
        %v3611 = vpop.permute.xlu0 %3610
        %3612 = vrot.lane.b32.xlu0 %v2815, 48
        %v3613 = vpop.permute.xlu0 %3612
        %3614 = vrot.lane.b32.xlu0 %v2816, 48
        %v3615 = vpop.permute.xlu0 %3614
        %3616 = vrot.lane.b32.xlu0 %v2817, 48
        %v3617 = vpop.permute.xlu0 %3616
        %3682 = vrot.lane.b32.xlu0 %v2818, 56
        %v3683 = vpop.permute.xlu0 %3682
        %3684 = vrot.lane.b32.xlu0 %v2819, 56
        %v3685 = vpop.permute.xlu0 %3684
        %3686 = vrot.lane.b32.xlu0 %v2820, 56
        %v3687 = vpop.permute.xlu0 %3686
        %3688 = vrot.lane.b32.xlu0 %v2821, 56
        %v3689 = vpop.permute.xlu0 %3688
        %3690 = vrot.lane.b32.xlu0 %v2822, 56
        %v3691 = vpop.permute.xlu0 %3690
        %3692 = vrot.lane.b32.xlu0 %v2823, 56
        %v3693 = vpop.permute.xlu0 %3692
        %3694 = vrot.lane.b32.xlu0 %v2824, 56
        %v3695 = vpop.permute.xlu0 %3694
        %3696 = vrot.lane.b32.xlu0 %v2825, 56
        %v3697 = vpop.permute.xlu0 %3696
        %3698 = vrot.lane.b32.xlu0 %v2826, 56
        %v3699 = vpop.permute.xlu0 %3698
        %3700 = vrot.lane.b32.xlu0 %v2827, 56
        %v3701 = vpop.permute.xlu0 %3700
        %3702 = vrot.lane.b32.xlu0 %v2828, 56
        %v3703 = vpop.permute.xlu0 %3702
        %3704 = vrot.lane.b32.xlu0 %v2829, 56
        %v3705 = vpop.permute.xlu0 %3704
        %3706 = vrot.lane.b32.xlu0 %v2830, 56
        %v3707 = vpop.permute.xlu0 %3706
        %3708 = vrot.lane.b32.xlu0 %v2831, 56
        %v3709 = vpop.permute.xlu0 %3708
        %3710 = vrot.lane.b32.xlu0 %v2832, 56
        %v3711 = vpop.permute.xlu0 %3710
        %3712 = vrot.lane.b32.xlu0 %v2833, 56
        %v3713 = vpop.permute.xlu0 %3712
        %3714 = vrot.lane.b32.xlu0 %v2834, 56
        %v3715 = vpop.permute.xlu0 %3714
        %3716 = vrot.lane.b32.xlu0 %v2835, 56
        %v3717 = vpop.permute.xlu0 %3716
        %3718 = vrot.lane.b32.xlu0 %v2836, 56
        %v3719 = vpop.permute.xlu0 %3718
        %3720 = vrot.lane.b32.xlu0 %v2837, 56
        %v3721 = vpop.permute.xlu0 %3720
        %3722 = vrot.lane.b32.xlu0 %v2838, 56
        %v3723 = vpop.permute.xlu0 %3722
        %3724 = vrot.lane.b32.xlu0 %v2839, 56
        %v3725 = vpop.permute.xlu0 %3724
        %3726 = vrot.lane.b32.xlu0 %v2840, 56
        %v3727 = vpop.permute.xlu0 %3726
        %3728 = vrot.lane.b32.xlu0 %v2841, 56
        %v3729 = vpop.permute.xlu0 %3728
        %3730 = vrot.lane.b32.xlu0 %v2842, 56
        %v3731 = vpop.permute.xlu0 %3730
        %3732 = vrot.lane.b32.xlu0 %v2843, 56
        %v3733 = vpop.permute.xlu0 %3732
        %3734 = vrot.lane.b32.xlu0 %v2844, 56
        %v3735 = vpop.permute.xlu0 %3734
        %3736 = vrot.lane.b32.xlu0 %v2845, 56
        %v3737 = vpop.permute.xlu0 %3736
        %3738 = vrot.lane.b32.xlu0 %v2846, 56
        %v3739 = vpop.permute.xlu0 %3738
        %3740 = vrot.lane.b32.xlu0 %v2847, 56
        %v3741 = vpop.permute.xlu0 %3740
        %3742 = vrot.lane.b32.xlu0 %v2848, 56
        %v3743 = vpop.permute.xlu0 %3742
        %3744 = vrot.lane.b32.xlu0 %v2849, 56
        %v3745 = vpop.permute.xlu0 %3744
        %3810 = vrot.lane.b32.xlu0 %v2850, 64
        %v3811 = vpop.permute.xlu0 %3810
        %3812 = vrot.lane.b32.xlu0 %v2851, 64
        %v3813 = vpop.permute.xlu0 %3812
        %3814 = vrot.lane.b32.xlu0 %v2852, 64
        %v3815 = vpop.permute.xlu0 %3814
        %3816 = vrot.lane.b32.xlu0 %v2853, 64
        %v3817 = vpop.permute.xlu0 %3816
        %3818 = vrot.lane.b32.xlu0 %v2854, 64
        %v3819 = vpop.permute.xlu0 %3818
        %3820 = vrot.lane.b32.xlu0 %v2855, 64
        %v3821 = vpop.permute.xlu0 %3820
        %3822 = vrot.lane.b32.xlu0 %v2856, 64
        %v3823 = vpop.permute.xlu0 %3822
        %3824 = vrot.lane.b32.xlu0 %v2857, 64
        %v3825 = vpop.permute.xlu0 %3824
        %3826 = vrot.lane.b32.xlu0 %v2858, 64
        %v3827 = vpop.permute.xlu0 %3826
        %3828 = vrot.lane.b32.xlu0 %v2859, 64
        %v3829 = vpop.permute.xlu0 %3828
        %3830 = vrot.lane.b32.xlu0 %v2860, 64
        %v3831 = vpop.permute.xlu0 %3830
        %3832 = vrot.lane.b32.xlu0 %v2861, 64
        %v3833 = vpop.permute.xlu0 %3832
        %3834 = vrot.lane.b32.xlu0 %v2862, 64
        %v3835 = vpop.permute.xlu0 %3834
        %3836 = vrot.lane.b32.xlu0 %v2863, 64
        %v3837 = vpop.permute.xlu0 %3836
        %3838 = vrot.lane.b32.xlu0 %v2864, 64
        %v3839 = vpop.permute.xlu0 %3838
        %3840 = vrot.lane.b32.xlu0 %v2865, 64
        %v3841 = vpop.permute.xlu0 %3840
        %3842 = vrot.lane.b32.xlu0 %v2866, 64
        %v3843 = vpop.permute.xlu0 %3842
        %3844 = vrot.lane.b32.xlu0 %v2867, 64
        %v3845 = vpop.permute.xlu0 %3844
        %3846 = vrot.lane.b32.xlu0 %v2868, 64
        %v3847 = vpop.permute.xlu0 %3846
        %3848 = vrot.lane.b32.xlu0 %v2869, 64
        %v3849 = vpop.permute.xlu0 %3848
        %3850 = vrot.lane.b32.xlu0 %v2870, 64
        %v3851 = vpop.permute.xlu0 %3850
        %3852 = vrot.lane.b32.xlu0 %v2871, 64
        %v3853 = vpop.permute.xlu0 %3852
        %3854 = vrot.lane.b32.xlu0 %v2872, 64
        %v3855 = vpop.permute.xlu0 %3854
        %3856 = vrot.lane.b32.xlu0 %v2873, 64
        %v3857 = vpop.permute.xlu0 %3856
        %3858 = vrot.lane.b32.xlu0 %v2874, 64
        %v3859 = vpop.permute.xlu0 %3858
        %3860 = vrot.lane.b32.xlu0 %v2875, 64
        %v3861 = vpop.permute.xlu0 %3860
        %3862 = vrot.lane.b32.xlu0 %v2876, 64
        %v3863 = vpop.permute.xlu0 %3862
        %3864 = vrot.lane.b32.xlu0 %v2877, 64
        %v3865 = vpop.permute.xlu0 %3864
        %3866 = vrot.lane.b32.xlu0 %v2878, 64
        %v3867 = vpop.permute.xlu0 %3866
        %3868 = vrot.lane.b32.xlu0 %v2879, 64
        %v3869 = vpop.permute.xlu0 %3868
        %3870 = vrot.lane.b32.xlu0 %v2880, 64
        %v3871 = vpop.permute.xlu0 %3870
        %3872 = vrot.lane.b32.xlu0 %v2881, 64
        %v3873 = vpop.permute.xlu0 %3872
        %v3906 = vsel %vm1802, %v2593, %v2915
        %v3907 = vsel %vm1802, %v2594, %v2917
        %v3908 = vsel %vm1802, %v2595, %v2919
        %v3909 = vsel %vm1802, %v2596, %v2921
        %v3910 = vsel %vm1802, %v2597, %v2923
        %v3911 = vsel %vm1802, %v2598, %v2925
        %v3912 = vsel %vm1802, %v2599, %v2927
        %v3913 = vsel %vm1802, %v2600, %v2929
        %v3914 = vsel %vm1802, %v2601, %v2931
        %v3915 = vsel %vm1802, %v2602, %v2933
        %v3916 = vsel %vm1802, %v2603, %v2935
        %v3917 = vsel %vm1802, %v2604, %v2937
        %v3918 = vsel %vm1802, %v2605, %v2939
        %v3919 = vsel %vm1802, %v2606, %v2941
        %v3920 = vsel %vm1802, %v2607, %v2943
        %v3921 = vsel %vm1802, %v2608, %v2945
        %v3922 = vsel %vm1802, %v2609, %v2947
        %v3923 = vsel %vm1802, %v2610, %v2949
        %v3924 = vsel %vm1802, %v2611, %v2951
        %v3925 = vsel %vm1802, %v2612, %v2953
        %v3926 = vsel %vm1802, %v2613, %v2955
        %v3927 = vsel %vm1802, %v2614, %v2957
        %v3928 = vsel %vm1802, %v2615, %v2959
        %v3929 = vsel %vm1802, %v2616, %v2961
        %v3930 = vsel %vm1802, %v2617, %v2963
        %v3931 = vsel %vm1802, %v2618, %v2965
        %v3932 = vsel %vm1802, %v2619, %v2967
        %v3933 = vsel %vm1802, %v2620, %v2969
        %v3934 = vsel %vm1802, %v2621, %v2971
        %v3935 = vsel %vm1802, %v2622, %v2973
        %v3936 = vsel %vm1802, %v2623, %v2975
        %v3937 = vsel %vm1802, %v2624, %v2977
        %v3938 = vsel %vm1868, %v3906, %v3043
        %v3939 = vsel %vm1868, %v3907, %v3045
        %v3940 = vsel %vm1868, %v3908, %v3047
        %v3941 = vsel %vm1868, %v3909, %v3049
        %v3942 = vsel %vm1868, %v3910, %v3051
        %v3943 = vsel %vm1868, %v3911, %v3053
        %v3944 = vsel %vm1868, %v3912, %v3055
        %v3945 = vsel %vm1868, %v3913, %v3057
        %v3946 = vsel %vm1868, %v3914, %v3059
        %v3947 = vsel %vm1868, %v3915, %v3061
        %v3948 = vsel %vm1868, %v3916, %v3063
        %v3949 = vsel %vm1868, %v3917, %v3065
        %v3950 = vsel %vm1868, %v3918, %v3067
        %v3951 = vsel %vm1868, %v3919, %v3069
        %v3952 = vsel %vm1868, %v3920, %v3071
        %v3953 = vsel %vm1868, %v3921, %v3073
        %v3954 = vsel %vm1868, %v3922, %v3075
        %v3955 = vsel %vm1868, %v3923, %v3077
        %v3956 = vsel %vm1868, %v3924, %v3079
        %v3957 = vsel %vm1868, %v3925, %v3081
        %v3958 = vsel %vm1868, %v3926, %v3083
        %v3959 = vsel %vm1868, %v3927, %v3085
        %v3960 = vsel %vm1868, %v3928, %v3087
        %v3961 = vsel %vm1868, %v3929, %v3089
        %v3962 = vsel %vm1868, %v3930, %v3091
        %v3963 = vsel %vm1868, %v3931, %v3093
        %v3964 = vsel %vm1868, %v3932, %v3095
        %v3965 = vsel %vm1868, %v3933, %v3097
        %v3966 = vsel %vm1868, %v3934, %v3099
        %v3967 = vsel %vm1868, %v3935, %v3101
        %v3968 = vsel %vm1868, %v3936, %v3103
        %v3969 = vsel %vm1868, %v3937, %v3105
        %v3970 = vsel %vm304, %v3938, %v3171
        %v3971 = vsel %vm304, %v3939, %v3173
        %v3972 = vsel %vm304, %v3940, %v3175
        %v3973 = vsel %vm304, %v3941, %v3177
        %v3974 = vsel %vm304, %v3942, %v3179
        %v3975 = vsel %vm304, %v3943, %v3181
        %v3976 = vsel %vm304, %v3944, %v3183
        %v3977 = vsel %vm304, %v3945, %v3185
        %v3978 = vsel %vm304, %v3946, %v3187
        %v3979 = vsel %vm304, %v3947, %v3189
        %v3980 = vsel %vm304, %v3948, %v3191
        %v3981 = vsel %vm304, %v3949, %v3193
        %v3982 = vsel %vm304, %v3950, %v3195
        %v3983 = vsel %vm304, %v3951, %v3197
        %v3984 = vsel %vm304, %v3952, %v3199
        %v3985 = vsel %vm304, %v3953, %v3201
        %v3986 = vsel %vm304, %v3954, %v3203
        %v3987 = vsel %vm304, %v3955, %v3205
        %v3988 = vsel %vm304, %v3956, %v3207
        %v3989 = vsel %vm304, %v3957, %v3209
        %v3990 = vsel %vm304, %v3958, %v3211
        %v3991 = vsel %vm304, %v3959, %v3213
        %v3992 = vsel %vm304, %v3960, %v3215
        %v3993 = vsel %vm304, %v3961, %v3217
        %v3994 = vsel %vm304, %v3962, %v3219
        %v3995 = vsel %vm304, %v3963, %v3221
        %v3996 = vsel %vm304, %v3964, %v3223
        %v3997 = vsel %vm304, %v3965, %v3225
        %v3998 = vsel %vm304, %v3966, %v3227
        %v3999 = vsel %vm304, %v3967, %v3229
        %v4000 = vsel %vm304, %v3968, %v3231
        %v4001 = vsel %vm304, %v3969, %v3233
        %v4002 = vsel %vm1999, %v3970, %v3299
        %v4003 = vsel %vm1999, %v3971, %v3301
        %v4004 = vsel %vm1999, %v3972, %v3303
        %v4005 = vsel %vm1999, %v3973, %v3305
        %v4006 = vsel %vm1999, %v3974, %v3307
        %v4007 = vsel %vm1999, %v3975, %v3309
        %v4008 = vsel %vm1999, %v3976, %v3311
        %v4009 = vsel %vm1999, %v3977, %v3313
        %v4010 = vsel %vm1999, %v3978, %v3315
        %v4011 = vsel %vm1999, %v3979, %v3317
        %v4012 = vsel %vm1999, %v3980, %v3319
        %v4013 = vsel %vm1999, %v3981, %v3321
        %v4014 = vsel %vm1999, %v3982, %v3323
        %v4015 = vsel %vm1999, %v3983, %v3325
        %v4016 = vsel %vm1999, %v3984, %v3327
        %v4017 = vsel %vm1999, %v3985, %v3329
        %v4018 = vsel %vm1999, %v3986, %v3331
        %v4019 = vsel %vm1999, %v3987, %v3333
        %v4020 = vsel %vm1999, %v3988, %v3335
        %v4021 = vsel %vm1999, %v3989, %v3337
        %v4022 = vsel %vm1999, %v3990, %v3339
        %v4023 = vsel %vm1999, %v3991, %v3341
        %v4024 = vsel %vm1999, %v3992, %v3343
        %v4025 = vsel %vm1999, %v3993, %v3345
        %v4026 = vsel %vm1999, %v3994, %v3347
        %v4027 = vsel %vm1999, %v3995, %v3349
        %v4028 = vsel %vm1999, %v3996, %v3351
        %v4029 = vsel %vm1999, %v3997, %v3353
        %v4030 = vsel %vm1999, %v3998, %v3355
        %v4031 = vsel %vm1999, %v3999, %v3357
        %v4032 = vsel %vm1999, %v4000, %v3359
        %v4033 = vsel %vm1999, %v4001, %v3361
        %vm4034 = vcmask 326656
        %v4035 = vsel %vm4034, %v4002, %v3427
        %v4036 = vsel %vm4034, %v4003, %v3429
        %v4037 = vsel %vm4034, %v4004, %v3431
        %v4038 = vsel %vm4034, %v4005, %v3433
        %v4039 = vsel %vm4034, %v4006, %v3435
        %v4040 = vsel %vm4034, %v4007, %v3437
        %v4041 = vsel %vm4034, %v4008, %v3439
        %v4042 = vsel %vm4034, %v4009, %v3441
        %v4043 = vsel %vm4034, %v4010, %v3443
        %v4044 = vsel %vm4034, %v4011, %v3445
        %v4045 = vsel %vm4034, %v4012, %v3447
        %v4046 = vsel %vm4034, %v4013, %v3449
        %v4047 = vsel %vm4034, %v4014, %v3451
        %v4048 = vsel %vm4034, %v4015, %v3453
        %v4049 = vsel %vm4034, %v4016, %v3455
        %v4050 = vsel %vm4034, %v4017, %v3457
        %v4051 = vsel %vm4034, %v4018, %v3459
        %v4052 = vsel %vm4034, %v4019, %v3461
        %v4053 = vsel %vm4034, %v4020, %v3463
        %v4054 = vsel %vm4034, %v4021, %v3465
        %v4055 = vsel %vm4034, %v4022, %v3467
        %v4056 = vsel %vm4034, %v4023, %v3469
        %v4057 = vsel %vm4034, %v4024, %v3471
        %v4058 = vsel %vm4034, %v4025, %v3473
        %v4059 = vsel %vm4034, %v4026, %v3475
        %v4060 = vsel %vm4034, %v4027, %v3477
        %v4061 = vsel %vm4034, %v4028, %v3479
        %v4062 = vsel %vm4034, %v4029, %v3481
        %v4063 = vsel %vm4034, %v4030, %v3483
        %v4064 = vsel %vm4034, %v4031, %v3485
        %v4065 = vsel %vm4034, %v4032, %v3487
        %v4066 = vsel %vm4034, %v4033, %v3489
        %vm4067 = vcmask 392192
        %v4068 = vsel %vm4067, %v4035, %v3555
        %v4069 = vsel %vm4067, %v4036, %v3557
        %v4070 = vsel %vm4067, %v4037, %v3559
        %v4071 = vsel %vm4067, %v4038, %v3561
        %v4072 = vsel %vm4067, %v4039, %v3563
        %v4073 = vsel %vm4067, %v4040, %v3565
        %v4074 = vsel %vm4067, %v4041, %v3567
        %v4075 = vsel %vm4067, %v4042, %v3569
        %v4076 = vsel %vm4067, %v4043, %v3571
        %v4077 = vsel %vm4067, %v4044, %v3573
        %v4078 = vsel %vm4067, %v4045, %v3575
        %v4079 = vsel %vm4067, %v4046, %v3577
        %v4080 = vsel %vm4067, %v4047, %v3579
        %v4081 = vsel %vm4067, %v4048, %v3581
        %v4082 = vsel %vm4067, %v4049, %v3583
        %v4083 = vsel %vm4067, %v4050, %v3585
        %v4084 = vsel %vm4067, %v4051, %v3587
        %v4085 = vsel %vm4067, %v4052, %v3589
        %v4086 = vsel %vm4067, %v4053, %v3591
        %v4087 = vsel %vm4067, %v4054, %v3593
        %v4088 = vsel %vm4067, %v4055, %v3595
        %v4089 = vsel %vm4067, %v4056, %v3597
        %v4090 = vsel %vm4067, %v4057, %v3599
        %v4091 = vsel %vm4067, %v4058, %v3601
        %v4092 = vsel %vm4067, %v4059, %v3603
        %v4093 = vsel %vm4067, %v4060, %v3605
        %v4094 = vsel %vm4067, %v4061, %v3607
        %v4095 = vsel %vm4067, %v4062, %v3609
        %v4096 = vsel %vm4067, %v4063, %v3611
        %v4097 = vsel %vm4067, %v4064, %v3613
        %v4098 = vsel %vm4067, %v4065, %v3615
        %v4099 = vsel %vm4067, %v4066, %v3617
        %vm4100 = vcmask 457728
        %v4101 = vsel %vm4100, %v4068, %v3683
        %v4102 = vsel %vm4100, %v4069, %v3685
        %v4103 = vsel %vm4100, %v4070, %v3687
        %v4104 = vsel %vm4100, %v4071, %v3689
        %v4105 = vsel %vm4100, %v4072, %v3691
        %v4106 = vsel %vm4100, %v4073, %v3693
        %v4107 = vsel %vm4100, %v4074, %v3695
        %v4108 = vsel %vm4100, %v4075, %v3697
        %v4109 = vsel %vm4100, %v4076, %v3699
        %v4110 = vsel %vm4100, %v4077, %v3701
        %v4111 = vsel %vm4100, %v4078, %v3703
        %v4112 = vsel %vm4100, %v4079, %v3705
        %v4113 = vsel %vm4100, %v4080, %v3707
        %v4114 = vsel %vm4100, %v4081, %v3709
        %v4115 = vsel %vm4100, %v4082, %v3711
        %v4116 = vsel %vm4100, %v4083, %v3713
        %v4117 = vsel %vm4100, %v4084, %v3715
        %v4118 = vsel %vm4100, %v4085, %v3717
        %v4119 = vsel %vm4100, %v4086, %v3719
        %v4120 = vsel %vm4100, %v4087, %v3721
        %v4121 = vsel %vm4100, %v4088, %v3723
        %v4122 = vsel %vm4100, %v4089, %v3725
        %v4123 = vsel %vm4100, %v4090, %v3727
        %v4124 = vsel %vm4100, %v4091, %v3729
        %v4125 = vsel %vm4100, %v4092, %v3731
        %v4126 = vsel %vm4100, %v4093, %v3733
        %v4127 = vsel %vm4100, %v4094, %v3735
        %v4128 = vsel %vm4100, %v4095, %v3737
        %v4129 = vsel %vm4100, %v4096, %v3739
        %v4130 = vsel %vm4100, %v4097, %v3741
        %v4131 = vsel %vm4100, %v4098, %v3743
        %v4132 = vsel %vm4100, %v4099, %v3745
        %vm4133 = vcmask 523264
        %v4134 = vsel %vm4133, %v4101, %v3811
        %v4135 = vsel %vm4133, %v4102, %v3813
        %v4136 = vsel %vm4133, %v4103, %v3815
        %v4137 = vsel %vm4133, %v4104, %v3817
        %v4138 = vsel %vm4133, %v4105, %v3819
        %v4139 = vsel %vm4133, %v4106, %v3821
        %v4140 = vsel %vm4133, %v4107, %v3823
        %v4141 = vsel %vm4133, %v4108, %v3825
        %v4142 = vsel %vm4133, %v4109, %v3827
        %v4143 = vsel %vm4133, %v4110, %v3829
        %v4144 = vsel %vm4133, %v4111, %v3831
        %v4145 = vsel %vm4133, %v4112, %v3833
        %v4146 = vsel %vm4133, %v4113, %v3835
        %v4147 = vsel %vm4133, %v4114, %v3837
        %v4148 = vsel %vm4133, %v4115, %v3839
        %v4149 = vsel %vm4133, %v4116, %v3841
        %v4150 = vsel %vm4133, %v4117, %v3843
        %v4151 = vsel %vm4133, %v4118, %v3845
        %v4152 = vsel %vm4133, %v4119, %v3847
        %v4153 = vsel %vm4133, %v4120, %v3849
        %v4154 = vsel %vm4133, %v4121, %v3851
        %v4155 = vsel %vm4133, %v4122, %v3853
        %v4156 = vsel %vm4133, %v4123, %v3855
        %v4157 = vsel %vm4133, %v4124, %v3857
        %v4158 = vsel %vm4133, %v4125, %v3859
        %v4159 = vsel %vm4133, %v4126, %v3861
        %v4160 = vsel %vm4133, %v4127, %v3863
        %v4161 = vsel %vm4133, %v4128, %v3865
        %v4162 = vsel %vm4133, %v4129, %v3867
        %v4163 = vsel %vm4133, %v4130, %v3869
        %v4164 = vsel %vm4133, %v4131, %v3871
        %v4165 = vsel %vm4133, %v4132, %v3873
        %v4166 = vld [vmem:[%s2] sm:$0xff]
        %v4167 = vld [vmem:[%s2 + $0x8] sm:$0xff]
        %v4168 = vld [vmem:[%s2 + $0x10] sm:$0xff]
        %v4169 = vld [vmem:[%s2 + $0x18] sm:$0xff]
        %v4170 = vld [vmem:[%s2 + $0x20] sm:$0xff]
        %v4171 = vld [vmem:[%s2 + $0x28] sm:$0xff]
        %v4172 = vld [vmem:[%s2 + $0x30] sm:$0xff]
        %v4173 = vld [vmem:[%s2 + $0x38] sm:$0xff]
        %v4174 = vld [vmem:[%s2 + $0x40] sm:$0xff]
        %v4175 = vlaneseq
        %v4176 = vshrl.u32 %v4175, 7
        %v4177 = vsub.s32 1, %v4176
        %v4178 = vrot.slane %v456, %v4177
        %vm4179 = vcmask 588800
        %v4181 = vsel %vm4179, %v4134, 0
        %v4184 = vsel %vm4179, %v4135, 0
        %v4187 = vsel %vm4179, %v4136, 0
        %v4190 = vsel %vm4179, %v4137, 0
        %v4193 = vsel %vm4179, %v4138, 0
        %v4196 = vsel %vm4179, %v4139, 0
        %v4199 = vsel %vm4179, %v4140, 0
        %v4202 = vsel %vm4179, %v4141, 0
        %v4205 = vsel %vm4179, %v4142, 0
        %v4208 = vsel %vm4179, %v4143, 0
        %v4211 = vsel %vm4179, %v4144, 0
        %v4214 = vsel %vm4179, %v4145, 0
        %v4217 = vsel %vm4179, %v4146, 0
        %v4220 = vsel %vm4179, %v4147, 0
        %v4223 = vsel %vm4179, %v4148, 0
        %v4226 = vsel %vm4179, %v4149, 0
        %v4229 = vsel %vm4179, %v4150, 0
        %v4232 = vsel %vm4179, %v4151, 0
        %v4235 = vsel %vm4179, %v4152, 0
        %v4238 = vsel %vm4179, %v4153, 0
        %v4241 = vsel %vm4179, %v4154, 0
        %v4244 = vsel %vm4179, %v4155, 0
        %v4247 = vsel %vm4179, %v4156, 0
        %v4250 = vsel %vm4179, %v4157, 0
        %v4253 = vsel %vm4179, %v4158, 0
        %v4256 = vsel %vm4179, %v4159, 0
        %v4259 = vsel %vm4179, %v4160, 0
        %v4262 = vsel %vm4179, %v4161, 0
        %v4265 = vsel %vm4179, %v4162, 0
        %v4268 = vsel %vm4179, %v4163, 0
        %v4271 = vsel %vm4179, %v4164, 0
        %v4274 = vsel %vm4179, %v4165, 0
        %4276 = vmatprep.subr.mxu0 0.0
        %4277 = vmatpush1.msra.mxu0 0.0
        %4278 = vmatprep.subr.mxu0 0.0
        %4279 = vmatpush1.msra.mxu0 0.0
        %4280 = vmatprep.subr.mxu0 0.0
        %4281 = vmatpush1.msra.mxu0 0.0
        %4282 = vmatprep.subr.mxu0 0.0
        %4283 = vmatpush1.msra.mxu0 0.0
        %4284 = vmatprep.subr.mxu0 0.0
        %4285 = vmatpush1.msra.mxu0 0.0
        %4286 = vmatprep.subr.mxu0 0.0
        %4287 = vmatpush1.msra.mxu0 0.0
        %4288 = vmatprep.subr.mxu0 0.0
        %4289 = vmatpush1.msra.mxu0 0.0
        %4290 = vmatprep.subr.mxu0 0.0
        %4291 = vmatpush1.msra.mxu0 %v4174
        %4292 = vmatprep.subr.mxu0 0.0
        %4293 = vmatpush1.msra.mxu0 %v4173
        %4294 = vmatprep.subr.mxu0 0.0
        %4295 = vmatpush1.msra.mxu0 %v4172
        %4296 = vmatprep.subr.mxu0 0.0
        %4297 = vmatpush1.msra.mxu0 %v4171
        %4298 = vmatprep.subr.mxu0 0.0
        %4299 = vmatpush1.msra.mxu0 %v4170
        %4300 = vmatprep.subr.mxu0 0.0
        %4301 = vmatpush1.msra.mxu0 %v4169
        %4302 = vmatprep.subr.mxu0 0.0
        %4303 = vmatpush1.msra.mxu0 %v4168
        %4304 = vmatprep.subr.mxu0 0.0
        %4305 = vmatpush1.msra.mxu0 %v4167
        %4306 = vmatprep.subr.mxu0 0.0
        %4307 = vmatpush1.msra.mxu0 %v4166
        %4308 = vmatprep.subr.mxu0 0.0
        %4309 = vmatpush2.msra.mxu0 0.0
        %4310 = vmatprep.subr.mxu0 0.0
        %4311 = vmatpush2.msra.mxu0 0.0
        %4312 = vmatprep.subr.mxu0 0.0
        %4313 = vmatpush2.msra.mxu0 0.0
        %4314 = vmatprep.subr.mxu0 0.0
        %4315 = vmatpush2.msra.mxu0 0.0
        %4316 = vmatprep.subr.mxu0 0.0
        %4317 = vmatpush2.msra.mxu0 0.0
        %4318 = vmatprep.subr.mxu0 0.0
        %4319 = vmatpush2.msra.mxu0 0.0
        %4320 = vmatprep.subr.mxu0 0.0
        %4321 = vmatpush2.msra.mxu0 0.0
        %4322 = vmatprep.subr.mxu0 0.0
        %4323 = vmatpush2.msra.mxu0 0.0
        %4324 = vmatprep.subr.mxu0 0.0
        %4325 = vmatpush2.msra.mxu0 0.0
        %4326 = vmatprep.subr.mxu0 0.0
        %4327 = vmatpush2.msra.mxu0 0.0
        %4328 = vmatprep.subr.mxu0 0.0
        %4329 = vmatpush2.msra.mxu0 0.0
        %4330 = vmatprep.subr.mxu0 0.0
        %4331 = vmatpush2.msra.mxu0 0.0
        %4332 = vmatprep.subr.mxu0 0.0
        %4333 = vmatpush2.msra.mxu0 0.0
        %4334 = vmatprep.subr.mxu0 0.0
        %4335 = vmatpush2.msra.mxu0 0.0
        %4336 = vmatprep.subr.mxu0 0.0
        %4337 = vmatpush2.msra.mxu0 0.0
        %4338 = vmatprep.subr.mxu0 0.0
        %4339 = vmatpush2.msra.mxu0 0.0
        %4340 = vmatprep.mubr.f32.mxu0 0.0
        %4341 = vmatmul.mubr.f32.gmra.mxu0 %v4181
        %v4342 = vpop.f32.mrf.mxu0
        %v4343 = vadd.f32 %v4178, %v4342
        %v4344 = vpop.f32.mrf.mxu0
        %4345 = vmatprep.mubr.f32.mxu0 0.0
        %4346 = vmatmul.mubr.f32.gmra.mxu0 %v4184
        %v4347 = vpop.f32.mrf.mxu0
        %v4348 = vadd.f32 %v4178, %v4347
        %v4349 = vpop.f32.mrf.mxu0
        %4350 = vmatprep.mubr.f32.mxu0 0.0
        %4351 = vmatmul.mubr.f32.gmra.mxu0 %v4187
        %v4352 = vpop.f32.mrf.mxu0
        %v4353 = vadd.f32 %v4178, %v4352
        %v4354 = vpop.f32.mrf.mxu0
        %4355 = vmatprep.mubr.f32.mxu0 0.0
        %4356 = vmatmul.mubr.f32.gmra.mxu0 %v4190
        %v4357 = vpop.f32.mrf.mxu0
        %v4358 = vadd.f32 %v4178, %v4357
        %v4359 = vpop.f32.mrf.mxu0
        %4360 = vmatprep.mubr.f32.mxu0 0.0
        %4361 = vmatmul.mubr.f32.gmra.mxu0 %v4193
        %v4362 = vpop.f32.mrf.mxu0
        %v4363 = vadd.f32 %v4178, %v4362
        %v4364 = vpop.f32.mrf.mxu0
        %4365 = vmatprep.mubr.f32.mxu0 0.0
        %4366 = vmatmul.mubr.f32.gmra.mxu0 %v4196
        %v4367 = vpop.f32.mrf.mxu0
        %v4368 = vadd.f32 %v4178, %v4367
        %v4369 = vpop.f32.mrf.mxu0
        %4370 = vmatprep.mubr.f32.mxu0 0.0
        %4371 = vmatmul.mubr.f32.gmra.mxu0 %v4199
        %v4372 = vpop.f32.mrf.mxu0
        %v4373 = vadd.f32 %v4178, %v4372
        %v4374 = vpop.f32.mrf.mxu0
        %4375 = vmatprep.mubr.f32.mxu0 0.0
        %4376 = vmatmul.mubr.f32.gmra.mxu0 %v4202
        %v4377 = vpop.f32.mrf.mxu0
        %v4378 = vadd.f32 %v4178, %v4377
        %v4379 = vpop.f32.mrf.mxu0
        %4380 = vmatprep.mubr.f32.mxu0 0.0
        %4381 = vmatmul.mubr.f32.gmra.mxu0 %v4205
        %v4382 = vpop.f32.mrf.mxu0
        %v4383 = vadd.f32 %v4178, %v4382
        %v4384 = vpop.f32.mrf.mxu0
        %4385 = vmatprep.mubr.f32.mxu0 0.0
        %4386 = vmatmul.mubr.f32.gmra.mxu0 %v4208
        %v4387 = vpop.f32.mrf.mxu0
        %v4388 = vadd.f32 %v4178, %v4387
        %v4389 = vpop.f32.mrf.mxu0
        %4390 = vmatprep.mubr.f32.mxu0 0.0
        %4391 = vmatmul.mubr.f32.gmra.mxu0 %v4211
        %v4392 = vpop.f32.mrf.mxu0
        %v4393 = vadd.f32 %v4178, %v4392
        %v4394 = vpop.f32.mrf.mxu0
        %4395 = vmatprep.mubr.f32.mxu0 0.0
        %4396 = vmatmul.mubr.f32.gmra.mxu0 %v4214
        %v4397 = vpop.f32.mrf.mxu0
        %v4398 = vadd.f32 %v4178, %v4397
        %v4399 = vpop.f32.mrf.mxu0
        %4400 = vmatprep.mubr.f32.mxu0 0.0
        %4401 = vmatmul.mubr.f32.gmra.mxu0 %v4217
        %v4402 = vpop.f32.mrf.mxu0
        %v4403 = vadd.f32 %v4178, %v4402
        %v4404 = vpop.f32.mrf.mxu0
        %4405 = vmatprep.mubr.f32.mxu0 0.0
        %4406 = vmatmul.mubr.f32.gmra.mxu0 %v4220
        %v4407 = vpop.f32.mrf.mxu0
        %v4408 = vadd.f32 %v4178, %v4407
        %v4409 = vpop.f32.mrf.mxu0
        %4410 = vmatprep.mubr.f32.mxu0 0.0
        %4411 = vmatmul.mubr.f32.gmra.mxu0 %v4223
        %v4412 = vpop.f32.mrf.mxu0
        %v4413 = vadd.f32 %v4178, %v4412
        %v4414 = vpop.f32.mrf.mxu0
        %4415 = vmatprep.mubr.f32.mxu0 0.0
        %4416 = vmatmul.mubr.f32.gmra.mxu0 %v4226
        %v4417 = vpop.f32.mrf.mxu0
        %v4418 = vadd.f32 %v4178, %v4417
        %v4419 = vpop.f32.mrf.mxu0
        %4420 = vmatprep.mubr.f32.mxu0 0.0
        %4421 = vmatmul.mubr.f32.gmra.mxu0 %v4229
        %v4422 = vpop.f32.mrf.mxu0
        %v4423 = vadd.f32 %v4178, %v4422
        %v4424 = vpop.f32.mrf.mxu0
        %4425 = vmatprep.mubr.f32.mxu0 0.0
        %4426 = vmatmul.mubr.f32.gmra.mxu0 %v4232
        %v4427 = vpop.f32.mrf.mxu0
        %v4428 = vadd.f32 %v4178, %v4427
        %v4429 = vpop.f32.mrf.mxu0
        %4430 = vmatprep.mubr.f32.mxu0 0.0
        %4431 = vmatmul.mubr.f32.gmra.mxu0 %v4235
        %v4432 = vpop.f32.mrf.mxu0
        %v4433 = vadd.f32 %v4178, %v4432
        %v4434 = vpop.f32.mrf.mxu0
        %4435 = vmatprep.mubr.f32.mxu0 0.0
        %4436 = vmatmul.mubr.f32.gmra.mxu0 %v4238
        %v4437 = vpop.f32.mrf.mxu0
        %v4438 = vadd.f32 %v4178, %v4437
        %v4439 = vpop.f32.mrf.mxu0
        %4440 = vmatprep.mubr.f32.mxu0 0.0
        %4441 = vmatmul.mubr.f32.gmra.mxu0 %v4241
        %v4442 = vpop.f32.mrf.mxu0
        %v4443 = vadd.f32 %v4178, %v4442
        %v4444 = vpop.f32.mrf.mxu0
        %4445 = vmatprep.mubr.f32.mxu0 0.0
        %4446 = vmatmul.mubr.f32.gmra.mxu0 %v4244
        %v4447 = vpop.f32.mrf.mxu0
        %v4448 = vadd.f32 %v4178, %v4447
        %v4449 = vpop.f32.mrf.mxu0
        %4450 = vmatprep.mubr.f32.mxu0 0.0
        %4451 = vmatmul.mubr.f32.gmra.mxu0 %v4247
        %v4452 = vpop.f32.mrf.mxu0
        %v4453 = vadd.f32 %v4178, %v4452
        %v4454 = vpop.f32.mrf.mxu0
        %4455 = vmatprep.mubr.f32.mxu0 0.0
        %4456 = vmatmul.mubr.f32.gmra.mxu0 %v4250
        %v4457 = vpop.f32.mrf.mxu0
        %v4458 = vadd.f32 %v4178, %v4457
        %v4459 = vpop.f32.mrf.mxu0
        %4460 = vmatprep.mubr.f32.mxu0 0.0
        %4461 = vmatmul.mubr.f32.gmra.mxu0 %v4253
        %v4462 = vpop.f32.mrf.mxu0
        %v4463 = vadd.f32 %v4178, %v4462
        %v4464 = vpop.f32.mrf.mxu0
        %4465 = vmatprep.mubr.f32.mxu0 0.0
        %4466 = vmatmul.mubr.f32.gmra.mxu0 %v4256
        %v4467 = vpop.f32.mrf.mxu0
        %v4468 = vadd.f32 %v4178, %v4467
        %v4469 = vpop.f32.mrf.mxu0
        %4470 = vmatprep.mubr.f32.mxu0 0.0
        %4471 = vmatmul.mubr.f32.gmra.mxu0 %v4259
        %v4472 = vpop.f32.mrf.mxu0
        %v4473 = vadd.f32 %v4178, %v4472
        %v4474 = vpop.f32.mrf.mxu0
        %4475 = vmatprep.mubr.f32.mxu0 0.0
        %4476 = vmatmul.mubr.f32.gmra.mxu0 %v4262
        %v4477 = vpop.f32.mrf.mxu0
        %v4478 = vadd.f32 %v4178, %v4477
        %v4479 = vpop.f32.mrf.mxu0
        %4480 = vmatprep.mubr.f32.mxu0 0.0
        %4481 = vmatmul.mubr.f32.gmra.mxu0 %v4265
        %v4482 = vpop.f32.mrf.mxu0
        %v4483 = vadd.f32 %v4178, %v4482
        %v4484 = vpop.f32.mrf.mxu0
        %4485 = vmatprep.mubr.f32.mxu0 0.0
        %4486 = vmatmul.mubr.f32.gmra.mxu0 %v4268
        %v4487 = vpop.f32.mrf.mxu0
        %v4488 = vadd.f32 %v4178, %v4487
        %v4489 = vpop.f32.mrf.mxu0
        %4490 = vmatprep.mubr.f32.mxu0 0.0
        %4491 = vmatmul.mubr.f32.gmra.mxu0 %v4271
        %v4492 = vpop.f32.mrf.mxu0
        %v4493 = vadd.f32 %v4178, %v4492
        %v4494 = vpop.f32.mrf.mxu0
        %4495 = vmatprep.mubr.f32.mxu0 0.0
        %4496 = vmatmul.mubr.f32.gmra.mxu0 %v4274
        %v4497 = vpop.f32.mrf.mxu0
        %v4498 = vadd.f32 %v4178, %v4497
        %v4499 = vpop.f32.mrf.mxu0
        %4500 = vdwg.mxu0
        %v4501 = vmax.f32 %v4343, 0.0
        %v4502 = vmax.f32 %v4348, 0.0
        %v4503 = vmax.f32 %v4353, 0.0
        %v4504 = vmax.f32 %v4358, 0.0
        %v4505 = vmax.f32 %v4363, 0.0
        %v4506 = vmax.f32 %v4368, 0.0
        %v4507 = vmax.f32 %v4373, 0.0
        %v4508 = vmax.f32 %v4378, 0.0
        %v4509 = vmax.f32 %v4383, 0.0
        %v4510 = vmax.f32 %v4388, 0.0
        %v4511 = vmax.f32 %v4393, 0.0
        %v4512 = vmax.f32 %v4398, 0.0
        %v4513 = vmax.f32 %v4403, 0.0
        %v4514 = vmax.f32 %v4408, 0.0
        %v4515 = vmax.f32 %v4413, 0.0
        %v4516 = vmax.f32 %v4418, 0.0
        %v4517 = vmax.f32 %v4423, 0.0
        %v4518 = vmax.f32 %v4428, 0.0
        %v4519 = vmax.f32 %v4433, 0.0
        %v4520 = vmax.f32 %v4438, 0.0
        %v4521 = vmax.f32 %v4443, 0.0
        %v4522 = vmax.f32 %v4448, 0.0
        %v4523 = vmax.f32 %v4453, 0.0
        %v4524 = vmax.f32 %v4458, 0.0
        %v4525 = vmax.f32 %v4463, 0.0
        %v4526 = vmax.f32 %v4468, 0.0
        %v4527 = vmax.f32 %v4473, 0.0
        %v4528 = vmax.f32 %v4478, 0.0
        %v4529 = vmax.f32 %v4483, 0.0
        %v4530 = vmax.f32 %v4488, 0.0
        %v4531 = vmax.f32 %v4493, 0.0
        %v4532 = vmax.f32 %v4498, 0.0
        %4565 = vrot.lane.b32.xlu0 %v4501, 8
        %v4566 = vpop.permute.xlu0 %4565
        %4567 = vrot.lane.b32.xlu0 %v4502, 8
        %v4568 = vpop.permute.xlu0 %4567
        %4569 = vrot.lane.b32.xlu0 %v4503, 8
        %v4570 = vpop.permute.xlu0 %4569
        %4571 = vrot.lane.b32.xlu0 %v4504, 8
        %v4572 = vpop.permute.xlu0 %4571
        %4573 = vrot.lane.b32.xlu0 %v4505, 8
        %v4574 = vpop.permute.xlu0 %4573
        %4575 = vrot.lane.b32.xlu0 %v4506, 8
        %v4576 = vpop.permute.xlu0 %4575
        %4577 = vrot.lane.b32.xlu0 %v4507, 8
        %v4578 = vpop.permute.xlu0 %4577
        %4579 = vrot.lane.b32.xlu0 %v4508, 8
        %v4580 = vpop.permute.xlu0 %4579
        %4581 = vrot.lane.b32.xlu0 %v4509, 8
        %v4582 = vpop.permute.xlu0 %4581
        %4583 = vrot.lane.b32.xlu0 %v4510, 8
        %v4584 = vpop.permute.xlu0 %4583
        %4585 = vrot.lane.b32.xlu0 %v4511, 8
        %v4586 = vpop.permute.xlu0 %4585
        %4587 = vrot.lane.b32.xlu0 %v4512, 8
        %v4588 = vpop.permute.xlu0 %4587
        %4589 = vrot.lane.b32.xlu0 %v4513, 8
        %v4590 = vpop.permute.xlu0 %4589
        %4591 = vrot.lane.b32.xlu0 %v4514, 8
        %v4592 = vpop.permute.xlu0 %4591
        %4593 = vrot.lane.b32.xlu0 %v4515, 8
        %v4594 = vpop.permute.xlu0 %4593
        %4595 = vrot.lane.b32.xlu0 %v4516, 8
        %v4596 = vpop.permute.xlu0 %4595
        %4597 = vrot.lane.b32.xlu0 %v4517, 8
        %v4598 = vpop.permute.xlu0 %4597
        %4599 = vrot.lane.b32.xlu0 %v4518, 8
        %v4600 = vpop.permute.xlu0 %4599
        %4601 = vrot.lane.b32.xlu0 %v4519, 8
        %v4602 = vpop.permute.xlu0 %4601
        %4603 = vrot.lane.b32.xlu0 %v4520, 8
        %v4604 = vpop.permute.xlu0 %4603
        %4605 = vrot.lane.b32.xlu0 %v4521, 8
        %v4606 = vpop.permute.xlu0 %4605
        %4607 = vrot.lane.b32.xlu0 %v4522, 8
        %v4608 = vpop.permute.xlu0 %4607
        %4609 = vrot.lane.b32.xlu0 %v4523, 8
        %v4610 = vpop.permute.xlu0 %4609
        %4611 = vrot.lane.b32.xlu0 %v4524, 8
        %v4612 = vpop.permute.xlu0 %4611
        %4613 = vrot.lane.b32.xlu0 %v4525, 8
        %v4614 = vpop.permute.xlu0 %4613
        %4615 = vrot.lane.b32.xlu0 %v4526, 8
        %v4616 = vpop.permute.xlu0 %4615
        %4617 = vrot.lane.b32.xlu0 %v4527, 8
        %v4618 = vpop.permute.xlu0 %4617
        %4619 = vrot.lane.b32.xlu0 %v4528, 8
        %v4620 = vpop.permute.xlu0 %4619
        %4621 = vrot.lane.b32.xlu0 %v4529, 8
        %v4622 = vpop.permute.xlu0 %4621
        %4623 = vrot.lane.b32.xlu0 %v4530, 8
        %v4624 = vpop.permute.xlu0 %4623
        %4625 = vrot.lane.b32.xlu0 %v4531, 8
        %v4626 = vpop.permute.xlu0 %4625
        %4627 = vrot.lane.b32.xlu0 %v4532, 8
        %v4628 = vpop.permute.xlu0 %4627
        %vm4661 = vcmask 97344
        %4662 = vst.msk [vmem:[%s298] sm:$0xff] %vm4661, %v4566
        %4663 = vst.msk [vmem:[%s298 + $0x8] sm:$0xff] %vm4661, %v4568
        %4664 = vst.msk [vmem:[%s298 + $0x10] sm:$0xff] %vm4661, %v4570
        %4665 = vst.msk [vmem:[%s298 + $0x18] sm:$0xff] %vm4661, %v4572
        %4666 = vst.msk [vmem:[%s298 + $0x20] sm:$0xff] %vm4661, %v4574
        %4667 = vst.msk [vmem:[%s298 + $0x28] sm:$0xff] %vm4661, %v4576
        %4668 = vst.msk [vmem:[%s298 + $0x30] sm:$0xff] %vm4661, %v4578
        %4669 = vst.msk [vmem:[%s298 + $0x38] sm:$0xff] %vm4661, %v4580
        %4670 = vst.msk [vmem:[%s298 + $0x40] sm:$0xff] %vm4661, %v4582
        %4671 = vst.msk [vmem:[%s298 + $0x48] sm:$0xff] %vm4661, %v4584
        %4672 = vst.msk [vmem:[%s298 + $0x50] sm:$0xff] %vm4661, %v4586
        %4673 = vst.msk [vmem:[%s298 + $0x58] sm:$0xff] %vm4661, %v4588
        %4674 = vst.msk [vmem:[%s298 + $0x60] sm:$0xff] %vm4661, %v4590
        %4675 = vst.msk [vmem:[%s298 + $0x68] sm:$0xff] %vm4661, %v4592
        %4676 = vst.msk [vmem:[%s298 + $0x70] sm:$0xff] %vm4661, %v4594
        %4677 = vst.msk [vmem:[%s298 + $0x78] sm:$0xff] %vm4661, %v4596
        %4678 = vst.msk [vmem:[%s298 + $0x80] sm:$0xff] %vm4661, %v4598
        %4679 = vst.msk [vmem:[%s298 + $0x88] sm:$0xff] %vm4661, %v4600
        %4680 = vst.msk [vmem:[%s298 + $0x90] sm:$0xff] %vm4661, %v4602
        %4681 = vst.msk [vmem:[%s298 + $0x98] sm:$0xff] %vm4661, %v4604
        %4682 = vst.msk [vmem:[%s298 + $0xa0] sm:$0xff] %vm4661, %v4606
        %4683 = vst.msk [vmem:[%s298 + $0xa8] sm:$0xff] %vm4661, %v4608
        %4684 = vst.msk [vmem:[%s298 + $0xb0] sm:$0xff] %vm4661, %v4610
        %4685 = vst.msk [vmem:[%s298 + $0xb8] sm:$0xff] %vm4661, %v4612
        %4686 = vst.msk [vmem:[%s298 + $0xc0] sm:$0xff] %vm4661, %v4614
        %4687 = vst.msk [vmem:[%s298 + $0xc8] sm:$0xff] %vm4661, %v4616
        %4688 = vst.msk [vmem:[%s298 + $0xd0] sm:$0xff] %vm4661, %v4618
        %4689 = vst.msk [vmem:[%s298 + $0xd8] sm:$0xff] %vm4661, %v4620
        %4690 = vst.msk [vmem:[%s298 + $0xe0] sm:$0xff] %vm4661, %v4622
        %4691 = vst.msk [vmem:[%s298 + $0xe8] sm:$0xff] %vm4661, %v4624
        %4692 = vst.msk [vmem:[%s298 + $0xf0] sm:$0xff] %vm4661, %v4626
        %4693 = vst.msk [vmem:[%s298 + $0xf8] sm:$0xff] %vm4661, %v4628
        %4694 = vst.msk [vmem:[%s325 + $0x3] sm:$0xff] %vm4661, %v4566
        %4695 = vst.msk [vmem:[%s325 + $0xb] sm:$0xff] %vm4661, %v4568
        %4696 = vst.msk [vmem:[%s325 + $0x1b] sm:$0xff] %vm4661, %v4570
        %4697 = vst.msk [vmem:[%s325 + $0x23] sm:$0xff] %vm4661, %v4572
        %4698 = vst.msk [vmem:[%s325 + $0x33] sm:$0xff] %vm4661, %v4574
        %4699 = vst.msk [vmem:[%s325 + $0x3b] sm:$0xff] %vm4661, %v4576
        %4700 = vst.msk [vmem:[%s325 + $0x4b] sm:$0xff] %vm4661, %v4578
        %4701 = vst.msk [vmem:[%s325 + $0x53] sm:$0xff] %vm4661, %v4580
        %4702 = vst.msk [vmem:[%s325 + $0x63] sm:$0xff] %vm4661, %v4582
        %4703 = vst.msk [vmem:[%s325 + $0x6b] sm:$0xff] %vm4661, %v4584
        %4704 = vst.msk [vmem:[%s325 + $0x7b] sm:$0xff] %vm4661, %v4586
        %4705 = vst.msk [vmem:[%s325 + $0x83] sm:$0xff] %vm4661, %v4588
        %4706 = vst.msk [vmem:[%s325 + $0x93] sm:$0xff] %vm4661, %v4590
        %4707 = vst.msk [vmem:[%s325 + $0x9b] sm:$0xff] %vm4661, %v4592
        %4708 = vst.msk [vmem:[%s325 + $0xab] sm:$0xff] %vm4661, %v4594
        %4709 = vst.msk [vmem:[%s325 + $0xb3] sm:$0xff] %vm4661, %v4596
        %4710 = vst.msk [vmem:[%s325 + $0xc3] sm:$0xff] %vm4661, %v4598
        %4711 = vst.msk [vmem:[%s325 + $0xcb] sm:$0xff] %vm4661, %v4600
        %4712 = vst.msk [vmem:[%s325 + $0xdb] sm:$0xff] %vm4661, %v4602
        %4713 = vst.msk [vmem:[%s325 + $0xe3] sm:$0xff] %vm4661, %v4604
        %4714 = vst.msk [vmem:[%s325 + $0xf3] sm:$0xff] %vm4661, %v4606
        %4715 = vst.msk [vmem:[%s325 + $0xfb] sm:$0xff] %vm4661, %v4608
        %4716 = vst.msk [vmem:[%s325 + $0x10b] sm:$0xff] %vm4661, %v4610
        %4717 = vst.msk [vmem:[%s325 + $0x113] sm:$0xff] %vm4661, %v4612
        %4718 = vst.msk [vmem:[%s325 + $0x123] sm:$0xff] %vm4661, %v4614
        %4719 = vst.msk [vmem:[%s325 + $0x12b] sm:$0xff] %vm4661, %v4616
        %4720 = vst.msk [vmem:[%s325 + $0x13b] sm:$0xff] %vm4661, %v4618
        %4721 = vst.msk [vmem:[%s325 + $0x143] sm:$0xff] %vm4661, %v4620
        %4722 = vst.msk [vmem:[%s325 + $0x153] sm:$0xff] %vm4661, %v4622
        %4723 = vst.msk [vmem:[%s325 + $0x15b] sm:$0xff] %vm4661, %v4624
        %4724 = vst.msk [vmem:[%s325 + $0x16b] sm:$0xff] %vm4661, %v4626
        %4725 = vst.msk [vmem:[%s325 + $0x173] sm:$0xff] %vm4661, %v4628
        %s4726 = scalar_lea.vmem [#allocation2], 48
        %v4727 = vld [vmem:[%s4726 + $0x2] sm:$0xff]
        %v4728 = vld [vmem:[%s4726 + $0xa] sm:$0xff]
        %v4729 = vld [vmem:[%s4726 + $0x1a] sm:$0xff]
        %v4730 = vld [vmem:[%s4726 + $0x22] sm:$0xff]
        %v4731 = vld [vmem:[%s4726 + $0x32] sm:$0xff]
        %v4732 = vld [vmem:[%s4726 + $0x3a] sm:$0xff]
        %v4733 = vld [vmem:[%s4726 + $0x4a] sm:$0xff]
        %v4734 = vld [vmem:[%s4726 + $0x52] sm:$0xff]
        %v4735 = vld [vmem:[%s4726 + $0x62] sm:$0xff]
        %v4736 = vld [vmem:[%s4726 + $0x6a] sm:$0xff]
        %v4737 = vld [vmem:[%s4726 + $0x7a] sm:$0xff]
        %v4738 = vld [vmem:[%s4726 + $0x82] sm:$0xff]
        %v4739 = vld [vmem:[%s4726 + $0x92] sm:$0xff]
        %v4740 = vld [vmem:[%s4726 + $0x9a] sm:$0xff]
        %v4741 = vld [vmem:[%s4726 + $0xaa] sm:$0xff]
        %v4742 = vld [vmem:[%s4726 + $0xb2] sm:$0xff]
        %v4743 = vld [vmem:[%s4726 + $0xc2] sm:$0xff]
        %v4744 = vld [vmem:[%s4726 + $0xca] sm:$0xff]
        %v4745 = vld [vmem:[%s4726 + $0xda] sm:$0xff]
        %v4746 = vld [vmem:[%s4726 + $0xe2] sm:$0xff]
        %v4747 = vld [vmem:[%s4726 + $0xf2] sm:$0xff]
        %v4748 = vld [vmem:[%s4726 + $0xfa] sm:$0xff]
        %v4749 = vld [vmem:[%s4726 + $0x10a] sm:$0xff]
        %v4750 = vld [vmem:[%s4726 + $0x112] sm:$0xff]
        %v4751 = vld [vmem:[%s4726 + $0x122] sm:$0xff]
        %v4752 = vld [vmem:[%s4726 + $0x12a] sm:$0xff]
        %v4753 = vld [vmem:[%s4726 + $0x13a] sm:$0xff]
        %v4754 = vld [vmem:[%s4726 + $0x142] sm:$0xff]
        %v4755 = vld [vmem:[%s4726 + $0x152] sm:$0xff]
        %v4756 = vld [vmem:[%s4726 + $0x15a] sm:$0xff]
        %v4757 = vld [vmem:[%s4726 + $0x16a] sm:$0xff]
        %v4758 = vld [vmem:[%s4726 + $0x172] sm:$0xff]
        %v4759 = vld [vmem:[%s4726 + $0x3] sm:$0xff]
        %v4760 = vld [vmem:[%s4726 + $0xb] sm:$0xff]
        %v4761 = vld [vmem:[%s4726 + $0x1b] sm:$0xff]
        %v4762 = vld [vmem:[%s4726 + $0x23] sm:$0xff]
        %v4763 = vld [vmem:[%s4726 + $0x33] sm:$0xff]
        %v4764 = vld [vmem:[%s4726 + $0x3b] sm:$0xff]
        %v4765 = vld [vmem:[%s4726 + $0x4b] sm:$0xff]
        %v4766 = vld [vmem:[%s4726 + $0x53] sm:$0xff]
        %v4767 = vld [vmem:[%s4726 + $0x63] sm:$0xff]
        %v4768 = vld [vmem:[%s4726 + $0x6b] sm:$0xff]
        %v4769 = vld [vmem:[%s4726 + $0x7b] sm:$0xff]
        %v4770 = vld [vmem:[%s4726 + $0x83] sm:$0xff]
        %v4771 = vld [vmem:[%s4726 + $0x93] sm:$0xff]
        %v4772 = vld [vmem:[%s4726 + $0x9b] sm:$0xff]
        %v4773 = vld [vmem:[%s4726 + $0xab] sm:$0xff]
        %v4774 = vld [vmem:[%s4726 + $0xb3] sm:$0xff]
        %v4775 = vld [vmem:[%s4726 + $0xc3] sm:$0xff]
        %v4776 = vld [vmem:[%s4726 + $0xcb] sm:$0xff]
        %v4777 = vld [vmem:[%s4726 + $0xdb] sm:$0xff]
        %v4778 = vld [vmem:[%s4726 + $0xe3] sm:$0xff]
        %v4779 = vld [vmem:[%s4726 + $0xf3] sm:$0xff]
        %v4780 = vld [vmem:[%s4726 + $0xfb] sm:$0xff]
        %v4781 = vld [vmem:[%s4726 + $0x10b] sm:$0xff]
        %v4782 = vld [vmem:[%s4726 + $0x113] sm:$0xff]
        %v4783 = vld [vmem:[%s4726 + $0x123] sm:$0xff]
        %v4784 = vld [vmem:[%s4726 + $0x12b] sm:$0xff]
        %v4785 = vld [vmem:[%s4726 + $0x13b] sm:$0xff]
        %v4786 = vld [vmem:[%s4726 + $0x143] sm:$0xff]
        %v4787 = vld [vmem:[%s4726 + $0x153] sm:$0xff]
        %v4788 = vld [vmem:[%s4726 + $0x15b] sm:$0xff]
        %v4789 = vld [vmem:[%s4726 + $0x16b] sm:$0xff]
        %v4790 = vld [vmem:[%s4726 + $0x173] sm:$0xff]
        %v4791 = vld [vmem:[%s4726 + $0x4] sm:$0xff]
        %v4792 = vld [vmem:[%s4726 + $0xc] sm:$0xff]
        %v4793 = vld [vmem:[%s4726 + $0x1c] sm:$0xff]
        %v4794 = vld [vmem:[%s4726 + $0x24] sm:$0xff]
        %v4795 = vld [vmem:[%s4726 + $0x34] sm:$0xff]
        %v4796 = vld [vmem:[%s4726 + $0x3c] sm:$0xff]
        %v4797 = vld [vmem:[%s4726 + $0x4c] sm:$0xff]
        %v4798 = vld [vmem:[%s4726 + $0x54] sm:$0xff]
        %v4799 = vld [vmem:[%s4726 + $0x64] sm:$0xff]
        %v4800 = vld [vmem:[%s4726 + $0x6c] sm:$0xff]
        %v4801 = vld [vmem:[%s4726 + $0x7c] sm:$0xff]
        %v4802 = vld [vmem:[%s4726 + $0x84] sm:$0xff]
        %v4803 = vld [vmem:[%s4726 + $0x94] sm:$0xff]
        %v4804 = vld [vmem:[%s4726 + $0x9c] sm:$0xff]
        %v4805 = vld [vmem:[%s4726 + $0xac] sm:$0xff]
        %v4806 = vld [vmem:[%s4726 + $0xb4] sm:$0xff]
        %v4807 = vld [vmem:[%s4726 + $0xc4] sm:$0xff]
        %v4808 = vld [vmem:[%s4726 + $0xcc] sm:$0xff]
        %v4809 = vld [vmem:[%s4726 + $0xdc] sm:$0xff]
        %v4810 = vld [vmem:[%s4726 + $0xe4] sm:$0xff]
        %v4811 = vld [vmem:[%s4726 + $0xf4] sm:$0xff]
        %v4812 = vld [vmem:[%s4726 + $0xfc] sm:$0xff]
        %v4813 = vld [vmem:[%s4726 + $0x10c] sm:$0xff]
        %v4814 = vld [vmem:[%s4726 + $0x114] sm:$0xff]
        %v4815 = vld [vmem:[%s4726 + $0x124] sm:$0xff]
        %v4816 = vld [vmem:[%s4726 + $0x12c] sm:$0xff]
        %v4817 = vld [vmem:[%s4726 + $0x13c] sm:$0xff]
        %v4818 = vld [vmem:[%s4726 + $0x144] sm:$0xff]
        %v4819 = vld [vmem:[%s4726 + $0x154] sm:$0xff]
        %v4820 = vld [vmem:[%s4726 + $0x15c] sm:$0xff]
        %v4821 = vld [vmem:[%s4726 + $0x16c] sm:$0xff]
        %v4822 = vld [vmem:[%s4726 + $0x174] sm:$0xff]
        %v4823 = vld [vmem:[%s325 + $0x2] sm:$0xff]
        %v4824 = vld [vmem:[%s325 + $0xa] sm:$0xff]
        %v4825 = vld [vmem:[%s325 + $0x1a] sm:$0xff]
        %v4826 = vld [vmem:[%s325 + $0x22] sm:$0xff]
        %v4827 = vld [vmem:[%s325 + $0x32] sm:$0xff]
        %v4828 = vld [vmem:[%s325 + $0x3a] sm:$0xff]
        %v4829 = vld [vmem:[%s325 + $0x4a] sm:$0xff]
        %v4830 = vld [vmem:[%s325 + $0x52] sm:$0xff]
        %v4831 = vld [vmem:[%s325 + $0x62] sm:$0xff]
        %v4832 = vld [vmem:[%s325 + $0x6a] sm:$0xff]
        %v4833 = vld [vmem:[%s325 + $0x7a] sm:$0xff]
        %v4834 = vld [vmem:[%s325 + $0x82] sm:$0xff]
        %v4835 = vld [vmem:[%s325 + $0x92] sm:$0xff]
        %v4836 = vld [vmem:[%s325 + $0x9a] sm:$0xff]
        %v4837 = vld [vmem:[%s325 + $0xaa] sm:$0xff]
        %v4838 = vld [vmem:[%s325 + $0xb2] sm:$0xff]
        %v4839 = vld [vmem:[%s325 + $0xc2] sm:$0xff]
        %v4840 = vld [vmem:[%s325 + $0xca] sm:$0xff]
        %v4841 = vld [vmem:[%s325 + $0xda] sm:$0xff]
        %v4842 = vld [vmem:[%s325 + $0xe2] sm:$0xff]
        %v4843 = vld [vmem:[%s325 + $0xf2] sm:$0xff]
        %v4844 = vld [vmem:[%s325 + $0xfa] sm:$0xff]
        %v4845 = vld [vmem:[%s325 + $0x10a] sm:$0xff]
        %v4846 = vld [vmem:[%s325 + $0x112] sm:$0xff]
        %v4847 = vld [vmem:[%s325 + $0x122] sm:$0xff]
        %v4848 = vld [vmem:[%s325 + $0x12a] sm:$0xff]
        %v4849 = vld [vmem:[%s325 + $0x13a] sm:$0xff]
        %v4850 = vld [vmem:[%s325 + $0x142] sm:$0xff]
        %v4851 = vld [vmem:[%s325 + $0x152] sm:$0xff]
        %v4852 = vld [vmem:[%s325 + $0x15a] sm:$0xff]
        %v4853 = vld [vmem:[%s325 + $0x16a] sm:$0xff]
        %v4854 = vld [vmem:[%s325 + $0x172] sm:$0xff]
        %v4855 = vld [vmem:[%s325 + $0x3] sm:$0xff]
        %v4856 = vld [vmem:[%s325 + $0xb] sm:$0xff]
        %v4857 = vld [vmem:[%s325 + $0x1b] sm:$0xff]
        %v4858 = vld [vmem:[%s325 + $0x23] sm:$0xff]
        %v4859 = vld [vmem:[%s325 + $0x33] sm:$0xff]
        %v4860 = vld [vmem:[%s325 + $0x3b] sm:$0xff]
        %v4861 = vld [vmem:[%s325 + $0x4b] sm:$0xff]
        %v4862 = vld [vmem:[%s325 + $0x53] sm:$0xff]
        %v4863 = vld [vmem:[%s325 + $0x63] sm:$0xff]
        %v4864 = vld [vmem:[%s325 + $0x6b] sm:$0xff]
        %v4865 = vld [vmem:[%s325 + $0x7b] sm:$0xff]
        %v4866 = vld [vmem:[%s325 + $0x83] sm:$0xff]
        %v4867 = vld [vmem:[%s325 + $0x93] sm:$0xff]
        %v4868 = vld [vmem:[%s325 + $0x9b] sm:$0xff]
        %v4869 = vld [vmem:[%s325 + $0xab] sm:$0xff]
        %v4870 = vld [vmem:[%s325 + $0xb3] sm:$0xff]
        %v4871 = vld [vmem:[%s325 + $0xc3] sm:$0xff]
        %v4872 = vld [vmem:[%s325 + $0xcb] sm:$0xff]
        %v4873 = vld [vmem:[%s325 + $0xdb] sm:$0xff]
        %v4874 = vld [vmem:[%s325 + $0xe3] sm:$0xff]
        %v4875 = vld [vmem:[%s325 + $0xf3] sm:$0xff]
        %v4876 = vld [vmem:[%s325 + $0xfb] sm:$0xff]
        %v4877 = vld [vmem:[%s325 + $0x10b] sm:$0xff]
        %v4878 = vld [vmem:[%s325 + $0x113] sm:$0xff]
        %v4879 = vld [vmem:[%s325 + $0x123] sm:$0xff]
        %v4880 = vld [vmem:[%s325 + $0x12b] sm:$0xff]
        %v4881 = vld [vmem:[%s325 + $0x13b] sm:$0xff]
        %v4882 = vld [vmem:[%s325 + $0x143] sm:$0xff]
        %v4883 = vld [vmem:[%s325 + $0x153] sm:$0xff]
        %v4884 = vld [vmem:[%s325 + $0x15b] sm:$0xff]
        %v4885 = vld [vmem:[%s325 + $0x16b] sm:$0xff]
        %v4886 = vld [vmem:[%s325 + $0x173] sm:$0xff]
        %v4887 = vld [vmem:[%s325 + $0x4] sm:$0xff]
        %v4888 = vld [vmem:[%s325 + $0xc] sm:$0xff]
        %v4889 = vld [vmem:[%s325 + $0x1c] sm:$0xff]
        %v4890 = vld [vmem:[%s325 + $0x24] sm:$0xff]
        %v4891 = vld [vmem:[%s325 + $0x34] sm:$0xff]
        %v4892 = vld [vmem:[%s325 + $0x3c] sm:$0xff]
        %v4893 = vld [vmem:[%s325 + $0x4c] sm:$0xff]
        %v4894 = vld [vmem:[%s325 + $0x54] sm:$0xff]
        %v4895 = vld [vmem:[%s325 + $0x64] sm:$0xff]
        %v4896 = vld [vmem:[%s325 + $0x6c] sm:$0xff]
        %v4897 = vld [vmem:[%s325 + $0x7c] sm:$0xff]
        %v4898 = vld [vmem:[%s325 + $0x84] sm:$0xff]
        %v4899 = vld [vmem:[%s325 + $0x94] sm:$0xff]
        %v4900 = vld [vmem:[%s325 + $0x9c] sm:$0xff]
        %v4901 = vld [vmem:[%s325 + $0xac] sm:$0xff]
        %v4902 = vld [vmem:[%s325 + $0xb4] sm:$0xff]
        %v4903 = vld [vmem:[%s325 + $0xc4] sm:$0xff]
        %v4904 = vld [vmem:[%s325 + $0xcc] sm:$0xff]
        %v4905 = vld [vmem:[%s325 + $0xdc] sm:$0xff]
        %v4906 = vld [vmem:[%s325 + $0xe4] sm:$0xff]
        %v4907 = vld [vmem:[%s325 + $0xf4] sm:$0xff]
        %v4908 = vld [vmem:[%s325 + $0xfc] sm:$0xff]
        %v4909 = vld [vmem:[%s325 + $0x10c] sm:$0xff]
        %v4910 = vld [vmem:[%s325 + $0x114] sm:$0xff]
        %v4911 = vld [vmem:[%s325 + $0x124] sm:$0xff]
        %v4912 = vld [vmem:[%s325 + $0x12c] sm:$0xff]
        %v4913 = vld [vmem:[%s325 + $0x13c] sm:$0xff]
        %v4914 = vld [vmem:[%s325 + $0x144] sm:$0xff]
        %v4915 = vld [vmem:[%s325 + $0x154] sm:$0xff]
        %v4916 = vld [vmem:[%s325 + $0x15c] sm:$0xff]
        %v4917 = vld [vmem:[%s325 + $0x16c] sm:$0xff]
        %v4918 = vld [vmem:[%s325 + $0x174] sm:$0xff]
        %s4919 = scalar_lea.vmem [#allocation2], 96
        %v4920 = vld [vmem:[%s4919 + $0x2] sm:$0xff]
        %v4921 = vld [vmem:[%s4919 + $0xa] sm:$0xff]
        %v4922 = vld [vmem:[%s4919 + $0x1a] sm:$0xff]
        %v4923 = vld [vmem:[%s4919 + $0x22] sm:$0xff]
        %v4924 = vld [vmem:[%s4919 + $0x32] sm:$0xff]
        %v4925 = vld [vmem:[%s4919 + $0x3a] sm:$0xff]
        %v4926 = vld [vmem:[%s4919 + $0x4a] sm:$0xff]
        %v4927 = vld [vmem:[%s4919 + $0x52] sm:$0xff]
        %v4928 = vld [vmem:[%s4919 + $0x62] sm:$0xff]
        %v4929 = vld [vmem:[%s4919 + $0x6a] sm:$0xff]
        %v4930 = vld [vmem:[%s4919 + $0x7a] sm:$0xff]
        %v4931 = vld [vmem:[%s4919 + $0x82] sm:$0xff]
        %v4932 = vld [vmem:[%s4919 + $0x92] sm:$0xff]
        %v4933 = vld [vmem:[%s4919 + $0x9a] sm:$0xff]
        %v4934 = vld [vmem:[%s4919 + $0xaa] sm:$0xff]
        %v4935 = vld [vmem:[%s4919 + $0xb2] sm:$0xff]
        %v4936 = vld [vmem:[%s4919 + $0xc2] sm:$0xff]
        %v4937 = vld [vmem:[%s4919 + $0xca] sm:$0xff]
        %v4938 = vld [vmem:[%s4919 + $0xda] sm:$0xff]
        %v4939 = vld [vmem:[%s4919 + $0xe2] sm:$0xff]
        %v4940 = vld [vmem:[%s4919 + $0xf2] sm:$0xff]
        %v4941 = vld [vmem:[%s4919 + $0xfa] sm:$0xff]
        %v4942 = vld [vmem:[%s4919 + $0x10a] sm:$0xff]
        %v4943 = vld [vmem:[%s4919 + $0x112] sm:$0xff]
        %v4944 = vld [vmem:[%s4919 + $0x122] sm:$0xff]
        %v4945 = vld [vmem:[%s4919 + $0x12a] sm:$0xff]
        %v4946 = vld [vmem:[%s4919 + $0x13a] sm:$0xff]
        %v4947 = vld [vmem:[%s4919 + $0x142] sm:$0xff]
        %v4948 = vld [vmem:[%s4919 + $0x152] sm:$0xff]
        %v4949 = vld [vmem:[%s4919 + $0x15a] sm:$0xff]
        %v4950 = vld [vmem:[%s4919 + $0x16a] sm:$0xff]
        %v4951 = vld [vmem:[%s4919 + $0x172] sm:$0xff]
        %v4952 = vld [vmem:[%s4919 + $0x3] sm:$0xff]
        %v4953 = vld [vmem:[%s4919 + $0xb] sm:$0xff]
        %v4954 = vld [vmem:[%s4919 + $0x1b] sm:$0xff]
        %v4955 = vld [vmem:[%s4919 + $0x23] sm:$0xff]
        %v4956 = vld [vmem:[%s4919 + $0x33] sm:$0xff]
        %v4957 = vld [vmem:[%s4919 + $0x3b] sm:$0xff]
        %v4958 = vld [vmem:[%s4919 + $0x4b] sm:$0xff]
        %v4959 = vld [vmem:[%s4919 + $0x53] sm:$0xff]
        %v4960 = vld [vmem:[%s4919 + $0x63] sm:$0xff]
        %v4961 = vld [vmem:[%s4919 + $0x6b] sm:$0xff]
        %v4962 = vld [vmem:[%s4919 + $0x7b] sm:$0xff]
        %v4963 = vld [vmem:[%s4919 + $0x83] sm:$0xff]
        %v4964 = vld [vmem:[%s4919 + $0x93] sm:$0xff]
        %v4965 = vld [vmem:[%s4919 + $0x9b] sm:$0xff]
        %v4966 = vld [vmem:[%s4919 + $0xab] sm:$0xff]
        %v4967 = vld [vmem:[%s4919 + $0xb3] sm:$0xff]
        %v4968 = vld [vmem:[%s4919 + $0xc3] sm:$0xff]
        %v4969 = vld [vmem:[%s4919 + $0xcb] sm:$0xff]
        %v4970 = vld [vmem:[%s4919 + $0xdb] sm:$0xff]
        %v4971 = vld [vmem:[%s4919 + $0xe3] sm:$0xff]
        %v4972 = vld [vmem:[%s4919 + $0xf3] sm:$0xff]
        %v4973 = vld [vmem:[%s4919 + $0xfb] sm:$0xff]
        %v4974 = vld [vmem:[%s4919 + $0x10b] sm:$0xff]
        %v4975 = vld [vmem:[%s4919 + $0x113] sm:$0xff]
        %v4976 = vld [vmem:[%s4919 + $0x123] sm:$0xff]
        %v4977 = vld [vmem:[%s4919 + $0x12b] sm:$0xff]
        %v4978 = vld [vmem:[%s4919 + $0x13b] sm:$0xff]
        %v4979 = vld [vmem:[%s4919 + $0x143] sm:$0xff]
        %v4980 = vld [vmem:[%s4919 + $0x153] sm:$0xff]
        %v4981 = vld [vmem:[%s4919 + $0x15b] sm:$0xff]
        %v4982 = vld [vmem:[%s4919 + $0x16b] sm:$0xff]
        %v4983 = vld [vmem:[%s4919 + $0x173] sm:$0xff]
        %v4984 = vld [vmem:[%s4919 + $0x4] sm:$0xff]
        %v4985 = vld [vmem:[%s4919 + $0xc] sm:$0xff]
        %v4986 = vld [vmem:[%s4919 + $0x1c] sm:$0xff]
        %v4987 = vld [vmem:[%s4919 + $0x24] sm:$0xff]
        %v4988 = vld [vmem:[%s4919 + $0x34] sm:$0xff]
        %v4989 = vld [vmem:[%s4919 + $0x3c] sm:$0xff]
        %v4990 = vld [vmem:[%s4919 + $0x4c] sm:$0xff]
        %v4991 = vld [vmem:[%s4919 + $0x54] sm:$0xff]
        %v4992 = vld [vmem:[%s4919 + $0x64] sm:$0xff]
        %v4993 = vld [vmem:[%s4919 + $0x6c] sm:$0xff]
        %v4994 = vld [vmem:[%s4919 + $0x7c] sm:$0xff]
        %v4995 = vld [vmem:[%s4919 + $0x84] sm:$0xff]
        %v4996 = vld [vmem:[%s4919 + $0x94] sm:$0xff]
        %v4997 = vld [vmem:[%s4919 + $0x9c] sm:$0xff]
        %v4998 = vld [vmem:[%s4919 + $0xac] sm:$0xff]
        %v4999 = vld [vmem:[%s4919 + $0xb4] sm:$0xff]
        %v5000 = vld [vmem:[%s4919 + $0xc4] sm:$0xff]
        %v5001 = vld [vmem:[%s4919 + $0xcc] sm:$0xff]
        %v5002 = vld [vmem:[%s4919 + $0xdc] sm:$0xff]
        %v5003 = vld [vmem:[%s4919 + $0xe4] sm:$0xff]
        %v5004 = vld [vmem:[%s4919 + $0xf4] sm:$0xff]
        %v5005 = vld [vmem:[%s4919 + $0xfc] sm:$0xff]
        %v5006 = vld [vmem:[%s4919 + $0x10c] sm:$0xff]
        %v5007 = vld [vmem:[%s4919 + $0x114] sm:$0xff]
        %v5008 = vld [vmem:[%s4919 + $0x124] sm:$0xff]
        %v5009 = vld [vmem:[%s4919 + $0x12c] sm:$0xff]
        %v5010 = vld [vmem:[%s4919 + $0x13c] sm:$0xff]
        %v5011 = vld [vmem:[%s4919 + $0x144] sm:$0xff]
        %v5012 = vld [vmem:[%s4919 + $0x154] sm:$0xff]
        %v5013 = vld [vmem:[%s4919 + $0x15c] sm:$0xff]
        %v5014 = vld [vmem:[%s4919 + $0x16c] sm:$0xff]
        %v5015 = vld [vmem:[%s4919 + $0x174] sm:$0xff]
        %5048 = vrot.lane.b32.xlu0 %v4759, 12
        %v5049 = vpop.permute.xlu0 %5048
        %5050 = vrot.lane.b32.xlu0 %v4760, 12
        %v5051 = vpop.permute.xlu0 %5050
        %5052 = vrot.lane.b32.xlu0 %v4761, 12
        %v5053 = vpop.permute.xlu0 %5052
        %5054 = vrot.lane.b32.xlu0 %v4762, 12
        %v5055 = vpop.permute.xlu0 %5054
        %5056 = vrot.lane.b32.xlu0 %v4763, 12
        %v5057 = vpop.permute.xlu0 %5056
        %5058 = vrot.lane.b32.xlu0 %v4764, 12
        %v5059 = vpop.permute.xlu0 %5058
        %5060 = vrot.lane.b32.xlu0 %v4765, 12
        %v5061 = vpop.permute.xlu0 %5060
        %5062 = vrot.lane.b32.xlu0 %v4766, 12
        %v5063 = vpop.permute.xlu0 %5062
        %5064 = vrot.lane.b32.xlu0 %v4767, 12
        %v5065 = vpop.permute.xlu0 %5064
        %5066 = vrot.lane.b32.xlu0 %v4768, 12
        %v5067 = vpop.permute.xlu0 %5066
        %5068 = vrot.lane.b32.xlu0 %v4769, 12
        %v5069 = vpop.permute.xlu0 %5068
        %5070 = vrot.lane.b32.xlu0 %v4770, 12
        %v5071 = vpop.permute.xlu0 %5070
        %5072 = vrot.lane.b32.xlu0 %v4771, 12
        %v5073 = vpop.permute.xlu0 %5072
        %5074 = vrot.lane.b32.xlu0 %v4772, 12
        %v5075 = vpop.permute.xlu0 %5074
        %5076 = vrot.lane.b32.xlu0 %v4773, 12
        %v5077 = vpop.permute.xlu0 %5076
        %5078 = vrot.lane.b32.xlu0 %v4774, 12
        %v5079 = vpop.permute.xlu0 %5078
        %5080 = vrot.lane.b32.xlu0 %v4775, 12
        %v5081 = vpop.permute.xlu0 %5080
        %5082 = vrot.lane.b32.xlu0 %v4776, 12
        %v5083 = vpop.permute.xlu0 %5082
        %5084 = vrot.lane.b32.xlu0 %v4777, 12
        %v5085 = vpop.permute.xlu0 %5084
        %5086 = vrot.lane.b32.xlu0 %v4778, 12
        %v5087 = vpop.permute.xlu0 %5086
        %5088 = vrot.lane.b32.xlu0 %v4779, 12
        %v5089 = vpop.permute.xlu0 %5088
        %5090 = vrot.lane.b32.xlu0 %v4780, 12
        %v5091 = vpop.permute.xlu0 %5090
        %5092 = vrot.lane.b32.xlu0 %v4781, 12
        %v5093 = vpop.permute.xlu0 %5092
        %5094 = vrot.lane.b32.xlu0 %v4782, 12
        %v5095 = vpop.permute.xlu0 %5094
        %5096 = vrot.lane.b32.xlu0 %v4783, 12
        %v5097 = vpop.permute.xlu0 %5096
        %5098 = vrot.lane.b32.xlu0 %v4784, 12
        %v5099 = vpop.permute.xlu0 %5098
        %5100 = vrot.lane.b32.xlu0 %v4785, 12
        %v5101 = vpop.permute.xlu0 %5100
        %5102 = vrot.lane.b32.xlu0 %v4786, 12
        %v5103 = vpop.permute.xlu0 %5102
        %5104 = vrot.lane.b32.xlu0 %v4787, 12
        %v5105 = vpop.permute.xlu0 %5104
        %5106 = vrot.lane.b32.xlu0 %v4788, 12
        %v5107 = vpop.permute.xlu0 %5106
        %5108 = vrot.lane.b32.xlu0 %v4789, 12
        %v5109 = vpop.permute.xlu0 %5108
        %5110 = vrot.lane.b32.xlu0 %v4790, 12
        %v5111 = vpop.permute.xlu0 %5110
        %5176 = vrot.lane.b32.xlu0 %v4791, 24
        %v5177 = vpop.permute.xlu0 %5176
        %5178 = vrot.lane.b32.xlu0 %v4792, 24
        %v5179 = vpop.permute.xlu0 %5178
        %5180 = vrot.lane.b32.xlu0 %v4793, 24
        %v5181 = vpop.permute.xlu0 %5180
        %5182 = vrot.lane.b32.xlu0 %v4794, 24
        %v5183 = vpop.permute.xlu0 %5182
        %5184 = vrot.lane.b32.xlu0 %v4795, 24
        %v5185 = vpop.permute.xlu0 %5184
        %5186 = vrot.lane.b32.xlu0 %v4796, 24
        %v5187 = vpop.permute.xlu0 %5186
        %5188 = vrot.lane.b32.xlu0 %v4797, 24
        %v5189 = vpop.permute.xlu0 %5188
        %5190 = vrot.lane.b32.xlu0 %v4798, 24
        %v5191 = vpop.permute.xlu0 %5190
        %5192 = vrot.lane.b32.xlu0 %v4799, 24
        %v5193 = vpop.permute.xlu0 %5192
        %5194 = vrot.lane.b32.xlu0 %v4800, 24
        %v5195 = vpop.permute.xlu0 %5194
        %5196 = vrot.lane.b32.xlu0 %v4801, 24
        %v5197 = vpop.permute.xlu0 %5196
        %5198 = vrot.lane.b32.xlu0 %v4802, 24
        %v5199 = vpop.permute.xlu0 %5198
        %5200 = vrot.lane.b32.xlu0 %v4803, 24
        %v5201 = vpop.permute.xlu0 %5200
        %5202 = vrot.lane.b32.xlu0 %v4804, 24
        %v5203 = vpop.permute.xlu0 %5202
        %5204 = vrot.lane.b32.xlu0 %v4805, 24
        %v5205 = vpop.permute.xlu0 %5204
        %5206 = vrot.lane.b32.xlu0 %v4806, 24
        %v5207 = vpop.permute.xlu0 %5206
        %5208 = vrot.lane.b32.xlu0 %v4807, 24
        %v5209 = vpop.permute.xlu0 %5208
        %5210 = vrot.lane.b32.xlu0 %v4808, 24
        %v5211 = vpop.permute.xlu0 %5210
        %5212 = vrot.lane.b32.xlu0 %v4809, 24
        %v5213 = vpop.permute.xlu0 %5212
        %5214 = vrot.lane.b32.xlu0 %v4810, 24
        %v5215 = vpop.permute.xlu0 %5214
        %5216 = vrot.lane.b32.xlu0 %v4811, 24
        %v5217 = vpop.permute.xlu0 %5216
        %5218 = vrot.lane.b32.xlu0 %v4812, 24
        %v5219 = vpop.permute.xlu0 %5218
        %5220 = vrot.lane.b32.xlu0 %v4813, 24
        %v5221 = vpop.permute.xlu0 %5220
        %5222 = vrot.lane.b32.xlu0 %v4814, 24
        %v5223 = vpop.permute.xlu0 %5222
        %5224 = vrot.lane.b32.xlu0 %v4815, 24
        %v5225 = vpop.permute.xlu0 %5224
        %5226 = vrot.lane.b32.xlu0 %v4816, 24
        %v5227 = vpop.permute.xlu0 %5226
        %5228 = vrot.lane.b32.xlu0 %v4817, 24
        %v5229 = vpop.permute.xlu0 %5228
        %5230 = vrot.lane.b32.xlu0 %v4818, 24
        %v5231 = vpop.permute.xlu0 %5230
        %5232 = vrot.lane.b32.xlu0 %v4819, 24
        %v5233 = vpop.permute.xlu0 %5232
        %5234 = vrot.lane.b32.xlu0 %v4820, 24
        %v5235 = vpop.permute.xlu0 %5234
        %5236 = vrot.lane.b32.xlu0 %v4821, 24
        %v5237 = vpop.permute.xlu0 %5236
        %5238 = vrot.lane.b32.xlu0 %v4822, 24
        %v5239 = vpop.permute.xlu0 %5238
        %5304 = vrot.lane.b32.xlu0 %v4823, 36
        %v5305 = vpop.permute.xlu0 %5304
        %5306 = vrot.lane.b32.xlu0 %v4824, 36
        %v5307 = vpop.permute.xlu0 %5306
        %5308 = vrot.lane.b32.xlu0 %v4825, 36
        %v5309 = vpop.permute.xlu0 %5308
        %5310 = vrot.lane.b32.xlu0 %v4826, 36
        %v5311 = vpop.permute.xlu0 %5310
        %5312 = vrot.lane.b32.xlu0 %v4827, 36
        %v5313 = vpop.permute.xlu0 %5312
        %5314 = vrot.lane.b32.xlu0 %v4828, 36
        %v5315 = vpop.permute.xlu0 %5314
        %5316 = vrot.lane.b32.xlu0 %v4829, 36
        %v5317 = vpop.permute.xlu0 %5316
        %5318 = vrot.lane.b32.xlu0 %v4830, 36
        %v5319 = vpop.permute.xlu0 %5318
        %5320 = vrot.lane.b32.xlu0 %v4831, 36
        %v5321 = vpop.permute.xlu0 %5320
        %5322 = vrot.lane.b32.xlu0 %v4832, 36
        %v5323 = vpop.permute.xlu0 %5322
        %5324 = vrot.lane.b32.xlu0 %v4833, 36
        %v5325 = vpop.permute.xlu0 %5324
        %5326 = vrot.lane.b32.xlu0 %v4834, 36
        %v5327 = vpop.permute.xlu0 %5326
        %5328 = vrot.lane.b32.xlu0 %v4835, 36
        %v5329 = vpop.permute.xlu0 %5328
        %5330 = vrot.lane.b32.xlu0 %v4836, 36
        %v5331 = vpop.permute.xlu0 %5330
        %5332 = vrot.lane.b32.xlu0 %v4837, 36
        %v5333 = vpop.permute.xlu0 %5332
        %5334 = vrot.lane.b32.xlu0 %v4838, 36
        %v5335 = vpop.permute.xlu0 %5334
        %5336 = vrot.lane.b32.xlu0 %v4839, 36
        %v5337 = vpop.permute.xlu0 %5336
        %5338 = vrot.lane.b32.xlu0 %v4840, 36
        %v5339 = vpop.permute.xlu0 %5338
        %5340 = vrot.lane.b32.xlu0 %v4841, 36
        %v5341 = vpop.permute.xlu0 %5340
        %5342 = vrot.lane.b32.xlu0 %v4842, 36
        %v5343 = vpop.permute.xlu0 %5342
        %5344 = vrot.lane.b32.xlu0 %v4843, 36
        %v5345 = vpop.permute.xlu0 %5344
        %5346 = vrot.lane.b32.xlu0 %v4844, 36
        %v5347 = vpop.permute.xlu0 %5346
        %5348 = vrot.lane.b32.xlu0 %v4845, 36
        %v5349 = vpop.permute.xlu0 %5348
        %5350 = vrot.lane.b32.xlu0 %v4846, 36
        %v5351 = vpop.permute.xlu0 %5350
        %5352 = vrot.lane.b32.xlu0 %v4847, 36
        %v5353 = vpop.permute.xlu0 %5352
        %5354 = vrot.lane.b32.xlu0 %v4848, 36
        %v5355 = vpop.permute.xlu0 %5354
        %5356 = vrot.lane.b32.xlu0 %v4849, 36
        %v5357 = vpop.permute.xlu0 %5356
        %5358 = vrot.lane.b32.xlu0 %v4850, 36
        %v5359 = vpop.permute.xlu0 %5358
        %5360 = vrot.lane.b32.xlu0 %v4851, 36
        %v5361 = vpop.permute.xlu0 %5360
        %5362 = vrot.lane.b32.xlu0 %v4852, 36
        %v5363 = vpop.permute.xlu0 %5362
        %5364 = vrot.lane.b32.xlu0 %v4853, 36
        %v5365 = vpop.permute.xlu0 %5364
        %5366 = vrot.lane.b32.xlu0 %v4854, 36
        %v5367 = vpop.permute.xlu0 %5366
        %5432 = vrot.lane.b32.xlu0 %v4855, 48
        %v5433 = vpop.permute.xlu0 %5432
        %5434 = vrot.lane.b32.xlu0 %v4856, 48
        %v5435 = vpop.permute.xlu0 %5434
        %5436 = vrot.lane.b32.xlu0 %v4857, 48
        %v5437 = vpop.permute.xlu0 %5436
        %5438 = vrot.lane.b32.xlu0 %v4858, 48
        %v5439 = vpop.permute.xlu0 %5438
        %5440 = vrot.lane.b32.xlu0 %v4859, 48
        %v5441 = vpop.permute.xlu0 %5440
        %5442 = vrot.lane.b32.xlu0 %v4860, 48
        %v5443 = vpop.permute.xlu0 %5442
        %5444 = vrot.lane.b32.xlu0 %v4861, 48
        %v5445 = vpop.permute.xlu0 %5444
        %5446 = vrot.lane.b32.xlu0 %v4862, 48
        %v5447 = vpop.permute.xlu0 %5446
        %5448 = vrot.lane.b32.xlu0 %v4863, 48
        %v5449 = vpop.permute.xlu0 %5448
        %5450 = vrot.lane.b32.xlu0 %v4864, 48
        %v5451 = vpop.permute.xlu0 %5450
        %5452 = vrot.lane.b32.xlu0 %v4865, 48
        %v5453 = vpop.permute.xlu0 %5452
        %5454 = vrot.lane.b32.xlu0 %v4866, 48
        %v5455 = vpop.permute.xlu0 %5454
        %5456 = vrot.lane.b32.xlu0 %v4867, 48
        %v5457 = vpop.permute.xlu0 %5456
        %5458 = vrot.lane.b32.xlu0 %v4868, 48
        %v5459 = vpop.permute.xlu0 %5458
        %5460 = vrot.lane.b32.xlu0 %v4869, 48
        %v5461 = vpop.permute.xlu0 %5460
        %5462 = vrot.lane.b32.xlu0 %v4870, 48
        %v5463 = vpop.permute.xlu0 %5462
        %5464 = vrot.lane.b32.xlu0 %v4871, 48
        %v5465 = vpop.permute.xlu0 %5464
        %5466 = vrot.lane.b32.xlu0 %v4872, 48
        %v5467 = vpop.permute.xlu0 %5466
        %5468 = vrot.lane.b32.xlu0 %v4873, 48
        %v5469 = vpop.permute.xlu0 %5468
        %5470 = vrot.lane.b32.xlu0 %v4874, 48
        %v5471 = vpop.permute.xlu0 %5470
        %5472 = vrot.lane.b32.xlu0 %v4875, 48
        %v5473 = vpop.permute.xlu0 %5472
        %5474 = vrot.lane.b32.xlu0 %v4876, 48
        %v5475 = vpop.permute.xlu0 %5474
        %5476 = vrot.lane.b32.xlu0 %v4877, 48
        %v5477 = vpop.permute.xlu0 %5476
        %5478 = vrot.lane.b32.xlu0 %v4878, 48
        %v5479 = vpop.permute.xlu0 %5478
        %5480 = vrot.lane.b32.xlu0 %v4879, 48
        %v5481 = vpop.permute.xlu0 %5480
        %5482 = vrot.lane.b32.xlu0 %v4880, 48
        %v5483 = vpop.permute.xlu0 %5482
        %5484 = vrot.lane.b32.xlu0 %v4881, 48
        %v5485 = vpop.permute.xlu0 %5484
        %5486 = vrot.lane.b32.xlu0 %v4882, 48
        %v5487 = vpop.permute.xlu0 %5486
        %5488 = vrot.lane.b32.xlu0 %v4883, 48
        %v5489 = vpop.permute.xlu0 %5488
        %5490 = vrot.lane.b32.xlu0 %v4884, 48
        %v5491 = vpop.permute.xlu0 %5490
        %5492 = vrot.lane.b32.xlu0 %v4885, 48
        %v5493 = vpop.permute.xlu0 %5492
        %5494 = vrot.lane.b32.xlu0 %v4886, 48
        %v5495 = vpop.permute.xlu0 %5494
        %5560 = vrot.lane.b32.xlu0 %v4887, 60
        %v5561 = vpop.permute.xlu0 %5560
        %5562 = vrot.lane.b32.xlu0 %v4888, 60
        %v5563 = vpop.permute.xlu0 %5562
        %5564 = vrot.lane.b32.xlu0 %v4889, 60
        %v5565 = vpop.permute.xlu0 %5564
        %5566 = vrot.lane.b32.xlu0 %v4890, 60
        %v5567 = vpop.permute.xlu0 %5566
        %5568 = vrot.lane.b32.xlu0 %v4891, 60
        %v5569 = vpop.permute.xlu0 %5568
        %5570 = vrot.lane.b32.xlu0 %v4892, 60
        %v5571 = vpop.permute.xlu0 %5570
        %5572 = vrot.lane.b32.xlu0 %v4893, 60
        %v5573 = vpop.permute.xlu0 %5572
        %5574 = vrot.lane.b32.xlu0 %v4894, 60
        %v5575 = vpop.permute.xlu0 %5574
        %5576 = vrot.lane.b32.xlu0 %v4895, 60
        %v5577 = vpop.permute.xlu0 %5576
        %5578 = vrot.lane.b32.xlu0 %v4896, 60
        %v5579 = vpop.permute.xlu0 %5578
        %5580 = vrot.lane.b32.xlu0 %v4897, 60
        %v5581 = vpop.permute.xlu0 %5580
        %5582 = vrot.lane.b32.xlu0 %v4898, 60
        %v5583 = vpop.permute.xlu0 %5582
        %5584 = vrot.lane.b32.xlu0 %v4899, 60
        %v5585 = vpop.permute.xlu0 %5584
        %5586 = vrot.lane.b32.xlu0 %v4900, 60
        %v5587 = vpop.permute.xlu0 %5586
        %5588 = vrot.lane.b32.xlu0 %v4901, 60
        %v5589 = vpop.permute.xlu0 %5588
        %5590 = vrot.lane.b32.xlu0 %v4902, 60
        %v5591 = vpop.permute.xlu0 %5590
        %5592 = vrot.lane.b32.xlu0 %v4903, 60
        %v5593 = vpop.permute.xlu0 %5592
        %5594 = vrot.lane.b32.xlu0 %v4904, 60
        %v5595 = vpop.permute.xlu0 %5594
        %5596 = vrot.lane.b32.xlu0 %v4905, 60
        %v5597 = vpop.permute.xlu0 %5596
        %5598 = vrot.lane.b32.xlu0 %v4906, 60
        %v5599 = vpop.permute.xlu0 %5598
        %5600 = vrot.lane.b32.xlu0 %v4907, 60
        %v5601 = vpop.permute.xlu0 %5600
        %5602 = vrot.lane.b32.xlu0 %v4908, 60
        %v5603 = vpop.permute.xlu0 %5602
        %5604 = vrot.lane.b32.xlu0 %v4909, 60
        %v5605 = vpop.permute.xlu0 %5604
        %5606 = vrot.lane.b32.xlu0 %v4910, 60
        %v5607 = vpop.permute.xlu0 %5606
        %5608 = vrot.lane.b32.xlu0 %v4911, 60
        %v5609 = vpop.permute.xlu0 %5608
        %5610 = vrot.lane.b32.xlu0 %v4912, 60
        %v5611 = vpop.permute.xlu0 %5610
        %5612 = vrot.lane.b32.xlu0 %v4913, 60
        %v5613 = vpop.permute.xlu0 %5612
        %5614 = vrot.lane.b32.xlu0 %v4914, 60
        %v5615 = vpop.permute.xlu0 %5614
        %5616 = vrot.lane.b32.xlu0 %v4915, 60
        %v5617 = vpop.permute.xlu0 %5616
        %5618 = vrot.lane.b32.xlu0 %v4916, 60
        %v5619 = vpop.permute.xlu0 %5618
        %5620 = vrot.lane.b32.xlu0 %v4917, 60
        %v5621 = vpop.permute.xlu0 %5620
        %5622 = vrot.lane.b32.xlu0 %v4918, 60
        %v5623 = vpop.permute.xlu0 %5622
        %5688 = vrot.lane.b32.xlu0 %v4920, 72
        %v5689 = vpop.permute.xlu0 %5688
        %5690 = vrot.lane.b32.xlu0 %v4921, 72
        %v5691 = vpop.permute.xlu0 %5690
        %5692 = vrot.lane.b32.xlu0 %v4922, 72
        %v5693 = vpop.permute.xlu0 %5692
        %5694 = vrot.lane.b32.xlu0 %v4923, 72
        %v5695 = vpop.permute.xlu0 %5694
        %5696 = vrot.lane.b32.xlu0 %v4924, 72
        %v5697 = vpop.permute.xlu0 %5696
        %5698 = vrot.lane.b32.xlu0 %v4925, 72
        %v5699 = vpop.permute.xlu0 %5698
        %5700 = vrot.lane.b32.xlu0 %v4926, 72
        %v5701 = vpop.permute.xlu0 %5700
        %5702 = vrot.lane.b32.xlu0 %v4927, 72
        %v5703 = vpop.permute.xlu0 %5702
        %5704 = vrot.lane.b32.xlu0 %v4928, 72
        %v5705 = vpop.permute.xlu0 %5704
        %5706 = vrot.lane.b32.xlu0 %v4929, 72
        %v5707 = vpop.permute.xlu0 %5706
        %5708 = vrot.lane.b32.xlu0 %v4930, 72
        %v5709 = vpop.permute.xlu0 %5708
        %5710 = vrot.lane.b32.xlu0 %v4931, 72
        %v5711 = vpop.permute.xlu0 %5710
        %5712 = vrot.lane.b32.xlu0 %v4932, 72
        %v5713 = vpop.permute.xlu0 %5712
        %5714 = vrot.lane.b32.xlu0 %v4933, 72
        %v5715 = vpop.permute.xlu0 %5714
        %5716 = vrot.lane.b32.xlu0 %v4934, 72
        %v5717 = vpop.permute.xlu0 %5716
        %5718 = vrot.lane.b32.xlu0 %v4935, 72
        %v5719 = vpop.permute.xlu0 %5718
        %5720 = vrot.lane.b32.xlu0 %v4936, 72
        %v5721 = vpop.permute.xlu0 %5720
        %5722 = vrot.lane.b32.xlu0 %v4937, 72
        %v5723 = vpop.permute.xlu0 %5722
        %5724 = vrot.lane.b32.xlu0 %v4938, 72
        %v5725 = vpop.permute.xlu0 %5724
        %5726 = vrot.lane.b32.xlu0 %v4939, 72
        %v5727 = vpop.permute.xlu0 %5726
        %5728 = vrot.lane.b32.xlu0 %v4940, 72
        %v5729 = vpop.permute.xlu0 %5728
        %5730 = vrot.lane.b32.xlu0 %v4941, 72
        %v5731 = vpop.permute.xlu0 %5730
        %5732 = vrot.lane.b32.xlu0 %v4942, 72
        %v5733 = vpop.permute.xlu0 %5732
        %5734 = vrot.lane.b32.xlu0 %v4943, 72
        %v5735 = vpop.permute.xlu0 %5734
        %5736 = vrot.lane.b32.xlu0 %v4944, 72
        %v5737 = vpop.permute.xlu0 %5736
        %5738 = vrot.lane.b32.xlu0 %v4945, 72
        %v5739 = vpop.permute.xlu0 %5738
        %5740 = vrot.lane.b32.xlu0 %v4946, 72
        %v5741 = vpop.permute.xlu0 %5740
        %5742 = vrot.lane.b32.xlu0 %v4947, 72
        %v5743 = vpop.permute.xlu0 %5742
        %5744 = vrot.lane.b32.xlu0 %v4948, 72
        %v5745 = vpop.permute.xlu0 %5744
        %5746 = vrot.lane.b32.xlu0 %v4949, 72
        %v5747 = vpop.permute.xlu0 %5746
        %5748 = vrot.lane.b32.xlu0 %v4950, 72
        %v5749 = vpop.permute.xlu0 %5748
        %5750 = vrot.lane.b32.xlu0 %v4951, 72
        %v5751 = vpop.permute.xlu0 %5750
        %5816 = vrot.lane.b32.xlu0 %v4952, 84
        %v5817 = vpop.permute.xlu0 %5816
        %5818 = vrot.lane.b32.xlu0 %v4953, 84
        %v5819 = vpop.permute.xlu0 %5818
        %5820 = vrot.lane.b32.xlu0 %v4954, 84
        %v5821 = vpop.permute.xlu0 %5820
        %5822 = vrot.lane.b32.xlu0 %v4955, 84
        %v5823 = vpop.permute.xlu0 %5822
        %5824 = vrot.lane.b32.xlu0 %v4956, 84
        %v5825 = vpop.permute.xlu0 %5824
        %5826 = vrot.lane.b32.xlu0 %v4957, 84
        %v5827 = vpop.permute.xlu0 %5826
        %5828 = vrot.lane.b32.xlu0 %v4958, 84
        %v5829 = vpop.permute.xlu0 %5828
        %5830 = vrot.lane.b32.xlu0 %v4959, 84
        %v5831 = vpop.permute.xlu0 %5830
        %5832 = vrot.lane.b32.xlu0 %v4960, 84
        %v5833 = vpop.permute.xlu0 %5832
        %5834 = vrot.lane.b32.xlu0 %v4961, 84
        %v5835 = vpop.permute.xlu0 %5834
        %5836 = vrot.lane.b32.xlu0 %v4962, 84
        %v5837 = vpop.permute.xlu0 %5836
        %5838 = vrot.lane.b32.xlu0 %v4963, 84
        %v5839 = vpop.permute.xlu0 %5838
        %5840 = vrot.lane.b32.xlu0 %v4964, 84
        %v5841 = vpop.permute.xlu0 %5840
        %5842 = vrot.lane.b32.xlu0 %v4965, 84
        %v5843 = vpop.permute.xlu0 %5842
        %5844 = vrot.lane.b32.xlu0 %v4966, 84
        %v5845 = vpop.permute.xlu0 %5844
        %5846 = vrot.lane.b32.xlu0 %v4967, 84
        %v5847 = vpop.permute.xlu0 %5846
        %5848 = vrot.lane.b32.xlu0 %v4968, 84
        %v5849 = vpop.permute.xlu0 %5848
        %5850 = vrot.lane.b32.xlu0 %v4969, 84
        %v5851 = vpop.permute.xlu0 %5850
        %5852 = vrot.lane.b32.xlu0 %v4970, 84
        %v5853 = vpop.permute.xlu0 %5852
        %5854 = vrot.lane.b32.xlu0 %v4971, 84
        %v5855 = vpop.permute.xlu0 %5854
        %5856 = vrot.lane.b32.xlu0 %v4972, 84
        %v5857 = vpop.permute.xlu0 %5856
        %5858 = vrot.lane.b32.xlu0 %v4973, 84
        %v5859 = vpop.permute.xlu0 %5858
        %5860 = vrot.lane.b32.xlu0 %v4974, 84
        %v5861 = vpop.permute.xlu0 %5860
        %5862 = vrot.lane.b32.xlu0 %v4975, 84
        %v5863 = vpop.permute.xlu0 %5862
        %5864 = vrot.lane.b32.xlu0 %v4976, 84
        %v5865 = vpop.permute.xlu0 %5864
        %5866 = vrot.lane.b32.xlu0 %v4977, 84
        %v5867 = vpop.permute.xlu0 %5866
        %5868 = vrot.lane.b32.xlu0 %v4978, 84
        %v5869 = vpop.permute.xlu0 %5868
        %5870 = vrot.lane.b32.xlu0 %v4979, 84
        %v5871 = vpop.permute.xlu0 %5870
        %5872 = vrot.lane.b32.xlu0 %v4980, 84
        %v5873 = vpop.permute.xlu0 %5872
        %5874 = vrot.lane.b32.xlu0 %v4981, 84
        %v5875 = vpop.permute.xlu0 %5874
        %5876 = vrot.lane.b32.xlu0 %v4982, 84
        %v5877 = vpop.permute.xlu0 %5876
        %5878 = vrot.lane.b32.xlu0 %v4983, 84
        %v5879 = vpop.permute.xlu0 %5878
        %5944 = vrot.lane.b32.xlu0 %v4984, 96
        %v5945 = vpop.permute.xlu0 %5944
        %5946 = vrot.lane.b32.xlu0 %v4985, 96
        %v5947 = vpop.permute.xlu0 %5946
        %5948 = vrot.lane.b32.xlu0 %v4986, 96
        %v5949 = vpop.permute.xlu0 %5948
        %5950 = vrot.lane.b32.xlu0 %v4987, 96
        %v5951 = vpop.permute.xlu0 %5950
        %5952 = vrot.lane.b32.xlu0 %v4988, 96
        %v5953 = vpop.permute.xlu0 %5952
        %5954 = vrot.lane.b32.xlu0 %v4989, 96
        %v5955 = vpop.permute.xlu0 %5954
        %5956 = vrot.lane.b32.xlu0 %v4990, 96
        %v5957 = vpop.permute.xlu0 %5956
        %5958 = vrot.lane.b32.xlu0 %v4991, 96
        %v5959 = vpop.permute.xlu0 %5958
        %5960 = vrot.lane.b32.xlu0 %v4992, 96
        %v5961 = vpop.permute.xlu0 %5960
        %5962 = vrot.lane.b32.xlu0 %v4993, 96
        %v5963 = vpop.permute.xlu0 %5962
        %5964 = vrot.lane.b32.xlu0 %v4994, 96
        %v5965 = vpop.permute.xlu0 %5964
        %5966 = vrot.lane.b32.xlu0 %v4995, 96
        %v5967 = vpop.permute.xlu0 %5966
        %5968 = vrot.lane.b32.xlu0 %v4996, 96
        %v5969 = vpop.permute.xlu0 %5968
        %5970 = vrot.lane.b32.xlu0 %v4997, 96
        %v5971 = vpop.permute.xlu0 %5970
        %5972 = vrot.lane.b32.xlu0 %v4998, 96
        %v5973 = vpop.permute.xlu0 %5972
        %5974 = vrot.lane.b32.xlu0 %v4999, 96
        %v5975 = vpop.permute.xlu0 %5974
        %5976 = vrot.lane.b32.xlu0 %v5000, 96
        %v5977 = vpop.permute.xlu0 %5976
        %5978 = vrot.lane.b32.xlu0 %v5001, 96
        %v5979 = vpop.permute.xlu0 %5978
        %5980 = vrot.lane.b32.xlu0 %v5002, 96
        %v5981 = vpop.permute.xlu0 %5980
        %5982 = vrot.lane.b32.xlu0 %v5003, 96
        %v5983 = vpop.permute.xlu0 %5982
        %5984 = vrot.lane.b32.xlu0 %v5004, 96
        %v5985 = vpop.permute.xlu0 %5984
        %5986 = vrot.lane.b32.xlu0 %v5005, 96
        %v5987 = vpop.permute.xlu0 %5986
        %5988 = vrot.lane.b32.xlu0 %v5006, 96
        %v5989 = vpop.permute.xlu0 %5988
        %5990 = vrot.lane.b32.xlu0 %v5007, 96
        %v5991 = vpop.permute.xlu0 %5990
        %5992 = vrot.lane.b32.xlu0 %v5008, 96
        %v5993 = vpop.permute.xlu0 %5992
        %5994 = vrot.lane.b32.xlu0 %v5009, 96
        %v5995 = vpop.permute.xlu0 %5994
        %5996 = vrot.lane.b32.xlu0 %v5010, 96
        %v5997 = vpop.permute.xlu0 %5996
        %5998 = vrot.lane.b32.xlu0 %v5011, 96
        %v5999 = vpop.permute.xlu0 %5998
        %6000 = vrot.lane.b32.xlu0 %v5012, 96
        %v6001 = vpop.permute.xlu0 %6000
        %6002 = vrot.lane.b32.xlu0 %v5013, 96
        %v6003 = vpop.permute.xlu0 %6002
        %6004 = vrot.lane.b32.xlu0 %v5014, 96
        %v6005 = vpop.permute.xlu0 %6004
        %6006 = vrot.lane.b32.xlu0 %v5015, 96
        %v6007 = vpop.permute.xlu0 %6006
        %v6040 = vsel %vm1835, %v4727, %v5049
        %v6041 = vsel %vm1835, %v4728, %v5051
        %v6042 = vsel %vm1835, %v4729, %v5053
        %v6043 = vsel %vm1835, %v4730, %v5055
        %v6044 = vsel %vm1835, %v4731, %v5057
        %v6045 = vsel %vm1835, %v4732, %v5059
        %v6046 = vsel %vm1835, %v4733, %v5061
        %v6047 = vsel %vm1835, %v4734, %v5063
        %v6048 = vsel %vm1835, %v4735, %v5065
        %v6049 = vsel %vm1835, %v4736, %v5067
        %v6050 = vsel %vm1835, %v4737, %v5069
        %v6051 = vsel %vm1835, %v4738, %v5071
        %v6052 = vsel %vm1835, %v4739, %v5073
        %v6053 = vsel %vm1835, %v4740, %v5075
        %v6054 = vsel %vm1835, %v4741, %v5077
        %v6055 = vsel %vm1835, %v4742, %v5079
        %v6056 = vsel %vm1835, %v4743, %v5081
        %v6057 = vsel %vm1835, %v4744, %v5083
        %v6058 = vsel %vm1835, %v4745, %v5085
        %v6059 = vsel %vm1835, %v4746, %v5087
        %v6060 = vsel %vm1835, %v4747, %v5089
        %v6061 = vsel %vm1835, %v4748, %v5091
        %v6062 = vsel %vm1835, %v4749, %v5093
        %v6063 = vsel %vm1835, %v4750, %v5095
        %v6064 = vsel %vm1835, %v4751, %v5097
        %v6065 = vsel %vm1835, %v4752, %v5099
        %v6066 = vsel %vm1835, %v4753, %v5101
        %v6067 = vsel %vm1835, %v4754, %v5103
        %v6068 = vsel %vm1835, %v4755, %v5105
        %v6069 = vsel %vm1835, %v4756, %v5107
        %v6070 = vsel %vm1835, %v4757, %v5109
        %v6071 = vsel %vm1835, %v4758, %v5111
        %v6072 = vsel %vm304, %v6040, %v5177
        %v6073 = vsel %vm304, %v6041, %v5179
        %v6074 = vsel %vm304, %v6042, %v5181
        %v6075 = vsel %vm304, %v6043, %v5183
        %v6076 = vsel %vm304, %v6044, %v5185
        %v6077 = vsel %vm304, %v6045, %v5187
        %v6078 = vsel %vm304, %v6046, %v5189
        %v6079 = vsel %vm304, %v6047, %v5191
        %v6080 = vsel %vm304, %v6048, %v5193
        %v6081 = vsel %vm304, %v6049, %v5195
        %v6082 = vsel %vm304, %v6050, %v5197
        %v6083 = vsel %vm304, %v6051, %v5199
        %v6084 = vsel %vm304, %v6052, %v5201
        %v6085 = vsel %vm304, %v6053, %v5203
        %v6086 = vsel %vm304, %v6054, %v5205
        %v6087 = vsel %vm304, %v6055, %v5207
        %v6088 = vsel %vm304, %v6056, %v5209
        %v6089 = vsel %vm304, %v6057, %v5211
        %v6090 = vsel %vm304, %v6058, %v5213
        %v6091 = vsel %vm304, %v6059, %v5215
        %v6092 = vsel %vm304, %v6060, %v5217
        %v6093 = vsel %vm304, %v6061, %v5219
        %v6094 = vsel %vm304, %v6062, %v5221
        %v6095 = vsel %vm304, %v6063, %v5223
        %v6096 = vsel %vm304, %v6064, %v5225
        %v6097 = vsel %vm304, %v6065, %v5227
        %v6098 = vsel %vm304, %v6066, %v5229
        %v6099 = vsel %vm304, %v6067, %v5231
        %v6100 = vsel %vm304, %v6068, %v5233
        %v6101 = vsel %vm304, %v6069, %v5235
        %v6102 = vsel %vm304, %v6070, %v5237
        %v6103 = vsel %vm304, %v6071, %v5239
        %v6104 = vsel %vm2041, %v6072, %v5305
        %v6105 = vsel %vm2041, %v6073, %v5307
        %v6106 = vsel %vm2041, %v6074, %v5309
        %v6107 = vsel %vm2041, %v6075, %v5311
        %v6108 = vsel %vm2041, %v6076, %v5313
        %v6109 = vsel %vm2041, %v6077, %v5315
        %v6110 = vsel %vm2041, %v6078, %v5317
        %v6111 = vsel %vm2041, %v6079, %v5319
        %v6112 = vsel %vm2041, %v6080, %v5321
        %v6113 = vsel %vm2041, %v6081, %v5323
        %v6114 = vsel %vm2041, %v6082, %v5325
        %v6115 = vsel %vm2041, %v6083, %v5327
        %v6116 = vsel %vm2041, %v6084, %v5329
        %v6117 = vsel %vm2041, %v6085, %v5331
        %v6118 = vsel %vm2041, %v6086, %v5333
        %v6119 = vsel %vm2041, %v6087, %v5335
        %v6120 = vsel %vm2041, %v6088, %v5337
        %v6121 = vsel %vm2041, %v6089, %v5339
        %v6122 = vsel %vm2041, %v6090, %v5341
        %v6123 = vsel %vm2041, %v6091, %v5343
        %v6124 = vsel %vm2041, %v6092, %v5345
        %v6125 = vsel %vm2041, %v6093, %v5347
        %v6126 = vsel %vm2041, %v6094, %v5349
        %v6127 = vsel %vm2041, %v6095, %v5351
        %v6128 = vsel %vm2041, %v6096, %v5353
        %v6129 = vsel %vm2041, %v6097, %v5355
        %v6130 = vsel %vm2041, %v6098, %v5357
        %v6131 = vsel %vm2041, %v6099, %v5359
        %v6132 = vsel %vm2041, %v6100, %v5361
        %v6133 = vsel %vm2041, %v6101, %v5363
        %v6134 = vsel %vm2041, %v6102, %v5365
        %v6135 = vsel %vm2041, %v6103, %v5367
        %v6136 = vsel %vm4067, %v6104, %v5433
        %v6137 = vsel %vm4067, %v6105, %v5435
        %v6138 = vsel %vm4067, %v6106, %v5437
        %v6139 = vsel %vm4067, %v6107, %v5439
        %v6140 = vsel %vm4067, %v6108, %v5441
        %v6141 = vsel %vm4067, %v6109, %v5443
        %v6142 = vsel %vm4067, %v6110, %v5445
        %v6143 = vsel %vm4067, %v6111, %v5447
        %v6144 = vsel %vm4067, %v6112, %v5449
        %v6145 = vsel %vm4067, %v6113, %v5451
        %v6146 = vsel %vm4067, %v6114, %v5453
        %v6147 = vsel %vm4067, %v6115, %v5455
        %v6148 = vsel %vm4067, %v6116, %v5457
        %v6149 = vsel %vm4067, %v6117, %v5459
        %v6150 = vsel %vm4067, %v6118, %v5461
        %v6151 = vsel %vm4067, %v6119, %v5463
        %v6152 = vsel %vm4067, %v6120, %v5465
        %v6153 = vsel %vm4067, %v6121, %v5467
        %v6154 = vsel %vm4067, %v6122, %v5469
        %v6155 = vsel %vm4067, %v6123, %v5471
        %v6156 = vsel %vm4067, %v6124, %v5473
        %v6157 = vsel %vm4067, %v6125, %v5475
        %v6158 = vsel %vm4067, %v6126, %v5477
        %v6159 = vsel %vm4067, %v6127, %v5479
        %v6160 = vsel %vm4067, %v6128, %v5481
        %v6161 = vsel %vm4067, %v6129, %v5483
        %v6162 = vsel %vm4067, %v6130, %v5485
        %v6163 = vsel %vm4067, %v6131, %v5487
        %v6164 = vsel %vm4067, %v6132, %v5489
        %v6165 = vsel %vm4067, %v6133, %v5491
        %v6166 = vsel %vm4067, %v6134, %v5493
        %v6167 = vsel %vm4067, %v6135, %v5495
        %vm6168 = vcmask 490496
        %v6169 = vsel %vm6168, %v6136, %v5561
        %v6170 = vsel %vm6168, %v6137, %v5563
        %v6171 = vsel %vm6168, %v6138, %v5565
        %v6172 = vsel %vm6168, %v6139, %v5567
        %v6173 = vsel %vm6168, %v6140, %v5569
        %v6174 = vsel %vm6168, %v6141, %v5571
        %v6175 = vsel %vm6168, %v6142, %v5573
        %v6176 = vsel %vm6168, %v6143, %v5575
        %v6177 = vsel %vm6168, %v6144, %v5577
        %v6178 = vsel %vm6168, %v6145, %v5579
        %v6179 = vsel %vm6168, %v6146, %v5581
        %v6180 = vsel %vm6168, %v6147, %v5583
        %v6181 = vsel %vm6168, %v6148, %v5585
        %v6182 = vsel %vm6168, %v6149, %v5587
        %v6183 = vsel %vm6168, %v6150, %v5589
        %v6184 = vsel %vm6168, %v6151, %v5591
        %v6185 = vsel %vm6168, %v6152, %v5593
        %v6186 = vsel %vm6168, %v6153, %v5595
        %v6187 = vsel %vm6168, %v6154, %v5597
        %v6188 = vsel %vm6168, %v6155, %v5599
        %v6189 = vsel %vm6168, %v6156, %v5601
        %v6190 = vsel %vm6168, %v6157, %v5603
        %v6191 = vsel %vm6168, %v6158, %v5605
        %v6192 = vsel %vm6168, %v6159, %v5607
        %v6193 = vsel %vm6168, %v6160, %v5609
        %v6194 = vsel %vm6168, %v6161, %v5611
        %v6195 = vsel %vm6168, %v6162, %v5613
        %v6196 = vsel %vm6168, %v6163, %v5615
        %v6197 = vsel %vm6168, %v6164, %v5617
        %v6198 = vsel %vm6168, %v6165, %v5619
        %v6199 = vsel %vm6168, %v6166, %v5621
        %v6200 = vsel %vm6168, %v6167, %v5623
        %v6201 = vsel %vm4179, %v6169, %v5689
        %v6202 = vsel %vm4179, %v6170, %v5691
        %v6203 = vsel %vm4179, %v6171, %v5693
        %v6204 = vsel %vm4179, %v6172, %v5695
        %v6205 = vsel %vm4179, %v6173, %v5697
        %v6206 = vsel %vm4179, %v6174, %v5699
        %v6207 = vsel %vm4179, %v6175, %v5701
        %v6208 = vsel %vm4179, %v6176, %v5703
        %v6209 = vsel %vm4179, %v6177, %v5705
        %v6210 = vsel %vm4179, %v6178, %v5707
        %v6211 = vsel %vm4179, %v6179, %v5709
        %v6212 = vsel %vm4179, %v6180, %v5711
        %v6213 = vsel %vm4179, %v6181, %v5713
        %v6214 = vsel %vm4179, %v6182, %v5715
        %v6215 = vsel %vm4179, %v6183, %v5717
        %v6216 = vsel %vm4179, %v6184, %v5719
        %v6217 = vsel %vm4179, %v6185, %v5721
        %v6218 = vsel %vm4179, %v6186, %v5723
        %v6219 = vsel %vm4179, %v6187, %v5725
        %v6220 = vsel %vm4179, %v6188, %v5727
        %v6221 = vsel %vm4179, %v6189, %v5729
        %v6222 = vsel %vm4179, %v6190, %v5731
        %v6223 = vsel %vm4179, %v6191, %v5733
        %v6224 = vsel %vm4179, %v6192, %v5735
        %v6225 = vsel %vm4179, %v6193, %v5737
        %v6226 = vsel %vm4179, %v6194, %v5739
        %v6227 = vsel %vm4179, %v6195, %v5741
        %v6228 = vsel %vm4179, %v6196, %v5743
        %v6229 = vsel %vm4179, %v6197, %v5745
        %v6230 = vsel %vm4179, %v6198, %v5747
        %v6231 = vsel %vm4179, %v6199, %v5749
        %v6232 = vsel %vm4179, %v6200, %v5751
        %vm6233 = vcmask 687104
        %v6234 = vsel %vm6233, %v6201, %v5817
        %v6235 = vsel %vm6233, %v6202, %v5819
        %v6236 = vsel %vm6233, %v6203, %v5821
        %v6237 = vsel %vm6233, %v6204, %v5823
        %v6238 = vsel %vm6233, %v6205, %v5825
        %v6239 = vsel %vm6233, %v6206, %v5827
        %v6240 = vsel %vm6233, %v6207, %v5829
        %v6241 = vsel %vm6233, %v6208, %v5831
        %v6242 = vsel %vm6233, %v6209, %v5833
        %v6243 = vsel %vm6233, %v6210, %v5835
        %v6244 = vsel %vm6233, %v6211, %v5837
        %v6245 = vsel %vm6233, %v6212, %v5839
        %v6246 = vsel %vm6233, %v6213, %v5841
        %v6247 = vsel %vm6233, %v6214, %v5843
        %v6248 = vsel %vm6233, %v6215, %v5845
        %v6249 = vsel %vm6233, %v6216, %v5847
        %v6250 = vsel %vm6233, %v6217, %v5849
        %v6251 = vsel %vm6233, %v6218, %v5851
        %v6252 = vsel %vm6233, %v6219, %v5853
        %v6253 = vsel %vm6233, %v6220, %v5855
        %v6254 = vsel %vm6233, %v6221, %v5857
        %v6255 = vsel %vm6233, %v6222, %v5859
        %v6256 = vsel %vm6233, %v6223, %v5861
        %v6257 = vsel %vm6233, %v6224, %v5863
        %v6258 = vsel %vm6233, %v6225, %v5865
        %v6259 = vsel %vm6233, %v6226, %v5867
        %v6260 = vsel %vm6233, %v6227, %v5869
        %v6261 = vsel %vm6233, %v6228, %v5871
        %v6262 = vsel %vm6233, %v6229, %v5873
        %v6263 = vsel %vm6233, %v6230, %v5875
        %v6264 = vsel %vm6233, %v6231, %v5877
        %v6265 = vsel %vm6233, %v6232, %v5879
        %vm6266 = vcmask 785408
        %v6267 = vsel %vm6266, %v6234, %v5945
        %v6268 = vsel %vm6266, %v6235, %v5947
        %v6269 = vsel %vm6266, %v6236, %v5949
        %v6270 = vsel %vm6266, %v6237, %v5951
        %v6271 = vsel %vm6266, %v6238, %v5953
        %v6272 = vsel %vm6266, %v6239, %v5955
        %v6273 = vsel %vm6266, %v6240, %v5957
        %v6274 = vsel %vm6266, %v6241, %v5959
        %v6275 = vsel %vm6266, %v6242, %v5961
        %v6276 = vsel %vm6266, %v6243, %v5963
        %v6277 = vsel %vm6266, %v6244, %v5965
        %v6278 = vsel %vm6266, %v6245, %v5967
        %v6279 = vsel %vm6266, %v6246, %v5969
        %v6280 = vsel %vm6266, %v6247, %v5971
        %v6281 = vsel %vm6266, %v6248, %v5973
        %v6282 = vsel %vm6266, %v6249, %v5975
        %v6283 = vsel %vm6266, %v6250, %v5977
        %v6284 = vsel %vm6266, %v6251, %v5979
        %v6285 = vsel %vm6266, %v6252, %v5981
        %v6286 = vsel %vm6266, %v6253, %v5983
        %v6287 = vsel %vm6266, %v6254, %v5985
        %v6288 = vsel %vm6266, %v6255, %v5987
        %v6289 = vsel %vm6266, %v6256, %v5989
        %v6290 = vsel %vm6266, %v6257, %v5991
        %v6291 = vsel %vm6266, %v6258, %v5993
        %v6292 = vsel %vm6266, %v6259, %v5995
        %v6293 = vsel %vm6266, %v6260, %v5997
        %v6294 = vsel %vm6266, %v6261, %v5999
        %v6295 = vsel %vm6266, %v6262, %v6001
        %v6296 = vsel %vm6266, %v6263, %v6003
        %v6297 = vsel %vm6266, %v6264, %v6005
        %v6298 = vsel %vm6266, %v6265, %v6007
        %v6299 = vld [vmem:[%s3] sm:$0xff]
        %v6300 = vld [vmem:[%s3 + $0x8] sm:$0xff]
        %v6301 = vld [vmem:[%s3 + $0x10] sm:$0xff]
        %v6302 = vld [vmem:[%s3 + $0x18] sm:$0xff]
        %v6303 = vld [vmem:[%s3 + $0x20] sm:$0xff]
        %v6304 = vld [vmem:[%s3 + $0x28] sm:$0xff]
        %v6305 = vld [vmem:[%s3 + $0x30] sm:$0xff]
        %v6306 = vld [vmem:[%s3 + $0x38] sm:$0xff]
        %v6307 = vld [vmem:[%s3 + $0x40] sm:$0xff]
        %v6308 = vld [vmem:[%s3 + $0x48] sm:$0xff]
        %v6309 = vld [vmem:[%s3 + $0x50] sm:$0xff]
        %v6310 = vld [vmem:[%s3 + $0x58] sm:$0xff]
        %v6311 = vld [vmem:[%s3 + $0x60] sm:$0xff]
        %v6312 = vld [vmem:[%s3 + $0x68] sm:$0xf]
        %v6313 = vlaneseq
        %v6314 = vshrl.u32 %v6313, 7
        %v6315 = vsub.s32 2, %v6314
        %v6316 = vrot.slane %v456, %v6315
        %vm6317 = vcmask 883712
        %v6319 = vsel %vm6317, %v6267, 0
        %v6322 = vsel %vm6317, %v6268, 0
        %v6325 = vsel %vm6317, %v6269, 0
        %v6328 = vsel %vm6317, %v6270, 0
        %v6331 = vsel %vm6317, %v6271, 0
        %v6334 = vsel %vm6317, %v6272, 0
        %v6337 = vsel %vm6317, %v6273, 0
        %v6340 = vsel %vm6317, %v6274, 0
        %v6343 = vsel %vm6317, %v6275, 0
        %v6346 = vsel %vm6317, %v6276, 0
        %v6349 = vsel %vm6317, %v6277, 0
        %v6352 = vsel %vm6317, %v6278, 0
        %v6355 = vsel %vm6317, %v6279, 0
        %v6358 = vsel %vm6317, %v6280, 0
        %v6361 = vsel %vm6317, %v6281, 0
        %v6364 = vsel %vm6317, %v6282, 0
        %v6367 = vsel %vm6317, %v6283, 0
        %v6370 = vsel %vm6317, %v6284, 0
        %v6373 = vsel %vm6317, %v6285, 0
        %v6376 = vsel %vm6317, %v6286, 0
        %v6379 = vsel %vm6317, %v6287, 0
        %v6382 = vsel %vm6317, %v6288, 0
        %v6385 = vsel %vm6317, %v6289, 0
        %v6388 = vsel %vm6317, %v6290, 0
        %v6391 = vsel %vm6317, %v6291, 0
        %v6394 = vsel %vm6317, %v6292, 0
        %v6397 = vsel %vm6317, %v6293, 0
        %v6400 = vsel %vm6317, %v6294, 0
        %v6403 = vsel %vm6317, %v6295, 0
        %v6406 = vsel %vm6317, %v6296, 0
        %v6409 = vsel %vm6317, %v6297, 0
        %v6412 = vsel %vm6317, %v6298, 0
        %v6415 = vsel %vm2138, %v6312, 0
        %6417 = vmatprep.subr.mxu0 0.0
        %6418 = vmatpush1.msra.mxu0 0.0
        %6419 = vmatprep.subr.mxu0 0.0
        %6420 = vmatpush1.msra.mxu0 0.0
        %6421 = vmatprep.subr.mxu0 0.0
        %6422 = vmatpush1.msra.mxu0 %v6415
        %6423 = vmatprep.subr.mxu0 0.0
        %6424 = vmatpush1.msra.mxu0 %v6311
        %6425 = vmatprep.subr.mxu0 0.0
        %6426 = vmatpush1.msra.mxu0 %v6310
        %6427 = vmatprep.subr.mxu0 0.0
        %6428 = vmatpush1.msra.mxu0 %v6309
        %6429 = vmatprep.subr.mxu0 0.0
        %6430 = vmatpush1.msra.mxu0 %v6308
        %6431 = vmatprep.subr.mxu0 0.0
        %6432 = vmatpush1.msra.mxu0 %v6307
        %6433 = vmatprep.subr.mxu0 0.0
        %6434 = vmatpush1.msra.mxu0 %v6306
        %6435 = vmatprep.subr.mxu0 0.0
        %6436 = vmatpush1.msra.mxu0 %v6305
        %6437 = vmatprep.subr.mxu0 0.0
        %6438 = vmatpush1.msra.mxu0 %v6304
        %6439 = vmatprep.subr.mxu0 0.0
        %6440 = vmatpush1.msra.mxu0 %v6303
        %6441 = vmatprep.subr.mxu0 0.0
        %6442 = vmatpush1.msra.mxu0 %v6302
        %6443 = vmatprep.subr.mxu0 0.0
        %6444 = vmatpush1.msra.mxu0 %v6301
        %6445 = vmatprep.subr.mxu0 0.0
        %6446 = vmatpush1.msra.mxu0 %v6300
        %6447 = vmatprep.subr.mxu0 0.0
        %6448 = vmatpush1.msra.mxu0 %v6299
        %6449 = vmatprep.subr.mxu0 0.0
        %6450 = vmatpush2.msra.mxu0 0.0
        %6451 = vmatprep.subr.mxu0 0.0
        %6452 = vmatpush2.msra.mxu0 0.0
        %6453 = vmatprep.subr.mxu0 0.0
        %6454 = vmatpush2.msra.mxu0 0.0
        %6455 = vmatprep.subr.mxu0 0.0
        %6456 = vmatpush2.msra.mxu0 0.0
        %6457 = vmatprep.subr.mxu0 0.0
        %6458 = vmatpush2.msra.mxu0 0.0
        %6459 = vmatprep.subr.mxu0 0.0
        %6460 = vmatpush2.msra.mxu0 0.0
        %6461 = vmatprep.subr.mxu0 0.0
        %6462 = vmatpush2.msra.mxu0 0.0
        %6463 = vmatprep.subr.mxu0 0.0
        %6464 = vmatpush2.msra.mxu0 0.0
        %6465 = vmatprep.subr.mxu0 0.0
        %6466 = vmatpush2.msra.mxu0 0.0
        %6467 = vmatprep.subr.mxu0 0.0
        %6468 = vmatpush2.msra.mxu0 0.0
        %6469 = vmatprep.subr.mxu0 0.0
        %6470 = vmatpush2.msra.mxu0 0.0
        %6471 = vmatprep.subr.mxu0 0.0
        %6472 = vmatpush2.msra.mxu0 0.0
        %6473 = vmatprep.subr.mxu0 0.0
        %6474 = vmatpush2.msra.mxu0 0.0
        %6475 = vmatprep.subr.mxu0 0.0
        %6476 = vmatpush2.msra.mxu0 0.0
        %6477 = vmatprep.subr.mxu0 0.0
        %6478 = vmatpush2.msra.mxu0 0.0
        %6479 = vmatprep.subr.mxu0 0.0
        %6480 = vmatpush2.msra.mxu0 0.0
        %6481 = vmatprep.mubr.f32.mxu0 0.0
        %6482 = vmatmul.mubr.f32.gmra.mxu0 %v6319
        %v6483 = vpop.f32.mrf.mxu0
        %v6484 = vadd.f32 %v6316, %v6483
        %v6485 = vpop.f32.mrf.mxu0
        %6486 = vmatprep.mubr.f32.mxu0 0.0
        %6487 = vmatmul.mubr.f32.gmra.mxu0 %v6322
        %v6488 = vpop.f32.mrf.mxu0
        %v6489 = vadd.f32 %v6316, %v6488
        %v6490 = vpop.f32.mrf.mxu0
        %6491 = vmatprep.mubr.f32.mxu0 0.0
        %6492 = vmatmul.mubr.f32.gmra.mxu0 %v6325
        %v6493 = vpop.f32.mrf.mxu0
        %v6494 = vadd.f32 %v6316, %v6493
        %v6495 = vpop.f32.mrf.mxu0
        %6496 = vmatprep.mubr.f32.mxu0 0.0
        %6497 = vmatmul.mubr.f32.gmra.mxu0 %v6328
        %v6498 = vpop.f32.mrf.mxu0
        %v6499 = vadd.f32 %v6316, %v6498
        %v6500 = vpop.f32.mrf.mxu0
        %6501 = vmatprep.mubr.f32.mxu0 0.0
        %6502 = vmatmul.mubr.f32.gmra.mxu0 %v6331
        %v6503 = vpop.f32.mrf.mxu0
        %v6504 = vadd.f32 %v6316, %v6503
        %v6505 = vpop.f32.mrf.mxu0
        %6506 = vmatprep.mubr.f32.mxu0 0.0
        %6507 = vmatmul.mubr.f32.gmra.mxu0 %v6334
        %v6508 = vpop.f32.mrf.mxu0
        %v6509 = vadd.f32 %v6316, %v6508
        %v6510 = vpop.f32.mrf.mxu0
        %6511 = vmatprep.mubr.f32.mxu0 0.0
        %6512 = vmatmul.mubr.f32.gmra.mxu0 %v6337
        %v6513 = vpop.f32.mrf.mxu0
        %v6514 = vadd.f32 %v6316, %v6513
        %v6515 = vpop.f32.mrf.mxu0
        %6516 = vmatprep.mubr.f32.mxu0 0.0
        %6517 = vmatmul.mubr.f32.gmra.mxu0 %v6340
        %v6518 = vpop.f32.mrf.mxu0
        %v6519 = vadd.f32 %v6316, %v6518
        %v6520 = vpop.f32.mrf.mxu0
        %6521 = vmatprep.mubr.f32.mxu0 0.0
        %6522 = vmatmul.mubr.f32.gmra.mxu0 %v6343
        %v6523 = vpop.f32.mrf.mxu0
        %v6524 = vadd.f32 %v6316, %v6523
        %v6525 = vpop.f32.mrf.mxu0
        %6526 = vmatprep.mubr.f32.mxu0 0.0
        %6527 = vmatmul.mubr.f32.gmra.mxu0 %v6346
        %v6528 = vpop.f32.mrf.mxu0
        %v6529 = vadd.f32 %v6316, %v6528
        %v6530 = vpop.f32.mrf.mxu0
        %6531 = vmatprep.mubr.f32.mxu0 0.0
        %6532 = vmatmul.mubr.f32.gmra.mxu0 %v6349
        %v6533 = vpop.f32.mrf.mxu0
        %v6534 = vadd.f32 %v6316, %v6533
        %v6535 = vpop.f32.mrf.mxu0
        %6536 = vmatprep.mubr.f32.mxu0 0.0
        %6537 = vmatmul.mubr.f32.gmra.mxu0 %v6352
        %v6538 = vpop.f32.mrf.mxu0
        %v6539 = vadd.f32 %v6316, %v6538
        %v6540 = vpop.f32.mrf.mxu0
        %6541 = vmatprep.mubr.f32.mxu0 0.0
        %6542 = vmatmul.mubr.f32.gmra.mxu0 %v6355
        %v6543 = vpop.f32.mrf.mxu0
        %v6544 = vadd.f32 %v6316, %v6543
        %v6545 = vpop.f32.mrf.mxu0
        %6546 = vmatprep.mubr.f32.mxu0 0.0
        %6547 = vmatmul.mubr.f32.gmra.mxu0 %v6358
        %v6548 = vpop.f32.mrf.mxu0
        %v6549 = vadd.f32 %v6316, %v6548
        %v6550 = vpop.f32.mrf.mxu0
        %6551 = vmatprep.mubr.f32.mxu0 0.0
        %6552 = vmatmul.mubr.f32.gmra.mxu0 %v6361
        %v6553 = vpop.f32.mrf.mxu0
        %v6554 = vadd.f32 %v6316, %v6553
        %v6555 = vpop.f32.mrf.mxu0
        %6556 = vmatprep.mubr.f32.mxu0 0.0
        %6557 = vmatmul.mubr.f32.gmra.mxu0 %v6364
        %v6558 = vpop.f32.mrf.mxu0
        %v6559 = vadd.f32 %v6316, %v6558
        %v6560 = vpop.f32.mrf.mxu0
        %6561 = vmatprep.mubr.f32.mxu0 0.0
        %6562 = vmatmul.mubr.f32.gmra.mxu0 %v6367
        %v6563 = vpop.f32.mrf.mxu0
        %v6564 = vadd.f32 %v6316, %v6563
        %v6565 = vpop.f32.mrf.mxu0
        %6566 = vmatprep.mubr.f32.mxu0 0.0
        %6567 = vmatmul.mubr.f32.gmra.mxu0 %v6370
        %v6568 = vpop.f32.mrf.mxu0
        %v6569 = vadd.f32 %v6316, %v6568
        %v6570 = vpop.f32.mrf.mxu0
        %6571 = vmatprep.mubr.f32.mxu0 0.0
        %6572 = vmatmul.mubr.f32.gmra.mxu0 %v6373
        %v6573 = vpop.f32.mrf.mxu0
        %v6574 = vadd.f32 %v6316, %v6573
        %v6575 = vpop.f32.mrf.mxu0
        %6576 = vmatprep.mubr.f32.mxu0 0.0
        %6577 = vmatmul.mubr.f32.gmra.mxu0 %v6376
        %v6578 = vpop.f32.mrf.mxu0
        %v6579 = vadd.f32 %v6316, %v6578
        %v6580 = vpop.f32.mrf.mxu0
        %6581 = vmatprep.mubr.f32.mxu0 0.0
        %6582 = vmatmul.mubr.f32.gmra.mxu0 %v6379
        %v6583 = vpop.f32.mrf.mxu0
        %v6584 = vadd.f32 %v6316, %v6583
        %v6585 = vpop.f32.mrf.mxu0
        %6586 = vmatprep.mubr.f32.mxu0 0.0
        %6587 = vmatmul.mubr.f32.gmra.mxu0 %v6382
        %v6588 = vpop.f32.mrf.mxu0
        %v6589 = vadd.f32 %v6316, %v6588
        %v6590 = vpop.f32.mrf.mxu0
        %6591 = vmatprep.mubr.f32.mxu0 0.0
        %6592 = vmatmul.mubr.f32.gmra.mxu0 %v6385
        %v6593 = vpop.f32.mrf.mxu0
        %v6594 = vadd.f32 %v6316, %v6593
        %v6595 = vpop.f32.mrf.mxu0
        %6596 = vmatprep.mubr.f32.mxu0 0.0
        %6597 = vmatmul.mubr.f32.gmra.mxu0 %v6388
        %v6598 = vpop.f32.mrf.mxu0
        %v6599 = vadd.f32 %v6316, %v6598
        %v6600 = vpop.f32.mrf.mxu0
        %6601 = vmatprep.mubr.f32.mxu0 0.0
        %6602 = vmatmul.mubr.f32.gmra.mxu0 %v6391
        %v6603 = vpop.f32.mrf.mxu0
        %v6604 = vadd.f32 %v6316, %v6603
        %v6605 = vpop.f32.mrf.mxu0
        %6606 = vmatprep.mubr.f32.mxu0 0.0
        %6607 = vmatmul.mubr.f32.gmra.mxu0 %v6394
        %v6608 = vpop.f32.mrf.mxu0
        %v6609 = vadd.f32 %v6316, %v6608
        %v6610 = vpop.f32.mrf.mxu0
        %6611 = vmatprep.mubr.f32.mxu0 0.0
        %6612 = vmatmul.mubr.f32.gmra.mxu0 %v6397
        %v6613 = vpop.f32.mrf.mxu0
        %v6614 = vadd.f32 %v6316, %v6613
        %v6615 = vpop.f32.mrf.mxu0
        %6616 = vmatprep.mubr.f32.mxu0 0.0
        %6617 = vmatmul.mubr.f32.gmra.mxu0 %v6400
        %v6618 = vpop.f32.mrf.mxu0
        %v6619 = vadd.f32 %v6316, %v6618
        %v6620 = vpop.f32.mrf.mxu0
        %6621 = vmatprep.mubr.f32.mxu0 0.0
        %6622 = vmatmul.mubr.f32.gmra.mxu0 %v6403
        %v6623 = vpop.f32.mrf.mxu0
        %v6624 = vadd.f32 %v6316, %v6623
        %v6625 = vpop.f32.mrf.mxu0
        %6626 = vmatprep.mubr.f32.mxu0 0.0
        %6627 = vmatmul.mubr.f32.gmra.mxu0 %v6406
        %v6628 = vpop.f32.mrf.mxu0
        %v6629 = vadd.f32 %v6316, %v6628
        %v6630 = vpop.f32.mrf.mxu0
        %6631 = vmatprep.mubr.f32.mxu0 0.0
        %6632 = vmatmul.mubr.f32.gmra.mxu0 %v6409
        %v6633 = vpop.f32.mrf.mxu0
        %v6634 = vadd.f32 %v6316, %v6633
        %v6635 = vpop.f32.mrf.mxu0
        %6636 = vmatprep.mubr.f32.mxu0 0.0
        %6637 = vmatmul.mubr.f32.gmra.mxu0 %v6412
        %v6638 = vpop.f32.mrf.mxu0
        %v6639 = vadd.f32 %v6316, %v6638
        %v6640 = vpop.f32.mrf.mxu0
        %6641 = vdwg.mxu0
        %v6642 = vmax.f32 %v6484, 0.0
        %v6643 = vmax.f32 %v6489, 0.0
        %v6644 = vmax.f32 %v6494, 0.0
        %v6645 = vmax.f32 %v6499, 0.0
        %v6646 = vmax.f32 %v6504, 0.0
        %v6647 = vmax.f32 %v6509, 0.0
        %v6648 = vmax.f32 %v6514, 0.0
        %v6649 = vmax.f32 %v6519, 0.0
        %v6650 = vmax.f32 %v6524, 0.0
        %v6651 = vmax.f32 %v6529, 0.0
        %v6652 = vmax.f32 %v6534, 0.0
        %v6653 = vmax.f32 %v6539, 0.0
        %v6654 = vmax.f32 %v6544, 0.0
        %v6655 = vmax.f32 %v6549, 0.0
        %v6656 = vmax.f32 %v6554, 0.0
        %v6657 = vmax.f32 %v6559, 0.0
        %v6658 = vmax.f32 %v6564, 0.0
        %v6659 = vmax.f32 %v6569, 0.0
        %v6660 = vmax.f32 %v6574, 0.0
        %v6661 = vmax.f32 %v6579, 0.0
        %v6662 = vmax.f32 %v6584, 0.0
        %v6663 = vmax.f32 %v6589, 0.0
        %v6664 = vmax.f32 %v6594, 0.0
        %v6665 = vmax.f32 %v6599, 0.0
        %v6666 = vmax.f32 %v6604, 0.0
        %v6667 = vmax.f32 %v6609, 0.0
        %v6668 = vmax.f32 %v6614, 0.0
        %v6669 = vmax.f32 %v6619, 0.0
        %v6670 = vmax.f32 %v6624, 0.0
        %v6671 = vmax.f32 %v6629, 0.0
        %v6672 = vmax.f32 %v6634, 0.0
        %v6673 = vmax.f32 %v6639, 0.0
        %6706 = vrot.lane.b32.xlu0 %v6642, 12
        %v6707 = vpop.permute.xlu0 %6706
        %6708 = vrot.lane.b32.xlu0 %v6643, 12
        %v6709 = vpop.permute.xlu0 %6708
        %6710 = vrot.lane.b32.xlu0 %v6644, 12
        %v6711 = vpop.permute.xlu0 %6710
        %6712 = vrot.lane.b32.xlu0 %v6645, 12
        %v6713 = vpop.permute.xlu0 %6712
        %6714 = vrot.lane.b32.xlu0 %v6646, 12
        %v6715 = vpop.permute.xlu0 %6714
        %6716 = vrot.lane.b32.xlu0 %v6647, 12
        %v6717 = vpop.permute.xlu0 %6716
        %6718 = vrot.lane.b32.xlu0 %v6648, 12
        %v6719 = vpop.permute.xlu0 %6718
        %6720 = vrot.lane.b32.xlu0 %v6649, 12
        %v6721 = vpop.permute.xlu0 %6720
        %6722 = vrot.lane.b32.xlu0 %v6650, 12
        %v6723 = vpop.permute.xlu0 %6722
        %6724 = vrot.lane.b32.xlu0 %v6651, 12
        %v6725 = vpop.permute.xlu0 %6724
        %6726 = vrot.lane.b32.xlu0 %v6652, 12
        %v6727 = vpop.permute.xlu0 %6726
        %6728 = vrot.lane.b32.xlu0 %v6653, 12
        %v6729 = vpop.permute.xlu0 %6728
        %6730 = vrot.lane.b32.xlu0 %v6654, 12
        %v6731 = vpop.permute.xlu0 %6730
        %6732 = vrot.lane.b32.xlu0 %v6655, 12
        %v6733 = vpop.permute.xlu0 %6732
        %6734 = vrot.lane.b32.xlu0 %v6656, 12
        %v6735 = vpop.permute.xlu0 %6734
        %6736 = vrot.lane.b32.xlu0 %v6657, 12
        %v6737 = vpop.permute.xlu0 %6736
        %6738 = vrot.lane.b32.xlu0 %v6658, 12
        %v6739 = vpop.permute.xlu0 %6738
        %6740 = vrot.lane.b32.xlu0 %v6659, 12
        %v6741 = vpop.permute.xlu0 %6740
        %6742 = vrot.lane.b32.xlu0 %v6660, 12
        %v6743 = vpop.permute.xlu0 %6742
        %6744 = vrot.lane.b32.xlu0 %v6661, 12
        %v6745 = vpop.permute.xlu0 %6744
        %6746 = vrot.lane.b32.xlu0 %v6662, 12
        %v6747 = vpop.permute.xlu0 %6746
        %6748 = vrot.lane.b32.xlu0 %v6663, 12
        %v6749 = vpop.permute.xlu0 %6748
        %6750 = vrot.lane.b32.xlu0 %v6664, 12
        %v6751 = vpop.permute.xlu0 %6750
        %6752 = vrot.lane.b32.xlu0 %v6665, 12
        %v6753 = vpop.permute.xlu0 %6752
        %6754 = vrot.lane.b32.xlu0 %v6666, 12
        %v6755 = vpop.permute.xlu0 %6754
        %6756 = vrot.lane.b32.xlu0 %v6667, 12
        %v6757 = vpop.permute.xlu0 %6756
        %6758 = vrot.lane.b32.xlu0 %v6668, 12
        %v6759 = vpop.permute.xlu0 %6758
        %6760 = vrot.lane.b32.xlu0 %v6669, 12
        %v6761 = vpop.permute.xlu0 %6760
        %6762 = vrot.lane.b32.xlu0 %v6670, 12
        %v6763 = vpop.permute.xlu0 %6762
        %6764 = vrot.lane.b32.xlu0 %v6671, 12
        %v6765 = vpop.permute.xlu0 %6764
        %6766 = vrot.lane.b32.xlu0 %v6672, 12
        %v6767 = vpop.permute.xlu0 %6766
        %6768 = vrot.lane.b32.xlu0 %v6673, 12
        %v6769 = vpop.permute.xlu0 %6768
        %vm6802 = vcmask 130144
        %6803 = vst.msk [vmem:[%s298] sm:$0xff] %vm6802, %v6707
        %6804 = vst.msk [vmem:[%s298 + $0x8] sm:$0xff] %vm6802, %v6709
        %6805 = vst.msk [vmem:[%s298 + $0x10] sm:$0xff] %vm6802, %v6711
        %6806 = vst.msk [vmem:[%s298 + $0x18] sm:$0xff] %vm6802, %v6713
        %6807 = vst.msk [vmem:[%s298 + $0x20] sm:$0xff] %vm6802, %v6715
        %6808 = vst.msk [vmem:[%s298 + $0x28] sm:$0xff] %vm6802, %v6717
        %6809 = vst.msk [vmem:[%s298 + $0x30] sm:$0xff] %vm6802, %v6719
        %6810 = vst.msk [vmem:[%s298 + $0x38] sm:$0xff] %vm6802, %v6721
        %6811 = vst.msk [vmem:[%s298 + $0x40] sm:$0xff] %vm6802, %v6723
        %6812 = vst.msk [vmem:[%s298 + $0x48] sm:$0xff] %vm6802, %v6725
        %6813 = vst.msk [vmem:[%s298 + $0x50] sm:$0xff] %vm6802, %v6727
        %6814 = vst.msk [vmem:[%s298 + $0x58] sm:$0xff] %vm6802, %v6729
        %6815 = vst.msk [vmem:[%s298 + $0x60] sm:$0xff] %vm6802, %v6731
        %6816 = vst.msk [vmem:[%s298 + $0x68] sm:$0xff] %vm6802, %v6733
        %6817 = vst.msk [vmem:[%s298 + $0x70] sm:$0xff] %vm6802, %v6735
        %6818 = vst.msk [vmem:[%s298 + $0x78] sm:$0xff] %vm6802, %v6737
        %6819 = vst.msk [vmem:[%s298 + $0x80] sm:$0xff] %vm6802, %v6739
        %6820 = vst.msk [vmem:[%s298 + $0x88] sm:$0xff] %vm6802, %v6741
        %6821 = vst.msk [vmem:[%s298 + $0x90] sm:$0xff] %vm6802, %v6743
        %6822 = vst.msk [vmem:[%s298 + $0x98] sm:$0xff] %vm6802, %v6745
        %6823 = vst.msk [vmem:[%s298 + $0xa0] sm:$0xff] %vm6802, %v6747
        %6824 = vst.msk [vmem:[%s298 + $0xa8] sm:$0xff] %vm6802, %v6749
        %6825 = vst.msk [vmem:[%s298 + $0xb0] sm:$0xff] %vm6802, %v6751
        %6826 = vst.msk [vmem:[%s298 + $0xb8] sm:$0xff] %vm6802, %v6753
        %6827 = vst.msk [vmem:[%s298 + $0xc0] sm:$0xff] %vm6802, %v6755
        %6828 = vst.msk [vmem:[%s298 + $0xc8] sm:$0xff] %vm6802, %v6757
        %6829 = vst.msk [vmem:[%s298 + $0xd0] sm:$0xff] %vm6802, %v6759
        %6830 = vst.msk [vmem:[%s298 + $0xd8] sm:$0xff] %vm6802, %v6761
        %6831 = vst.msk [vmem:[%s298 + $0xe0] sm:$0xff] %vm6802, %v6763
        %6832 = vst.msk [vmem:[%s298 + $0xe8] sm:$0xff] %vm6802, %v6765
        %6833 = vst.msk [vmem:[%s298 + $0xf0] sm:$0xff] %vm6802, %v6767
        %6834 = vst.msk [vmem:[%s298 + $0xf8] sm:$0xff] %vm6802, %v6769
        %6835 = vst.msk [vmem:[%s325 + $0x3] sm:$0xff] %vm6802, %v6707
        %6836 = vst.msk [vmem:[%s325 + $0xb] sm:$0xff] %vm6802, %v6709
        %6837 = vst.msk [vmem:[%s325 + $0x1b] sm:$0xff] %vm6802, %v6711
        %6838 = vst.msk [vmem:[%s325 + $0x23] sm:$0xff] %vm6802, %v6713
        %6839 = vst.msk [vmem:[%s325 + $0x33] sm:$0xff] %vm6802, %v6715
        %6840 = vst.msk [vmem:[%s325 + $0x3b] sm:$0xff] %vm6802, %v6717
        %6841 = vst.msk [vmem:[%s325 + $0x4b] sm:$0xff] %vm6802, %v6719
        %6842 = vst.msk [vmem:[%s325 + $0x53] sm:$0xff] %vm6802, %v6721
        %6843 = vst.msk [vmem:[%s325 + $0x63] sm:$0xff] %vm6802, %v6723
        %6844 = vst.msk [vmem:[%s325 + $0x6b] sm:$0xff] %vm6802, %v6725
        %6845 = vst.msk [vmem:[%s325 + $0x7b] sm:$0xff] %vm6802, %v6727
        %6846 = vst.msk [vmem:[%s325 + $0x83] sm:$0xff] %vm6802, %v6729
        %6847 = vst.msk [vmem:[%s325 + $0x93] sm:$0xff] %vm6802, %v6731
        %6848 = vst.msk [vmem:[%s325 + $0x9b] sm:$0xff] %vm6802, %v6733
        %6849 = vst.msk [vmem:[%s325 + $0xab] sm:$0xff] %vm6802, %v6735
        %6850 = vst.msk [vmem:[%s325 + $0xb3] sm:$0xff] %vm6802, %v6737
        %6851 = vst.msk [vmem:[%s325 + $0xc3] sm:$0xff] %vm6802, %v6739
        %6852 = vst.msk [vmem:[%s325 + $0xcb] sm:$0xff] %vm6802, %v6741
        %6853 = vst.msk [vmem:[%s325 + $0xdb] sm:$0xff] %vm6802, %v6743
        %6854 = vst.msk [vmem:[%s325 + $0xe3] sm:$0xff] %vm6802, %v6745
        %6855 = vst.msk [vmem:[%s325 + $0xf3] sm:$0xff] %vm6802, %v6747
        %6856 = vst.msk [vmem:[%s325 + $0xfb] sm:$0xff] %vm6802, %v6749
        %6857 = vst.msk [vmem:[%s325 + $0x10b] sm:$0xff] %vm6802, %v6751
        %6858 = vst.msk [vmem:[%s325 + $0x113] sm:$0xff] %vm6802, %v6753
        %6859 = vst.msk [vmem:[%s325 + $0x123] sm:$0xff] %vm6802, %v6755
        %6860 = vst.msk [vmem:[%s325 + $0x12b] sm:$0xff] %vm6802, %v6757
        %6861 = vst.msk [vmem:[%s325 + $0x13b] sm:$0xff] %vm6802, %v6759
        %6862 = vst.msk [vmem:[%s325 + $0x143] sm:$0xff] %vm6802, %v6761
        %6863 = vst.msk [vmem:[%s325 + $0x153] sm:$0xff] %vm6802, %v6763
        %6864 = vst.msk [vmem:[%s325 + $0x15b] sm:$0xff] %vm6802, %v6765
        %6865 = vst.msk [vmem:[%s325 + $0x16b] sm:$0xff] %vm6802, %v6767
        %6866 = vst.msk [vmem:[%s325 + $0x173] sm:$0xff] %vm6802, %v6769
        %v6867 = vld [vmem:[%s4726 + $0x2] sm:$0xff]
        %v6868 = vld [vmem:[%s4726 + $0xa] sm:$0xff]
        %v6869 = vld [vmem:[%s4726 + $0x1a] sm:$0xff]
        %v6870 = vld [vmem:[%s4726 + $0x22] sm:$0xff]
        %v6871 = vld [vmem:[%s4726 + $0x32] sm:$0xff]
        %v6872 = vld [vmem:[%s4726 + $0x3a] sm:$0xff]
        %v6873 = vld [vmem:[%s4726 + $0x4a] sm:$0xff]
        %v6874 = vld [vmem:[%s4726 + $0x52] sm:$0xff]
        %v6875 = vld [vmem:[%s4726 + $0x62] sm:$0xff]
        %v6876 = vld [vmem:[%s4726 + $0x6a] sm:$0xff]
        %v6877 = vld [vmem:[%s4726 + $0x7a] sm:$0xff]
        %v6878 = vld [vmem:[%s4726 + $0x82] sm:$0xff]
        %v6879 = vld [vmem:[%s4726 + $0x92] sm:$0xff]
        %v6880 = vld [vmem:[%s4726 + $0x9a] sm:$0xff]
        %v6881 = vld [vmem:[%s4726 + $0xaa] sm:$0xff]
        %v6882 = vld [vmem:[%s4726 + $0xb2] sm:$0xff]
        %v6883 = vld [vmem:[%s4726 + $0xc2] sm:$0xff]
        %v6884 = vld [vmem:[%s4726 + $0xca] sm:$0xff]
        %v6885 = vld [vmem:[%s4726 + $0xda] sm:$0xff]
        %v6886 = vld [vmem:[%s4726 + $0xe2] sm:$0xff]
        %v6887 = vld [vmem:[%s4726 + $0xf2] sm:$0xff]
        %v6888 = vld [vmem:[%s4726 + $0xfa] sm:$0xff]
        %v6889 = vld [vmem:[%s4726 + $0x10a] sm:$0xff]
        %v6890 = vld [vmem:[%s4726 + $0x112] sm:$0xff]
        %v6891 = vld [vmem:[%s4726 + $0x122] sm:$0xff]
        %v6892 = vld [vmem:[%s4726 + $0x12a] sm:$0xff]
        %v6893 = vld [vmem:[%s4726 + $0x13a] sm:$0xff]
        %v6894 = vld [vmem:[%s4726 + $0x142] sm:$0xff]
        %v6895 = vld [vmem:[%s4726 + $0x152] sm:$0xff]
        %v6896 = vld [vmem:[%s4726 + $0x15a] sm:$0xff]
        %v6897 = vld [vmem:[%s4726 + $0x16a] sm:$0xff]
        %v6898 = vld [vmem:[%s4726 + $0x172] sm:$0xff]
        %v6899 = vld [vmem:[%s4726 + $0x3] sm:$0xff]
        %v6900 = vld [vmem:[%s4726 + $0xb] sm:$0xff]
        %v6901 = vld [vmem:[%s4726 + $0x1b] sm:$0xff]
        %v6902 = vld [vmem:[%s4726 + $0x23] sm:$0xff]
        %v6903 = vld [vmem:[%s4726 + $0x33] sm:$0xff]
        %v6904 = vld [vmem:[%s4726 + $0x3b] sm:$0xff]
        %v6905 = vld [vmem:[%s4726 + $0x4b] sm:$0xff]
        %v6906 = vld [vmem:[%s4726 + $0x53] sm:$0xff]
        %v6907 = vld [vmem:[%s4726 + $0x63] sm:$0xff]
        %v6908 = vld [vmem:[%s4726 + $0x6b] sm:$0xff]
        %v6909 = vld [vmem:[%s4726 + $0x7b] sm:$0xff]
        %v6910 = vld [vmem:[%s4726 + $0x83] sm:$0xff]
        %v6911 = vld [vmem:[%s4726 + $0x93] sm:$0xff]
        %v6912 = vld [vmem:[%s4726 + $0x9b] sm:$0xff]
        %v6913 = vld [vmem:[%s4726 + $0xab] sm:$0xff]
        %v6914 = vld [vmem:[%s4726 + $0xb3] sm:$0xff]
        %v6915 = vld [vmem:[%s4726 + $0xc3] sm:$0xff]
        %v6916 = vld [vmem:[%s4726 + $0xcb] sm:$0xff]
        %v6917 = vld [vmem:[%s4726 + $0xdb] sm:$0xff]
        %v6918 = vld [vmem:[%s4726 + $0xe3] sm:$0xff]
        %v6919 = vld [vmem:[%s4726 + $0xf3] sm:$0xff]
        %v6920 = vld [vmem:[%s4726 + $0xfb] sm:$0xff]
        %v6921 = vld [vmem:[%s4726 + $0x10b] sm:$0xff]
        %v6922 = vld [vmem:[%s4726 + $0x113] sm:$0xff]
        %v6923 = vld [vmem:[%s4726 + $0x123] sm:$0xff]
        %v6924 = vld [vmem:[%s4726 + $0x12b] sm:$0xff]
        %v6925 = vld [vmem:[%s4726 + $0x13b] sm:$0xff]
        %v6926 = vld [vmem:[%s4726 + $0x143] sm:$0xff]
        %v6927 = vld [vmem:[%s4726 + $0x153] sm:$0xff]
        %v6928 = vld [vmem:[%s4726 + $0x15b] sm:$0xff]
        %v6929 = vld [vmem:[%s4726 + $0x16b] sm:$0xff]
        %v6930 = vld [vmem:[%s4726 + $0x173] sm:$0xff]
        %v6931 = vld [vmem:[%s4726 + $0x4] sm:$0xff]
        %v6932 = vld [vmem:[%s4726 + $0xc] sm:$0xff]
        %v6933 = vld [vmem:[%s4726 + $0x1c] sm:$0xff]
        %v6934 = vld [vmem:[%s4726 + $0x24] sm:$0xff]
        %v6935 = vld [vmem:[%s4726 + $0x34] sm:$0xff]
        %v6936 = vld [vmem:[%s4726 + $0x3c] sm:$0xff]
        %v6937 = vld [vmem:[%s4726 + $0x4c] sm:$0xff]
        %v6938 = vld [vmem:[%s4726 + $0x54] sm:$0xff]
        %v6939 = vld [vmem:[%s4726 + $0x64] sm:$0xff]
        %v6940 = vld [vmem:[%s4726 + $0x6c] sm:$0xff]
        %v6941 = vld [vmem:[%s4726 + $0x7c] sm:$0xff]
        %v6942 = vld [vmem:[%s4726 + $0x84] sm:$0xff]
        %v6943 = vld [vmem:[%s4726 + $0x94] sm:$0xff]
        %v6944 = vld [vmem:[%s4726 + $0x9c] sm:$0xff]
        %v6945 = vld [vmem:[%s4726 + $0xac] sm:$0xff]
        %v6946 = vld [vmem:[%s4726 + $0xb4] sm:$0xff]
        %v6947 = vld [vmem:[%s4726 + $0xc4] sm:$0xff]
        %v6948 = vld [vmem:[%s4726 + $0xcc] sm:$0xff]
        %v6949 = vld [vmem:[%s4726 + $0xdc] sm:$0xff]
        %v6950 = vld [vmem:[%s4726 + $0xe4] sm:$0xff]
        %v6951 = vld [vmem:[%s4726 + $0xf4] sm:$0xff]
        %v6952 = vld [vmem:[%s4726 + $0xfc] sm:$0xff]
        %v6953 = vld [vmem:[%s4726 + $0x10c] sm:$0xff]
        %v6954 = vld [vmem:[%s4726 + $0x114] sm:$0xff]
        %v6955 = vld [vmem:[%s4726 + $0x124] sm:$0xff]
        %v6956 = vld [vmem:[%s4726 + $0x12c] sm:$0xff]
        %v6957 = vld [vmem:[%s4726 + $0x13c] sm:$0xff]
        %v6958 = vld [vmem:[%s4726 + $0x144] sm:$0xff]
        %v6959 = vld [vmem:[%s4726 + $0x154] sm:$0xff]
        %v6960 = vld [vmem:[%s4726 + $0x15c] sm:$0xff]
        %v6961 = vld [vmem:[%s4726 + $0x16c] sm:$0xff]
        %v6962 = vld [vmem:[%s4726 + $0x174] sm:$0xff]
        %v6963 = vld [vmem:[%s325 + $0x2] sm:$0xff]
        %v6964 = vld [vmem:[%s325 + $0xa] sm:$0xff]
        %v6965 = vld [vmem:[%s325 + $0x1a] sm:$0xff]
        %v6966 = vld [vmem:[%s325 + $0x22] sm:$0xff]
        %v6967 = vld [vmem:[%s325 + $0x32] sm:$0xff]
        %v6968 = vld [vmem:[%s325 + $0x3a] sm:$0xff]
        %v6969 = vld [vmem:[%s325 + $0x4a] sm:$0xff]
        %v6970 = vld [vmem:[%s325 + $0x52] sm:$0xff]
        %v6971 = vld [vmem:[%s325 + $0x62] sm:$0xff]
        %v6972 = vld [vmem:[%s325 + $0x6a] sm:$0xff]
        %v6973 = vld [vmem:[%s325 + $0x7a] sm:$0xff]
        %v6974 = vld [vmem:[%s325 + $0x82] sm:$0xff]
        %v6975 = vld [vmem:[%s325 + $0x92] sm:$0xff]
        %v6976 = vld [vmem:[%s325 + $0x9a] sm:$0xff]
        %v6977 = vld [vmem:[%s325 + $0xaa] sm:$0xff]
        %v6978 = vld [vmem:[%s325 + $0xb2] sm:$0xff]
        %v6979 = vld [vmem:[%s325 + $0xc2] sm:$0xff]
        %v6980 = vld [vmem:[%s325 + $0xca] sm:$0xff]
        %v6981 = vld [vmem:[%s325 + $0xda] sm:$0xff]
        %v6982 = vld [vmem:[%s325 + $0xe2] sm:$0xff]
        %v6983 = vld [vmem:[%s325 + $0xf2] sm:$0xff]
        %v6984 = vld [vmem:[%s325 + $0xfa] sm:$0xff]
        %v6985 = vld [vmem:[%s325 + $0x10a] sm:$0xff]
        %v6986 = vld [vmem:[%s325 + $0x112] sm:$0xff]
        %v6987 = vld [vmem:[%s325 + $0x122] sm:$0xff]
        %v6988 = vld [vmem:[%s325 + $0x12a] sm:$0xff]
        %v6989 = vld [vmem:[%s325 + $0x13a] sm:$0xff]
        %v6990 = vld [vmem:[%s325 + $0x142] sm:$0xff]
        %v6991 = vld [vmem:[%s325 + $0x152] sm:$0xff]
        %v6992 = vld [vmem:[%s325 + $0x15a] sm:$0xff]
        %v6993 = vld [vmem:[%s325 + $0x16a] sm:$0xff]
        %v6994 = vld [vmem:[%s325 + $0x172] sm:$0xff]
        %v6995 = vld [vmem:[%s325 + $0x3] sm:$0xff]
        %v6996 = vld [vmem:[%s325 + $0xb] sm:$0xff]
        %v6997 = vld [vmem:[%s325 + $0x1b] sm:$0xff]
        %v6998 = vld [vmem:[%s325 + $0x23] sm:$0xff]
        %v6999 = vld [vmem:[%s325 + $0x33] sm:$0xff]
        %v7000 = vld [vmem:[%s325 + $0x3b] sm:$0xff]
        %v7001 = vld [vmem:[%s325 + $0x4b] sm:$0xff]
        %v7002 = vld [vmem:[%s325 + $0x53] sm:$0xff]
        %v7003 = vld [vmem:[%s325 + $0x63] sm:$0xff]
        %v7004 = vld [vmem:[%s325 + $0x6b] sm:$0xff]
        %v7005 = vld [vmem:[%s325 + $0x7b] sm:$0xff]
        %v7006 = vld [vmem:[%s325 + $0x83] sm:$0xff]
        %v7007 = vld [vmem:[%s325 + $0x93] sm:$0xff]
        %v7008 = vld [vmem:[%s325 + $0x9b] sm:$0xff]
        %v7009 = vld [vmem:[%s325 + $0xab] sm:$0xff]
        %v7010 = vld [vmem:[%s325 + $0xb3] sm:$0xff]
        %v7011 = vld [vmem:[%s325 + $0xc3] sm:$0xff]
        %v7012 = vld [vmem:[%s325 + $0xcb] sm:$0xff]
        %v7013 = vld [vmem:[%s325 + $0xdb] sm:$0xff]
        %v7014 = vld [vmem:[%s325 + $0xe3] sm:$0xff]
        %v7015 = vld [vmem:[%s325 + $0xf3] sm:$0xff]
        %v7016 = vld [vmem:[%s325 + $0xfb] sm:$0xff]
        %v7017 = vld [vmem:[%s325 + $0x10b] sm:$0xff]
        %v7018 = vld [vmem:[%s325 + $0x113] sm:$0xff]
        %v7019 = vld [vmem:[%s325 + $0x123] sm:$0xff]
        %v7020 = vld [vmem:[%s325 + $0x12b] sm:$0xff]
        %v7021 = vld [vmem:[%s325 + $0x13b] sm:$0xff]
        %v7022 = vld [vmem:[%s325 + $0x143] sm:$0xff]
        %v7023 = vld [vmem:[%s325 + $0x153] sm:$0xff]
        %v7024 = vld [vmem:[%s325 + $0x15b] sm:$0xff]
        %v7025 = vld [vmem:[%s325 + $0x16b] sm:$0xff]
        %v7026 = vld [vmem:[%s325 + $0x173] sm:$0xff]
        %v7027 = vld [vmem:[%s325 + $0x4] sm:$0xff]
        %v7028 = vld [vmem:[%s325 + $0xc] sm:$0xff]
        %v7029 = vld [vmem:[%s325 + $0x1c] sm:$0xff]
        %v7030 = vld [vmem:[%s325 + $0x24] sm:$0xff]
        %v7031 = vld [vmem:[%s325 + $0x34] sm:$0xff]
        %v7032 = vld [vmem:[%s325 + $0x3c] sm:$0xff]
        %v7033 = vld [vmem:[%s325 + $0x4c] sm:$0xff]
        %v7034 = vld [vmem:[%s325 + $0x54] sm:$0xff]
        %v7035 = vld [vmem:[%s325 + $0x64] sm:$0xff]
        %v7036 = vld [vmem:[%s325 + $0x6c] sm:$0xff]
        %v7037 = vld [vmem:[%s325 + $0x7c] sm:$0xff]
        %v7038 = vld [vmem:[%s325 + $0x84] sm:$0xff]
        %v7039 = vld [vmem:[%s325 + $0x94] sm:$0xff]
        %v7040 = vld [vmem:[%s325 + $0x9c] sm:$0xff]
        %v7041 = vld [vmem:[%s325 + $0xac] sm:$0xff]
        %v7042 = vld [vmem:[%s325 + $0xb4] sm:$0xff]
        %v7043 = vld [vmem:[%s325 + $0xc4] sm:$0xff]
        %v7044 = vld [vmem:[%s325 + $0xcc] sm:$0xff]
        %v7045 = vld [vmem:[%s325 + $0xdc] sm:$0xff]
        %v7046 = vld [vmem:[%s325 + $0xe4] sm:$0xff]
        %v7047 = vld [vmem:[%s325 + $0xf4] sm:$0xff]
        %v7048 = vld [vmem:[%s325 + $0xfc] sm:$0xff]
        %v7049 = vld [vmem:[%s325 + $0x10c] sm:$0xff]
        %v7050 = vld [vmem:[%s325 + $0x114] sm:$0xff]
        %v7051 = vld [vmem:[%s325 + $0x124] sm:$0xff]
        %v7052 = vld [vmem:[%s325 + $0x12c] sm:$0xff]
        %v7053 = vld [vmem:[%s325 + $0x13c] sm:$0xff]
        %v7054 = vld [vmem:[%s325 + $0x144] sm:$0xff]
        %v7055 = vld [vmem:[%s325 + $0x154] sm:$0xff]
        %v7056 = vld [vmem:[%s325 + $0x15c] sm:$0xff]
        %v7057 = vld [vmem:[%s325 + $0x16c] sm:$0xff]
        %v7058 = vld [vmem:[%s325 + $0x174] sm:$0xff]
        %v7059 = vld [vmem:[%s4919 + $0x2] sm:$0xff]
        %v7060 = vld [vmem:[%s4919 + $0xa] sm:$0xff]
        %v7061 = vld [vmem:[%s4919 + $0x1a] sm:$0xff]
        %v7062 = vld [vmem:[%s4919 + $0x22] sm:$0xff]
        %v7063 = vld [vmem:[%s4919 + $0x32] sm:$0xff]
        %v7064 = vld [vmem:[%s4919 + $0x3a] sm:$0xff]
        %v7065 = vld [vmem:[%s4919 + $0x4a] sm:$0xff]
        %v7066 = vld [vmem:[%s4919 + $0x52] sm:$0xff]
        %v7067 = vld [vmem:[%s4919 + $0x62] sm:$0xff]
        %v7068 = vld [vmem:[%s4919 + $0x6a] sm:$0xff]
        %v7069 = vld [vmem:[%s4919 + $0x7a] sm:$0xff]
        %v7070 = vld [vmem:[%s4919 + $0x82] sm:$0xff]
        %v7071 = vld [vmem:[%s4919 + $0x92] sm:$0xff]
        %v7072 = vld [vmem:[%s4919 + $0x9a] sm:$0xff]
        %v7073 = vld [vmem:[%s4919 + $0xaa] sm:$0xff]
        %v7074 = vld [vmem:[%s4919 + $0xb2] sm:$0xff]
        %v7075 = vld [vmem:[%s4919 + $0xc2] sm:$0xff]
        %v7076 = vld [vmem:[%s4919 + $0xca] sm:$0xff]
        %v7077 = vld [vmem:[%s4919 + $0xda] sm:$0xff]
        %v7078 = vld [vmem:[%s4919 + $0xe2] sm:$0xff]
        %v7079 = vld [vmem:[%s4919 + $0xf2] sm:$0xff]
        %v7080 = vld [vmem:[%s4919 + $0xfa] sm:$0xff]
        %v7081 = vld [vmem:[%s4919 + $0x10a] sm:$0xff]
        %v7082 = vld [vmem:[%s4919 + $0x112] sm:$0xff]
        %v7083 = vld [vmem:[%s4919 + $0x122] sm:$0xff]
        %v7084 = vld [vmem:[%s4919 + $0x12a] sm:$0xff]
        %v7085 = vld [vmem:[%s4919 + $0x13a] sm:$0xff]
        %v7086 = vld [vmem:[%s4919 + $0x142] sm:$0xff]
        %v7087 = vld [vmem:[%s4919 + $0x152] sm:$0xff]
        %v7088 = vld [vmem:[%s4919 + $0x15a] sm:$0xff]
        %v7089 = vld [vmem:[%s4919 + $0x16a] sm:$0xff]
        %v7090 = vld [vmem:[%s4919 + $0x172] sm:$0xff]
        %v7091 = vld [vmem:[%s4919 + $0x3] sm:$0xff]
        %v7092 = vld [vmem:[%s4919 + $0xb] sm:$0xff]
        %v7093 = vld [vmem:[%s4919 + $0x1b] sm:$0xff]
        %v7094 = vld [vmem:[%s4919 + $0x23] sm:$0xff]
        %v7095 = vld [vmem:[%s4919 + $0x33] sm:$0xff]
        %v7096 = vld [vmem:[%s4919 + $0x3b] sm:$0xff]
        %v7097 = vld [vmem:[%s4919 + $0x4b] sm:$0xff]
        %v7098 = vld [vmem:[%s4919 + $0x53] sm:$0xff]
        %v7099 = vld [vmem:[%s4919 + $0x63] sm:$0xff]
        %v7100 = vld [vmem:[%s4919 + $0x6b] sm:$0xff]
        %v7101 = vld [vmem:[%s4919 + $0x7b] sm:$0xff]
        %v7102 = vld [vmem:[%s4919 + $0x83] sm:$0xff]
        %v7103 = vld [vmem:[%s4919 + $0x93] sm:$0xff]
        %v7104 = vld [vmem:[%s4919 + $0x9b] sm:$0xff]
        %v7105 = vld [vmem:[%s4919 + $0xab] sm:$0xff]
        %v7106 = vld [vmem:[%s4919 + $0xb3] sm:$0xff]
        %v7107 = vld [vmem:[%s4919 + $0xc3] sm:$0xff]
        %v7108 = vld [vmem:[%s4919 + $0xcb] sm:$0xff]
        %v7109 = vld [vmem:[%s4919 + $0xdb] sm:$0xff]
        %v7110 = vld [vmem:[%s4919 + $0xe3] sm:$0xff]
        %v7111 = vld [vmem:[%s4919 + $0xf3] sm:$0xff]
        %v7112 = vld [vmem:[%s4919 + $0xfb] sm:$0xff]
        %v7113 = vld [vmem:[%s4919 + $0x10b] sm:$0xff]
        %v7114 = vld [vmem:[%s4919 + $0x113] sm:$0xff]
        %v7115 = vld [vmem:[%s4919 + $0x123] sm:$0xff]
        %v7116 = vld [vmem:[%s4919 + $0x12b] sm:$0xff]
        %v7117 = vld [vmem:[%s4919 + $0x13b] sm:$0xff]
        %v7118 = vld [vmem:[%s4919 + $0x143] sm:$0xff]
        %v7119 = vld [vmem:[%s4919 + $0x153] sm:$0xff]
        %v7120 = vld [vmem:[%s4919 + $0x15b] sm:$0xff]
        %v7121 = vld [vmem:[%s4919 + $0x16b] sm:$0xff]
        %v7122 = vld [vmem:[%s4919 + $0x173] sm:$0xff]
        %v7123 = vld [vmem:[%s4919 + $0x4] sm:$0xff]
        %v7124 = vld [vmem:[%s4919 + $0xc] sm:$0xff]
        %v7125 = vld [vmem:[%s4919 + $0x1c] sm:$0xff]
        %v7126 = vld [vmem:[%s4919 + $0x24] sm:$0xff]
        %v7127 = vld [vmem:[%s4919 + $0x34] sm:$0xff]
        %v7128 = vld [vmem:[%s4919 + $0x3c] sm:$0xff]
        %v7129 = vld [vmem:[%s4919 + $0x4c] sm:$0xff]
        %v7130 = vld [vmem:[%s4919 + $0x54] sm:$0xff]
        %v7131 = vld [vmem:[%s4919 + $0x64] sm:$0xff]
        %v7132 = vld [vmem:[%s4919 + $0x6c] sm:$0xff]
        %v7133 = vld [vmem:[%s4919 + $0x7c] sm:$0xff]
        %v7134 = vld [vmem:[%s4919 + $0x84] sm:$0xff]
        %v7135 = vld [vmem:[%s4919 + $0x94] sm:$0xff]
        %v7136 = vld [vmem:[%s4919 + $0x9c] sm:$0xff]
        %v7137 = vld [vmem:[%s4919 + $0xac] sm:$0xff]
        %v7138 = vld [vmem:[%s4919 + $0xb4] sm:$0xff]
        %v7139 = vld [vmem:[%s4919 + $0xc4] sm:$0xff]
        %v7140 = vld [vmem:[%s4919 + $0xcc] sm:$0xff]
        %v7141 = vld [vmem:[%s4919 + $0xdc] sm:$0xff]
        %v7142 = vld [vmem:[%s4919 + $0xe4] sm:$0xff]
        %v7143 = vld [vmem:[%s4919 + $0xf4] sm:$0xff]
        %v7144 = vld [vmem:[%s4919 + $0xfc] sm:$0xff]
        %v7145 = vld [vmem:[%s4919 + $0x10c] sm:$0xff]
        %v7146 = vld [vmem:[%s4919 + $0x114] sm:$0xff]
        %v7147 = vld [vmem:[%s4919 + $0x124] sm:$0xff]
        %v7148 = vld [vmem:[%s4919 + $0x12c] sm:$0xff]
        %v7149 = vld [vmem:[%s4919 + $0x13c] sm:$0xff]
        %v7150 = vld [vmem:[%s4919 + $0x144] sm:$0xff]
        %v7151 = vld [vmem:[%s4919 + $0x154] sm:$0xff]
        %v7152 = vld [vmem:[%s4919 + $0x15c] sm:$0xff]
        %v7153 = vld [vmem:[%s4919 + $0x16c] sm:$0xff]
        %v7154 = vld [vmem:[%s4919 + $0x174] sm:$0xff]
        %7187 = vrot.lane.b32.xlu0 %v6899, 16
        %v7188 = vpop.permute.xlu0 %7187
        %7189 = vrot.lane.b32.xlu0 %v6900, 16
        %v7190 = vpop.permute.xlu0 %7189
        %7191 = vrot.lane.b32.xlu0 %v6901, 16
        %v7192 = vpop.permute.xlu0 %7191
        %7193 = vrot.lane.b32.xlu0 %v6902, 16
        %v7194 = vpop.permute.xlu0 %7193
        %7195 = vrot.lane.b32.xlu0 %v6903, 16
        %v7196 = vpop.permute.xlu0 %7195
        %7197 = vrot.lane.b32.xlu0 %v6904, 16
        %v7198 = vpop.permute.xlu0 %7197
        %7199 = vrot.lane.b32.xlu0 %v6905, 16
        %v7200 = vpop.permute.xlu0 %7199
        %7201 = vrot.lane.b32.xlu0 %v6906, 16
        %v7202 = vpop.permute.xlu0 %7201
        %7203 = vrot.lane.b32.xlu0 %v6907, 16
        %v7204 = vpop.permute.xlu0 %7203
        %7205 = vrot.lane.b32.xlu0 %v6908, 16
        %v7206 = vpop.permute.xlu0 %7205
        %7207 = vrot.lane.b32.xlu0 %v6909, 16
        %v7208 = vpop.permute.xlu0 %7207
        %7209 = vrot.lane.b32.xlu0 %v6910, 16
        %v7210 = vpop.permute.xlu0 %7209
        %7211 = vrot.lane.b32.xlu0 %v6911, 16
        %v7212 = vpop.permute.xlu0 %7211
        %7213 = vrot.lane.b32.xlu0 %v6912, 16
        %v7214 = vpop.permute.xlu0 %7213
        %7215 = vrot.lane.b32.xlu0 %v6913, 16
        %v7216 = vpop.permute.xlu0 %7215
        %7217 = vrot.lane.b32.xlu0 %v6914, 16
        %v7218 = vpop.permute.xlu0 %7217
        %7219 = vrot.lane.b32.xlu0 %v6915, 16
        %v7220 = vpop.permute.xlu0 %7219
        %7221 = vrot.lane.b32.xlu0 %v6916, 16
        %v7222 = vpop.permute.xlu0 %7221
        %7223 = vrot.lane.b32.xlu0 %v6917, 16
        %v7224 = vpop.permute.xlu0 %7223
        %7225 = vrot.lane.b32.xlu0 %v6918, 16
        %v7226 = vpop.permute.xlu0 %7225
        %7227 = vrot.lane.b32.xlu0 %v6919, 16
        %v7228 = vpop.permute.xlu0 %7227
        %7229 = vrot.lane.b32.xlu0 %v6920, 16
        %v7230 = vpop.permute.xlu0 %7229
        %7231 = vrot.lane.b32.xlu0 %v6921, 16
        %v7232 = vpop.permute.xlu0 %7231
        %7233 = vrot.lane.b32.xlu0 %v6922, 16
        %v7234 = vpop.permute.xlu0 %7233
        %7235 = vrot.lane.b32.xlu0 %v6923, 16
        %v7236 = vpop.permute.xlu0 %7235
        %7237 = vrot.lane.b32.xlu0 %v6924, 16
        %v7238 = vpop.permute.xlu0 %7237
        %7239 = vrot.lane.b32.xlu0 %v6925, 16
        %v7240 = vpop.permute.xlu0 %7239
        %7241 = vrot.lane.b32.xlu0 %v6926, 16
        %v7242 = vpop.permute.xlu0 %7241
        %7243 = vrot.lane.b32.xlu0 %v6927, 16
        %v7244 = vpop.permute.xlu0 %7243
        %7245 = vrot.lane.b32.xlu0 %v6928, 16
        %v7246 = vpop.permute.xlu0 %7245
        %7247 = vrot.lane.b32.xlu0 %v6929, 16
        %v7248 = vpop.permute.xlu0 %7247
        %7249 = vrot.lane.b32.xlu0 %v6930, 16
        %v7250 = vpop.permute.xlu0 %7249
        %7315 = vrot.lane.b32.xlu0 %v6931, 32
        %v7316 = vpop.permute.xlu0 %7315
        %7317 = vrot.lane.b32.xlu0 %v6932, 32
        %v7318 = vpop.permute.xlu0 %7317
        %7319 = vrot.lane.b32.xlu0 %v6933, 32
        %v7320 = vpop.permute.xlu0 %7319
        %7321 = vrot.lane.b32.xlu0 %v6934, 32
        %v7322 = vpop.permute.xlu0 %7321
        %7323 = vrot.lane.b32.xlu0 %v6935, 32
        %v7324 = vpop.permute.xlu0 %7323
        %7325 = vrot.lane.b32.xlu0 %v6936, 32
        %v7326 = vpop.permute.xlu0 %7325
        %7327 = vrot.lane.b32.xlu0 %v6937, 32
        %v7328 = vpop.permute.xlu0 %7327
        %7329 = vrot.lane.b32.xlu0 %v6938, 32
        %v7330 = vpop.permute.xlu0 %7329
        %7331 = vrot.lane.b32.xlu0 %v6939, 32
        %v7332 = vpop.permute.xlu0 %7331
        %7333 = vrot.lane.b32.xlu0 %v6940, 32
        %v7334 = vpop.permute.xlu0 %7333
        %7335 = vrot.lane.b32.xlu0 %v6941, 32
        %v7336 = vpop.permute.xlu0 %7335
        %7337 = vrot.lane.b32.xlu0 %v6942, 32
        %v7338 = vpop.permute.xlu0 %7337
        %7339 = vrot.lane.b32.xlu0 %v6943, 32
        %v7340 = vpop.permute.xlu0 %7339
        %7341 = vrot.lane.b32.xlu0 %v6944, 32
        %v7342 = vpop.permute.xlu0 %7341
        %7343 = vrot.lane.b32.xlu0 %v6945, 32
        %v7344 = vpop.permute.xlu0 %7343
        %7345 = vrot.lane.b32.xlu0 %v6946, 32
        %v7346 = vpop.permute.xlu0 %7345
        %7347 = vrot.lane.b32.xlu0 %v6947, 32
        %v7348 = vpop.permute.xlu0 %7347
        %7349 = vrot.lane.b32.xlu0 %v6948, 32
        %v7350 = vpop.permute.xlu0 %7349
        %7351 = vrot.lane.b32.xlu0 %v6949, 32
        %v7352 = vpop.permute.xlu0 %7351
        %7353 = vrot.lane.b32.xlu0 %v6950, 32
        %v7354 = vpop.permute.xlu0 %7353
        %7355 = vrot.lane.b32.xlu0 %v6951, 32
        %v7356 = vpop.permute.xlu0 %7355
        %7357 = vrot.lane.b32.xlu0 %v6952, 32
        %v7358 = vpop.permute.xlu0 %7357
        %7359 = vrot.lane.b32.xlu0 %v6953, 32
        %v7360 = vpop.permute.xlu0 %7359
        %7361 = vrot.lane.b32.xlu0 %v6954, 32
        %v7362 = vpop.permute.xlu0 %7361
        %7363 = vrot.lane.b32.xlu0 %v6955, 32
        %v7364 = vpop.permute.xlu0 %7363
        %7365 = vrot.lane.b32.xlu0 %v6956, 32
        %v7366 = vpop.permute.xlu0 %7365
        %7367 = vrot.lane.b32.xlu0 %v6957, 32
        %v7368 = vpop.permute.xlu0 %7367
        %7369 = vrot.lane.b32.xlu0 %v6958, 32
        %v7370 = vpop.permute.xlu0 %7369
        %7371 = vrot.lane.b32.xlu0 %v6959, 32
        %v7372 = vpop.permute.xlu0 %7371
        %7373 = vrot.lane.b32.xlu0 %v6960, 32
        %v7374 = vpop.permute.xlu0 %7373
        %7375 = vrot.lane.b32.xlu0 %v6961, 32
        %v7376 = vpop.permute.xlu0 %7375
        %7377 = vrot.lane.b32.xlu0 %v6962, 32
        %v7378 = vpop.permute.xlu0 %7377
        %7443 = vrot.lane.b32.xlu0 %v6963, 48
        %v7444 = vpop.permute.xlu0 %7443
        %7445 = vrot.lane.b32.xlu0 %v6964, 48
        %v7446 = vpop.permute.xlu0 %7445
        %7447 = vrot.lane.b32.xlu0 %v6965, 48
        %v7448 = vpop.permute.xlu0 %7447
        %7449 = vrot.lane.b32.xlu0 %v6966, 48
        %v7450 = vpop.permute.xlu0 %7449
        %7451 = vrot.lane.b32.xlu0 %v6967, 48
        %v7452 = vpop.permute.xlu0 %7451
        %7453 = vrot.lane.b32.xlu0 %v6968, 48
        %v7454 = vpop.permute.xlu0 %7453
        %7455 = vrot.lane.b32.xlu0 %v6969, 48
        %v7456 = vpop.permute.xlu0 %7455
        %7457 = vrot.lane.b32.xlu0 %v6970, 48
        %v7458 = vpop.permute.xlu0 %7457
        %7459 = vrot.lane.b32.xlu0 %v6971, 48
        %v7460 = vpop.permute.xlu0 %7459
        %7461 = vrot.lane.b32.xlu0 %v6972, 48
        %v7462 = vpop.permute.xlu0 %7461
        %7463 = vrot.lane.b32.xlu0 %v6973, 48
        %v7464 = vpop.permute.xlu0 %7463
        %7465 = vrot.lane.b32.xlu0 %v6974, 48
        %v7466 = vpop.permute.xlu0 %7465
        %7467 = vrot.lane.b32.xlu0 %v6975, 48
        %v7468 = vpop.permute.xlu0 %7467
        %7469 = vrot.lane.b32.xlu0 %v6976, 48
        %v7470 = vpop.permute.xlu0 %7469
        %7471 = vrot.lane.b32.xlu0 %v6977, 48
        %v7472 = vpop.permute.xlu0 %7471
        %7473 = vrot.lane.b32.xlu0 %v6978, 48
        %v7474 = vpop.permute.xlu0 %7473
        %7475 = vrot.lane.b32.xlu0 %v6979, 48
        %v7476 = vpop.permute.xlu0 %7475
        %7477 = vrot.lane.b32.xlu0 %v6980, 48
        %v7478 = vpop.permute.xlu0 %7477
        %7479 = vrot.lane.b32.xlu0 %v6981, 48
        %v7480 = vpop.permute.xlu0 %7479
        %7481 = vrot.lane.b32.xlu0 %v6982, 48
        %v7482 = vpop.permute.xlu0 %7481
        %7483 = vrot.lane.b32.xlu0 %v6983, 48
        %v7484 = vpop.permute.xlu0 %7483
        %7485 = vrot.lane.b32.xlu0 %v6984, 48
        %v7486 = vpop.permute.xlu0 %7485
        %7487 = vrot.lane.b32.xlu0 %v6985, 48
        %v7488 = vpop.permute.xlu0 %7487
        %7489 = vrot.lane.b32.xlu0 %v6986, 48
        %v7490 = vpop.permute.xlu0 %7489
        %7491 = vrot.lane.b32.xlu0 %v6987, 48
        %v7492 = vpop.permute.xlu0 %7491
        %7493 = vrot.lane.b32.xlu0 %v6988, 48
        %v7494 = vpop.permute.xlu0 %7493
        %7495 = vrot.lane.b32.xlu0 %v6989, 48
        %v7496 = vpop.permute.xlu0 %7495
        %7497 = vrot.lane.b32.xlu0 %v6990, 48
        %v7498 = vpop.permute.xlu0 %7497
        %7499 = vrot.lane.b32.xlu0 %v6991, 48
        %v7500 = vpop.permute.xlu0 %7499
        %7501 = vrot.lane.b32.xlu0 %v6992, 48
        %v7502 = vpop.permute.xlu0 %7501
        %7503 = vrot.lane.b32.xlu0 %v6993, 48
        %v7504 = vpop.permute.xlu0 %7503
        %7505 = vrot.lane.b32.xlu0 %v6994, 48
        %v7506 = vpop.permute.xlu0 %7505
        %7571 = vrot.lane.b32.xlu0 %v6995, 64
        %v7572 = vpop.permute.xlu0 %7571
        %7573 = vrot.lane.b32.xlu0 %v6996, 64
        %v7574 = vpop.permute.xlu0 %7573
        %7575 = vrot.lane.b32.xlu0 %v6997, 64
        %v7576 = vpop.permute.xlu0 %7575
        %7577 = vrot.lane.b32.xlu0 %v6998, 64
        %v7578 = vpop.permute.xlu0 %7577
        %7579 = vrot.lane.b32.xlu0 %v6999, 64
        %v7580 = vpop.permute.xlu0 %7579
        %7581 = vrot.lane.b32.xlu0 %v7000, 64
        %v7582 = vpop.permute.xlu0 %7581
        %7583 = vrot.lane.b32.xlu0 %v7001, 64
        %v7584 = vpop.permute.xlu0 %7583
        %7585 = vrot.lane.b32.xlu0 %v7002, 64
        %v7586 = vpop.permute.xlu0 %7585
        %7587 = vrot.lane.b32.xlu0 %v7003, 64
        %v7588 = vpop.permute.xlu0 %7587
        %7589 = vrot.lane.b32.xlu0 %v7004, 64
        %v7590 = vpop.permute.xlu0 %7589
        %7591 = vrot.lane.b32.xlu0 %v7005, 64
        %v7592 = vpop.permute.xlu0 %7591
        %7593 = vrot.lane.b32.xlu0 %v7006, 64
        %v7594 = vpop.permute.xlu0 %7593
        %7595 = vrot.lane.b32.xlu0 %v7007, 64
        %v7596 = vpop.permute.xlu0 %7595
        %7597 = vrot.lane.b32.xlu0 %v7008, 64
        %v7598 = vpop.permute.xlu0 %7597
        %7599 = vrot.lane.b32.xlu0 %v7009, 64
        %v7600 = vpop.permute.xlu0 %7599
        %7601 = vrot.lane.b32.xlu0 %v7010, 64
        %v7602 = vpop.permute.xlu0 %7601
        %7603 = vrot.lane.b32.xlu0 %v7011, 64
        %v7604 = vpop.permute.xlu0 %7603
        %7605 = vrot.lane.b32.xlu0 %v7012, 64
        %v7606 = vpop.permute.xlu0 %7605
        %7607 = vrot.lane.b32.xlu0 %v7013, 64
        %v7608 = vpop.permute.xlu0 %7607
        %7609 = vrot.lane.b32.xlu0 %v7014, 64
        %v7610 = vpop.permute.xlu0 %7609
        %7611 = vrot.lane.b32.xlu0 %v7015, 64
        %v7612 = vpop.permute.xlu0 %7611
        %7613 = vrot.lane.b32.xlu0 %v7016, 64
        %v7614 = vpop.permute.xlu0 %7613
        %7615 = vrot.lane.b32.xlu0 %v7017, 64
        %v7616 = vpop.permute.xlu0 %7615
        %7617 = vrot.lane.b32.xlu0 %v7018, 64
        %v7618 = vpop.permute.xlu0 %7617
        %7619 = vrot.lane.b32.xlu0 %v7019, 64
        %v7620 = vpop.permute.xlu0 %7619
        %7621 = vrot.lane.b32.xlu0 %v7020, 64
        %v7622 = vpop.permute.xlu0 %7621
        %7623 = vrot.lane.b32.xlu0 %v7021, 64
        %v7624 = vpop.permute.xlu0 %7623
        %7625 = vrot.lane.b32.xlu0 %v7022, 64
        %v7626 = vpop.permute.xlu0 %7625
        %7627 = vrot.lane.b32.xlu0 %v7023, 64
        %v7628 = vpop.permute.xlu0 %7627
        %7629 = vrot.lane.b32.xlu0 %v7024, 64
        %v7630 = vpop.permute.xlu0 %7629
        %7631 = vrot.lane.b32.xlu0 %v7025, 64
        %v7632 = vpop.permute.xlu0 %7631
        %7633 = vrot.lane.b32.xlu0 %v7026, 64
        %v7634 = vpop.permute.xlu0 %7633
        %7699 = vrot.lane.b32.xlu0 %v7027, 80
        %v7700 = vpop.permute.xlu0 %7699
        %7701 = vrot.lane.b32.xlu0 %v7028, 80
        %v7702 = vpop.permute.xlu0 %7701
        %7703 = vrot.lane.b32.xlu0 %v7029, 80
        %v7704 = vpop.permute.xlu0 %7703
        %7705 = vrot.lane.b32.xlu0 %v7030, 80
        %v7706 = vpop.permute.xlu0 %7705
        %7707 = vrot.lane.b32.xlu0 %v7031, 80
        %v7708 = vpop.permute.xlu0 %7707
        %7709 = vrot.lane.b32.xlu0 %v7032, 80
        %v7710 = vpop.permute.xlu0 %7709
        %7711 = vrot.lane.b32.xlu0 %v7033, 80
        %v7712 = vpop.permute.xlu0 %7711
        %7713 = vrot.lane.b32.xlu0 %v7034, 80
        %v7714 = vpop.permute.xlu0 %7713
        %7715 = vrot.lane.b32.xlu0 %v7035, 80
        %v7716 = vpop.permute.xlu0 %7715
        %7717 = vrot.lane.b32.xlu0 %v7036, 80
        %v7718 = vpop.permute.xlu0 %7717
        %7719 = vrot.lane.b32.xlu0 %v7037, 80
        %v7720 = vpop.permute.xlu0 %7719
        %7721 = vrot.lane.b32.xlu0 %v7038, 80
        %v7722 = vpop.permute.xlu0 %7721
        %7723 = vrot.lane.b32.xlu0 %v7039, 80
        %v7724 = vpop.permute.xlu0 %7723
        %7725 = vrot.lane.b32.xlu0 %v7040, 80
        %v7726 = vpop.permute.xlu0 %7725
        %7727 = vrot.lane.b32.xlu0 %v7041, 80
        %v7728 = vpop.permute.xlu0 %7727
        %7729 = vrot.lane.b32.xlu0 %v7042, 80
        %v7730 = vpop.permute.xlu0 %7729
        %7731 = vrot.lane.b32.xlu0 %v7043, 80
        %v7732 = vpop.permute.xlu0 %7731
        %7733 = vrot.lane.b32.xlu0 %v7044, 80
        %v7734 = vpop.permute.xlu0 %7733
        %7735 = vrot.lane.b32.xlu0 %v7045, 80
        %v7736 = vpop.permute.xlu0 %7735
        %7737 = vrot.lane.b32.xlu0 %v7046, 80
        %v7738 = vpop.permute.xlu0 %7737
        %7739 = vrot.lane.b32.xlu0 %v7047, 80
        %v7740 = vpop.permute.xlu0 %7739
        %7741 = vrot.lane.b32.xlu0 %v7048, 80
        %v7742 = vpop.permute.xlu0 %7741
        %7743 = vrot.lane.b32.xlu0 %v7049, 80
        %v7744 = vpop.permute.xlu0 %7743
        %7745 = vrot.lane.b32.xlu0 %v7050, 80
        %v7746 = vpop.permute.xlu0 %7745
        %7747 = vrot.lane.b32.xlu0 %v7051, 80
        %v7748 = vpop.permute.xlu0 %7747
        %7749 = vrot.lane.b32.xlu0 %v7052, 80
        %v7750 = vpop.permute.xlu0 %7749
        %7751 = vrot.lane.b32.xlu0 %v7053, 80
        %v7752 = vpop.permute.xlu0 %7751
        %7753 = vrot.lane.b32.xlu0 %v7054, 80
        %v7754 = vpop.permute.xlu0 %7753
        %7755 = vrot.lane.b32.xlu0 %v7055, 80
        %v7756 = vpop.permute.xlu0 %7755
        %7757 = vrot.lane.b32.xlu0 %v7056, 80
        %v7758 = vpop.permute.xlu0 %7757
        %7759 = vrot.lane.b32.xlu0 %v7057, 80
        %v7760 = vpop.permute.xlu0 %7759
        %7761 = vrot.lane.b32.xlu0 %v7058, 80
        %v7762 = vpop.permute.xlu0 %7761
        %7827 = vrot.lane.b32.xlu0 %v7059, 96
        %v7828 = vpop.permute.xlu0 %7827
        %7829 = vrot.lane.b32.xlu0 %v7060, 96
        %v7830 = vpop.permute.xlu0 %7829
        %7831 = vrot.lane.b32.xlu0 %v7061, 96
        %v7832 = vpop.permute.xlu0 %7831
        %7833 = vrot.lane.b32.xlu0 %v7062, 96
        %v7834 = vpop.permute.xlu0 %7833
        %7835 = vrot.lane.b32.xlu0 %v7063, 96
        %v7836 = vpop.permute.xlu0 %7835
        %7837 = vrot.lane.b32.xlu0 %v7064, 96
        %v7838 = vpop.permute.xlu0 %7837
        %7839 = vrot.lane.b32.xlu0 %v7065, 96
        %v7840 = vpop.permute.xlu0 %7839
        %7841 = vrot.lane.b32.xlu0 %v7066, 96
        %v7842 = vpop.permute.xlu0 %7841
        %7843 = vrot.lane.b32.xlu0 %v7067, 96
        %v7844 = vpop.permute.xlu0 %7843
        %7845 = vrot.lane.b32.xlu0 %v7068, 96
        %v7846 = vpop.permute.xlu0 %7845
        %7847 = vrot.lane.b32.xlu0 %v7069, 96
        %v7848 = vpop.permute.xlu0 %7847
        %7849 = vrot.lane.b32.xlu0 %v7070, 96
        %v7850 = vpop.permute.xlu0 %7849
        %7851 = vrot.lane.b32.xlu0 %v7071, 96
        %v7852 = vpop.permute.xlu0 %7851
        %7853 = vrot.lane.b32.xlu0 %v7072, 96
        %v7854 = vpop.permute.xlu0 %7853
        %7855 = vrot.lane.b32.xlu0 %v7073, 96
        %v7856 = vpop.permute.xlu0 %7855
        %7857 = vrot.lane.b32.xlu0 %v7074, 96
        %v7858 = vpop.permute.xlu0 %7857
        %7859 = vrot.lane.b32.xlu0 %v7075, 96
        %v7860 = vpop.permute.xlu0 %7859
        %7861 = vrot.lane.b32.xlu0 %v7076, 96
        %v7862 = vpop.permute.xlu0 %7861
        %7863 = vrot.lane.b32.xlu0 %v7077, 96
        %v7864 = vpop.permute.xlu0 %7863
        %7865 = vrot.lane.b32.xlu0 %v7078, 96
        %v7866 = vpop.permute.xlu0 %7865
        %7867 = vrot.lane.b32.xlu0 %v7079, 96
        %v7868 = vpop.permute.xlu0 %7867
        %7869 = vrot.lane.b32.xlu0 %v7080, 96
        %v7870 = vpop.permute.xlu0 %7869
        %7871 = vrot.lane.b32.xlu0 %v7081, 96
        %v7872 = vpop.permute.xlu0 %7871
        %7873 = vrot.lane.b32.xlu0 %v7082, 96
        %v7874 = vpop.permute.xlu0 %7873
        %7875 = vrot.lane.b32.xlu0 %v7083, 96
        %v7876 = vpop.permute.xlu0 %7875
        %7877 = vrot.lane.b32.xlu0 %v7084, 96
        %v7878 = vpop.permute.xlu0 %7877
        %7879 = vrot.lane.b32.xlu0 %v7085, 96
        %v7880 = vpop.permute.xlu0 %7879
        %7881 = vrot.lane.b32.xlu0 %v7086, 96
        %v7882 = vpop.permute.xlu0 %7881
        %7883 = vrot.lane.b32.xlu0 %v7087, 96
        %v7884 = vpop.permute.xlu0 %7883
        %7885 = vrot.lane.b32.xlu0 %v7088, 96
        %v7886 = vpop.permute.xlu0 %7885
        %7887 = vrot.lane.b32.xlu0 %v7089, 96
        %v7888 = vpop.permute.xlu0 %7887
        %7889 = vrot.lane.b32.xlu0 %v7090, 96
        %v7890 = vpop.permute.xlu0 %7889
        %7955 = vrot.lane.b32.xlu0 %v7091, 112
        %v7956 = vpop.permute.xlu0 %7955
        %7957 = vrot.lane.b32.xlu0 %v7092, 112
        %v7958 = vpop.permute.xlu0 %7957
        %7959 = vrot.lane.b32.xlu0 %v7093, 112
        %v7960 = vpop.permute.xlu0 %7959
        %7961 = vrot.lane.b32.xlu0 %v7094, 112
        %v7962 = vpop.permute.xlu0 %7961
        %7963 = vrot.lane.b32.xlu0 %v7095, 112
        %v7964 = vpop.permute.xlu0 %7963
        %7965 = vrot.lane.b32.xlu0 %v7096, 112
        %v7966 = vpop.permute.xlu0 %7965
        %7967 = vrot.lane.b32.xlu0 %v7097, 112
        %v7968 = vpop.permute.xlu0 %7967
        %7969 = vrot.lane.b32.xlu0 %v7098, 112
        %v7970 = vpop.permute.xlu0 %7969
        %7971 = vrot.lane.b32.xlu0 %v7099, 112
        %v7972 = vpop.permute.xlu0 %7971
        %7973 = vrot.lane.b32.xlu0 %v7100, 112
        %v7974 = vpop.permute.xlu0 %7973
        %7975 = vrot.lane.b32.xlu0 %v7101, 112
        %v7976 = vpop.permute.xlu0 %7975
        %7977 = vrot.lane.b32.xlu0 %v7102, 112
        %v7978 = vpop.permute.xlu0 %7977
        %7979 = vrot.lane.b32.xlu0 %v7103, 112
        %v7980 = vpop.permute.xlu0 %7979
        %7981 = vrot.lane.b32.xlu0 %v7104, 112
        %v7982 = vpop.permute.xlu0 %7981
        %7983 = vrot.lane.b32.xlu0 %v7105, 112
        %v7984 = vpop.permute.xlu0 %7983
        %7985 = vrot.lane.b32.xlu0 %v7106, 112
        %v7986 = vpop.permute.xlu0 %7985
        %7987 = vrot.lane.b32.xlu0 %v7107, 112
        %v7988 = vpop.permute.xlu0 %7987
        %7989 = vrot.lane.b32.xlu0 %v7108, 112
        %v7990 = vpop.permute.xlu0 %7989
        %7991 = vrot.lane.b32.xlu0 %v7109, 112
        %v7992 = vpop.permute.xlu0 %7991
        %7993 = vrot.lane.b32.xlu0 %v7110, 112
        %v7994 = vpop.permute.xlu0 %7993
        %7995 = vrot.lane.b32.xlu0 %v7111, 112
        %v7996 = vpop.permute.xlu0 %7995
        %7997 = vrot.lane.b32.xlu0 %v7112, 112
        %v7998 = vpop.permute.xlu0 %7997
        %7999 = vrot.lane.b32.xlu0 %v7113, 112
        %v8000 = vpop.permute.xlu0 %7999
        %8001 = vrot.lane.b32.xlu0 %v7114, 112
        %v8002 = vpop.permute.xlu0 %8001
        %8003 = vrot.lane.b32.xlu0 %v7115, 112
        %v8004 = vpop.permute.xlu0 %8003
        %8005 = vrot.lane.b32.xlu0 %v7116, 112
        %v8006 = vpop.permute.xlu0 %8005
        %8007 = vrot.lane.b32.xlu0 %v7117, 112
        %v8008 = vpop.permute.xlu0 %8007
        %8009 = vrot.lane.b32.xlu0 %v7118, 112
        %v8010 = vpop.permute.xlu0 %8009
        %8011 = vrot.lane.b32.xlu0 %v7119, 112
        %v8012 = vpop.permute.xlu0 %8011
        %8013 = vrot.lane.b32.xlu0 %v7120, 112
        %v8014 = vpop.permute.xlu0 %8013
        %8015 = vrot.lane.b32.xlu0 %v7121, 112
        %v8016 = vpop.permute.xlu0 %8015
        %8017 = vrot.lane.b32.xlu0 %v7122, 112
        %v8018 = vpop.permute.xlu0 %8017
        %v8051 = vsel %vm1868, %v6867, %v7188
        %v8052 = vsel %vm1868, %v6868, %v7190
        %v8053 = vsel %vm1868, %v6869, %v7192
        %v8054 = vsel %vm1868, %v6870, %v7194
        %v8055 = vsel %vm1868, %v6871, %v7196
        %v8056 = vsel %vm1868, %v6872, %v7198
        %v8057 = vsel %vm1868, %v6873, %v7200
        %v8058 = vsel %vm1868, %v6874, %v7202
        %v8059 = vsel %vm1868, %v6875, %v7204
        %v8060 = vsel %vm1868, %v6876, %v7206
        %v8061 = vsel %vm1868, %v6877, %v7208
        %v8062 = vsel %vm1868, %v6878, %v7210
        %v8063 = vsel %vm1868, %v6879, %v7212
        %v8064 = vsel %vm1868, %v6880, %v7214
        %v8065 = vsel %vm1868, %v6881, %v7216
        %v8066 = vsel %vm1868, %v6882, %v7218
        %v8067 = vsel %vm1868, %v6883, %v7220
        %v8068 = vsel %vm1868, %v6884, %v7222
        %v8069 = vsel %vm1868, %v6885, %v7224
        %v8070 = vsel %vm1868, %v6886, %v7226
        %v8071 = vsel %vm1868, %v6887, %v7228
        %v8072 = vsel %vm1868, %v6888, %v7230
        %v8073 = vsel %vm1868, %v6889, %v7232
        %v8074 = vsel %vm1868, %v6890, %v7234
        %v8075 = vsel %vm1868, %v6891, %v7236
        %v8076 = vsel %vm1868, %v6892, %v7238
        %v8077 = vsel %vm1868, %v6893, %v7240
        %v8078 = vsel %vm1868, %v6894, %v7242
        %v8079 = vsel %vm1868, %v6895, %v7244
        %v8080 = vsel %vm1868, %v6896, %v7246
        %v8081 = vsel %vm1868, %v6897, %v7248
        %v8082 = vsel %vm1868, %v6898, %v7250
        %v8083 = vsel %vm1999, %v8051, %v7316
        %v8084 = vsel %vm1999, %v8052, %v7318
        %v8085 = vsel %vm1999, %v8053, %v7320
        %v8086 = vsel %vm1999, %v8054, %v7322
        %v8087 = vsel %vm1999, %v8055, %v7324
        %v8088 = vsel %vm1999, %v8056, %v7326
        %v8089 = vsel %vm1999, %v8057, %v7328
        %v8090 = vsel %vm1999, %v8058, %v7330
        %v8091 = vsel %vm1999, %v8059, %v7332
        %v8092 = vsel %vm1999, %v8060, %v7334
        %v8093 = vsel %vm1999, %v8061, %v7336
        %v8094 = vsel %vm1999, %v8062, %v7338
        %v8095 = vsel %vm1999, %v8063, %v7340
        %v8096 = vsel %vm1999, %v8064, %v7342
        %v8097 = vsel %vm1999, %v8065, %v7344
        %v8098 = vsel %vm1999, %v8066, %v7346
        %v8099 = vsel %vm1999, %v8067, %v7348
        %v8100 = vsel %vm1999, %v8068, %v7350
        %v8101 = vsel %vm1999, %v8069, %v7352
        %v8102 = vsel %vm1999, %v8070, %v7354
        %v8103 = vsel %vm1999, %v8071, %v7356
        %v8104 = vsel %vm1999, %v8072, %v7358
        %v8105 = vsel %vm1999, %v8073, %v7360
        %v8106 = vsel %vm1999, %v8074, %v7362
        %v8107 = vsel %vm1999, %v8075, %v7364
        %v8108 = vsel %vm1999, %v8076, %v7366
        %v8109 = vsel %vm1999, %v8077, %v7368
        %v8110 = vsel %vm1999, %v8078, %v7370
        %v8111 = vsel %vm1999, %v8079, %v7372
        %v8112 = vsel %vm1999, %v8080, %v7374
        %v8113 = vsel %vm1999, %v8081, %v7376
        %v8114 = vsel %vm1999, %v8082, %v7378
        %v8115 = vsel %vm4067, %v8083, %v7444
        %v8116 = vsel %vm4067, %v8084, %v7446
        %v8117 = vsel %vm4067, %v8085, %v7448
        %v8118 = vsel %vm4067, %v8086, %v7450
        %v8119 = vsel %vm4067, %v8087, %v7452
        %v8120 = vsel %vm4067, %v8088, %v7454
        %v8121 = vsel %vm4067, %v8089, %v7456
        %v8122 = vsel %vm4067, %v8090, %v7458
        %v8123 = vsel %vm4067, %v8091, %v7460
        %v8124 = vsel %vm4067, %v8092, %v7462
        %v8125 = vsel %vm4067, %v8093, %v7464
        %v8126 = vsel %vm4067, %v8094, %v7466
        %v8127 = vsel %vm4067, %v8095, %v7468
        %v8128 = vsel %vm4067, %v8096, %v7470
        %v8129 = vsel %vm4067, %v8097, %v7472
        %v8130 = vsel %vm4067, %v8098, %v7474
        %v8131 = vsel %vm4067, %v8099, %v7476
        %v8132 = vsel %vm4067, %v8100, %v7478
        %v8133 = vsel %vm4067, %v8101, %v7480
        %v8134 = vsel %vm4067, %v8102, %v7482
        %v8135 = vsel %vm4067, %v8103, %v7484
        %v8136 = vsel %vm4067, %v8104, %v7486
        %v8137 = vsel %vm4067, %v8105, %v7488
        %v8138 = vsel %vm4067, %v8106, %v7490
        %v8139 = vsel %vm4067, %v8107, %v7492
        %v8140 = vsel %vm4067, %v8108, %v7494
        %v8141 = vsel %vm4067, %v8109, %v7496
        %v8142 = vsel %vm4067, %v8110, %v7498
        %v8143 = vsel %vm4067, %v8111, %v7500
        %v8144 = vsel %vm4067, %v8112, %v7502
        %v8145 = vsel %vm4067, %v8113, %v7504
        %v8146 = vsel %vm4067, %v8114, %v7506
        %v8147 = vsel %vm4133, %v8115, %v7572
        %v8148 = vsel %vm4133, %v8116, %v7574
        %v8149 = vsel %vm4133, %v8117, %v7576
        %v8150 = vsel %vm4133, %v8118, %v7578
        %v8151 = vsel %vm4133, %v8119, %v7580
        %v8152 = vsel %vm4133, %v8120, %v7582
        %v8153 = vsel %vm4133, %v8121, %v7584
        %v8154 = vsel %vm4133, %v8122, %v7586
        %v8155 = vsel %vm4133, %v8123, %v7588
        %v8156 = vsel %vm4133, %v8124, %v7590
        %v8157 = vsel %vm4133, %v8125, %v7592
        %v8158 = vsel %vm4133, %v8126, %v7594
        %v8159 = vsel %vm4133, %v8127, %v7596
        %v8160 = vsel %vm4133, %v8128, %v7598
        %v8161 = vsel %vm4133, %v8129, %v7600
        %v8162 = vsel %vm4133, %v8130, %v7602
        %v8163 = vsel %vm4133, %v8131, %v7604
        %v8164 = vsel %vm4133, %v8132, %v7606
        %v8165 = vsel %vm4133, %v8133, %v7608
        %v8166 = vsel %vm4133, %v8134, %v7610
        %v8167 = vsel %vm4133, %v8135, %v7612
        %v8168 = vsel %vm4133, %v8136, %v7614
        %v8169 = vsel %vm4133, %v8137, %v7616
        %v8170 = vsel %vm4133, %v8138, %v7618
        %v8171 = vsel %vm4133, %v8139, %v7620
        %v8172 = vsel %vm4133, %v8140, %v7622
        %v8173 = vsel %vm4133, %v8141, %v7624
        %v8174 = vsel %vm4133, %v8142, %v7626
        %v8175 = vsel %vm4133, %v8143, %v7628
        %v8176 = vsel %vm4133, %v8144, %v7630
        %v8177 = vsel %vm4133, %v8145, %v7632
        %v8178 = vsel %vm4133, %v8146, %v7634
        %vm8179 = vcmask 654336
        %v8180 = vsel %vm8179, %v8147, %v7700
        %v8181 = vsel %vm8179, %v8148, %v7702
        %v8182 = vsel %vm8179, %v8149, %v7704
        %v8183 = vsel %vm8179, %v8150, %v7706
        %v8184 = vsel %vm8179, %v8151, %v7708
        %v8185 = vsel %vm8179, %v8152, %v7710
        %v8186 = vsel %vm8179, %v8153, %v7712
        %v8187 = vsel %vm8179, %v8154, %v7714
        %v8188 = vsel %vm8179, %v8155, %v7716
        %v8189 = vsel %vm8179, %v8156, %v7718
        %v8190 = vsel %vm8179, %v8157, %v7720
        %v8191 = vsel %vm8179, %v8158, %v7722
        %v8192 = vsel %vm8179, %v8159, %v7724
        %v8193 = vsel %vm8179, %v8160, %v7726
        %v8194 = vsel %vm8179, %v8161, %v7728
        %v8195 = vsel %vm8179, %v8162, %v7730
        %v8196 = vsel %vm8179, %v8163, %v7732
        %v8197 = vsel %vm8179, %v8164, %v7734
        %v8198 = vsel %vm8179, %v8165, %v7736
        %v8199 = vsel %vm8179, %v8166, %v7738
        %v8200 = vsel %vm8179, %v8167, %v7740
        %v8201 = vsel %vm8179, %v8168, %v7742
        %v8202 = vsel %vm8179, %v8169, %v7744
        %v8203 = vsel %vm8179, %v8170, %v7746
        %v8204 = vsel %vm8179, %v8171, %v7748
        %v8205 = vsel %vm8179, %v8172, %v7750
        %v8206 = vsel %vm8179, %v8173, %v7752
        %v8207 = vsel %vm8179, %v8174, %v7754
        %v8208 = vsel %vm8179, %v8175, %v7756
        %v8209 = vsel %vm8179, %v8176, %v7758
        %v8210 = vsel %vm8179, %v8177, %v7760
        %v8211 = vsel %vm8179, %v8178, %v7762
        %v8212 = vsel %vm6266, %v8180, %v7828
        %v8213 = vsel %vm6266, %v8181, %v7830
        %v8214 = vsel %vm6266, %v8182, %v7832
        %v8215 = vsel %vm6266, %v8183, %v7834
        %v8216 = vsel %vm6266, %v8184, %v7836
        %v8217 = vsel %vm6266, %v8185, %v7838
        %v8218 = vsel %vm6266, %v8186, %v7840
        %v8219 = vsel %vm6266, %v8187, %v7842
        %v8220 = vsel %vm6266, %v8188, %v7844
        %v8221 = vsel %vm6266, %v8189, %v7846
        %v8222 = vsel %vm6266, %v8190, %v7848
        %v8223 = vsel %vm6266, %v8191, %v7850
        %v8224 = vsel %vm6266, %v8192, %v7852
        %v8225 = vsel %vm6266, %v8193, %v7854
        %v8226 = vsel %vm6266, %v8194, %v7856
        %v8227 = vsel %vm6266, %v8195, %v7858
        %v8228 = vsel %vm6266, %v8196, %v7860
        %v8229 = vsel %vm6266, %v8197, %v7862
        %v8230 = vsel %vm6266, %v8198, %v7864
        %v8231 = vsel %vm6266, %v8199, %v7866
        %v8232 = vsel %vm6266, %v8200, %v7868
        %v8233 = vsel %vm6266, %v8201, %v7870
        %v8234 = vsel %vm6266, %v8202, %v7872
        %v8235 = vsel %vm6266, %v8203, %v7874
        %v8236 = vsel %vm6266, %v8204, %v7876
        %v8237 = vsel %vm6266, %v8205, %v7878
        %v8238 = vsel %vm6266, %v8206, %v7880
        %v8239 = vsel %vm6266, %v8207, %v7882
        %v8240 = vsel %vm6266, %v8208, %v7884
        %v8241 = vsel %vm6266, %v8209, %v7886
        %v8242 = vsel %vm6266, %v8210, %v7888
        %v8243 = vsel %vm6266, %v8211, %v7890
        %vm8244 = vcmask 916480
        %v8245 = vsel %vm8244, %v8212, %v7956
        %v8246 = vsel %vm8244, %v8213, %v7958
        %v8247 = vsel %vm8244, %v8214, %v7960
        %v8248 = vsel %vm8244, %v8215, %v7962
        %v8249 = vsel %vm8244, %v8216, %v7964
        %v8250 = vsel %vm8244, %v8217, %v7966
        %v8251 = vsel %vm8244, %v8218, %v7968
        %v8252 = vsel %vm8244, %v8219, %v7970
        %v8253 = vsel %vm8244, %v8220, %v7972
        %v8254 = vsel %vm8244, %v8221, %v7974
        %v8255 = vsel %vm8244, %v8222, %v7976
        %v8256 = vsel %vm8244, %v8223, %v7978
        %v8257 = vsel %vm8244, %v8224, %v7980
        %v8258 = vsel %vm8244, %v8225, %v7982
        %v8259 = vsel %vm8244, %v8226, %v7984
        %v8260 = vsel %vm8244, %v8227, %v7986
        %v8261 = vsel %vm8244, %v8228, %v7988
        %v8262 = vsel %vm8244, %v8229, %v7990
        %v8263 = vsel %vm8244, %v8230, %v7992
        %v8264 = vsel %vm8244, %v8231, %v7994
        %v8265 = vsel %vm8244, %v8232, %v7996
        %v8266 = vsel %vm8244, %v8233, %v7998
        %v8267 = vsel %vm8244, %v8234, %v8000
        %v8268 = vsel %vm8244, %v8235, %v8002
        %v8269 = vsel %vm8244, %v8236, %v8004
        %v8270 = vsel %vm8244, %v8237, %v8006
        %v8271 = vsel %vm8244, %v8238, %v8008
        %v8272 = vsel %vm8244, %v8239, %v8010
        %v8273 = vsel %vm8244, %v8240, %v8012
        %v8274 = vsel %vm8244, %v8241, %v8014
        %v8275 = vsel %vm8244, %v8242, %v8016
        %v8276 = vsel %vm8244, %v8243, %v8018
        %v8277 = vld [vmem:[%s4] sm:$0xff]
        %v8278 = vld [vmem:[%s4 + $0x8] sm:$0xff]
        %v8279 = vld [vmem:[%s4 + $0x10] sm:$0xff]
        %v8280 = vld [vmem:[%s4 + $0x18] sm:$0xff]
        %v8281 = vld [vmem:[%s4 + $0x20] sm:$0xff]
        %v8282 = vld [vmem:[%s4 + $0x28] sm:$0xff]
        %v8283 = vld [vmem:[%s4 + $0x30] sm:$0xff]
        %v8284 = vld [vmem:[%s4 + $0x38] sm:$0xff]
        %v8285 = vld [vmem:[%s4 + $0x40] sm:$0xff]
        %v8286 = vld [vmem:[%s4 + $0x48] sm:$0xff]
        %v8287 = vld [vmem:[%s4 + $0x50] sm:$0xff]
        %v8288 = vld [vmem:[%s4 + $0x58] sm:$0xff]
        %v8289 = vld [vmem:[%s4 + $0x60] sm:$0xff]
        %v8290 = vld [vmem:[%s4 + $0x68] sm:$0xff]
        %v8291 = vld [vmem:[%s4 + $0x70] sm:$0xff]
        %v8292 = vld [vmem:[%s4 + $0x78] sm:$0xff]
        %v8293 = vld [vmem:[%s4 + $0x80] sm:$0xff]
        %v8294 = vld [vmem:[%s4 + $0x88] sm:$0xff]
        %v8295 = vlaneseq
        %v8296 = vshrl.u32 %v8295, 7
        %v8297 = vsub.s32 3, %v8296
        %v8298 = vrot.slane %v456, %v8297
        %v8300 = vsel %vm1868, %v7123, 0
        %v8303 = vsel %vm1868, %v7124, 0
        %v8306 = vsel %vm1868, %v7125, 0
        %v8309 = vsel %vm1868, %v7126, 0
        %v8312 = vsel %vm1868, %v7127, 0
        %v8315 = vsel %vm1868, %v7128, 0
        %v8318 = vsel %vm1868, %v7129, 0
        %v8321 = vsel %vm1868, %v7130, 0
        %v8324 = vsel %vm1868, %v7131, 0
        %v8327 = vsel %vm1868, %v7132, 0
        %v8330 = vsel %vm1868, %v7133, 0
        %v8333 = vsel %vm1868, %v7134, 0
        %v8336 = vsel %vm1868, %v7135, 0
        %v8339 = vsel %vm1868, %v7136, 0
        %v8342 = vsel %vm1868, %v7137, 0
        %v8345 = vsel %vm1868, %v7138, 0
        %v8348 = vsel %vm1868, %v7139, 0
        %v8351 = vsel %vm1868, %v7140, 0
        %v8354 = vsel %vm1868, %v7141, 0
        %v8357 = vsel %vm1868, %v7142, 0
        %v8360 = vsel %vm1868, %v7143, 0
        %v8363 = vsel %vm1868, %v7144, 0
        %v8366 = vsel %vm1868, %v7145, 0
        %v8369 = vsel %vm1868, %v7146, 0
        %v8372 = vsel %vm1868, %v7147, 0
        %v8375 = vsel %vm1868, %v7148, 0
        %v8378 = vsel %vm1868, %v7149, 0
        %v8381 = vsel %vm1868, %v7150, 0
        %v8384 = vsel %vm1868, %v7151, 0
        %v8387 = vsel %vm1868, %v7152, 0
        %v8390 = vsel %vm1868, %v7153, 0
        %v8393 = vsel %vm1868, %v7154, 0
        %8395 = vmatprep.subr.mxu0 0.0
        %8396 = vmatpush1.msra.mxu0 %v8292
        %8397 = vmatprep.subr.mxu0 0.0
        %8398 = vmatpush1.msra.mxu0 %v8291
        %8399 = vmatprep.subr.mxu0 0.0
        %8400 = vmatpush1.msra.mxu0 %v8290
        %8401 = vmatprep.subr.mxu0 0.0
        %8402 = vmatpush1.msra.mxu0 %v8289
        %8403 = vmatprep.subr.mxu0 0.0
        %8404 = vmatpush1.msra.mxu0 %v8288
        %8405 = vmatprep.subr.mxu0 0.0
        %8406 = vmatpush1.msra.mxu0 %v8287
        %8407 = vmatprep.subr.mxu0 0.0
        %8408 = vmatpush1.msra.mxu0 %v8286
        %8409 = vmatprep.subr.mxu0 0.0
        %8410 = vmatpush1.msra.mxu0 %v8285
        %8411 = vmatprep.subr.mxu0 0.0
        %8412 = vmatpush1.msra.mxu0 %v8284
        %8413 = vmatprep.subr.mxu0 0.0
        %8414 = vmatpush1.msra.mxu0 %v8283
        %8415 = vmatprep.subr.mxu0 0.0
        %8416 = vmatpush1.msra.mxu0 %v8282
        %8417 = vmatprep.subr.mxu0 0.0
        %8418 = vmatpush1.msra.mxu0 %v8281
        %8419 = vmatprep.subr.mxu0 0.0
        %8420 = vmatpush1.msra.mxu0 %v8280
        %8421 = vmatprep.subr.mxu0 0.0
        %8422 = vmatpush1.msra.mxu0 %v8279
        %8423 = vmatprep.subr.mxu0 0.0
        %8424 = vmatpush1.msra.mxu0 %v8278
        %8425 = vmatprep.subr.mxu0 0.0
        %8426 = vmatpush1.msra.mxu0 %v8277
        %8427 = vmatprep.subr.mxu0 0.0
        %8428 = vmatpush2.msra.mxu0 0.0
        %8429 = vmatprep.subr.mxu0 0.0
        %8430 = vmatpush2.msra.mxu0 0.0
        %8431 = vmatprep.subr.mxu0 0.0
        %8432 = vmatpush2.msra.mxu0 0.0
        %8433 = vmatprep.subr.mxu0 0.0
        %8434 = vmatpush2.msra.mxu0 0.0
        %8435 = vmatprep.subr.mxu0 0.0
        %8436 = vmatpush2.msra.mxu0 0.0
        %8437 = vmatprep.subr.mxu0 0.0
        %8438 = vmatpush2.msra.mxu0 0.0
        %8439 = vmatprep.subr.mxu0 0.0
        %8440 = vmatpush2.msra.mxu0 0.0
        %8441 = vmatprep.subr.mxu0 0.0
        %8442 = vmatpush2.msra.mxu0 0.0
        %8443 = vmatprep.subr.mxu0 0.0
        %8444 = vmatpush2.msra.mxu0 0.0
        %8445 = vmatprep.subr.mxu0 0.0
        %8446 = vmatpush2.msra.mxu0 0.0
        %8447 = vmatprep.subr.mxu0 0.0
        %8448 = vmatpush2.msra.mxu0 0.0
        %8449 = vmatprep.subr.mxu0 0.0
        %8450 = vmatpush2.msra.mxu0 0.0
        %8451 = vmatprep.subr.mxu0 0.0
        %8452 = vmatpush2.msra.mxu0 0.0
        %8453 = vmatprep.subr.mxu0 0.0
        %8454 = vmatpush2.msra.mxu0 0.0
        %8455 = vmatprep.subr.mxu0 0.0
        %8456 = vmatpush2.msra.mxu0 %v8294
        %8457 = vmatprep.subr.mxu0 0.0
        %8458 = vmatpush2.msra.mxu0 %v8293
        %8459 = vmatprep.mubr.f32.mxu0 %v8300
        %8460 = vmatmul.mubr.f32.gmra.mxu0 %v8245
        %v8461 = vpop.f32.mrf.mxu0
        %v8462 = vadd.f32 %v8298, %v8461
        %v8463 = vpop.f32.mrf.mxu0
        %8464 = vmatprep.mubr.f32.mxu0 %v8303
        %8465 = vmatmul.mubr.f32.gmra.mxu0 %v8246
        %v8466 = vpop.f32.mrf.mxu0
        %v8467 = vadd.f32 %v8298, %v8466
        %v8468 = vpop.f32.mrf.mxu0
        %8469 = vmatprep.mubr.f32.mxu0 %v8306
        %8470 = vmatmul.mubr.f32.gmra.mxu0 %v8247
        %v8471 = vpop.f32.mrf.mxu0
        %v8472 = vadd.f32 %v8298, %v8471
        %v8473 = vpop.f32.mrf.mxu0
        %8474 = vmatprep.mubr.f32.mxu0 %v8309
        %8475 = vmatmul.mubr.f32.gmra.mxu0 %v8248
        %v8476 = vpop.f32.mrf.mxu0
        %v8477 = vadd.f32 %v8298, %v8476
        %v8478 = vpop.f32.mrf.mxu0
        %8479 = vmatprep.mubr.f32.mxu0 %v8312
        %8480 = vmatmul.mubr.f32.gmra.mxu0 %v8249
        %v8481 = vpop.f32.mrf.mxu0
        %v8482 = vadd.f32 %v8298, %v8481
        %v8483 = vpop.f32.mrf.mxu0
        %8484 = vmatprep.mubr.f32.mxu0 %v8315
        %8485 = vmatmul.mubr.f32.gmra.mxu0 %v8250
        %v8486 = vpop.f32.mrf.mxu0
        %v8487 = vadd.f32 %v8298, %v8486
        %v8488 = vpop.f32.mrf.mxu0
        %8489 = vmatprep.mubr.f32.mxu0 %v8318
        %8490 = vmatmul.mubr.f32.gmra.mxu0 %v8251
        %v8491 = vpop.f32.mrf.mxu0
        %v8492 = vadd.f32 %v8298, %v8491
        %v8493 = vpop.f32.mrf.mxu0
        %8494 = vmatprep.mubr.f32.mxu0 %v8321
        %8495 = vmatmul.mubr.f32.gmra.mxu0 %v8252
        %v8496 = vpop.f32.mrf.mxu0
        %v8497 = vadd.f32 %v8298, %v8496
        %v8498 = vpop.f32.mrf.mxu0
        %8499 = vmatprep.mubr.f32.mxu0 %v8324
        %8500 = vmatmul.mubr.f32.gmra.mxu0 %v8253
        %v8501 = vpop.f32.mrf.mxu0
        %v8502 = vadd.f32 %v8298, %v8501
        %v8503 = vpop.f32.mrf.mxu0
        %8504 = vmatprep.mubr.f32.mxu0 %v8327
        %8505 = vmatmul.mubr.f32.gmra.mxu0 %v8254
        %v8506 = vpop.f32.mrf.mxu0
        %v8507 = vadd.f32 %v8298, %v8506
        %v8508 = vpop.f32.mrf.mxu0
        %8509 = vmatprep.mubr.f32.mxu0 %v8330
        %8510 = vmatmul.mubr.f32.gmra.mxu0 %v8255
        %v8511 = vpop.f32.mrf.mxu0
        %v8512 = vadd.f32 %v8298, %v8511
        %v8513 = vpop.f32.mrf.mxu0
        %8514 = vmatprep.mubr.f32.mxu0 %v8333
        %8515 = vmatmul.mubr.f32.gmra.mxu0 %v8256
        %v8516 = vpop.f32.mrf.mxu0
        %v8517 = vadd.f32 %v8298, %v8516
        %v8518 = vpop.f32.mrf.mxu0
        %8519 = vmatprep.mubr.f32.mxu0 %v8336
        %8520 = vmatmul.mubr.f32.gmra.mxu0 %v8257
        %v8521 = vpop.f32.mrf.mxu0
        %v8522 = vadd.f32 %v8298, %v8521
        %v8523 = vpop.f32.mrf.mxu0
        %8524 = vmatprep.mubr.f32.mxu0 %v8339
        %8525 = vmatmul.mubr.f32.gmra.mxu0 %v8258
        %v8526 = vpop.f32.mrf.mxu0
        %v8527 = vadd.f32 %v8298, %v8526
        %v8528 = vpop.f32.mrf.mxu0
        %8529 = vmatprep.mubr.f32.mxu0 %v8342
        %8530 = vmatmul.mubr.f32.gmra.mxu0 %v8259
        %v8531 = vpop.f32.mrf.mxu0
        %v8532 = vadd.f32 %v8298, %v8531
        %v8533 = vpop.f32.mrf.mxu0
        %8534 = vmatprep.mubr.f32.mxu0 %v8345
        %8535 = vmatmul.mubr.f32.gmra.mxu0 %v8260
        %v8536 = vpop.f32.mrf.mxu0
        %v8537 = vadd.f32 %v8298, %v8536
        %v8538 = vpop.f32.mrf.mxu0
        %8539 = vmatprep.mubr.f32.mxu0 %v8348
        %8540 = vmatmul.mubr.f32.gmra.mxu0 %v8261
        %v8541 = vpop.f32.mrf.mxu0
        %v8542 = vadd.f32 %v8298, %v8541
        %v8543 = vpop.f32.mrf.mxu0
        %8544 = vmatprep.mubr.f32.mxu0 %v8351
        %8545 = vmatmul.mubr.f32.gmra.mxu0 %v8262
        %v8546 = vpop.f32.mrf.mxu0
        %v8547 = vadd.f32 %v8298, %v8546
        %v8548 = vpop.f32.mrf.mxu0
        %8549 = vmatprep.mubr.f32.mxu0 %v8354
        %8550 = vmatmul.mubr.f32.gmra.mxu0 %v8263
        %v8551 = vpop.f32.mrf.mxu0
        %v8552 = vadd.f32 %v8298, %v8551
        %v8553 = vpop.f32.mrf.mxu0
        %8554 = vmatprep.mubr.f32.mxu0 %v8357
        %8555 = vmatmul.mubr.f32.gmra.mxu0 %v8264
        %v8556 = vpop.f32.mrf.mxu0
        %v8557 = vadd.f32 %v8298, %v8556
        %v8558 = vpop.f32.mrf.mxu0
        %8559 = vmatprep.mubr.f32.mxu0 %v8360
        %8560 = vmatmul.mubr.f32.gmra.mxu0 %v8265
        %v8561 = vpop.f32.mrf.mxu0
        %v8562 = vadd.f32 %v8298, %v8561
        %v8563 = vpop.f32.mrf.mxu0
        %8564 = vmatprep.mubr.f32.mxu0 %v8363
        %8565 = vmatmul.mubr.f32.gmra.mxu0 %v8266
        %v8566 = vpop.f32.mrf.mxu0
        %v8567 = vadd.f32 %v8298, %v8566
        %v8568 = vpop.f32.mrf.mxu0
        %8569 = vmatprep.mubr.f32.mxu0 %v8366
        %8570 = vmatmul.mubr.f32.gmra.mxu0 %v8267
        %v8571 = vpop.f32.mrf.mxu0
        %v8572 = vadd.f32 %v8298, %v8571
        %v8573 = vpop.f32.mrf.mxu0
        %8574 = vmatprep.mubr.f32.mxu0 %v8369
        %8575 = vmatmul.mubr.f32.gmra.mxu0 %v8268
        %v8576 = vpop.f32.mrf.mxu0
        %v8577 = vadd.f32 %v8298, %v8576
        %v8578 = vpop.f32.mrf.mxu0
        %8579 = vmatprep.mubr.f32.mxu0 %v8372
        %8580 = vmatmul.mubr.f32.gmra.mxu0 %v8269
        %v8581 = vpop.f32.mrf.mxu0
        %v8582 = vadd.f32 %v8298, %v8581
        %v8583 = vpop.f32.mrf.mxu0
        %8584 = vmatprep.mubr.f32.mxu0 %v8375
        %8585 = vmatmul.mubr.f32.gmra.mxu0 %v8270
        %v8586 = vpop.f32.mrf.mxu0
        %v8587 = vadd.f32 %v8298, %v8586
        %v8588 = vpop.f32.mrf.mxu0
        %8589 = vmatprep.mubr.f32.mxu0 %v8378
        %8590 = vmatmul.mubr.f32.gmra.mxu0 %v8271
        %v8591 = vpop.f32.mrf.mxu0
        %v8592 = vadd.f32 %v8298, %v8591
        %v8593 = vpop.f32.mrf.mxu0
        %8594 = vmatprep.mubr.f32.mxu0 %v8381
        %8595 = vmatmul.mubr.f32.gmra.mxu0 %v8272
        %v8596 = vpop.f32.mrf.mxu0
        %v8597 = vadd.f32 %v8298, %v8596
        %v8598 = vpop.f32.mrf.mxu0
        %8599 = vmatprep.mubr.f32.mxu0 %v8384
        %8600 = vmatmul.mubr.f32.gmra.mxu0 %v8273
        %v8601 = vpop.f32.mrf.mxu0
        %v8602 = vadd.f32 %v8298, %v8601
        %v8603 = vpop.f32.mrf.mxu0
        %8604 = vmatprep.mubr.f32.mxu0 %v8387
        %8605 = vmatmul.mubr.f32.gmra.mxu0 %v8274
        %v8606 = vpop.f32.mrf.mxu0
        %v8607 = vadd.f32 %v8298, %v8606
        %v8608 = vpop.f32.mrf.mxu0
        %8609 = vmatprep.mubr.f32.mxu0 %v8390
        %8610 = vmatmul.mubr.f32.gmra.mxu0 %v8275
        %v8611 = vpop.f32.mrf.mxu0
        %v8612 = vadd.f32 %v8298, %v8611
        %v8613 = vpop.f32.mrf.mxu0
        %8614 = vmatprep.mubr.f32.mxu0 %v8393
        %8615 = vmatmul.mubr.f32.gmra.mxu0 %v8276
        %v8616 = vpop.f32.mrf.mxu0
        %v8617 = vadd.f32 %v8298, %v8616
        %v8618 = vpop.f32.mrf.mxu0
        %8619 = vdwg.mxu0
        %v8620 = vmax.f32 %v8462, 0.0
        %v8621 = vmax.f32 %v8467, 0.0
        %v8622 = vmax.f32 %v8472, 0.0
        %v8623 = vmax.f32 %v8477, 0.0
        %v8624 = vmax.f32 %v8482, 0.0
        %v8625 = vmax.f32 %v8487, 0.0
        %v8626 = vmax.f32 %v8492, 0.0
        %v8627 = vmax.f32 %v8497, 0.0
        %v8628 = vmax.f32 %v8502, 0.0
        %v8629 = vmax.f32 %v8507, 0.0
        %v8630 = vmax.f32 %v8512, 0.0
        %v8631 = vmax.f32 %v8517, 0.0
        %v8632 = vmax.f32 %v8522, 0.0
        %v8633 = vmax.f32 %v8527, 0.0
        %v8634 = vmax.f32 %v8532, 0.0
        %v8635 = vmax.f32 %v8537, 0.0
        %v8636 = vmax.f32 %v8542, 0.0
        %v8637 = vmax.f32 %v8547, 0.0
        %v8638 = vmax.f32 %v8552, 0.0
        %v8639 = vmax.f32 %v8557, 0.0
        %v8640 = vmax.f32 %v8562, 0.0
        %v8641 = vmax.f32 %v8567, 0.0
        %v8642 = vmax.f32 %v8572, 0.0
        %v8643 = vmax.f32 %v8577, 0.0
        %v8644 = vmax.f32 %v8582, 0.0
        %v8645 = vmax.f32 %v8587, 0.0
        %v8646 = vmax.f32 %v8592, 0.0
        %v8647 = vmax.f32 %v8597, 0.0
        %v8648 = vmax.f32 %v8602, 0.0
        %v8649 = vmax.f32 %v8607, 0.0
        %v8650 = vmax.f32 %v8612, 0.0
        %v8651 = vmax.f32 %v8617, 0.0
        %8684 = vrot.lane.b32.xlu0 %v8620, 16
        %v8685 = vpop.permute.xlu0 %8684
        %8686 = vrot.lane.b32.xlu0 %v8621, 16
        %v8687 = vpop.permute.xlu0 %8686
        %8688 = vrot.lane.b32.xlu0 %v8622, 16
        %v8689 = vpop.permute.xlu0 %8688
        %8690 = vrot.lane.b32.xlu0 %v8623, 16
        %v8691 = vpop.permute.xlu0 %8690
        %8692 = vrot.lane.b32.xlu0 %v8624, 16
        %v8693 = vpop.permute.xlu0 %8692
        %8694 = vrot.lane.b32.xlu0 %v8625, 16
        %v8695 = vpop.permute.xlu0 %8694
        %8696 = vrot.lane.b32.xlu0 %v8626, 16
        %v8697 = vpop.permute.xlu0 %8696
        %8698 = vrot.lane.b32.xlu0 %v8627, 16
        %v8699 = vpop.permute.xlu0 %8698
        %8700 = vrot.lane.b32.xlu0 %v8628, 16
        %v8701 = vpop.permute.xlu0 %8700
        %8702 = vrot.lane.b32.xlu0 %v8629, 16
        %v8703 = vpop.permute.xlu0 %8702
        %8704 = vrot.lane.b32.xlu0 %v8630, 16
        %v8705 = vpop.permute.xlu0 %8704
        %8706 = vrot.lane.b32.xlu0 %v8631, 16
        %v8707 = vpop.permute.xlu0 %8706
        %8708 = vrot.lane.b32.xlu0 %v8632, 16
        %v8709 = vpop.permute.xlu0 %8708
        %8710 = vrot.lane.b32.xlu0 %v8633, 16
        %v8711 = vpop.permute.xlu0 %8710
        %8712 = vrot.lane.b32.xlu0 %v8634, 16
        %v8713 = vpop.permute.xlu0 %8712
        %8714 = vrot.lane.b32.xlu0 %v8635, 16
        %v8715 = vpop.permute.xlu0 %8714
        %8716 = vrot.lane.b32.xlu0 %v8636, 16
        %v8717 = vpop.permute.xlu0 %8716
        %8718 = vrot.lane.b32.xlu0 %v8637, 16
        %v8719 = vpop.permute.xlu0 %8718
        %8720 = vrot.lane.b32.xlu0 %v8638, 16
        %v8721 = vpop.permute.xlu0 %8720
        %8722 = vrot.lane.b32.xlu0 %v8639, 16
        %v8723 = vpop.permute.xlu0 %8722
        %8724 = vrot.lane.b32.xlu0 %v8640, 16
        %v8725 = vpop.permute.xlu0 %8724
        %8726 = vrot.lane.b32.xlu0 %v8641, 16
        %v8727 = vpop.permute.xlu0 %8726
        %8728 = vrot.lane.b32.xlu0 %v8642, 16
        %v8729 = vpop.permute.xlu0 %8728
        %8730 = vrot.lane.b32.xlu0 %v8643, 16
        %v8731 = vpop.permute.xlu0 %8730
        %8732 = vrot.lane.b32.xlu0 %v8644, 16
        %v8733 = vpop.permute.xlu0 %8732
        %8734 = vrot.lane.b32.xlu0 %v8645, 16
        %v8735 = vpop.permute.xlu0 %8734
        %8736 = vrot.lane.b32.xlu0 %v8646, 16
        %v8737 = vpop.permute.xlu0 %8736
        %8738 = vrot.lane.b32.xlu0 %v8647, 16
        %v8739 = vpop.permute.xlu0 %8738
        %8740 = vrot.lane.b32.xlu0 %v8648, 16
        %v8741 = vpop.permute.xlu0 %8740
        %8742 = vrot.lane.b32.xlu0 %v8649, 16
        %v8743 = vpop.permute.xlu0 %8742
        %8744 = vrot.lane.b32.xlu0 %v8650, 16
        %v8745 = vpop.permute.xlu0 %8744
        %8746 = vrot.lane.b32.xlu0 %v8651, 16
        %v8747 = vpop.permute.xlu0 %8746
        %vm8780 = vcmask 162944
        %8781 = vst.msk [vmem:[%s298] sm:$0xff] %vm8780, %v8685
        %8782 = vst.msk [vmem:[%s298 + $0x8] sm:$0xff] %vm8780, %v8687
        %8783 = vst.msk [vmem:[%s298 + $0x10] sm:$0xff] %vm8780, %v8689
        %8784 = vst.msk [vmem:[%s298 + $0x18] sm:$0xff] %vm8780, %v8691
        %8785 = vst.msk [vmem:[%s298 + $0x20] sm:$0xff] %vm8780, %v8693
        %8786 = vst.msk [vmem:[%s298 + $0x28] sm:$0xff] %vm8780, %v8695
        %8787 = vst.msk [vmem:[%s298 + $0x30] sm:$0xff] %vm8780, %v8697
        %8788 = vst.msk [vmem:[%s298 + $0x38] sm:$0xff] %vm8780, %v8699
        %8789 = vst.msk [vmem:[%s298 + $0x40] sm:$0xff] %vm8780, %v8701
        %8790 = vst.msk [vmem:[%s298 + $0x48] sm:$0xff] %vm8780, %v8703
        %8791 = vst.msk [vmem:[%s298 + $0x50] sm:$0xff] %vm8780, %v8705
        %8792 = vst.msk [vmem:[%s298 + $0x58] sm:$0xff] %vm8780, %v8707
        %8793 = vst.msk [vmem:[%s298 + $0x60] sm:$0xff] %vm8780, %v8709
        %8794 = vst.msk [vmem:[%s298 + $0x68] sm:$0xff] %vm8780, %v8711
        %8795 = vst.msk [vmem:[%s298 + $0x70] sm:$0xff] %vm8780, %v8713
        %8796 = vst.msk [vmem:[%s298 + $0x78] sm:$0xff] %vm8780, %v8715
        %8797 = vst.msk [vmem:[%s298 + $0x80] sm:$0xff] %vm8780, %v8717
        %8798 = vst.msk [vmem:[%s298 + $0x88] sm:$0xff] %vm8780, %v8719
        %8799 = vst.msk [vmem:[%s298 + $0x90] sm:$0xff] %vm8780, %v8721
        %8800 = vst.msk [vmem:[%s298 + $0x98] sm:$0xff] %vm8780, %v8723
        %8801 = vst.msk [vmem:[%s298 + $0xa0] sm:$0xff] %vm8780, %v8725
        %8802 = vst.msk [vmem:[%s298 + $0xa8] sm:$0xff] %vm8780, %v8727
        %8803 = vst.msk [vmem:[%s298 + $0xb0] sm:$0xff] %vm8780, %v8729
        %8804 = vst.msk [vmem:[%s298 + $0xb8] sm:$0xff] %vm8780, %v8731
        %8805 = vst.msk [vmem:[%s298 + $0xc0] sm:$0xff] %vm8780, %v8733
        %8806 = vst.msk [vmem:[%s298 + $0xc8] sm:$0xff] %vm8780, %v8735
        %8807 = vst.msk [vmem:[%s298 + $0xd0] sm:$0xff] %vm8780, %v8737
        %8808 = vst.msk [vmem:[%s298 + $0xd8] sm:$0xff] %vm8780, %v8739
        %8809 = vst.msk [vmem:[%s298 + $0xe0] sm:$0xff] %vm8780, %v8741
        %8810 = vst.msk [vmem:[%s298 + $0xe8] sm:$0xff] %vm8780, %v8743
        %8811 = vst.msk [vmem:[%s298 + $0xf0] sm:$0xff] %vm8780, %v8745
        %8812 = vst.msk [vmem:[%s298 + $0xf8] sm:$0xff] %vm8780, %v8747
        %8813 = vst.msk [vmem:[%s325 + $0x3] sm:$0xff] %vm8780, %v8685
        %8814 = vst.msk [vmem:[%s325 + $0xb] sm:$0xff] %vm8780, %v8687
        %8815 = vst.msk [vmem:[%s325 + $0x1b] sm:$0xff] %vm8780, %v8689
        %8816 = vst.msk [vmem:[%s325 + $0x23] sm:$0xff] %vm8780, %v8691
        %8817 = vst.msk [vmem:[%s325 + $0x33] sm:$0xff] %vm8780, %v8693
        %8818 = vst.msk [vmem:[%s325 + $0x3b] sm:$0xff] %vm8780, %v8695
        %8819 = vst.msk [vmem:[%s325 + $0x4b] sm:$0xff] %vm8780, %v8697
        %8820 = vst.msk [vmem:[%s325 + $0x53] sm:$0xff] %vm8780, %v8699
        %8821 = vst.msk [vmem:[%s325 + $0x63] sm:$0xff] %vm8780, %v8701
        %8822 = vst.msk [vmem:[%s325 + $0x6b] sm:$0xff] %vm8780, %v8703
        %8823 = vst.msk [vmem:[%s325 + $0x7b] sm:$0xff] %vm8780, %v8705
        %8824 = vst.msk [vmem:[%s325 + $0x83] sm:$0xff] %vm8780, %v8707
        %8825 = vst.msk [vmem:[%s325 + $0x93] sm:$0xff] %vm8780, %v8709
        %8826 = vst.msk [vmem:[%s325 + $0x9b] sm:$0xff] %vm8780, %v8711
        %8827 = vst.msk [vmem:[%s325 + $0xab] sm:$0xff] %vm8780, %v8713
        %8828 = vst.msk [vmem:[%s325 + $0xb3] sm:$0xff] %vm8780, %v8715
        %8829 = vst.msk [vmem:[%s325 + $0xc3] sm:$0xff] %vm8780, %v8717
        %8830 = vst.msk [vmem:[%s325 + $0xcb] sm:$0xff] %vm8780, %v8719
        %8831 = vst.msk [vmem:[%s325 + $0xdb] sm:$0xff] %vm8780, %v8721
        %8832 = vst.msk [vmem:[%s325 + $0xe3] sm:$0xff] %vm8780, %v8723
        %8833 = vst.msk [vmem:[%s325 + $0xf3] sm:$0xff] %vm8780, %v8725
        %8834 = vst.msk [vmem:[%s325 + $0xfb] sm:$0xff] %vm8780, %v8727
        %8835 = vst.msk [vmem:[%s325 + $0x10b] sm:$0xff] %vm8780, %v8729
        %8836 = vst.msk [vmem:[%s325 + $0x113] sm:$0xff] %vm8780, %v8731
        %8837 = vst.msk [vmem:[%s325 + $0x123] sm:$0xff] %vm8780, %v8733
        %8838 = vst.msk [vmem:[%s325 + $0x12b] sm:$0xff] %vm8780, %v8735
        %8839 = vst.msk [vmem:[%s325 + $0x13b] sm:$0xff] %vm8780, %v8737
        %8840 = vst.msk [vmem:[%s325 + $0x143] sm:$0xff] %vm8780, %v8739
        %8841 = vst.msk [vmem:[%s325 + $0x153] sm:$0xff] %vm8780, %v8741
        %8842 = vst.msk [vmem:[%s325 + $0x15b] sm:$0xff] %vm8780, %v8743
        %8843 = vst.msk [vmem:[%s325 + $0x16b] sm:$0xff] %vm8780, %v8745
        %8844 = vst.msk [vmem:[%s325 + $0x173] sm:$0xff] %vm8780, %v8747
        %v8845 = vld [vmem:[%s4726 + $0x2] sm:$0xff]
        %v8846 = vld [vmem:[%s4726 + $0xa] sm:$0xff]
        %v8847 = vld [vmem:[%s4726 + $0x1a] sm:$0xff]
        %v8848 = vld [vmem:[%s4726 + $0x22] sm:$0xff]
        %v8849 = vld [vmem:[%s4726 + $0x32] sm:$0xff]
        %v8850 = vld [vmem:[%s4726 + $0x3a] sm:$0xff]
        %v8851 = vld [vmem:[%s4726 + $0x4a] sm:$0xff]
        %v8852 = vld [vmem:[%s4726 + $0x52] sm:$0xff]
        %v8853 = vld [vmem:[%s4726 + $0x62] sm:$0xff]
        %v8854 = vld [vmem:[%s4726 + $0x6a] sm:$0xff]
        %v8855 = vld [vmem:[%s4726 + $0x7a] sm:$0xff]
        %v8856 = vld [vmem:[%s4726 + $0x82] sm:$0xff]
        %v8857 = vld [vmem:[%s4726 + $0x92] sm:$0xff]
        %v8858 = vld [vmem:[%s4726 + $0x9a] sm:$0xff]
        %v8859 = vld [vmem:[%s4726 + $0xaa] sm:$0xff]
        %v8860 = vld [vmem:[%s4726 + $0xb2] sm:$0xff]
        %v8861 = vld [vmem:[%s4726 + $0xc2] sm:$0xff]
        %v8862 = vld [vmem:[%s4726 + $0xca] sm:$0xff]
        %v8863 = vld [vmem:[%s4726 + $0xda] sm:$0xff]
        %v8864 = vld [vmem:[%s4726 + $0xe2] sm:$0xff]
        %v8865 = vld [vmem:[%s4726 + $0xf2] sm:$0xff]
        %v8866 = vld [vmem:[%s4726 + $0xfa] sm:$0xff]
        %v8867 = vld [vmem:[%s4726 + $0x10a] sm:$0xff]
        %v8868 = vld [vmem:[%s4726 + $0x112] sm:$0xff]
        %v8869 = vld [vmem:[%s4726 + $0x122] sm:$0xff]
        %v8870 = vld [vmem:[%s4726 + $0x12a] sm:$0xff]
        %v8871 = vld [vmem:[%s4726 + $0x13a] sm:$0xff]
        %v8872 = vld [vmem:[%s4726 + $0x142] sm:$0xff]
        %v8873 = vld [vmem:[%s4726 + $0x152] sm:$0xff]
        %v8874 = vld [vmem:[%s4726 + $0x15a] sm:$0xff]
        %v8875 = vld [vmem:[%s4726 + $0x16a] sm:$0xff]
        %v8876 = vld [vmem:[%s4726 + $0x172] sm:$0xff]
        %v8877 = vld [vmem:[%s4726 + $0x3] sm:$0xff]
        %v8878 = vld [vmem:[%s4726 + $0xb] sm:$0xff]
        %v8879 = vld [vmem:[%s4726 + $0x1b] sm:$0xff]
        %v8880 = vld [vmem:[%s4726 + $0x23] sm:$0xff]
        %v8881 = vld [vmem:[%s4726 + $0x33] sm:$0xff]
        %v8882 = vld [vmem:[%s4726 + $0x3b] sm:$0xff]
        %v8883 = vld [vmem:[%s4726 + $0x4b] sm:$0xff]
        %v8884 = vld [vmem:[%s4726 + $0x53] sm:$0xff]
        %v8885 = vld [vmem:[%s4726 + $0x63] sm:$0xff]
        %v8886 = vld [vmem:[%s4726 + $0x6b] sm:$0xff]
        %v8887 = vld [vmem:[%s4726 + $0x7b] sm:$0xff]
        %v8888 = vld [vmem:[%s4726 + $0x83] sm:$0xff]
        %v8889 = vld [vmem:[%s4726 + $0x93] sm:$0xff]
        %v8890 = vld [vmem:[%s4726 + $0x9b] sm:$0xff]
        %v8891 = vld [vmem:[%s4726 + $0xab] sm:$0xff]
        %v8892 = vld [vmem:[%s4726 + $0xb3] sm:$0xff]
        %v8893 = vld [vmem:[%s4726 + $0xc3] sm:$0xff]
        %v8894 = vld [vmem:[%s4726 + $0xcb] sm:$0xff]
        %v8895 = vld [vmem:[%s4726 + $0xdb] sm:$0xff]
        %v8896 = vld [vmem:[%s4726 + $0xe3] sm:$0xff]
        %v8897 = vld [vmem:[%s4726 + $0xf3] sm:$0xff]
        %v8898 = vld [vmem:[%s4726 + $0xfb] sm:$0xff]
        %v8899 = vld [vmem:[%s4726 + $0x10b] sm:$0xff]
        %v8900 = vld [vmem:[%s4726 + $0x113] sm:$0xff]
        %v8901 = vld [vmem:[%s4726 + $0x123] sm:$0xff]
        %v8902 = vld [vmem:[%s4726 + $0x12b] sm:$0xff]
        %v8903 = vld [vmem:[%s4726 + $0x13b] sm:$0xff]
        %v8904 = vld [vmem:[%s4726 + $0x143] sm:$0xff]
        %v8905 = vld [vmem:[%s4726 + $0x153] sm:$0xff]
        %v8906 = vld [vmem:[%s4726 + $0x15b] sm:$0xff]
        %v8907 = vld [vmem:[%s4726 + $0x16b] sm:$0xff]
        %v8908 = vld [vmem:[%s4726 + $0x173] sm:$0xff]
        %v8909 = vld [vmem:[%s4726 + $0x4] sm:$0xff]
        %v8910 = vld [vmem:[%s4726 + $0xc] sm:$0xff]
        %v8911 = vld [vmem:[%s4726 + $0x1c] sm:$0xff]
        %v8912 = vld [vmem:[%s4726 + $0x24] sm:$0xff]
        %v8913 = vld [vmem:[%s4726 + $0x34] sm:$0xff]
        %v8914 = vld [vmem:[%s4726 + $0x3c] sm:$0xff]
        %v8915 = vld [vmem:[%s4726 + $0x4c] sm:$0xff]
        %v8916 = vld [vmem:[%s4726 + $0x54] sm:$0xff]
        %v8917 = vld [vmem:[%s4726 + $0x64] sm:$0xff]
        %v8918 = vld [vmem:[%s4726 + $0x6c] sm:$0xff]
        %v8919 = vld [vmem:[%s4726 + $0x7c] sm:$0xff]
        %v8920 = vld [vmem:[%s4726 + $0x84] sm:$0xff]
        %v8921 = vld [vmem:[%s4726 + $0x94] sm:$0xff]
        %v8922 = vld [vmem:[%s4726 + $0x9c] sm:$0xff]
        %v8923 = vld [vmem:[%s4726 + $0xac] sm:$0xff]
        %v8924 = vld [vmem:[%s4726 + $0xb4] sm:$0xff]
        %v8925 = vld [vmem:[%s4726 + $0xc4] sm:$0xff]
        %v8926 = vld [vmem:[%s4726 + $0xcc] sm:$0xff]
        %v8927 = vld [vmem:[%s4726 + $0xdc] sm:$0xff]
        %v8928 = vld [vmem:[%s4726 + $0xe4] sm:$0xff]
        %v8929 = vld [vmem:[%s4726 + $0xf4] sm:$0xff]
        %v8930 = vld [vmem:[%s4726 + $0xfc] sm:$0xff]
        %v8931 = vld [vmem:[%s4726 + $0x10c] sm:$0xff]
        %v8932 = vld [vmem:[%s4726 + $0x114] sm:$0xff]
        %v8933 = vld [vmem:[%s4726 + $0x124] sm:$0xff]
        %v8934 = vld [vmem:[%s4726 + $0x12c] sm:$0xff]
        %v8935 = vld [vmem:[%s4726 + $0x13c] sm:$0xff]
        %v8936 = vld [vmem:[%s4726 + $0x144] sm:$0xff]
        %v8937 = vld [vmem:[%s4726 + $0x154] sm:$0xff]
        %v8938 = vld [vmem:[%s4726 + $0x15c] sm:$0xff]
        %v8939 = vld [vmem:[%s4726 + $0x16c] sm:$0xff]
        %v8940 = vld [vmem:[%s4726 + $0x174] sm:$0xff]
        %v8941 = vld [vmem:[%s325 + $0x2] sm:$0xff]
        %v8942 = vld [vmem:[%s325 + $0xa] sm:$0xff]
        %v8943 = vld [vmem:[%s325 + $0x1a] sm:$0xff]
        %v8944 = vld [vmem:[%s325 + $0x22] sm:$0xff]
        %v8945 = vld [vmem:[%s325 + $0x32] sm:$0xff]
        %v8946 = vld [vmem:[%s325 + $0x3a] sm:$0xff]
        %v8947 = vld [vmem:[%s325 + $0x4a] sm:$0xff]
        %v8948 = vld [vmem:[%s325 + $0x52] sm:$0xff]
        %v8949 = vld [vmem:[%s325 + $0x62] sm:$0xff]
        %v8950 = vld [vmem:[%s325 + $0x6a] sm:$0xff]
        %v8951 = vld [vmem:[%s325 + $0x7a] sm:$0xff]
        %v8952 = vld [vmem:[%s325 + $0x82] sm:$0xff]
        %v8953 = vld [vmem:[%s325 + $0x92] sm:$0xff]
        %v8954 = vld [vmem:[%s325 + $0x9a] sm:$0xff]
        %v8955 = vld [vmem:[%s325 + $0xaa] sm:$0xff]
        %v8956 = vld [vmem:[%s325 + $0xb2] sm:$0xff]
        %v8957 = vld [vmem:[%s325 + $0xc2] sm:$0xff]
        %v8958 = vld [vmem:[%s325 + $0xca] sm:$0xff]
        %v8959 = vld [vmem:[%s325 + $0xda] sm:$0xff]
        %v8960 = vld [vmem:[%s325 + $0xe2] sm:$0xff]
        %v8961 = vld [vmem:[%s325 + $0xf2] sm:$0xff]
        %v8962 = vld [vmem:[%s325 + $0xfa] sm:$0xff]
        %v8963 = vld [vmem:[%s325 + $0x10a] sm:$0xff]
        %v8964 = vld [vmem:[%s325 + $0x112] sm:$0xff]
        %v8965 = vld [vmem:[%s325 + $0x122] sm:$0xff]
        %v8966 = vld [vmem:[%s325 + $0x12a] sm:$0xff]
        %v8967 = vld [vmem:[%s325 + $0x13a] sm:$0xff]
        %v8968 = vld [vmem:[%s325 + $0x142] sm:$0xff]
        %v8969 = vld [vmem:[%s325 + $0x152] sm:$0xff]
        %v8970 = vld [vmem:[%s325 + $0x15a] sm:$0xff]
        %v8971 = vld [vmem:[%s325 + $0x16a] sm:$0xff]
        %v8972 = vld [vmem:[%s325 + $0x172] sm:$0xff]
        %v8973 = vld [vmem:[%s325 + $0x3] sm:$0xff]
        %v8974 = vld [vmem:[%s325 + $0xb] sm:$0xff]
        %v8975 = vld [vmem:[%s325 + $0x1b] sm:$0xff]
        %v8976 = vld [vmem:[%s325 + $0x23] sm:$0xff]
        %v8977 = vld [vmem:[%s325 + $0x33] sm:$0xff]
        %v8978 = vld [vmem:[%s325 + $0x3b] sm:$0xff]
        %v8979 = vld [vmem:[%s325 + $0x4b] sm:$0xff]
        %v8980 = vld [vmem:[%s325 + $0x53] sm:$0xff]
        %v8981 = vld [vmem:[%s325 + $0x63] sm:$0xff]
        %v8982 = vld [vmem:[%s325 + $0x6b] sm:$0xff]
        %v8983 = vld [vmem:[%s325 + $0x7b] sm:$0xff]
        %v8984 = vld [vmem:[%s325 + $0x83] sm:$0xff]
        %v8985 = vld [vmem:[%s325 + $0x93] sm:$0xff]
        %v8986 = vld [vmem:[%s325 + $0x9b] sm:$0xff]
        %v8987 = vld [vmem:[%s325 + $0xab] sm:$0xff]
        %v8988 = vld [vmem:[%s325 + $0xb3] sm:$0xff]
        %v8989 = vld [vmem:[%s325 + $0xc3] sm:$0xff]
        %v8990 = vld [vmem:[%s325 + $0xcb] sm:$0xff]
        %v8991 = vld [vmem:[%s325 + $0xdb] sm:$0xff]
        %v8992 = vld [vmem:[%s325 + $0xe3] sm:$0xff]
        %v8993 = vld [vmem:[%s325 + $0xf3] sm:$0xff]
        %v8994 = vld [vmem:[%s325 + $0xfb] sm:$0xff]
        %v8995 = vld [vmem:[%s325 + $0x10b] sm:$0xff]
        %v8996 = vld [vmem:[%s325 + $0x113] sm:$0xff]
        %v8997 = vld [vmem:[%s325 + $0x123] sm:$0xff]
        %v8998 = vld [vmem:[%s325 + $0x12b] sm:$0xff]
        %v8999 = vld [vmem:[%s325 + $0x13b] sm:$0xff]
        %v9000 = vld [vmem:[%s325 + $0x143] sm:$0xff]
        %v9001 = vld [vmem:[%s325 + $0x153] sm:$0xff]
        %v9002 = vld [vmem:[%s325 + $0x15b] sm:$0xff]
        %v9003 = vld [vmem:[%s325 + $0x16b] sm:$0xff]
        %v9004 = vld [vmem:[%s325 + $0x173] sm:$0xff]
        %v9005 = vld [vmem:[%s325 + $0x4] sm:$0xff]
        %v9006 = vld [vmem:[%s325 + $0xc] sm:$0xff]
        %v9007 = vld [vmem:[%s325 + $0x1c] sm:$0xff]
        %v9008 = vld [vmem:[%s325 + $0x24] sm:$0xff]
        %v9009 = vld [vmem:[%s325 + $0x34] sm:$0xff]
        %v9010 = vld [vmem:[%s325 + $0x3c] sm:$0xff]
        %v9011 = vld [vmem:[%s325 + $0x4c] sm:$0xff]
        %v9012 = vld [vmem:[%s325 + $0x54] sm:$0xff]
        %v9013 = vld [vmem:[%s325 + $0x64] sm:$0xff]
        %v9014 = vld [vmem:[%s325 + $0x6c] sm:$0xff]
        %v9015 = vld [vmem:[%s325 + $0x7c] sm:$0xff]
        %v9016 = vld [vmem:[%s325 + $0x84] sm:$0xff]
        %v9017 = vld [vmem:[%s325 + $0x94] sm:$0xff]
        %v9018 = vld [vmem:[%s325 + $0x9c] sm:$0xff]
        %v9019 = vld [vmem:[%s325 + $0xac] sm:$0xff]
        %v9020 = vld [vmem:[%s325 + $0xb4] sm:$0xff]
        %v9021 = vld [vmem:[%s325 + $0xc4] sm:$0xff]
        %v9022 = vld [vmem:[%s325 + $0xcc] sm:$0xff]
        %v9023 = vld [vmem:[%s325 + $0xdc] sm:$0xff]
        %v9024 = vld [vmem:[%s325 + $0xe4] sm:$0xff]
        %v9025 = vld [vmem:[%s325 + $0xf4] sm:$0xff]
        %v9026 = vld [vmem:[%s325 + $0xfc] sm:$0xff]
        %v9027 = vld [vmem:[%s325 + $0x10c] sm:$0xff]
        %v9028 = vld [vmem:[%s325 + $0x114] sm:$0xff]
        %v9029 = vld [vmem:[%s325 + $0x124] sm:$0xff]
        %v9030 = vld [vmem:[%s325 + $0x12c] sm:$0xff]
        %v9031 = vld [vmem:[%s325 + $0x13c] sm:$0xff]
        %v9032 = vld [vmem:[%s325 + $0x144] sm:$0xff]
        %v9033 = vld [vmem:[%s325 + $0x154] sm:$0xff]
        %v9034 = vld [vmem:[%s325 + $0x15c] sm:$0xff]
        %v9035 = vld [vmem:[%s325 + $0x16c] sm:$0xff]
        %v9036 = vld [vmem:[%s325 + $0x174] sm:$0xff]
        %v9037 = vld [vmem:[%s4919 + $0x2] sm:$0xff]
        %v9038 = vld [vmem:[%s4919 + $0xa] sm:$0xff]
        %v9039 = vld [vmem:[%s4919 + $0x1a] sm:$0xff]
        %v9040 = vld [vmem:[%s4919 + $0x22] sm:$0xff]
        %v9041 = vld [vmem:[%s4919 + $0x32] sm:$0xff]
        %v9042 = vld [vmem:[%s4919 + $0x3a] sm:$0xff]
        %v9043 = vld [vmem:[%s4919 + $0x4a] sm:$0xff]
        %v9044 = vld [vmem:[%s4919 + $0x52] sm:$0xff]
        %v9045 = vld [vmem:[%s4919 + $0x62] sm:$0xff]
        %v9046 = vld [vmem:[%s4919 + $0x6a] sm:$0xff]
        %v9047 = vld [vmem:[%s4919 + $0x7a] sm:$0xff]
        %v9048 = vld [vmem:[%s4919 + $0x82] sm:$0xff]
        %v9049 = vld [vmem:[%s4919 + $0x92] sm:$0xff]
        %v9050 = vld [vmem:[%s4919 + $0x9a] sm:$0xff]
        %v9051 = vld [vmem:[%s4919 + $0xaa] sm:$0xff]
        %v9052 = vld [vmem:[%s4919 + $0xb2] sm:$0xff]
        %v9053 = vld [vmem:[%s4919 + $0xc2] sm:$0xff]
        %v9054 = vld [vmem:[%s4919 + $0xca] sm:$0xff]
        %v9055 = vld [vmem:[%s4919 + $0xda] sm:$0xff]
        %v9056 = vld [vmem:[%s4919 + $0xe2] sm:$0xff]
        %v9057 = vld [vmem:[%s4919 + $0xf2] sm:$0xff]
        %v9058 = vld [vmem:[%s4919 + $0xfa] sm:$0xff]
        %v9059 = vld [vmem:[%s4919 + $0x10a] sm:$0xff]
        %v9060 = vld [vmem:[%s4919 + $0x112] sm:$0xff]
        %v9061 = vld [vmem:[%s4919 + $0x122] sm:$0xff]
        %v9062 = vld [vmem:[%s4919 + $0x12a] sm:$0xff]
        %v9063 = vld [vmem:[%s4919 + $0x13a] sm:$0xff]
        %v9064 = vld [vmem:[%s4919 + $0x142] sm:$0xff]
        %v9065 = vld [vmem:[%s4919 + $0x152] sm:$0xff]
        %v9066 = vld [vmem:[%s4919 + $0x15a] sm:$0xff]
        %v9067 = vld [vmem:[%s4919 + $0x16a] sm:$0xff]
        %v9068 = vld [vmem:[%s4919 + $0x172] sm:$0xff]
        %v9069 = vld [vmem:[%s4919 + $0x3] sm:$0xff]
        %v9070 = vld [vmem:[%s4919 + $0xb] sm:$0xff]
        %v9071 = vld [vmem:[%s4919 + $0x1b] sm:$0xff]
        %v9072 = vld [vmem:[%s4919 + $0x23] sm:$0xff]
        %v9073 = vld [vmem:[%s4919 + $0x33] sm:$0xff]
        %v9074 = vld [vmem:[%s4919 + $0x3b] sm:$0xff]
        %v9075 = vld [vmem:[%s4919 + $0x4b] sm:$0xff]
        %v9076 = vld [vmem:[%s4919 + $0x53] sm:$0xff]
        %v9077 = vld [vmem:[%s4919 + $0x63] sm:$0xff]
        %v9078 = vld [vmem:[%s4919 + $0x6b] sm:$0xff]
        %v9079 = vld [vmem:[%s4919 + $0x7b] sm:$0xff]
        %v9080 = vld [vmem:[%s4919 + $0x83] sm:$0xff]
        %v9081 = vld [vmem:[%s4919 + $0x93] sm:$0xff]
        %v9082 = vld [vmem:[%s4919 + $0x9b] sm:$0xff]
        %v9083 = vld [vmem:[%s4919 + $0xab] sm:$0xff]
        %v9084 = vld [vmem:[%s4919 + $0xb3] sm:$0xff]
        %v9085 = vld [vmem:[%s4919 + $0xc3] sm:$0xff]
        %v9086 = vld [vmem:[%s4919 + $0xcb] sm:$0xff]
        %v9087 = vld [vmem:[%s4919 + $0xdb] sm:$0xff]
        %v9088 = vld [vmem:[%s4919 + $0xe3] sm:$0xff]
        %v9089 = vld [vmem:[%s4919 + $0xf3] sm:$0xff]
        %v9090 = vld [vmem:[%s4919 + $0xfb] sm:$0xff]
        %v9091 = vld [vmem:[%s4919 + $0x10b] sm:$0xff]
        %v9092 = vld [vmem:[%s4919 + $0x113] sm:$0xff]
        %v9093 = vld [vmem:[%s4919 + $0x123] sm:$0xff]
        %v9094 = vld [vmem:[%s4919 + $0x12b] sm:$0xff]
        %v9095 = vld [vmem:[%s4919 + $0x13b] sm:$0xff]
        %v9096 = vld [vmem:[%s4919 + $0x143] sm:$0xff]
        %v9097 = vld [vmem:[%s4919 + $0x153] sm:$0xff]
        %v9098 = vld [vmem:[%s4919 + $0x15b] sm:$0xff]
        %v9099 = vld [vmem:[%s4919 + $0x16b] sm:$0xff]
        %v9100 = vld [vmem:[%s4919 + $0x173] sm:$0xff]
        %v9101 = vld [vmem:[%s4919 + $0x4] sm:$0xff]
        %v9102 = vld [vmem:[%s4919 + $0xc] sm:$0xff]
        %v9103 = vld [vmem:[%s4919 + $0x1c] sm:$0xff]
        %v9104 = vld [vmem:[%s4919 + $0x24] sm:$0xff]
        %v9105 = vld [vmem:[%s4919 + $0x34] sm:$0xff]
        %v9106 = vld [vmem:[%s4919 + $0x3c] sm:$0xff]
        %v9107 = vld [vmem:[%s4919 + $0x4c] sm:$0xff]
        %v9108 = vld [vmem:[%s4919 + $0x54] sm:$0xff]
        %v9109 = vld [vmem:[%s4919 + $0x64] sm:$0xff]
        %v9110 = vld [vmem:[%s4919 + $0x6c] sm:$0xff]
        %v9111 = vld [vmem:[%s4919 + $0x7c] sm:$0xff]
        %v9112 = vld [vmem:[%s4919 + $0x84] sm:$0xff]
        %v9113 = vld [vmem:[%s4919 + $0x94] sm:$0xff]
        %v9114 = vld [vmem:[%s4919 + $0x9c] sm:$0xff]
        %v9115 = vld [vmem:[%s4919 + $0xac] sm:$0xff]
        %v9116 = vld [vmem:[%s4919 + $0xb4] sm:$0xff]
        %v9117 = vld [vmem:[%s4919 + $0xc4] sm:$0xff]
        %v9118 = vld [vmem:[%s4919 + $0xcc] sm:$0xff]
        %v9119 = vld [vmem:[%s4919 + $0xdc] sm:$0xff]
        %v9120 = vld [vmem:[%s4919 + $0xe4] sm:$0xff]
        %v9121 = vld [vmem:[%s4919 + $0xf4] sm:$0xff]
        %v9122 = vld [vmem:[%s4919 + $0xfc] sm:$0xff]
        %v9123 = vld [vmem:[%s4919 + $0x10c] sm:$0xff]
        %v9124 = vld [vmem:[%s4919 + $0x114] sm:$0xff]
        %v9125 = vld [vmem:[%s4919 + $0x124] sm:$0xff]
        %v9126 = vld [vmem:[%s4919 + $0x12c] sm:$0xff]
        %v9127 = vld [vmem:[%s4919 + $0x13c] sm:$0xff]
        %v9128 = vld [vmem:[%s4919 + $0x144] sm:$0xff]
        %v9129 = vld [vmem:[%s4919 + $0x154] sm:$0xff]
        %v9130 = vld [vmem:[%s4919 + $0x15c] sm:$0xff]
        %v9131 = vld [vmem:[%s4919 + $0x16c] sm:$0xff]
        %v9132 = vld [vmem:[%s4919 + $0x174] sm:$0xff]
        %9165 = vrot.lane.b32.xlu0 %v8877, 20
        %v9166 = vpop.permute.xlu0 %9165
        %9167 = vrot.lane.b32.xlu0 %v8878, 20
        %v9168 = vpop.permute.xlu0 %9167
        %9169 = vrot.lane.b32.xlu0 %v8879, 20
        %v9170 = vpop.permute.xlu0 %9169
        %9171 = vrot.lane.b32.xlu0 %v8880, 20
        %v9172 = vpop.permute.xlu0 %9171
        %9173 = vrot.lane.b32.xlu0 %v8881, 20
        %v9174 = vpop.permute.xlu0 %9173
        %9175 = vrot.lane.b32.xlu0 %v8882, 20
        %v9176 = vpop.permute.xlu0 %9175
        %9177 = vrot.lane.b32.xlu0 %v8883, 20
        %v9178 = vpop.permute.xlu0 %9177
        %9179 = vrot.lane.b32.xlu0 %v8884, 20
        %v9180 = vpop.permute.xlu0 %9179
        %9181 = vrot.lane.b32.xlu0 %v8885, 20
        %v9182 = vpop.permute.xlu0 %9181
        %9183 = vrot.lane.b32.xlu0 %v8886, 20
        %v9184 = vpop.permute.xlu0 %9183
        %9185 = vrot.lane.b32.xlu0 %v8887, 20
        %v9186 = vpop.permute.xlu0 %9185
        %9187 = vrot.lane.b32.xlu0 %v8888, 20
        %v9188 = vpop.permute.xlu0 %9187
        %9189 = vrot.lane.b32.xlu0 %v8889, 20
        %v9190 = vpop.permute.xlu0 %9189
        %9191 = vrot.lane.b32.xlu0 %v8890, 20
        %v9192 = vpop.permute.xlu0 %9191
        %9193 = vrot.lane.b32.xlu0 %v8891, 20
        %v9194 = vpop.permute.xlu0 %9193
        %9195 = vrot.lane.b32.xlu0 %v8892, 20
        %v9196 = vpop.permute.xlu0 %9195
        %9197 = vrot.lane.b32.xlu0 %v8893, 20
        %v9198 = vpop.permute.xlu0 %9197
        %9199 = vrot.lane.b32.xlu0 %v8894, 20
        %v9200 = vpop.permute.xlu0 %9199
        %9201 = vrot.lane.b32.xlu0 %v8895, 20
        %v9202 = vpop.permute.xlu0 %9201
        %9203 = vrot.lane.b32.xlu0 %v8896, 20
        %v9204 = vpop.permute.xlu0 %9203
        %9205 = vrot.lane.b32.xlu0 %v8897, 20
        %v9206 = vpop.permute.xlu0 %9205
        %9207 = vrot.lane.b32.xlu0 %v8898, 20
        %v9208 = vpop.permute.xlu0 %9207
        %9209 = vrot.lane.b32.xlu0 %v8899, 20
        %v9210 = vpop.permute.xlu0 %9209
        %9211 = vrot.lane.b32.xlu0 %v8900, 20
        %v9212 = vpop.permute.xlu0 %9211
        %9213 = vrot.lane.b32.xlu0 %v8901, 20
        %v9214 = vpop.permute.xlu0 %9213
        %9215 = vrot.lane.b32.xlu0 %v8902, 20
        %v9216 = vpop.permute.xlu0 %9215
        %9217 = vrot.lane.b32.xlu0 %v8903, 20
        %v9218 = vpop.permute.xlu0 %9217
        %9219 = vrot.lane.b32.xlu0 %v8904, 20
        %v9220 = vpop.permute.xlu0 %9219
        %9221 = vrot.lane.b32.xlu0 %v8905, 20
        %v9222 = vpop.permute.xlu0 %9221
        %9223 = vrot.lane.b32.xlu0 %v8906, 20
        %v9224 = vpop.permute.xlu0 %9223
        %9225 = vrot.lane.b32.xlu0 %v8907, 20
        %v9226 = vpop.permute.xlu0 %9225
        %9227 = vrot.lane.b32.xlu0 %v8908, 20
        %v9228 = vpop.permute.xlu0 %9227
        %9293 = vrot.lane.b32.xlu0 %v8909, 40
        %v9294 = vpop.permute.xlu0 %9293
        %9295 = vrot.lane.b32.xlu0 %v8910, 40
        %v9296 = vpop.permute.xlu0 %9295
        %9297 = vrot.lane.b32.xlu0 %v8911, 40
        %v9298 = vpop.permute.xlu0 %9297
        %9299 = vrot.lane.b32.xlu0 %v8912, 40
        %v9300 = vpop.permute.xlu0 %9299
        %9301 = vrot.lane.b32.xlu0 %v8913, 40
        %v9302 = vpop.permute.xlu0 %9301
        %9303 = vrot.lane.b32.xlu0 %v8914, 40
        %v9304 = vpop.permute.xlu0 %9303
        %9305 = vrot.lane.b32.xlu0 %v8915, 40
        %v9306 = vpop.permute.xlu0 %9305
        %9307 = vrot.lane.b32.xlu0 %v8916, 40
        %v9308 = vpop.permute.xlu0 %9307
        %9309 = vrot.lane.b32.xlu0 %v8917, 40
        %v9310 = vpop.permute.xlu0 %9309
        %9311 = vrot.lane.b32.xlu0 %v8918, 40
        %v9312 = vpop.permute.xlu0 %9311
        %9313 = vrot.lane.b32.xlu0 %v8919, 40
        %v9314 = vpop.permute.xlu0 %9313
        %9315 = vrot.lane.b32.xlu0 %v8920, 40
        %v9316 = vpop.permute.xlu0 %9315
        %9317 = vrot.lane.b32.xlu0 %v8921, 40
        %v9318 = vpop.permute.xlu0 %9317
        %9319 = vrot.lane.b32.xlu0 %v8922, 40
        %v9320 = vpop.permute.xlu0 %9319
        %9321 = vrot.lane.b32.xlu0 %v8923, 40
        %v9322 = vpop.permute.xlu0 %9321
        %9323 = vrot.lane.b32.xlu0 %v8924, 40
        %v9324 = vpop.permute.xlu0 %9323
        %9325 = vrot.lane.b32.xlu0 %v8925, 40
        %v9326 = vpop.permute.xlu0 %9325
        %9327 = vrot.lane.b32.xlu0 %v8926, 40
        %v9328 = vpop.permute.xlu0 %9327
        %9329 = vrot.lane.b32.xlu0 %v8927, 40
        %v9330 = vpop.permute.xlu0 %9329
        %9331 = vrot.lane.b32.xlu0 %v8928, 40
        %v9332 = vpop.permute.xlu0 %9331
        %9333 = vrot.lane.b32.xlu0 %v8929, 40
        %v9334 = vpop.permute.xlu0 %9333
        %9335 = vrot.lane.b32.xlu0 %v8930, 40
        %v9336 = vpop.permute.xlu0 %9335
        %9337 = vrot.lane.b32.xlu0 %v8931, 40
        %v9338 = vpop.permute.xlu0 %9337
        %9339 = vrot.lane.b32.xlu0 %v8932, 40
        %v9340 = vpop.permute.xlu0 %9339
        %9341 = vrot.lane.b32.xlu0 %v8933, 40
        %v9342 = vpop.permute.xlu0 %9341
        %9343 = vrot.lane.b32.xlu0 %v8934, 40
        %v9344 = vpop.permute.xlu0 %9343
        %9345 = vrot.lane.b32.xlu0 %v8935, 40
        %v9346 = vpop.permute.xlu0 %9345
        %9347 = vrot.lane.b32.xlu0 %v8936, 40
        %v9348 = vpop.permute.xlu0 %9347
        %9349 = vrot.lane.b32.xlu0 %v8937, 40
        %v9350 = vpop.permute.xlu0 %9349
        %9351 = vrot.lane.b32.xlu0 %v8938, 40
        %v9352 = vpop.permute.xlu0 %9351
        %9353 = vrot.lane.b32.xlu0 %v8939, 40
        %v9354 = vpop.permute.xlu0 %9353
        %9355 = vrot.lane.b32.xlu0 %v8940, 40
        %v9356 = vpop.permute.xlu0 %9355
        %9421 = vrot.lane.b32.xlu0 %v8941, 60
        %v9422 = vpop.permute.xlu0 %9421
        %9423 = vrot.lane.b32.xlu0 %v8942, 60
        %v9424 = vpop.permute.xlu0 %9423
        %9425 = vrot.lane.b32.xlu0 %v8943, 60
        %v9426 = vpop.permute.xlu0 %9425
        %9427 = vrot.lane.b32.xlu0 %v8944, 60
        %v9428 = vpop.permute.xlu0 %9427
        %9429 = vrot.lane.b32.xlu0 %v8945, 60
        %v9430 = vpop.permute.xlu0 %9429
        %9431 = vrot.lane.b32.xlu0 %v8946, 60
        %v9432 = vpop.permute.xlu0 %9431
        %9433 = vrot.lane.b32.xlu0 %v8947, 60
        %v9434 = vpop.permute.xlu0 %9433
        %9435 = vrot.lane.b32.xlu0 %v8948, 60
        %v9436 = vpop.permute.xlu0 %9435
        %9437 = vrot.lane.b32.xlu0 %v8949, 60
        %v9438 = vpop.permute.xlu0 %9437
        %9439 = vrot.lane.b32.xlu0 %v8950, 60
        %v9440 = vpop.permute.xlu0 %9439
        %9441 = vrot.lane.b32.xlu0 %v8951, 60
        %v9442 = vpop.permute.xlu0 %9441
        %9443 = vrot.lane.b32.xlu0 %v8952, 60
        %v9444 = vpop.permute.xlu0 %9443
        %9445 = vrot.lane.b32.xlu0 %v8953, 60
        %v9446 = vpop.permute.xlu0 %9445
        %9447 = vrot.lane.b32.xlu0 %v8954, 60
        %v9448 = vpop.permute.xlu0 %9447
        %9449 = vrot.lane.b32.xlu0 %v8955, 60
        %v9450 = vpop.permute.xlu0 %9449
        %9451 = vrot.lane.b32.xlu0 %v8956, 60
        %v9452 = vpop.permute.xlu0 %9451
        %9453 = vrot.lane.b32.xlu0 %v8957, 60
        %v9454 = vpop.permute.xlu0 %9453
        %9455 = vrot.lane.b32.xlu0 %v8958, 60
        %v9456 = vpop.permute.xlu0 %9455
        %9457 = vrot.lane.b32.xlu0 %v8959, 60
        %v9458 = vpop.permute.xlu0 %9457
        %9459 = vrot.lane.b32.xlu0 %v8960, 60
        %v9460 = vpop.permute.xlu0 %9459
        %9461 = vrot.lane.b32.xlu0 %v8961, 60
        %v9462 = vpop.permute.xlu0 %9461
        %9463 = vrot.lane.b32.xlu0 %v8962, 60
        %v9464 = vpop.permute.xlu0 %9463
        %9465 = vrot.lane.b32.xlu0 %v8963, 60
        %v9466 = vpop.permute.xlu0 %9465
        %9467 = vrot.lane.b32.xlu0 %v8964, 60
        %v9468 = vpop.permute.xlu0 %9467
        %9469 = vrot.lane.b32.xlu0 %v8965, 60
        %v9470 = vpop.permute.xlu0 %9469
        %9471 = vrot.lane.b32.xlu0 %v8966, 60
        %v9472 = vpop.permute.xlu0 %9471
        %9473 = vrot.lane.b32.xlu0 %v8967, 60
        %v9474 = vpop.permute.xlu0 %9473
        %9475 = vrot.lane.b32.xlu0 %v8968, 60
        %v9476 = vpop.permute.xlu0 %9475
        %9477 = vrot.lane.b32.xlu0 %v8969, 60
        %v9478 = vpop.permute.xlu0 %9477
        %9479 = vrot.lane.b32.xlu0 %v8970, 60
        %v9480 = vpop.permute.xlu0 %9479
        %9481 = vrot.lane.b32.xlu0 %v8971, 60
        %v9482 = vpop.permute.xlu0 %9481
        %9483 = vrot.lane.b32.xlu0 %v8972, 60
        %v9484 = vpop.permute.xlu0 %9483
        %9549 = vrot.lane.b32.xlu0 %v8973, 80
        %v9550 = vpop.permute.xlu0 %9549
        %9551 = vrot.lane.b32.xlu0 %v8974, 80
        %v9552 = vpop.permute.xlu0 %9551
        %9553 = vrot.lane.b32.xlu0 %v8975, 80
        %v9554 = vpop.permute.xlu0 %9553
        %9555 = vrot.lane.b32.xlu0 %v8976, 80
        %v9556 = vpop.permute.xlu0 %9555
        %9557 = vrot.lane.b32.xlu0 %v8977, 80
        %v9558 = vpop.permute.xlu0 %9557
        %9559 = vrot.lane.b32.xlu0 %v8978, 80
        %v9560 = vpop.permute.xlu0 %9559
        %9561 = vrot.lane.b32.xlu0 %v8979, 80
        %v9562 = vpop.permute.xlu0 %9561
        %9563 = vrot.lane.b32.xlu0 %v8980, 80
        %v9564 = vpop.permute.xlu0 %9563
        %9565 = vrot.lane.b32.xlu0 %v8981, 80
        %v9566 = vpop.permute.xlu0 %9565
        %9567 = vrot.lane.b32.xlu0 %v8982, 80
        %v9568 = vpop.permute.xlu0 %9567
        %9569 = vrot.lane.b32.xlu0 %v8983, 80
        %v9570 = vpop.permute.xlu0 %9569
        %9571 = vrot.lane.b32.xlu0 %v8984, 80
        %v9572 = vpop.permute.xlu0 %9571
        %9573 = vrot.lane.b32.xlu0 %v8985, 80
        %v9574 = vpop.permute.xlu0 %9573
        %9575 = vrot.lane.b32.xlu0 %v8986, 80
        %v9576 = vpop.permute.xlu0 %9575
        %9577 = vrot.lane.b32.xlu0 %v8987, 80
        %v9578 = vpop.permute.xlu0 %9577
        %9579 = vrot.lane.b32.xlu0 %v8988, 80
        %v9580 = vpop.permute.xlu0 %9579
        %9581 = vrot.lane.b32.xlu0 %v8989, 80
        %v9582 = vpop.permute.xlu0 %9581
        %9583 = vrot.lane.b32.xlu0 %v8990, 80
        %v9584 = vpop.permute.xlu0 %9583
        %9585 = vrot.lane.b32.xlu0 %v8991, 80
        %v9586 = vpop.permute.xlu0 %9585
        %9587 = vrot.lane.b32.xlu0 %v8992, 80
        %v9588 = vpop.permute.xlu0 %9587
        %9589 = vrot.lane.b32.xlu0 %v8993, 80
        %v9590 = vpop.permute.xlu0 %9589
        %9591 = vrot.lane.b32.xlu0 %v8994, 80
        %v9592 = vpop.permute.xlu0 %9591
        %9593 = vrot.lane.b32.xlu0 %v8995, 80
        %v9594 = vpop.permute.xlu0 %9593
        %9595 = vrot.lane.b32.xlu0 %v8996, 80
        %v9596 = vpop.permute.xlu0 %9595
        %9597 = vrot.lane.b32.xlu0 %v8997, 80
        %v9598 = vpop.permute.xlu0 %9597
        %9599 = vrot.lane.b32.xlu0 %v8998, 80
        %v9600 = vpop.permute.xlu0 %9599
        %9601 = vrot.lane.b32.xlu0 %v8999, 80
        %v9602 = vpop.permute.xlu0 %9601
        %9603 = vrot.lane.b32.xlu0 %v9000, 80
        %v9604 = vpop.permute.xlu0 %9603
        %9605 = vrot.lane.b32.xlu0 %v9001, 80
        %v9606 = vpop.permute.xlu0 %9605
        %9607 = vrot.lane.b32.xlu0 %v9002, 80
        %v9608 = vpop.permute.xlu0 %9607
        %9609 = vrot.lane.b32.xlu0 %v9003, 80
        %v9610 = vpop.permute.xlu0 %9609
        %9611 = vrot.lane.b32.xlu0 %v9004, 80
        %v9612 = vpop.permute.xlu0 %9611
        %9677 = vrot.lane.b32.xlu0 %v9005, 100
        %v9678 = vpop.permute.xlu0 %9677
        %9679 = vrot.lane.b32.xlu0 %v9006, 100
        %v9680 = vpop.permute.xlu0 %9679
        %9681 = vrot.lane.b32.xlu0 %v9007, 100
        %v9682 = vpop.permute.xlu0 %9681
        %9683 = vrot.lane.b32.xlu0 %v9008, 100
        %v9684 = vpop.permute.xlu0 %9683
        %9685 = vrot.lane.b32.xlu0 %v9009, 100
        %v9686 = vpop.permute.xlu0 %9685
        %9687 = vrot.lane.b32.xlu0 %v9010, 100
        %v9688 = vpop.permute.xlu0 %9687
        %9689 = vrot.lane.b32.xlu0 %v9011, 100
        %v9690 = vpop.permute.xlu0 %9689
        %9691 = vrot.lane.b32.xlu0 %v9012, 100
        %v9692 = vpop.permute.xlu0 %9691
        %9693 = vrot.lane.b32.xlu0 %v9013, 100
        %v9694 = vpop.permute.xlu0 %9693
        %9695 = vrot.lane.b32.xlu0 %v9014, 100
        %v9696 = vpop.permute.xlu0 %9695
        %9697 = vrot.lane.b32.xlu0 %v9015, 100
        %v9698 = vpop.permute.xlu0 %9697
        %9699 = vrot.lane.b32.xlu0 %v9016, 100
        %v9700 = vpop.permute.xlu0 %9699
        %9701 = vrot.lane.b32.xlu0 %v9017, 100
        %v9702 = vpop.permute.xlu0 %9701
        %9703 = vrot.lane.b32.xlu0 %v9018, 100
        %v9704 = vpop.permute.xlu0 %9703
        %9705 = vrot.lane.b32.xlu0 %v9019, 100
        %v9706 = vpop.permute.xlu0 %9705
        %9707 = vrot.lane.b32.xlu0 %v9020, 100
        %v9708 = vpop.permute.xlu0 %9707
        %9709 = vrot.lane.b32.xlu0 %v9021, 100
        %v9710 = vpop.permute.xlu0 %9709
        %9711 = vrot.lane.b32.xlu0 %v9022, 100
        %v9712 = vpop.permute.xlu0 %9711
        %9713 = vrot.lane.b32.xlu0 %v9023, 100
        %v9714 = vpop.permute.xlu0 %9713
        %9715 = vrot.lane.b32.xlu0 %v9024, 100
        %v9716 = vpop.permute.xlu0 %9715
        %9717 = vrot.lane.b32.xlu0 %v9025, 100
        %v9718 = vpop.permute.xlu0 %9717
        %9719 = vrot.lane.b32.xlu0 %v9026, 100
        %v9720 = vpop.permute.xlu0 %9719
        %9721 = vrot.lane.b32.xlu0 %v9027, 100
        %v9722 = vpop.permute.xlu0 %9721
        %9723 = vrot.lane.b32.xlu0 %v9028, 100
        %v9724 = vpop.permute.xlu0 %9723
        %9725 = vrot.lane.b32.xlu0 %v9029, 100
        %v9726 = vpop.permute.xlu0 %9725
        %9727 = vrot.lane.b32.xlu0 %v9030, 100
        %v9728 = vpop.permute.xlu0 %9727
        %9729 = vrot.lane.b32.xlu0 %v9031, 100
        %v9730 = vpop.permute.xlu0 %9729
        %9731 = vrot.lane.b32.xlu0 %v9032, 100
        %v9732 = vpop.permute.xlu0 %9731
        %9733 = vrot.lane.b32.xlu0 %v9033, 100
        %v9734 = vpop.permute.xlu0 %9733
        %9735 = vrot.lane.b32.xlu0 %v9034, 100
        %v9736 = vpop.permute.xlu0 %9735
        %9737 = vrot.lane.b32.xlu0 %v9035, 100
        %v9738 = vpop.permute.xlu0 %9737
        %9739 = vrot.lane.b32.xlu0 %v9036, 100
        %v9740 = vpop.permute.xlu0 %9739
        %9805 = vrot.lane.b32.xlu0 %v9037, 120
        %v9806 = vpop.permute.xlu0 %9805
        %9807 = vrot.lane.b32.xlu0 %v9038, 120
        %v9808 = vpop.permute.xlu0 %9807
        %9809 = vrot.lane.b32.xlu0 %v9039, 120
        %v9810 = vpop.permute.xlu0 %9809
        %9811 = vrot.lane.b32.xlu0 %v9040, 120
        %v9812 = vpop.permute.xlu0 %9811
        %9813 = vrot.lane.b32.xlu0 %v9041, 120
        %v9814 = vpop.permute.xlu0 %9813
        %9815 = vrot.lane.b32.xlu0 %v9042, 120
        %v9816 = vpop.permute.xlu0 %9815
        %9817 = vrot.lane.b32.xlu0 %v9043, 120
        %v9818 = vpop.permute.xlu0 %9817
        %9819 = vrot.lane.b32.xlu0 %v9044, 120
        %v9820 = vpop.permute.xlu0 %9819
        %9821 = vrot.lane.b32.xlu0 %v9045, 120
        %v9822 = vpop.permute.xlu0 %9821
        %9823 = vrot.lane.b32.xlu0 %v9046, 120
        %v9824 = vpop.permute.xlu0 %9823
        %9825 = vrot.lane.b32.xlu0 %v9047, 120
        %v9826 = vpop.permute.xlu0 %9825
        %9827 = vrot.lane.b32.xlu0 %v9048, 120
        %v9828 = vpop.permute.xlu0 %9827
        %9829 = vrot.lane.b32.xlu0 %v9049, 120
        %v9830 = vpop.permute.xlu0 %9829
        %9831 = vrot.lane.b32.xlu0 %v9050, 120
        %v9832 = vpop.permute.xlu0 %9831
        %9833 = vrot.lane.b32.xlu0 %v9051, 120
        %v9834 = vpop.permute.xlu0 %9833
        %9835 = vrot.lane.b32.xlu0 %v9052, 120
        %v9836 = vpop.permute.xlu0 %9835
        %9837 = vrot.lane.b32.xlu0 %v9053, 120
        %v9838 = vpop.permute.xlu0 %9837
        %9839 = vrot.lane.b32.xlu0 %v9054, 120
        %v9840 = vpop.permute.xlu0 %9839
        %9841 = vrot.lane.b32.xlu0 %v9055, 120
        %v9842 = vpop.permute.xlu0 %9841
        %9843 = vrot.lane.b32.xlu0 %v9056, 120
        %v9844 = vpop.permute.xlu0 %9843
        %9845 = vrot.lane.b32.xlu0 %v9057, 120
        %v9846 = vpop.permute.xlu0 %9845
        %9847 = vrot.lane.b32.xlu0 %v9058, 120
        %v9848 = vpop.permute.xlu0 %9847
        %9849 = vrot.lane.b32.xlu0 %v9059, 120
        %v9850 = vpop.permute.xlu0 %9849
        %9851 = vrot.lane.b32.xlu0 %v9060, 120
        %v9852 = vpop.permute.xlu0 %9851
        %9853 = vrot.lane.b32.xlu0 %v9061, 120
        %v9854 = vpop.permute.xlu0 %9853
        %9855 = vrot.lane.b32.xlu0 %v9062, 120
        %v9856 = vpop.permute.xlu0 %9855
        %9857 = vrot.lane.b32.xlu0 %v9063, 120
        %v9858 = vpop.permute.xlu0 %9857
        %9859 = vrot.lane.b32.xlu0 %v9064, 120
        %v9860 = vpop.permute.xlu0 %9859
        %9861 = vrot.lane.b32.xlu0 %v9065, 120
        %v9862 = vpop.permute.xlu0 %9861
        %9863 = vrot.lane.b32.xlu0 %v9066, 120
        %v9864 = vpop.permute.xlu0 %9863
        %9865 = vrot.lane.b32.xlu0 %v9067, 120
        %v9866 = vpop.permute.xlu0 %9865
        %9867 = vrot.lane.b32.xlu0 %v9068, 120
        %v9868 = vpop.permute.xlu0 %9867
        %9933 = vrot.lane.b32.xlu0 %v9069, 12
        %v9934 = vpop.permute.xlu0 %9933
        %9935 = vrot.lane.b32.xlu0 %v9070, 12
        %v9936 = vpop.permute.xlu0 %9935
        %9937 = vrot.lane.b32.xlu0 %v9071, 12
        %v9938 = vpop.permute.xlu0 %9937
        %9939 = vrot.lane.b32.xlu0 %v9072, 12
        %v9940 = vpop.permute.xlu0 %9939
        %9941 = vrot.lane.b32.xlu0 %v9073, 12
        %v9942 = vpop.permute.xlu0 %9941
        %9943 = vrot.lane.b32.xlu0 %v9074, 12
        %v9944 = vpop.permute.xlu0 %9943
        %9945 = vrot.lane.b32.xlu0 %v9075, 12
        %v9946 = vpop.permute.xlu0 %9945
        %9947 = vrot.lane.b32.xlu0 %v9076, 12
        %v9948 = vpop.permute.xlu0 %9947
        %9949 = vrot.lane.b32.xlu0 %v9077, 12
        %v9950 = vpop.permute.xlu0 %9949
        %9951 = vrot.lane.b32.xlu0 %v9078, 12
        %v9952 = vpop.permute.xlu0 %9951
        %9953 = vrot.lane.b32.xlu0 %v9079, 12
        %v9954 = vpop.permute.xlu0 %9953
        %9955 = vrot.lane.b32.xlu0 %v9080, 12
        %v9956 = vpop.permute.xlu0 %9955
        %9957 = vrot.lane.b32.xlu0 %v9081, 12
        %v9958 = vpop.permute.xlu0 %9957
        %9959 = vrot.lane.b32.xlu0 %v9082, 12
        %v9960 = vpop.permute.xlu0 %9959
        %9961 = vrot.lane.b32.xlu0 %v9083, 12
        %v9962 = vpop.permute.xlu0 %9961
        %9963 = vrot.lane.b32.xlu0 %v9084, 12
        %v9964 = vpop.permute.xlu0 %9963
        %9965 = vrot.lane.b32.xlu0 %v9085, 12
        %v9966 = vpop.permute.xlu0 %9965
        %9967 = vrot.lane.b32.xlu0 %v9086, 12
        %v9968 = vpop.permute.xlu0 %9967
        %9969 = vrot.lane.b32.xlu0 %v9087, 12
        %v9970 = vpop.permute.xlu0 %9969
        %9971 = vrot.lane.b32.xlu0 %v9088, 12
        %v9972 = vpop.permute.xlu0 %9971
        %9973 = vrot.lane.b32.xlu0 %v9089, 12
        %v9974 = vpop.permute.xlu0 %9973
        %9975 = vrot.lane.b32.xlu0 %v9090, 12
        %v9976 = vpop.permute.xlu0 %9975
        %9977 = vrot.lane.b32.xlu0 %v9091, 12
        %v9978 = vpop.permute.xlu0 %9977
        %9979 = vrot.lane.b32.xlu0 %v9092, 12
        %v9980 = vpop.permute.xlu0 %9979
        %9981 = vrot.lane.b32.xlu0 %v9093, 12
        %v9982 = vpop.permute.xlu0 %9981
        %9983 = vrot.lane.b32.xlu0 %v9094, 12
        %v9984 = vpop.permute.xlu0 %9983
        %9985 = vrot.lane.b32.xlu0 %v9095, 12
        %v9986 = vpop.permute.xlu0 %9985
        %9987 = vrot.lane.b32.xlu0 %v9096, 12
        %v9988 = vpop.permute.xlu0 %9987
        %9989 = vrot.lane.b32.xlu0 %v9097, 12
        %v9990 = vpop.permute.xlu0 %9989
        %9991 = vrot.lane.b32.xlu0 %v9098, 12
        %v9992 = vpop.permute.xlu0 %9991
        %9993 = vrot.lane.b32.xlu0 %v9099, 12
        %v9994 = vpop.permute.xlu0 %9993
        %9995 = vrot.lane.b32.xlu0 %v9100, 12
        %v9996 = vpop.permute.xlu0 %9995
        %10061 = vrot.lane.b32.xlu0 %v9101, 32
        %v10062 = vpop.permute.xlu0 %10061
        %10063 = vrot.lane.b32.xlu0 %v9102, 32
        %v10064 = vpop.permute.xlu0 %10063
        %10065 = vrot.lane.b32.xlu0 %v9103, 32
        %v10066 = vpop.permute.xlu0 %10065
        %10067 = vrot.lane.b32.xlu0 %v9104, 32
        %v10068 = vpop.permute.xlu0 %10067
        %10069 = vrot.lane.b32.xlu0 %v9105, 32
        %v10070 = vpop.permute.xlu0 %10069
        %10071 = vrot.lane.b32.xlu0 %v9106, 32
        %v10072 = vpop.permute.xlu0 %10071
        %10073 = vrot.lane.b32.xlu0 %v9107, 32
        %v10074 = vpop.permute.xlu0 %10073
        %10075 = vrot.lane.b32.xlu0 %v9108, 32
        %v10076 = vpop.permute.xlu0 %10075
        %10077 = vrot.lane.b32.xlu0 %v9109, 32
        %v10078 = vpop.permute.xlu0 %10077
        %10079 = vrot.lane.b32.xlu0 %v9110, 32
        %v10080 = vpop.permute.xlu0 %10079
        %10081 = vrot.lane.b32.xlu0 %v9111, 32
        %v10082 = vpop.permute.xlu0 %10081
        %10083 = vrot.lane.b32.xlu0 %v9112, 32
        %v10084 = vpop.permute.xlu0 %10083
        %10085 = vrot.lane.b32.xlu0 %v9113, 32
        %v10086 = vpop.permute.xlu0 %10085
        %10087 = vrot.lane.b32.xlu0 %v9114, 32
        %v10088 = vpop.permute.xlu0 %10087
        %10089 = vrot.lane.b32.xlu0 %v9115, 32
        %v10090 = vpop.permute.xlu0 %10089
        %10091 = vrot.lane.b32.xlu0 %v9116, 32
        %v10092 = vpop.permute.xlu0 %10091
        %10093 = vrot.lane.b32.xlu0 %v9117, 32
        %v10094 = vpop.permute.xlu0 %10093
        %10095 = vrot.lane.b32.xlu0 %v9118, 32
        %v10096 = vpop.permute.xlu0 %10095
        %10097 = vrot.lane.b32.xlu0 %v9119, 32
        %v10098 = vpop.permute.xlu0 %10097
        %10099 = vrot.lane.b32.xlu0 %v9120, 32
        %v10100 = vpop.permute.xlu0 %10099
        %10101 = vrot.lane.b32.xlu0 %v9121, 32
        %v10102 = vpop.permute.xlu0 %10101
        %10103 = vrot.lane.b32.xlu0 %v9122, 32
        %v10104 = vpop.permute.xlu0 %10103
        %10105 = vrot.lane.b32.xlu0 %v9123, 32
        %v10106 = vpop.permute.xlu0 %10105
        %10107 = vrot.lane.b32.xlu0 %v9124, 32
        %v10108 = vpop.permute.xlu0 %10107
        %10109 = vrot.lane.b32.xlu0 %v9125, 32
        %v10110 = vpop.permute.xlu0 %10109
        %10111 = vrot.lane.b32.xlu0 %v9126, 32
        %v10112 = vpop.permute.xlu0 %10111
        %10113 = vrot.lane.b32.xlu0 %v9127, 32
        %v10114 = vpop.permute.xlu0 %10113
        %10115 = vrot.lane.b32.xlu0 %v9128, 32
        %v10116 = vpop.permute.xlu0 %10115
        %10117 = vrot.lane.b32.xlu0 %v9129, 32
        %v10118 = vpop.permute.xlu0 %10117
        %10119 = vrot.lane.b32.xlu0 %v9130, 32
        %v10120 = vpop.permute.xlu0 %10119
        %10121 = vrot.lane.b32.xlu0 %v9131, 32
        %v10122 = vpop.permute.xlu0 %10121
        %10123 = vrot.lane.b32.xlu0 %v9132, 32
        %v10124 = vpop.permute.xlu0 %10123
        %v10157 = vsel %vm1901, %v8845, %v9166
        %v10158 = vsel %vm1901, %v8846, %v9168
        %v10159 = vsel %vm1901, %v8847, %v9170
        %v10160 = vsel %vm1901, %v8848, %v9172
        %v10161 = vsel %vm1901, %v8849, %v9174
        %v10162 = vsel %vm1901, %v8850, %v9176
        %v10163 = vsel %vm1901, %v8851, %v9178
        %v10164 = vsel %vm1901, %v8852, %v9180
        %v10165 = vsel %vm1901, %v8853, %v9182
        %v10166 = vsel %vm1901, %v8854, %v9184
        %v10167 = vsel %vm1901, %v8855, %v9186
        %v10168 = vsel %vm1901, %v8856, %v9188
        %v10169 = vsel %vm1901, %v8857, %v9190
        %v10170 = vsel %vm1901, %v8858, %v9192
        %v10171 = vsel %vm1901, %v8859, %v9194
        %v10172 = vsel %vm1901, %v8860, %v9196
        %v10173 = vsel %vm1901, %v8861, %v9198
        %v10174 = vsel %vm1901, %v8862, %v9200
        %v10175 = vsel %vm1901, %v8863, %v9202
        %v10176 = vsel %vm1901, %v8864, %v9204
        %v10177 = vsel %vm1901, %v8865, %v9206
        %v10178 = vsel %vm1901, %v8866, %v9208
        %v10179 = vsel %vm1901, %v8867, %v9210
        %v10180 = vsel %vm1901, %v8868, %v9212
        %v10181 = vsel %vm1901, %v8869, %v9214
        %v10182 = vsel %vm1901, %v8870, %v9216
        %v10183 = vsel %vm1901, %v8871, %v9218
        %v10184 = vsel %vm1901, %v8872, %v9220
        %v10185 = vsel %vm1901, %v8873, %v9222
        %v10186 = vsel %vm1901, %v8874, %v9224
        %v10187 = vsel %vm1901, %v8875, %v9226
        %v10188 = vsel %vm1901, %v8876, %v9228
        %v10189 = vsel %vm4034, %v10157, %v9294
        %v10190 = vsel %vm4034, %v10158, %v9296
        %v10191 = vsel %vm4034, %v10159, %v9298
        %v10192 = vsel %vm4034, %v10160, %v9300
        %v10193 = vsel %vm4034, %v10161, %v9302
        %v10194 = vsel %vm4034, %v10162, %v9304
        %v10195 = vsel %vm4034, %v10163, %v9306
        %v10196 = vsel %vm4034, %v10164, %v9308
        %v10197 = vsel %vm4034, %v10165, %v9310
        %v10198 = vsel %vm4034, %v10166, %v9312
        %v10199 = vsel %vm4034, %v10167, %v9314
        %v10200 = vsel %vm4034, %v10168, %v9316
        %v10201 = vsel %vm4034, %v10169, %v9318
        %v10202 = vsel %vm4034, %v10170, %v9320
        %v10203 = vsel %vm4034, %v10171, %v9322
        %v10204 = vsel %vm4034, %v10172, %v9324
        %v10205 = vsel %vm4034, %v10173, %v9326
        %v10206 = vsel %vm4034, %v10174, %v9328
        %v10207 = vsel %vm4034, %v10175, %v9330
        %v10208 = vsel %vm4034, %v10176, %v9332
        %v10209 = vsel %vm4034, %v10177, %v9334
        %v10210 = vsel %vm4034, %v10178, %v9336
        %v10211 = vsel %vm4034, %v10179, %v9338
        %v10212 = vsel %vm4034, %v10180, %v9340
        %v10213 = vsel %vm4034, %v10181, %v9342
        %v10214 = vsel %vm4034, %v10182, %v9344
        %v10215 = vsel %vm4034, %v10183, %v9346
        %v10216 = vsel %vm4034, %v10184, %v9348
        %v10217 = vsel %vm4034, %v10185, %v9350
        %v10218 = vsel %vm4034, %v10186, %v9352
        %v10219 = vsel %vm4034, %v10187, %v9354
        %v10220 = vsel %vm4034, %v10188, %v9356
        %v10221 = vsel %vm6168, %v10189, %v9422
        %v10222 = vsel %vm6168, %v10190, %v9424
        %v10223 = vsel %vm6168, %v10191, %v9426
        %v10224 = vsel %vm6168, %v10192, %v9428
        %v10225 = vsel %vm6168, %v10193, %v9430
        %v10226 = vsel %vm6168, %v10194, %v9432
        %v10227 = vsel %vm6168, %v10195, %v9434
        %v10228 = vsel %vm6168, %v10196, %v9436
        %v10229 = vsel %vm6168, %v10197, %v9438
        %v10230 = vsel %vm6168, %v10198, %v9440
        %v10231 = vsel %vm6168, %v10199, %v9442
        %v10232 = vsel %vm6168, %v10200, %v9444
        %v10233 = vsel %vm6168, %v10201, %v9446
        %v10234 = vsel %vm6168, %v10202, %v9448
        %v10235 = vsel %vm6168, %v10203, %v9450
        %v10236 = vsel %vm6168, %v10204, %v9452
        %v10237 = vsel %vm6168, %v10205, %v9454
        %v10238 = vsel %vm6168, %v10206, %v9456
        %v10239 = vsel %vm6168, %v10207, %v9458
        %v10240 = vsel %vm6168, %v10208, %v9460
        %v10241 = vsel %vm6168, %v10209, %v9462
        %v10242 = vsel %vm6168, %v10210, %v9464
        %v10243 = vsel %vm6168, %v10211, %v9466
        %v10244 = vsel %vm6168, %v10212, %v9468
        %v10245 = vsel %vm6168, %v10213, %v9470
        %v10246 = vsel %vm6168, %v10214, %v9472
        %v10247 = vsel %vm6168, %v10215, %v9474
        %v10248 = vsel %vm6168, %v10216, %v9476
        %v10249 = vsel %vm6168, %v10217, %v9478
        %v10250 = vsel %vm6168, %v10218, %v9480
        %v10251 = vsel %vm6168, %v10219, %v9482
        %v10252 = vsel %vm6168, %v10220, %v9484
        %v10253 = vsel %vm8179, %v10221, %v9550
        %v10254 = vsel %vm8179, %v10222, %v9552
        %v10255 = vsel %vm8179, %v10223, %v9554
        %v10256 = vsel %vm8179, %v10224, %v9556
        %v10257 = vsel %vm8179, %v10225, %v9558
        %v10258 = vsel %vm8179, %v10226, %v9560
        %v10259 = vsel %vm8179, %v10227, %v9562
        %v10260 = vsel %vm8179, %v10228, %v9564
        %v10261 = vsel %vm8179, %v10229, %v9566
        %v10262 = vsel %vm8179, %v10230, %v9568
        %v10263 = vsel %vm8179, %v10231, %v9570
        %v10264 = vsel %vm8179, %v10232, %v9572
        %v10265 = vsel %vm8179, %v10233, %v9574
        %v10266 = vsel %vm8179, %v10234, %v9576
        %v10267 = vsel %vm8179, %v10235, %v9578
        %v10268 = vsel %vm8179, %v10236, %v9580
        %v10269 = vsel %vm8179, %v10237, %v9582
        %v10270 = vsel %vm8179, %v10238, %v9584
        %v10271 = vsel %vm8179, %v10239, %v9586
        %v10272 = vsel %vm8179, %v10240, %v9588
        %v10273 = vsel %vm8179, %v10241, %v9590
        %v10274 = vsel %vm8179, %v10242, %v9592
        %v10275 = vsel %vm8179, %v10243, %v9594
        %v10276 = vsel %vm8179, %v10244, %v9596
        %v10277 = vsel %vm8179, %v10245, %v9598
        %v10278 = vsel %vm8179, %v10246, %v9600
        %v10279 = vsel %vm8179, %v10247, %v9602
        %v10280 = vsel %vm8179, %v10248, %v9604
        %v10281 = vsel %vm8179, %v10249, %v9606
        %v10282 = vsel %vm8179, %v10250, %v9608
        %v10283 = vsel %vm8179, %v10251, %v9610
        %v10284 = vsel %vm8179, %v10252, %v9612
        %vm10285 = vcmask 818176
        %v10286 = vsel %vm10285, %v10253, %v9678
        %v10287 = vsel %vm10285, %v10254, %v9680
        %v10288 = vsel %vm10285, %v10255, %v9682
        %v10289 = vsel %vm10285, %v10256, %v9684
        %v10290 = vsel %vm10285, %v10257, %v9686
        %v10291 = vsel %vm10285, %v10258, %v9688
        %v10292 = vsel %vm10285, %v10259, %v9690
        %v10293 = vsel %vm10285, %v10260, %v9692
        %v10294 = vsel %vm10285, %v10261, %v9694
        %v10295 = vsel %vm10285, %v10262, %v9696
        %v10296 = vsel %vm10285, %v10263, %v9698
        %v10297 = vsel %vm10285, %v10264, %v9700
        %v10298 = vsel %vm10285, %v10265, %v9702
        %v10299 = vsel %vm10285, %v10266, %v9704
        %v10300 = vsel %vm10285, %v10267, %v9706
        %v10301 = vsel %vm10285, %v10268, %v9708
        %v10302 = vsel %vm10285, %v10269, %v9710
        %v10303 = vsel %vm10285, %v10270, %v9712
        %v10304 = vsel %vm10285, %v10271, %v9714
        %v10305 = vsel %vm10285, %v10272, %v9716
        %v10306 = vsel %vm10285, %v10273, %v9718
        %v10307 = vsel %vm10285, %v10274, %v9720
        %v10308 = vsel %vm10285, %v10275, %v9722
        %v10309 = vsel %vm10285, %v10276, %v9724
        %v10310 = vsel %vm10285, %v10277, %v9726
        %v10311 = vsel %vm10285, %v10278, %v9728
        %v10312 = vsel %vm10285, %v10279, %v9730
        %v10313 = vsel %vm10285, %v10280, %v9732
        %v10314 = vsel %vm10285, %v10281, %v9734
        %v10315 = vsel %vm10285, %v10282, %v9736
        %v10316 = vsel %vm10285, %v10283, %v9738
        %v10317 = vsel %vm10285, %v10284, %v9740
        %vm10318 = vcmask 982016
        %v10319 = vsel %vm10318, %v10286, %v9806
        %v10320 = vsel %vm10318, %v10287, %v9808
        %v10321 = vsel %vm10318, %v10288, %v9810
        %v10322 = vsel %vm10318, %v10289, %v9812
        %v10323 = vsel %vm10318, %v10290, %v9814
        %v10324 = vsel %vm10318, %v10291, %v9816
        %v10325 = vsel %vm10318, %v10292, %v9818
        %v10326 = vsel %vm10318, %v10293, %v9820
        %v10327 = vsel %vm10318, %v10294, %v9822
        %v10328 = vsel %vm10318, %v10295, %v9824
        %v10329 = vsel %vm10318, %v10296, %v9826
        %v10330 = vsel %vm10318, %v10297, %v9828
        %v10331 = vsel %vm10318, %v10298, %v9830
        %v10332 = vsel %vm10318, %v10299, %v9832
        %v10333 = vsel %vm10318, %v10300, %v9834
        %v10334 = vsel %vm10318, %v10301, %v9836
        %v10335 = vsel %vm10318, %v10302, %v9838
        %v10336 = vsel %vm10318, %v10303, %v9840
        %v10337 = vsel %vm10318, %v10304, %v9842
        %v10338 = vsel %vm10318, %v10305, %v9844
        %v10339 = vsel %vm10318, %v10306, %v9846
        %v10340 = vsel %vm10318, %v10307, %v9848
        %v10341 = vsel %vm10318, %v10308, %v9850
        %v10342 = vsel %vm10318, %v10309, %v9852
        %v10343 = vsel %vm10318, %v10310, %v9854
        %v10344 = vsel %vm10318, %v10311, %v9856
        %v10345 = vsel %vm10318, %v10312, %v9858
        %v10346 = vsel %vm10318, %v10313, %v9860
        %v10347 = vsel %vm10318, %v10314, %v9862
        %v10348 = vsel %vm10318, %v10315, %v9864
        %v10349 = vsel %vm10318, %v10316, %v9866
        %v10350 = vsel %vm10318, %v10317, %v9868
        %v10351 = vsel %vm1835, %v9806, %v9934
        %v10352 = vsel %vm1835, %v9808, %v9936
        %v10353 = vsel %vm1835, %v9810, %v9938
        %v10354 = vsel %vm1835, %v9812, %v9940
        %v10355 = vsel %vm1835, %v9814, %v9942
        %v10356 = vsel %vm1835, %v9816, %v9944
        %v10357 = vsel %vm1835, %v9818, %v9946
        %v10358 = vsel %vm1835, %v9820, %v9948
        %v10359 = vsel %vm1835, %v9822, %v9950
        %v10360 = vsel %vm1835, %v9824, %v9952
        %v10361 = vsel %vm1835, %v9826, %v9954
        %v10362 = vsel %vm1835, %v9828, %v9956
        %v10363 = vsel %vm1835, %v9830, %v9958
        %v10364 = vsel %vm1835, %v9832, %v9960
        %v10365 = vsel %vm1835, %v9834, %v9962
        %v10366 = vsel %vm1835, %v9836, %v9964
        %v10367 = vsel %vm1835, %v9838, %v9966
        %v10368 = vsel %vm1835, %v9840, %v9968
        %v10369 = vsel %vm1835, %v9842, %v9970
        %v10370 = vsel %vm1835, %v9844, %v9972
        %v10371 = vsel %vm1835, %v9846, %v9974
        %v10372 = vsel %vm1835, %v9848, %v9976
        %v10373 = vsel %vm1835, %v9850, %v9978
        %v10374 = vsel %vm1835, %v9852, %v9980
        %v10375 = vsel %vm1835, %v9854, %v9982
        %v10376 = vsel %vm1835, %v9856, %v9984
        %v10377 = vsel %vm1835, %v9858, %v9986
        %v10378 = vsel %vm1835, %v9860, %v9988
        %v10379 = vsel %vm1835, %v9862, %v9990
        %v10380 = vsel %vm1835, %v9864, %v9992
        %v10381 = vsel %vm1835, %v9866, %v9994
        %v10382 = vsel %vm1835, %v9868, %v9996
        %v10383 = vsel %vm1999, %v10351, %v10062
        %v10384 = vsel %vm1999, %v10352, %v10064
        %v10385 = vsel %vm1999, %v10353, %v10066
        %v10386 = vsel %vm1999, %v10354, %v10068
        %v10387 = vsel %vm1999, %v10355, %v10070
        %v10388 = vsel %vm1999, %v10356, %v10072
        %v10389 = vsel %vm1999, %v10357, %v10074
        %v10390 = vsel %vm1999, %v10358, %v10076
        %v10391 = vsel %vm1999, %v10359, %v10078
        %v10392 = vsel %vm1999, %v10360, %v10080
        %v10393 = vsel %vm1999, %v10361, %v10082
        %v10394 = vsel %vm1999, %v10362, %v10084
        %v10395 = vsel %vm1999, %v10363, %v10086
        %v10396 = vsel %vm1999, %v10364, %v10088
        %v10397 = vsel %vm1999, %v10365, %v10090
        %v10398 = vsel %vm1999, %v10366, %v10092
        %v10399 = vsel %vm1999, %v10367, %v10094
        %v10400 = vsel %vm1999, %v10368, %v10096
        %v10401 = vsel %vm1999, %v10369, %v10098
        %v10402 = vsel %vm1999, %v10370, %v10100
        %v10403 = vsel %vm1999, %v10371, %v10102
        %v10404 = vsel %vm1999, %v10372, %v10104
        %v10405 = vsel %vm1999, %v10373, %v10106
        %v10406 = vsel %vm1999, %v10374, %v10108
        %v10407 = vsel %vm1999, %v10375, %v10110
        %v10408 = vsel %vm1999, %v10376, %v10112
        %v10409 = vsel %vm1999, %v10377, %v10114
        %v10410 = vsel %vm1999, %v10378, %v10116
        %v10411 = vsel %vm1999, %v10379, %v10118
        %v10412 = vsel %vm1999, %v10380, %v10120
        %v10413 = vsel %vm1999, %v10381, %v10122
        %v10414 = vsel %vm1999, %v10382, %v10124
        %v10415 = vld [vmem:[%s5] sm:$0xff]
        %v10416 = vld [vmem:[%s5 + $0x8] sm:$0xff]
        %v10417 = vld [vmem:[%s5 + $0x10] sm:$0xff]
        %v10418 = vld [vmem:[%s5 + $0x18] sm:$0xff]
        %v10419 = vld [vmem:[%s5 + $0x20] sm:$0xff]
        %v10420 = vld [vmem:[%s5 + $0x28] sm:$0xff]
        %v10421 = vld [vmem:[%s5 + $0x30] sm:$0xff]
        %v10422 = vld [vmem:[%s5 + $0x38] sm:$0xff]
        %v10423 = vld [vmem:[%s5 + $0x40] sm:$0xff]
        %v10424 = vld [vmem:[%s5 + $0x48] sm:$0xff]
        %v10425 = vld [vmem:[%s5 + $0x50] sm:$0xff]
        %v10426 = vld [vmem:[%s5 + $0x58] sm:$0xff]
        %v10427 = vld [vmem:[%s5 + $0x60] sm:$0xff]
        %v10428 = vld [vmem:[%s5 + $0x68] sm:$0xff]
        %v10429 = vld [vmem:[%s5 + $0x70] sm:$0xff]
        %v10430 = vld [vmem:[%s5 + $0x78] sm:$0xff]
        %v10431 = vld [vmem:[%s5 + $0x80] sm:$0xff]
        %v10432 = vld [vmem:[%s5 + $0x88] sm:$0xff]
        %v10433 = vld [vmem:[%s5 + $0x90] sm:$0xff]
        %v10434 = vld [vmem:[%s5 + $0x98] sm:$0xff]
        %v10435 = vld [vmem:[%s5 + $0xa0] sm:$0xff]
        %v10436 = vld [vmem:[%s5 + $0xa8] sm:$0xff]
        %v10437 = vld [vmem:[%s5 + $0xb0] sm:$0xf]
        %v10438 = vlaneseq
        %v10439 = vshrl.u32 %v10438, 7
        %v10440 = vsub.s32 4, %v10439
        %v10441 = vrot.slane %v456, %v10440
        %vm10442 = vcmask 424960
        %v10444 = vsel %vm10442, %v10383, 0
        %v10447 = vsel %vm10442, %v10384, 0
        %v10450 = vsel %vm10442, %v10385, 0
        %v10453 = vsel %vm10442, %v10386, 0
        %v10456 = vsel %vm10442, %v10387, 0
        %v10459 = vsel %vm10442, %v10388, 0
        %v10462 = vsel %vm10442, %v10389, 0
        %v10465 = vsel %vm10442, %v10390, 0
        %v10468 = vsel %vm10442, %v10391, 0
        %v10471 = vsel %vm10442, %v10392, 0
        %v10474 = vsel %vm10442, %v10393, 0
        %v10477 = vsel %vm10442, %v10394, 0
        %v10480 = vsel %vm10442, %v10395, 0
        %v10483 = vsel %vm10442, %v10396, 0
        %v10486 = vsel %vm10442, %v10397, 0
        %v10489 = vsel %vm10442, %v10398, 0
        %v10492 = vsel %vm10442, %v10399, 0
        %v10495 = vsel %vm10442, %v10400, 0
        %v10498 = vsel %vm10442, %v10401, 0
        %v10501 = vsel %vm10442, %v10402, 0
        %v10504 = vsel %vm10442, %v10403, 0
        %v10507 = vsel %vm10442, %v10404, 0
        %v10510 = vsel %vm10442, %v10405, 0
        %v10513 = vsel %vm10442, %v10406, 0
        %v10516 = vsel %vm10442, %v10407, 0
        %v10519 = vsel %vm10442, %v10408, 0
        %v10522 = vsel %vm10442, %v10409, 0
        %v10525 = vsel %vm10442, %v10410, 0
        %v10528 = vsel %vm10442, %v10411, 0
        %v10531 = vsel %vm10442, %v10412, 0
        %v10534 = vsel %vm10442, %v10413, 0
        %v10537 = vsel %vm10442, %v10414, 0
        %v10540 = vsel %vm2138, %v10437, 0
        %10542 = vmatprep.subr.mxu0 0.0
        %10543 = vmatpush1.msra.mxu0 %v10430
        %10544 = vmatprep.subr.mxu0 0.0
        %10545 = vmatpush1.msra.mxu0 %v10429
        %10546 = vmatprep.subr.mxu0 0.0
        %10547 = vmatpush1.msra.mxu0 %v10428
        %10548 = vmatprep.subr.mxu0 0.0
        %10549 = vmatpush1.msra.mxu0 %v10427
        %10550 = vmatprep.subr.mxu0 0.0
        %10551 = vmatpush1.msra.mxu0 %v10426
        %10552 = vmatprep.subr.mxu0 0.0
        %10553 = vmatpush1.msra.mxu0 %v10425
        %10554 = vmatprep.subr.mxu0 0.0
        %10555 = vmatpush1.msra.mxu0 %v10424
        %10556 = vmatprep.subr.mxu0 0.0
        %10557 = vmatpush1.msra.mxu0 %v10423
        %10558 = vmatprep.subr.mxu0 0.0
        %10559 = vmatpush1.msra.mxu0 %v10422
        %10560 = vmatprep.subr.mxu0 0.0
        %10561 = vmatpush1.msra.mxu0 %v10421
        %10562 = vmatprep.subr.mxu0 0.0
        %10563 = vmatpush1.msra.mxu0 %v10420
        %10564 = vmatprep.subr.mxu0 0.0
        %10565 = vmatpush1.msra.mxu0 %v10419
        %10566 = vmatprep.subr.mxu0 0.0
        %10567 = vmatpush1.msra.mxu0 %v10418
        %10568 = vmatprep.subr.mxu0 0.0
        %10569 = vmatpush1.msra.mxu0 %v10417
        %10570 = vmatprep.subr.mxu0 0.0
        %10571 = vmatpush1.msra.mxu0 %v10416
        %10572 = vmatprep.subr.mxu0 0.0
        %10573 = vmatpush1.msra.mxu0 %v10415
        %10574 = vmatprep.subr.mxu0 0.0
        %10575 = vmatpush2.msra.mxu0 0.0
        %10576 = vmatprep.subr.mxu0 0.0
        %10577 = vmatpush2.msra.mxu0 0.0
        %10578 = vmatprep.subr.mxu0 0.0
        %10579 = vmatpush2.msra.mxu0 0.0
        %10580 = vmatprep.subr.mxu0 0.0
        %10581 = vmatpush2.msra.mxu0 0.0
        %10582 = vmatprep.subr.mxu0 0.0
        %10583 = vmatpush2.msra.mxu0 0.0
        %10584 = vmatprep.subr.mxu0 0.0
        %10585 = vmatpush2.msra.mxu0 0.0
        %10586 = vmatprep.subr.mxu0 0.0
        %10587 = vmatpush2.msra.mxu0 0.0
        %10588 = vmatprep.subr.mxu0 0.0
        %10589 = vmatpush2.msra.mxu0 0.0
        %10590 = vmatprep.subr.mxu0 0.0
        %10591 = vmatpush2.msra.mxu0 0.0
        %10592 = vmatprep.subr.mxu0 0.0
        %10593 = vmatpush2.msra.mxu0 %v10540
        %10594 = vmatprep.subr.mxu0 0.0
        %10595 = vmatpush2.msra.mxu0 %v10436
        %10596 = vmatprep.subr.mxu0 0.0
        %10597 = vmatpush2.msra.mxu0 %v10435
        %10598 = vmatprep.subr.mxu0 0.0
        %10599 = vmatpush2.msra.mxu0 %v10434
        %10600 = vmatprep.subr.mxu0 0.0
        %10601 = vmatpush2.msra.mxu0 %v10433
        %10602 = vmatprep.subr.mxu0 0.0
        %10603 = vmatpush2.msra.mxu0 %v10432
        %10604 = vmatprep.subr.mxu0 0.0
        %10605 = vmatpush2.msra.mxu0 %v10431
        %10606 = vmatprep.mubr.f32.mxu0 %v10444
        %10607 = vmatmul.mubr.f32.gmra.mxu0 %v10319
        %v10608 = vpop.f32.mrf.mxu0
        %v10609 = vadd.f32 %v10441, %v10608
        %v10610 = vpop.f32.mrf.mxu0
        %10611 = vmatprep.mubr.f32.mxu0 %v10447
        %10612 = vmatmul.mubr.f32.gmra.mxu0 %v10320
        %v10613 = vpop.f32.mrf.mxu0
        %v10614 = vadd.f32 %v10441, %v10613
        %v10615 = vpop.f32.mrf.mxu0
        %10616 = vmatprep.mubr.f32.mxu0 %v10450
        %10617 = vmatmul.mubr.f32.gmra.mxu0 %v10321
        %v10618 = vpop.f32.mrf.mxu0
        %v10619 = vadd.f32 %v10441, %v10618
        %v10620 = vpop.f32.mrf.mxu0
        %10621 = vmatprep.mubr.f32.mxu0 %v10453
        %10622 = vmatmul.mubr.f32.gmra.mxu0 %v10322
        %v10623 = vpop.f32.mrf.mxu0
        %v10624 = vadd.f32 %v10441, %v10623
        %v10625 = vpop.f32.mrf.mxu0
        %10626 = vmatprep.mubr.f32.mxu0 %v10456
        %10627 = vmatmul.mubr.f32.gmra.mxu0 %v10323
        %v10628 = vpop.f32.mrf.mxu0
        %v10629 = vadd.f32 %v10441, %v10628
        %v10630 = vpop.f32.mrf.mxu0
        %10631 = vmatprep.mubr.f32.mxu0 %v10459
        %10632 = vmatmul.mubr.f32.gmra.mxu0 %v10324
        %v10633 = vpop.f32.mrf.mxu0
        %v10634 = vadd.f32 %v10441, %v10633
        %v10635 = vpop.f32.mrf.mxu0
        %10636 = vmatprep.mubr.f32.mxu0 %v10462
        %10637 = vmatmul.mubr.f32.gmra.mxu0 %v10325
        %v10638 = vpop.f32.mrf.mxu0
        %v10639 = vadd.f32 %v10441, %v10638
        %v10640 = vpop.f32.mrf.mxu0
        %10641 = vmatprep.mubr.f32.mxu0 %v10465
        %10642 = vmatmul.mubr.f32.gmra.mxu0 %v10326
        %v10643 = vpop.f32.mrf.mxu0
        %v10644 = vadd.f32 %v10441, %v10643
        %v10645 = vpop.f32.mrf.mxu0
        %10646 = vmatprep.mubr.f32.mxu0 %v10468
        %10647 = vmatmul.mubr.f32.gmra.mxu0 %v10327
        %v10648 = vpop.f32.mrf.mxu0
        %v10649 = vadd.f32 %v10441, %v10648
        %v10650 = vpop.f32.mrf.mxu0
        %10651 = vmatprep.mubr.f32.mxu0 %v10471
        %10652 = vmatmul.mubr.f32.gmra.mxu0 %v10328
        %v10653 = vpop.f32.mrf.mxu0
        %v10654 = vadd.f32 %v10441, %v10653
        %v10655 = vpop.f32.mrf.mxu0
        %10656 = vmatprep.mubr.f32.mxu0 %v10474
        %10657 = vmatmul.mubr.f32.gmra.mxu0 %v10329
        %v10658 = vpop.f32.mrf.mxu0
        %v10659 = vadd.f32 %v10441, %v10658
        %v10660 = vpop.f32.mrf.mxu0
        %10661 = vmatprep.mubr.f32.mxu0 %v10477
        %10662 = vmatmul.mubr.f32.gmra.mxu0 %v10330
        %v10663 = vpop.f32.mrf.mxu0
        %v10664 = vadd.f32 %v10441, %v10663
        %v10665 = vpop.f32.mrf.mxu0
        %10666 = vmatprep.mubr.f32.mxu0 %v10480
        %10667 = vmatmul.mubr.f32.gmra.mxu0 %v10331
        %v10668 = vpop.f32.mrf.mxu0
        %v10669 = vadd.f32 %v10441, %v10668
        %v10670 = vpop.f32.mrf.mxu0
        %10671 = vmatprep.mubr.f32.mxu0 %v10483
        %10672 = vmatmul.mubr.f32.gmra.mxu0 %v10332
        %v10673 = vpop.f32.mrf.mxu0
        %v10674 = vadd.f32 %v10441, %v10673
        %v10675 = vpop.f32.mrf.mxu0
        %10676 = vmatprep.mubr.f32.mxu0 %v10486
        %10677 = vmatmul.mubr.f32.gmra.mxu0 %v10333
        %v10678 = vpop.f32.mrf.mxu0
        %v10679 = vadd.f32 %v10441, %v10678
        %v10680 = vpop.f32.mrf.mxu0
        %10681 = vmatprep.mubr.f32.mxu0 %v10489
        %10682 = vmatmul.mubr.f32.gmra.mxu0 %v10334
        %v10683 = vpop.f32.mrf.mxu0
        %v10684 = vadd.f32 %v10441, %v10683
        %v10685 = vpop.f32.mrf.mxu0
        %10686 = vmatprep.mubr.f32.mxu0 %v10492
        %10687 = vmatmul.mubr.f32.gmra.mxu0 %v10335
        %v10688 = vpop.f32.mrf.mxu0
        %v10689 = vadd.f32 %v10441, %v10688
        %v10690 = vpop.f32.mrf.mxu0
        %10691 = vmatprep.mubr.f32.mxu0 %v10495
        %10692 = vmatmul.mubr.f32.gmra.mxu0 %v10336
        %v10693 = vpop.f32.mrf.mxu0
        %v10694 = vadd.f32 %v10441, %v10693
        %v10695 = vpop.f32.mrf.mxu0
        %10696 = vmatprep.mubr.f32.mxu0 %v10498
        %10697 = vmatmul.mubr.f32.gmra.mxu0 %v10337
        %v10698 = vpop.f32.mrf.mxu0
        %v10699 = vadd.f32 %v10441, %v10698
        %v10700 = vpop.f32.mrf.mxu0
        %10701 = vmatprep.mubr.f32.mxu0 %v10501
        %10702 = vmatmul.mubr.f32.gmra.mxu0 %v10338
        %v10703 = vpop.f32.mrf.mxu0
        %v10704 = vadd.f32 %v10441, %v10703
        %v10705 = vpop.f32.mrf.mxu0
        %10706 = vmatprep.mubr.f32.mxu0 %v10504
        %10707 = vmatmul.mubr.f32.gmra.mxu0 %v10339
        %v10708 = vpop.f32.mrf.mxu0
        %v10709 = vadd.f32 %v10441, %v10708
        %v10710 = vpop.f32.mrf.mxu0
        %10711 = vmatprep.mubr.f32.mxu0 %v10507
        %10712 = vmatmul.mubr.f32.gmra.mxu0 %v10340
        %v10713 = vpop.f32.mrf.mxu0
        %v10714 = vadd.f32 %v10441, %v10713
        %v10715 = vpop.f32.mrf.mxu0
        %10716 = vmatprep.mubr.f32.mxu0 %v10510
        %10717 = vmatmul.mubr.f32.gmra.mxu0 %v10341
        %v10718 = vpop.f32.mrf.mxu0
        %v10719 = vadd.f32 %v10441, %v10718
        %v10720 = vpop.f32.mrf.mxu0
        %10721 = vmatprep.mubr.f32.mxu0 %v10513
        %10722 = vmatmul.mubr.f32.gmra.mxu0 %v10342
        %v10723 = vpop.f32.mrf.mxu0
        %v10724 = vadd.f32 %v10441, %v10723
        %v10725 = vpop.f32.mrf.mxu0
        %10726 = vmatprep.mubr.f32.mxu0 %v10516
        %10727 = vmatmul.mubr.f32.gmra.mxu0 %v10343
        %v10728 = vpop.f32.mrf.mxu0
        %v10729 = vadd.f32 %v10441, %v10728
        %v10730 = vpop.f32.mrf.mxu0
        %10731 = vmatprep.mubr.f32.mxu0 %v10519
        %10732 = vmatmul.mubr.f32.gmra.mxu0 %v10344
        %v10733 = vpop.f32.mrf.mxu0
        %v10734 = vadd.f32 %v10441, %v10733
        %v10735 = vpop.f32.mrf.mxu0
        %10736 = vmatprep.mubr.f32.mxu0 %v10522
        %10737 = vmatmul.mubr.f32.gmra.mxu0 %v10345
        %v10738 = vpop.f32.mrf.mxu0
        %v10739 = vadd.f32 %v10441, %v10738
        %v10740 = vpop.f32.mrf.mxu0
        %10741 = vmatprep.mubr.f32.mxu0 %v10525
        %10742 = vmatmul.mubr.f32.gmra.mxu0 %v10346
        %v10743 = vpop.f32.mrf.mxu0
        %v10744 = vadd.f32 %v10441, %v10743
        %v10745 = vpop.f32.mrf.mxu0
        %10746 = vmatprep.mubr.f32.mxu0 %v10528
        %10747 = vmatmul.mubr.f32.gmra.mxu0 %v10347
        %v10748 = vpop.f32.mrf.mxu0
        %v10749 = vadd.f32 %v10441, %v10748
        %v10750 = vpop.f32.mrf.mxu0
        %10751 = vmatprep.mubr.f32.mxu0 %v10531
        %10752 = vmatmul.mubr.f32.gmra.mxu0 %v10348
        %v10753 = vpop.f32.mrf.mxu0
        %v10754 = vadd.f32 %v10441, %v10753
        %v10755 = vpop.f32.mrf.mxu0
        %10756 = vmatprep.mubr.f32.mxu0 %v10534
        %10757 = vmatmul.mubr.f32.gmra.mxu0 %v10349
        %v10758 = vpop.f32.mrf.mxu0
        %v10759 = vadd.f32 %v10441, %v10758
        %v10760 = vpop.f32.mrf.mxu0
        %10761 = vmatprep.mubr.f32.mxu0 %v10537
        %10762 = vmatmul.mubr.f32.gmra.mxu0 %v10350
        %v10763 = vpop.f32.mrf.mxu0
        %v10764 = vadd.f32 %v10441, %v10763
        %v10765 = vpop.f32.mrf.mxu0
        %10766 = vdwg.mxu0
        %v10767 = vmax.f32 %v10609, 0.0
        %v10768 = vmax.f32 %v10614, 0.0
        %v10769 = vmax.f32 %v10619, 0.0
        %v10770 = vmax.f32 %v10624, 0.0
        %v10771 = vmax.f32 %v10629, 0.0
        %v10772 = vmax.f32 %v10634, 0.0
        %v10773 = vmax.f32 %v10639, 0.0
        %v10774 = vmax.f32 %v10644, 0.0
        %v10775 = vmax.f32 %v10649, 0.0
        %v10776 = vmax.f32 %v10654, 0.0
        %v10777 = vmax.f32 %v10659, 0.0
        %v10778 = vmax.f32 %v10664, 0.0
        %v10779 = vmax.f32 %v10669, 0.0
        %v10780 = vmax.f32 %v10674, 0.0
        %v10781 = vmax.f32 %v10679, 0.0
        %v10782 = vmax.f32 %v10684, 0.0
        %v10783 = vmax.f32 %v10689, 0.0
        %v10784 = vmax.f32 %v10694, 0.0
        %v10785 = vmax.f32 %v10699, 0.0
        %v10786 = vmax.f32 %v10704, 0.0
        %v10787 = vmax.f32 %v10709, 0.0
        %v10788 = vmax.f32 %v10714, 0.0
        %v10789 = vmax.f32 %v10719, 0.0
        %v10790 = vmax.f32 %v10724, 0.0
        %v10791 = vmax.f32 %v10729, 0.0
        %v10792 = vmax.f32 %v10734, 0.0
        %v10793 = vmax.f32 %v10739, 0.0
        %v10794 = vmax.f32 %v10744, 0.0
        %v10795 = vmax.f32 %v10749, 0.0
        %v10796 = vmax.f32 %v10754, 0.0
        %v10797 = vmax.f32 %v10759, 0.0
        %v10798 = vmax.f32 %v10764, 0.0
        %10831 = vrot.lane.b32.xlu0 %v10767, 20
        %v10832 = vpop.permute.xlu0 %10831
        %10833 = vrot.lane.b32.xlu0 %v10768, 20
        %v10834 = vpop.permute.xlu0 %10833
        %10835 = vrot.lane.b32.xlu0 %v10769, 20
        %v10836 = vpop.permute.xlu0 %10835
        %10837 = vrot.lane.b32.xlu0 %v10770, 20
        %v10838 = vpop.permute.xlu0 %10837
        %10839 = vrot.lane.b32.xlu0 %v10771, 20
        %v10840 = vpop.permute.xlu0 %10839
        %10841 = vrot.lane.b32.xlu0 %v10772, 20
        %v10842 = vpop.permute.xlu0 %10841
        %10843 = vrot.lane.b32.xlu0 %v10773, 20
        %v10844 = vpop.permute.xlu0 %10843
        %10845 = vrot.lane.b32.xlu0 %v10774, 20
        %v10846 = vpop.permute.xlu0 %10845
        %10847 = vrot.lane.b32.xlu0 %v10775, 20
        %v10848 = vpop.permute.xlu0 %10847
        %10849 = vrot.lane.b32.xlu0 %v10776, 20
        %v10850 = vpop.permute.xlu0 %10849
        %10851 = vrot.lane.b32.xlu0 %v10777, 20
        %v10852 = vpop.permute.xlu0 %10851
        %10853 = vrot.lane.b32.xlu0 %v10778, 20
        %v10854 = vpop.permute.xlu0 %10853
        %10855 = vrot.lane.b32.xlu0 %v10779, 20
        %v10856 = vpop.permute.xlu0 %10855
        %10857 = vrot.lane.b32.xlu0 %v10780, 20
        %v10858 = vpop.permute.xlu0 %10857
        %10859 = vrot.lane.b32.xlu0 %v10781, 20
        %v10860 = vpop.permute.xlu0 %10859
        %10861 = vrot.lane.b32.xlu0 %v10782, 20
        %v10862 = vpop.permute.xlu0 %10861
        %10863 = vrot.lane.b32.xlu0 %v10783, 20
        %v10864 = vpop.permute.xlu0 %10863
        %10865 = vrot.lane.b32.xlu0 %v10784, 20
        %v10866 = vpop.permute.xlu0 %10865
        %10867 = vrot.lane.b32.xlu0 %v10785, 20
        %v10868 = vpop.permute.xlu0 %10867
        %10869 = vrot.lane.b32.xlu0 %v10786, 20
        %v10870 = vpop.permute.xlu0 %10869
        %10871 = vrot.lane.b32.xlu0 %v10787, 20
        %v10872 = vpop.permute.xlu0 %10871
        %10873 = vrot.lane.b32.xlu0 %v10788, 20
        %v10874 = vpop.permute.xlu0 %10873
        %10875 = vrot.lane.b32.xlu0 %v10789, 20
        %v10876 = vpop.permute.xlu0 %10875
        %10877 = vrot.lane.b32.xlu0 %v10790, 20
        %v10878 = vpop.permute.xlu0 %10877
        %10879 = vrot.lane.b32.xlu0 %v10791, 20
        %v10880 = vpop.permute.xlu0 %10879
        %10881 = vrot.lane.b32.xlu0 %v10792, 20
        %v10882 = vpop.permute.xlu0 %10881
        %10883 = vrot.lane.b32.xlu0 %v10793, 20
        %v10884 = vpop.permute.xlu0 %10883
        %10885 = vrot.lane.b32.xlu0 %v10794, 20
        %v10886 = vpop.permute.xlu0 %10885
        %10887 = vrot.lane.b32.xlu0 %v10795, 20
        %v10888 = vpop.permute.xlu0 %10887
        %10889 = vrot.lane.b32.xlu0 %v10796, 20
        %v10890 = vpop.permute.xlu0 %10889
        %10891 = vrot.lane.b32.xlu0 %v10797, 20
        %v10892 = vpop.permute.xlu0 %10891
        %10893 = vrot.lane.b32.xlu0 %v10798, 20
        %v10894 = vpop.permute.xlu0 %10893
        %vm10927 = vcmask 195744
        %10928 = vst.msk [vmem:[%s298] sm:$0xff] %vm10927, %v10832
        %10929 = vst.msk [vmem:[%s298 + $0x8] sm:$0xff] %vm10927, %v10834
        %10930 = vst.msk [vmem:[%s298 + $0x10] sm:$0xff] %vm10927, %v10836
        %10931 = vst.msk [vmem:[%s298 + $0x18] sm:$0xff] %vm10927, %v10838
        %10932 = vst.msk [vmem:[%s298 + $0x20] sm:$0xff] %vm10927, %v10840
        %10933 = vst.msk [vmem:[%s298 + $0x28] sm:$0xff] %vm10927, %v10842
        %10934 = vst.msk [vmem:[%s298 + $0x30] sm:$0xff] %vm10927, %v10844
        %10935 = vst.msk [vmem:[%s298 + $0x38] sm:$0xff] %vm10927, %v10846
        %10936 = vst.msk [vmem:[%s298 + $0x40] sm:$0xff] %vm10927, %v10848
        %10937 = vst.msk [vmem:[%s298 + $0x48] sm:$0xff] %vm10927, %v10850
        %10938 = vst.msk [vmem:[%s298 + $0x50] sm:$0xff] %vm10927, %v10852
        %10939 = vst.msk [vmem:[%s298 + $0x58] sm:$0xff] %vm10927, %v10854
        %10940 = vst.msk [vmem:[%s298 + $0x60] sm:$0xff] %vm10927, %v10856
        %10941 = vst.msk [vmem:[%s298 + $0x68] sm:$0xff] %vm10927, %v10858
        %10942 = vst.msk [vmem:[%s298 + $0x70] sm:$0xff] %vm10927, %v10860
        %10943 = vst.msk [vmem:[%s298 + $0x78] sm:$0xff] %vm10927, %v10862
        %10944 = vst.msk [vmem:[%s298 + $0x80] sm:$0xff] %vm10927, %v10864
        %10945 = vst.msk [vmem:[%s298 + $0x88] sm:$0xff] %vm10927, %v10866
        %10946 = vst.msk [vmem:[%s298 + $0x90] sm:$0xff] %vm10927, %v10868
        %10947 = vst.msk [vmem:[%s298 + $0x98] sm:$0xff] %vm10927, %v10870
        %10948 = vst.msk [vmem:[%s298 + $0xa0] sm:$0xff] %vm10927, %v10872
        %10949 = vst.msk [vmem:[%s298 + $0xa8] sm:$0xff] %vm10927, %v10874
        %10950 = vst.msk [vmem:[%s298 + $0xb0] sm:$0xff] %vm10927, %v10876
        %10951 = vst.msk [vmem:[%s298 + $0xb8] sm:$0xff] %vm10927, %v10878
        %10952 = vst.msk [vmem:[%s298 + $0xc0] sm:$0xff] %vm10927, %v10880
        %10953 = vst.msk [vmem:[%s298 + $0xc8] sm:$0xff] %vm10927, %v10882
        %10954 = vst.msk [vmem:[%s298 + $0xd0] sm:$0xff] %vm10927, %v10884
        %10955 = vst.msk [vmem:[%s298 + $0xd8] sm:$0xff] %vm10927, %v10886
        %10956 = vst.msk [vmem:[%s298 + $0xe0] sm:$0xff] %vm10927, %v10888
        %10957 = vst.msk [vmem:[%s298 + $0xe8] sm:$0xff] %vm10927, %v10890
        %10958 = vst.msk [vmem:[%s298 + $0xf0] sm:$0xff] %vm10927, %v10892
        %10959 = vst.msk [vmem:[%s298 + $0xf8] sm:$0xff] %vm10927, %v10894
        %10960 = vst.msk [vmem:[%s325 + $0x3] sm:$0xff] %vm10927, %v10832
        %10961 = vst.msk [vmem:[%s325 + $0xb] sm:$0xff] %vm10927, %v10834
        %10962 = vst.msk [vmem:[%s325 + $0x1b] sm:$0xff] %vm10927, %v10836
        %10963 = vst.msk [vmem:[%s325 + $0x23] sm:$0xff] %vm10927, %v10838
        %10964 = vst.msk [vmem:[%s325 + $0x33] sm:$0xff] %vm10927, %v10840
        %10965 = vst.msk [vmem:[%s325 + $0x3b] sm:$0xff] %vm10927, %v10842
        %10966 = vst.msk [vmem:[%s325 + $0x4b] sm:$0xff] %vm10927, %v10844
        %10967 = vst.msk [vmem:[%s325 + $0x53] sm:$0xff] %vm10927, %v10846
        %10968 = vst.msk [vmem:[%s325 + $0x63] sm:$0xff] %vm10927, %v10848
        %10969 = vst.msk [vmem:[%s325 + $0x6b] sm:$0xff] %vm10927, %v10850
        %10970 = vst.msk [vmem:[%s325 + $0x7b] sm:$0xff] %vm10927, %v10852
        %10971 = vst.msk [vmem:[%s325 + $0x83] sm:$0xff] %vm10927, %v10854
        %10972 = vst.msk [vmem:[%s325 + $0x93] sm:$0xff] %vm10927, %v10856
        %10973 = vst.msk [vmem:[%s325 + $0x9b] sm:$0xff] %vm10927, %v10858
        %10974 = vst.msk [vmem:[%s325 + $0xab] sm:$0xff] %vm10927, %v10860
        %10975 = vst.msk [vmem:[%s325 + $0xb3] sm:$0xff] %vm10927, %v10862
        %10976 = vst.msk [vmem:[%s325 + $0xc3] sm:$0xff] %vm10927, %v10864
        %10977 = vst.msk [vmem:[%s325 + $0xcb] sm:$0xff] %vm10927, %v10866
        %10978 = vst.msk [vmem:[%s325 + $0xdb] sm:$0xff] %vm10927, %v10868
        %10979 = vst.msk [vmem:[%s325 + $0xe3] sm:$0xff] %vm10927, %v10870
        %10980 = vst.msk [vmem:[%s325 + $0xf3] sm:$0xff] %vm10927, %v10872
        %10981 = vst.msk [vmem:[%s325 + $0xfb] sm:$0xff] %vm10927, %v10874
        %10982 = vst.msk [vmem:[%s325 + $0x10b] sm:$0xff] %vm10927, %v10876
        %10983 = vst.msk [vmem:[%s325 + $0x113] sm:$0xff] %vm10927, %v10878
        %10984 = vst.msk [vmem:[%s325 + $0x123] sm:$0xff] %vm10927, %v10880
        %10985 = vst.msk [vmem:[%s325 + $0x12b] sm:$0xff] %vm10927, %v10882
        %10986 = vst.msk [vmem:[%s325 + $0x13b] sm:$0xff] %vm10927, %v10884
        %10987 = vst.msk [vmem:[%s325 + $0x143] sm:$0xff] %vm10927, %v10886
        %10988 = vst.msk [vmem:[%s325 + $0x153] sm:$0xff] %vm10927, %v10888
        %10989 = vst.msk [vmem:[%s325 + $0x15b] sm:$0xff] %vm10927, %v10890
        %10990 = vst.msk [vmem:[%s325 + $0x16b] sm:$0xff] %vm10927, %v10892
        %10991 = vst.msk [vmem:[%s325 + $0x173] sm:$0xff] %vm10927, %v10894
        %v10992 = vld [vmem:[%s4726 + $0x2] sm:$0xff]
        %v10993 = vld [vmem:[%s4726 + $0xa] sm:$0xff]
        %v10994 = vld [vmem:[%s4726 + $0x1a] sm:$0xff]
        %v10995 = vld [vmem:[%s4726 + $0x22] sm:$0xff]
        %v10996 = vld [vmem:[%s4726 + $0x32] sm:$0xff]
        %v10997 = vld [vmem:[%s4726 + $0x3a] sm:$0xff]
        %v10998 = vld [vmem:[%s4726 + $0x4a] sm:$0xff]
        %v10999 = vld [vmem:[%s4726 + $0x52] sm:$0xff]
        %v11000 = vld [vmem:[%s4726 + $0x62] sm:$0xff]
        %v11001 = vld [vmem:[%s4726 + $0x6a] sm:$0xff]
        %v11002 = vld [vmem:[%s4726 + $0x7a] sm:$0xff]
        %v11003 = vld [vmem:[%s4726 + $0x82] sm:$0xff]
        %v11004 = vld [vmem:[%s4726 + $0x92] sm:$0xff]
        %v11005 = vld [vmem:[%s4726 + $0x9a] sm:$0xff]
        %v11006 = vld [vmem:[%s4726 + $0xaa] sm:$0xff]
        %v11007 = vld [vmem:[%s4726 + $0xb2] sm:$0xff]
        %v11008 = vld [vmem:[%s4726 + $0xc2] sm:$0xff]
        %v11009 = vld [vmem:[%s4726 + $0xca] sm:$0xff]
        %v11010 = vld [vmem:[%s4726 + $0xda] sm:$0xff]
        %v11011 = vld [vmem:[%s4726 + $0xe2] sm:$0xff]
        %v11012 = vld [vmem:[%s4726 + $0xf2] sm:$0xff]
        %v11013 = vld [vmem:[%s4726 + $0xfa] sm:$0xff]
        %v11014 = vld [vmem:[%s4726 + $0x10a] sm:$0xff]
        %v11015 = vld [vmem:[%s4726 + $0x112] sm:$0xff]
        %v11016 = vld [vmem:[%s4726 + $0x122] sm:$0xff]
        %v11017 = vld [vmem:[%s4726 + $0x12a] sm:$0xff]
        %v11018 = vld [vmem:[%s4726 + $0x13a] sm:$0xff]
        %v11019 = vld [vmem:[%s4726 + $0x142] sm:$0xff]
        %v11020 = vld [vmem:[%s4726 + $0x152] sm:$0xff]
        %v11021 = vld [vmem:[%s4726 + $0x15a] sm:$0xff]
        %v11022 = vld [vmem:[%s4726 + $0x16a] sm:$0xff]
        %v11023 = vld [vmem:[%s4726 + $0x172] sm:$0xff]
        %v11024 = vld [vmem:[%s4726 + $0x3] sm:$0xff]
        %v11025 = vld [vmem:[%s4726 + $0xb] sm:$0xff]
        %v11026 = vld [vmem:[%s4726 + $0x1b] sm:$0xff]
        %v11027 = vld [vmem:[%s4726 + $0x23] sm:$0xff]
        %v11028 = vld [vmem:[%s4726 + $0x33] sm:$0xff]
        %v11029 = vld [vmem:[%s4726 + $0x3b] sm:$0xff]
        %v11030 = vld [vmem:[%s4726 + $0x4b] sm:$0xff]
        %v11031 = vld [vmem:[%s4726 + $0x53] sm:$0xff]
        %v11032 = vld [vmem:[%s4726 + $0x63] sm:$0xff]
        %v11033 = vld [vmem:[%s4726 + $0x6b] sm:$0xff]
        %v11034 = vld [vmem:[%s4726 + $0x7b] sm:$0xff]
        %v11035 = vld [vmem:[%s4726 + $0x83] sm:$0xff]
        %v11036 = vld [vmem:[%s4726 + $0x93] sm:$0xff]
        %v11037 = vld [vmem:[%s4726 + $0x9b] sm:$0xff]
        %v11038 = vld [vmem:[%s4726 + $0xab] sm:$0xff]
        %v11039 = vld [vmem:[%s4726 + $0xb3] sm:$0xff]
        %v11040 = vld [vmem:[%s4726 + $0xc3] sm:$0xff]
        %v11041 = vld [vmem:[%s4726 + $0xcb] sm:$0xff]
        %v11042 = vld [vmem:[%s4726 + $0xdb] sm:$0xff]
        %v11043 = vld [vmem:[%s4726 + $0xe3] sm:$0xff]
        %v11044 = vld [vmem:[%s4726 + $0xf3] sm:$0xff]
        %v11045 = vld [vmem:[%s4726 + $0xfb] sm:$0xff]
        %v11046 = vld [vmem:[%s4726 + $0x10b] sm:$0xff]
        %v11047 = vld [vmem:[%s4726 + $0x113] sm:$0xff]
        %v11048 = vld [vmem:[%s4726 + $0x123] sm:$0xff]
        %v11049 = vld [vmem:[%s4726 + $0x12b] sm:$0xff]
        %v11050 = vld [vmem:[%s4726 + $0x13b] sm:$0xff]
        %v11051 = vld [vmem:[%s4726 + $0x143] sm:$0xff]
        %v11052 = vld [vmem:[%s4726 + $0x153] sm:$0xff]
        %v11053 = vld [vmem:[%s4726 + $0x15b] sm:$0xff]
        %v11054 = vld [vmem:[%s4726 + $0x16b] sm:$0xff]
        %v11055 = vld [vmem:[%s4726 + $0x173] sm:$0xff]
        %v11056 = vld [vmem:[%s4726 + $0x4] sm:$0xff]
        %v11057 = vld [vmem:[%s4726 + $0xc] sm:$0xff]
        %v11058 = vld [vmem:[%s4726 + $0x1c] sm:$0xff]
        %v11059 = vld [vmem:[%s4726 + $0x24] sm:$0xff]
        %v11060 = vld [vmem:[%s4726 + $0x34] sm:$0xff]
        %v11061 = vld [vmem:[%s4726 + $0x3c] sm:$0xff]
        %v11062 = vld [vmem:[%s4726 + $0x4c] sm:$0xff]
        %v11063 = vld [vmem:[%s4726 + $0x54] sm:$0xff]
        %v11064 = vld [vmem:[%s4726 + $0x64] sm:$0xff]
        %v11065 = vld [vmem:[%s4726 + $0x6c] sm:$0xff]
        %v11066 = vld [vmem:[%s4726 + $0x7c] sm:$0xff]
        %v11067 = vld [vmem:[%s4726 + $0x84] sm:$0xff]
        %v11068 = vld [vmem:[%s4726 + $0x94] sm:$0xff]
        %v11069 = vld [vmem:[%s4726 + $0x9c] sm:$0xff]
        %v11070 = vld [vmem:[%s4726 + $0xac] sm:$0xff]
        %v11071 = vld [vmem:[%s4726 + $0xb4] sm:$0xff]
        %v11072 = vld [vmem:[%s4726 + $0xc4] sm:$0xff]
        %v11073 = vld [vmem:[%s4726 + $0xcc] sm:$0xff]
        %v11074 = vld [vmem:[%s4726 + $0xdc] sm:$0xff]
        %v11075 = vld [vmem:[%s4726 + $0xe4] sm:$0xff]
        %v11076 = vld [vmem:[%s4726 + $0xf4] sm:$0xff]
        %v11077 = vld [vmem:[%s4726 + $0xfc] sm:$0xff]
        %v11078 = vld [vmem:[%s4726 + $0x10c] sm:$0xff]
        %v11079 = vld [vmem:[%s4726 + $0x114] sm:$0xff]
        %v11080 = vld [vmem:[%s4726 + $0x124] sm:$0xff]
        %v11081 = vld [vmem:[%s4726 + $0x12c] sm:$0xff]
        %v11082 = vld [vmem:[%s4726 + $0x13c] sm:$0xff]
        %v11083 = vld [vmem:[%s4726 + $0x144] sm:$0xff]
        %v11084 = vld [vmem:[%s4726 + $0x154] sm:$0xff]
        %v11085 = vld [vmem:[%s4726 + $0x15c] sm:$0xff]
        %v11086 = vld [vmem:[%s4726 + $0x16c] sm:$0xff]
        %v11087 = vld [vmem:[%s4726 + $0x174] sm:$0xff]
        %v11088 = vld [vmem:[%s325 + $0x2] sm:$0xff]
        %v11089 = vld [vmem:[%s325 + $0xa] sm:$0xff]
        %v11090 = vld [vmem:[%s325 + $0x1a] sm:$0xff]
        %v11091 = vld [vmem:[%s325 + $0x22] sm:$0xff]
        %v11092 = vld [vmem:[%s325 + $0x32] sm:$0xff]
        %v11093 = vld [vmem:[%s325 + $0x3a] sm:$0xff]
        %v11094 = vld [vmem:[%s325 + $0x4a] sm:$0xff]
        %v11095 = vld [vmem:[%s325 + $0x52] sm:$0xff]
        %v11096 = vld [vmem:[%s325 + $0x62] sm:$0xff]
        %v11097 = vld [vmem:[%s325 + $0x6a] sm:$0xff]
        %v11098 = vld [vmem:[%s325 + $0x7a] sm:$0xff]
        %v11099 = vld [vmem:[%s325 + $0x82] sm:$0xff]
        %v11100 = vld [vmem:[%s325 + $0x92] sm:$0xff]
        %v11101 = vld [vmem:[%s325 + $0x9a] sm:$0xff]
        %v11102 = vld [vmem:[%s325 + $0xaa] sm:$0xff]
        %v11103 = vld [vmem:[%s325 + $0xb2] sm:$0xff]
        %v11104 = vld [vmem:[%s325 + $0xc2] sm:$0xff]
        %v11105 = vld [vmem:[%s325 + $0xca] sm:$0xff]
        %v11106 = vld [vmem:[%s325 + $0xda] sm:$0xff]
        %v11107 = vld [vmem:[%s325 + $0xe2] sm:$0xff]
        %v11108 = vld [vmem:[%s325 + $0xf2] sm:$0xff]
        %v11109 = vld [vmem:[%s325 + $0xfa] sm:$0xff]
        %v11110 = vld [vmem:[%s325 + $0x10a] sm:$0xff]
        %v11111 = vld [vmem:[%s325 + $0x112] sm:$0xff]
        %v11112 = vld [vmem:[%s325 + $0x122] sm:$0xff]
        %v11113 = vld [vmem:[%s325 + $0x12a] sm:$0xff]
        %v11114 = vld [vmem:[%s325 + $0x13a] sm:$0xff]
        %v11115 = vld [vmem:[%s325 + $0x142] sm:$0xff]
        %v11116 = vld [vmem:[%s325 + $0x152] sm:$0xff]
        %v11117 = vld [vmem:[%s325 + $0x15a] sm:$0xff]
        %v11118 = vld [vmem:[%s325 + $0x16a] sm:$0xff]
        %v11119 = vld [vmem:[%s325 + $0x172] sm:$0xff]
        %v11120 = vld [vmem:[%s325 + $0x3] sm:$0xff]
        %v11121 = vld [vmem:[%s325 + $0xb] sm:$0xff]
        %v11122 = vld [vmem:[%s325 + $0x1b] sm:$0xff]
        %v11123 = vld [vmem:[%s325 + $0x23] sm:$0xff]
        %v11124 = vld [vmem:[%s325 + $0x33] sm:$0xff]
        %v11125 = vld [vmem:[%s325 + $0x3b] sm:$0xff]
        %v11126 = vld [vmem:[%s325 + $0x4b] sm:$0xff]
        %v11127 = vld [vmem:[%s325 + $0x53] sm:$0xff]
        %v11128 = vld [vmem:[%s325 + $0x63] sm:$0xff]
        %v11129 = vld [vmem:[%s325 + $0x6b] sm:$0xff]
        %v11130 = vld [vmem:[%s325 + $0x7b] sm:$0xff]
        %v11131 = vld [vmem:[%s325 + $0x83] sm:$0xff]
        %v11132 = vld [vmem:[%s325 + $0x93] sm:$0xff]
        %v11133 = vld [vmem:[%s325 + $0x9b] sm:$0xff]
        %v11134 = vld [vmem:[%s325 + $0xab] sm:$0xff]
        %v11135 = vld [vmem:[%s325 + $0xb3] sm:$0xff]
        %v11136 = vld [vmem:[%s325 + $0xc3] sm:$0xff]
        %v11137 = vld [vmem:[%s325 + $0xcb] sm:$0xff]
        %v11138 = vld [vmem:[%s325 + $0xdb] sm:$0xff]
        %v11139 = vld [vmem:[%s325 + $0xe3] sm:$0xff]
        %v11140 = vld [vmem:[%s325 + $0xf3] sm:$0xff]
        %v11141 = vld [vmem:[%s325 + $0xfb] sm:$0xff]
        %v11142 = vld [vmem:[%s325 + $0x10b] sm:$0xff]
        %v11143 = vld [vmem:[%s325 + $0x113] sm:$0xff]
        %v11144 = vld [vmem:[%s325 + $0x123] sm:$0xff]
        %v11145 = vld [vmem:[%s325 + $0x12b] sm:$0xff]
        %v11146 = vld [vmem:[%s325 + $0x13b] sm:$0xff]
        %v11147 = vld [vmem:[%s325 + $0x143] sm:$0xff]
        %v11148 = vld [vmem:[%s325 + $0x153] sm:$0xff]
        %v11149 = vld [vmem:[%s325 + $0x15b] sm:$0xff]
        %v11150 = vld [vmem:[%s325 + $0x16b] sm:$0xff]
        %v11151 = vld [vmem:[%s325 + $0x173] sm:$0xff]
        %v11152 = vld [vmem:[%s325 + $0x4] sm:$0xff]
        %v11153 = vld [vmem:[%s325 + $0xc] sm:$0xff]
        %v11154 = vld [vmem:[%s325 + $0x1c] sm:$0xff]
        %v11155 = vld [vmem:[%s325 + $0x24] sm:$0xff]
        %v11156 = vld [vmem:[%s325 + $0x34] sm:$0xff]
        %v11157 = vld [vmem:[%s325 + $0x3c] sm:$0xff]
        %v11158 = vld [vmem:[%s325 + $0x4c] sm:$0xff]
        %v11159 = vld [vmem:[%s325 + $0x54] sm:$0xff]
        %v11160 = vld [vmem:[%s325 + $0x64] sm:$0xff]
        %v11161 = vld [vmem:[%s325 + $0x6c] sm:$0xff]
        %v11162 = vld [vmem:[%s325 + $0x7c] sm:$0xff]
        %v11163 = vld [vmem:[%s325 + $0x84] sm:$0xff]
        %v11164 = vld [vmem:[%s325 + $0x94] sm:$0xff]
        %v11165 = vld [vmem:[%s325 + $0x9c] sm:$0xff]
        %v11166 = vld [vmem:[%s325 + $0xac] sm:$0xff]
        %v11167 = vld [vmem:[%s325 + $0xb4] sm:$0xff]
        %v11168 = vld [vmem:[%s325 + $0xc4] sm:$0xff]
        %v11169 = vld [vmem:[%s325 + $0xcc] sm:$0xff]
        %v11170 = vld [vmem:[%s325 + $0xdc] sm:$0xff]
        %v11171 = vld [vmem:[%s325 + $0xe4] sm:$0xff]
        %v11172 = vld [vmem:[%s325 + $0xf4] sm:$0xff]
        %v11173 = vld [vmem:[%s325 + $0xfc] sm:$0xff]
        %v11174 = vld [vmem:[%s325 + $0x10c] sm:$0xff]
        %v11175 = vld [vmem:[%s325 + $0x114] sm:$0xff]
        %v11176 = vld [vmem:[%s325 + $0x124] sm:$0xff]
        %v11177 = vld [vmem:[%s325 + $0x12c] sm:$0xff]
        %v11178 = vld [vmem:[%s325 + $0x13c] sm:$0xff]
        %v11179 = vld [vmem:[%s325 + $0x144] sm:$0xff]
        %v11180 = vld [vmem:[%s325 + $0x154] sm:$0xff]
        %v11181 = vld [vmem:[%s325 + $0x15c] sm:$0xff]
        %v11182 = vld [vmem:[%s325 + $0x16c] sm:$0xff]
        %v11183 = vld [vmem:[%s325 + $0x174] sm:$0xff]
        %v11184 = vld [vmem:[%s4919 + $0x2] sm:$0xff]
        %v11185 = vld [vmem:[%s4919 + $0xa] sm:$0xff]
        %v11186 = vld [vmem:[%s4919 + $0x1a] sm:$0xff]
        %v11187 = vld [vmem:[%s4919 + $0x22] sm:$0xff]
        %v11188 = vld [vmem:[%s4919 + $0x32] sm:$0xff]
        %v11189 = vld [vmem:[%s4919 + $0x3a] sm:$0xff]
        %v11190 = vld [vmem:[%s4919 + $0x4a] sm:$0xff]
        %v11191 = vld [vmem:[%s4919 + $0x52] sm:$0xff]
        %v11192 = vld [vmem:[%s4919 + $0x62] sm:$0xff]
        %v11193 = vld [vmem:[%s4919 + $0x6a] sm:$0xff]
        %v11194 = vld [vmem:[%s4919 + $0x7a] sm:$0xff]
        %v11195 = vld [vmem:[%s4919 + $0x82] sm:$0xff]
        %v11196 = vld [vmem:[%s4919 + $0x92] sm:$0xff]
        %v11197 = vld [vmem:[%s4919 + $0x9a] sm:$0xff]
        %v11198 = vld [vmem:[%s4919 + $0xaa] sm:$0xff]
        %v11199 = vld [vmem:[%s4919 + $0xb2] sm:$0xff]
        %v11200 = vld [vmem:[%s4919 + $0xc2] sm:$0xff]
        %v11201 = vld [vmem:[%s4919 + $0xca] sm:$0xff]
        %v11202 = vld [vmem:[%s4919 + $0xda] sm:$0xff]
        %v11203 = vld [vmem:[%s4919 + $0xe2] sm:$0xff]
        %v11204 = vld [vmem:[%s4919 + $0xf2] sm:$0xff]
        %v11205 = vld [vmem:[%s4919 + $0xfa] sm:$0xff]
        %v11206 = vld [vmem:[%s4919 + $0x10a] sm:$0xff]
        %v11207 = vld [vmem:[%s4919 + $0x112] sm:$0xff]
        %v11208 = vld [vmem:[%s4919 + $0x122] sm:$0xff]
        %v11209 = vld [vmem:[%s4919 + $0x12a] sm:$0xff]
        %v11210 = vld [vmem:[%s4919 + $0x13a] sm:$0xff]
        %v11211 = vld [vmem:[%s4919 + $0x142] sm:$0xff]
        %v11212 = vld [vmem:[%s4919 + $0x152] sm:$0xff]
        %v11213 = vld [vmem:[%s4919 + $0x15a] sm:$0xff]
        %v11214 = vld [vmem:[%s4919 + $0x16a] sm:$0xff]
        %v11215 = vld [vmem:[%s4919 + $0x172] sm:$0xff]
        %v11216 = vld [vmem:[%s4919 + $0x3] sm:$0xff]
        %v11217 = vld [vmem:[%s4919 + $0xb] sm:$0xff]
        %v11218 = vld [vmem:[%s4919 + $0x1b] sm:$0xff]
        %v11219 = vld [vmem:[%s4919 + $0x23] sm:$0xff]
        %v11220 = vld [vmem:[%s4919 + $0x33] sm:$0xff]
        %v11221 = vld [vmem:[%s4919 + $0x3b] sm:$0xff]
        %v11222 = vld [vmem:[%s4919 + $0x4b] sm:$0xff]
        %v11223 = vld [vmem:[%s4919 + $0x53] sm:$0xff]
        %v11224 = vld [vmem:[%s4919 + $0x63] sm:$0xff]
        %v11225 = vld [vmem:[%s4919 + $0x6b] sm:$0xff]
        %v11226 = vld [vmem:[%s4919 + $0x7b] sm:$0xff]
        %v11227 = vld [vmem:[%s4919 + $0x83] sm:$0xff]
        %v11228 = vld [vmem:[%s4919 + $0x93] sm:$0xff]
        %v11229 = vld [vmem:[%s4919 + $0x9b] sm:$0xff]
        %v11230 = vld [vmem:[%s4919 + $0xab] sm:$0xff]
        %v11231 = vld [vmem:[%s4919 + $0xb3] sm:$0xff]
        %v11232 = vld [vmem:[%s4919 + $0xc3] sm:$0xff]
        %v11233 = vld [vmem:[%s4919 + $0xcb] sm:$0xff]
        %v11234 = vld [vmem:[%s4919 + $0xdb] sm:$0xff]
        %v11235 = vld [vmem:[%s4919 + $0xe3] sm:$0xff]
        %v11236 = vld [vmem:[%s4919 + $0xf3] sm:$0xff]
        %v11237 = vld [vmem:[%s4919 + $0xfb] sm:$0xff]
        %v11238 = vld [vmem:[%s4919 + $0x10b] sm:$0xff]
        %v11239 = vld [vmem:[%s4919 + $0x113] sm:$0xff]
        %v11240 = vld [vmem:[%s4919 + $0x123] sm:$0xff]
        %v11241 = vld [vmem:[%s4919 + $0x12b] sm:$0xff]
        %v11242 = vld [vmem:[%s4919 + $0x13b] sm:$0xff]
        %v11243 = vld [vmem:[%s4919 + $0x143] sm:$0xff]
        %v11244 = vld [vmem:[%s4919 + $0x153] sm:$0xff]
        %v11245 = vld [vmem:[%s4919 + $0x15b] sm:$0xff]
        %v11246 = vld [vmem:[%s4919 + $0x16b] sm:$0xff]
        %v11247 = vld [vmem:[%s4919 + $0x173] sm:$0xff]
        %v11248 = vld [vmem:[%s4919 + $0x4] sm:$0xff]
        %v11249 = vld [vmem:[%s4919 + $0xc] sm:$0xff]
        %v11250 = vld [vmem:[%s4919 + $0x1c] sm:$0xff]
        %v11251 = vld [vmem:[%s4919 + $0x24] sm:$0xff]
        %v11252 = vld [vmem:[%s4919 + $0x34] sm:$0xff]
        %v11253 = vld [vmem:[%s4919 + $0x3c] sm:$0xff]
        %v11254 = vld [vmem:[%s4919 + $0x4c] sm:$0xff]
        %v11255 = vld [vmem:[%s4919 + $0x54] sm:$0xff]
        %v11256 = vld [vmem:[%s4919 + $0x64] sm:$0xff]
        %v11257 = vld [vmem:[%s4919 + $0x6c] sm:$0xff]
        %v11258 = vld [vmem:[%s4919 + $0x7c] sm:$0xff]
        %v11259 = vld [vmem:[%s4919 + $0x84] sm:$0xff]
        %v11260 = vld [vmem:[%s4919 + $0x94] sm:$0xff]
        %v11261 = vld [vmem:[%s4919 + $0x9c] sm:$0xff]
        %v11262 = vld [vmem:[%s4919 + $0xac] sm:$0xff]
        %v11263 = vld [vmem:[%s4919 + $0xb4] sm:$0xff]
        %v11264 = vld [vmem:[%s4919 + $0xc4] sm:$0xff]
        %v11265 = vld [vmem:[%s4919 + $0xcc] sm:$0xff]
        %v11266 = vld [vmem:[%s4919 + $0xdc] sm:$0xff]
        %v11267 = vld [vmem:[%s4919 + $0xe4] sm:$0xff]
        %v11268 = vld [vmem:[%s4919 + $0xf4] sm:$0xff]
        %v11269 = vld [vmem:[%s4919 + $0xfc] sm:$0xff]
        %v11270 = vld [vmem:[%s4919 + $0x10c] sm:$0xff]
        %v11271 = vld [vmem:[%s4919 + $0x114] sm:$0xff]
        %v11272 = vld [vmem:[%s4919 + $0x124] sm:$0xff]
        %v11273 = vld [vmem:[%s4919 + $0x12c] sm:$0xff]
        %v11274 = vld [vmem:[%s4919 + $0x13c] sm:$0xff]
        %v11275 = vld [vmem:[%s4919 + $0x144] sm:$0xff]
        %v11276 = vld [vmem:[%s4919 + $0x154] sm:$0xff]
        %v11277 = vld [vmem:[%s4919 + $0x15c] sm:$0xff]
        %v11278 = vld [vmem:[%s4919 + $0x16c] sm:$0xff]
        %v11279 = vld [vmem:[%s4919 + $0x174] sm:$0xff]
        %11312 = vrot.lane.b32.xlu0 %v11024, 24
        %v11313 = vpop.permute.xlu0 %11312
        %11314 = vrot.lane.b32.xlu0 %v11025, 24
        %v11315 = vpop.permute.xlu0 %11314
        %11316 = vrot.lane.b32.xlu0 %v11026, 24
        %v11317 = vpop.permute.xlu0 %11316
        %11318 = vrot.lane.b32.xlu0 %v11027, 24
        %v11319 = vpop.permute.xlu0 %11318
        %11320 = vrot.lane.b32.xlu0 %v11028, 24
        %v11321 = vpop.permute.xlu0 %11320
        %11322 = vrot.lane.b32.xlu0 %v11029, 24
        %v11323 = vpop.permute.xlu0 %11322
        %11324 = vrot.lane.b32.xlu0 %v11030, 24
        %v11325 = vpop.permute.xlu0 %11324
        %11326 = vrot.lane.b32.xlu0 %v11031, 24
        %v11327 = vpop.permute.xlu0 %11326
        %11328 = vrot.lane.b32.xlu0 %v11032, 24
        %v11329 = vpop.permute.xlu0 %11328
        %11330 = vrot.lane.b32.xlu0 %v11033, 24
        %v11331 = vpop.permute.xlu0 %11330
        %11332 = vrot.lane.b32.xlu0 %v11034, 24
        %v11333 = vpop.permute.xlu0 %11332
        %11334 = vrot.lane.b32.xlu0 %v11035, 24
        %v11335 = vpop.permute.xlu0 %11334
        %11336 = vrot.lane.b32.xlu0 %v11036, 24
        %v11337 = vpop.permute.xlu0 %11336
        %11338 = vrot.lane.b32.xlu0 %v11037, 24
        %v11339 = vpop.permute.xlu0 %11338
        %11340 = vrot.lane.b32.xlu0 %v11038, 24
        %v11341 = vpop.permute.xlu0 %11340
        %11342 = vrot.lane.b32.xlu0 %v11039, 24
        %v11343 = vpop.permute.xlu0 %11342
        %11344 = vrot.lane.b32.xlu0 %v11040, 24
        %v11345 = vpop.permute.xlu0 %11344
        %11346 = vrot.lane.b32.xlu0 %v11041, 24
        %v11347 = vpop.permute.xlu0 %11346
        %11348 = vrot.lane.b32.xlu0 %v11042, 24
        %v11349 = vpop.permute.xlu0 %11348
        %11350 = vrot.lane.b32.xlu0 %v11043, 24
        %v11351 = vpop.permute.xlu0 %11350
        %11352 = vrot.lane.b32.xlu0 %v11044, 24
        %v11353 = vpop.permute.xlu0 %11352
        %11354 = vrot.lane.b32.xlu0 %v11045, 24
        %v11355 = vpop.permute.xlu0 %11354
        %11356 = vrot.lane.b32.xlu0 %v11046, 24
        %v11357 = vpop.permute.xlu0 %11356
        %11358 = vrot.lane.b32.xlu0 %v11047, 24
        %v11359 = vpop.permute.xlu0 %11358
        %11360 = vrot.lane.b32.xlu0 %v11048, 24
        %v11361 = vpop.permute.xlu0 %11360
        %11362 = vrot.lane.b32.xlu0 %v11049, 24
        %v11363 = vpop.permute.xlu0 %11362
        %11364 = vrot.lane.b32.xlu0 %v11050, 24
        %v11365 = vpop.permute.xlu0 %11364
        %11366 = vrot.lane.b32.xlu0 %v11051, 24
        %v11367 = vpop.permute.xlu0 %11366
        %11368 = vrot.lane.b32.xlu0 %v11052, 24
        %v11369 = vpop.permute.xlu0 %11368
        %11370 = vrot.lane.b32.xlu0 %v11053, 24
        %v11371 = vpop.permute.xlu0 %11370
        %11372 = vrot.lane.b32.xlu0 %v11054, 24
        %v11373 = vpop.permute.xlu0 %11372
        %11374 = vrot.lane.b32.xlu0 %v11055, 24
        %v11375 = vpop.permute.xlu0 %11374
        %11440 = vrot.lane.b32.xlu0 %v11056, 48
        %v11441 = vpop.permute.xlu0 %11440
        %11442 = vrot.lane.b32.xlu0 %v11057, 48
        %v11443 = vpop.permute.xlu0 %11442
        %11444 = vrot.lane.b32.xlu0 %v11058, 48
        %v11445 = vpop.permute.xlu0 %11444
        %11446 = vrot.lane.b32.xlu0 %v11059, 48
        %v11447 = vpop.permute.xlu0 %11446
        %11448 = vrot.lane.b32.xlu0 %v11060, 48
        %v11449 = vpop.permute.xlu0 %11448
        %11450 = vrot.lane.b32.xlu0 %v11061, 48
        %v11451 = vpop.permute.xlu0 %11450
        %11452 = vrot.lane.b32.xlu0 %v11062, 48
        %v11453 = vpop.permute.xlu0 %11452
        %11454 = vrot.lane.b32.xlu0 %v11063, 48
        %v11455 = vpop.permute.xlu0 %11454
        %11456 = vrot.lane.b32.xlu0 %v11064, 48
        %v11457 = vpop.permute.xlu0 %11456
        %11458 = vrot.lane.b32.xlu0 %v11065, 48
        %v11459 = vpop.permute.xlu0 %11458
        %11460 = vrot.lane.b32.xlu0 %v11066, 48
        %v11461 = vpop.permute.xlu0 %11460
        %11462 = vrot.lane.b32.xlu0 %v11067, 48
        %v11463 = vpop.permute.xlu0 %11462
        %11464 = vrot.lane.b32.xlu0 %v11068, 48
        %v11465 = vpop.permute.xlu0 %11464
        %11466 = vrot.lane.b32.xlu0 %v11069, 48
        %v11467 = vpop.permute.xlu0 %11466
        %11468 = vrot.lane.b32.xlu0 %v11070, 48
        %v11469 = vpop.permute.xlu0 %11468
        %11470 = vrot.lane.b32.xlu0 %v11071, 48
        %v11471 = vpop.permute.xlu0 %11470
        %11472 = vrot.lane.b32.xlu0 %v11072, 48
        %v11473 = vpop.permute.xlu0 %11472
        %11474 = vrot.lane.b32.xlu0 %v11073, 48
        %v11475 = vpop.permute.xlu0 %11474
        %11476 = vrot.lane.b32.xlu0 %v11074, 48
        %v11477 = vpop.permute.xlu0 %11476
        %11478 = vrot.lane.b32.xlu0 %v11075, 48
        %v11479 = vpop.permute.xlu0 %11478
        %11480 = vrot.lane.b32.xlu0 %v11076, 48
        %v11481 = vpop.permute.xlu0 %11480
        %11482 = vrot.lane.b32.xlu0 %v11077, 48
        %v11483 = vpop.permute.xlu0 %11482
        %11484 = vrot.lane.b32.xlu0 %v11078, 48
        %v11485 = vpop.permute.xlu0 %11484
        %11486 = vrot.lane.b32.xlu0 %v11079, 48
        %v11487 = vpop.permute.xlu0 %11486
        %11488 = vrot.lane.b32.xlu0 %v11080, 48
        %v11489 = vpop.permute.xlu0 %11488
        %11490 = vrot.lane.b32.xlu0 %v11081, 48
        %v11491 = vpop.permute.xlu0 %11490
        %11492 = vrot.lane.b32.xlu0 %v11082, 48
        %v11493 = vpop.permute.xlu0 %11492
        %11494 = vrot.lane.b32.xlu0 %v11083, 48
        %v11495 = vpop.permute.xlu0 %11494
        %11496 = vrot.lane.b32.xlu0 %v11084, 48
        %v11497 = vpop.permute.xlu0 %11496
        %11498 = vrot.lane.b32.xlu0 %v11085, 48
        %v11499 = vpop.permute.xlu0 %11498
        %11500 = vrot.lane.b32.xlu0 %v11086, 48
        %v11501 = vpop.permute.xlu0 %11500
        %11502 = vrot.lane.b32.xlu0 %v11087, 48
        %v11503 = vpop.permute.xlu0 %11502
        %11568 = vrot.lane.b32.xlu0 %v11088, 72
        %v11569 = vpop.permute.xlu0 %11568
        %11570 = vrot.lane.b32.xlu0 %v11089, 72
        %v11571 = vpop.permute.xlu0 %11570
        %11572 = vrot.lane.b32.xlu0 %v11090, 72
        %v11573 = vpop.permute.xlu0 %11572
        %11574 = vrot.lane.b32.xlu0 %v11091, 72
        %v11575 = vpop.permute.xlu0 %11574
        %11576 = vrot.lane.b32.xlu0 %v11092, 72
        %v11577 = vpop.permute.xlu0 %11576
        %11578 = vrot.lane.b32.xlu0 %v11093, 72
        %v11579 = vpop.permute.xlu0 %11578
        %11580 = vrot.lane.b32.xlu0 %v11094, 72
        %v11581 = vpop.permute.xlu0 %11580
        %11582 = vrot.lane.b32.xlu0 %v11095, 72
        %v11583 = vpop.permute.xlu0 %11582
        %11584 = vrot.lane.b32.xlu0 %v11096, 72
        %v11585 = vpop.permute.xlu0 %11584
        %11586 = vrot.lane.b32.xlu0 %v11097, 72
        %v11587 = vpop.permute.xlu0 %11586
        %11588 = vrot.lane.b32.xlu0 %v11098, 72
        %v11589 = vpop.permute.xlu0 %11588
        %11590 = vrot.lane.b32.xlu0 %v11099, 72
        %v11591 = vpop.permute.xlu0 %11590
        %11592 = vrot.lane.b32.xlu0 %v11100, 72
        %v11593 = vpop.permute.xlu0 %11592
        %11594 = vrot.lane.b32.xlu0 %v11101, 72
        %v11595 = vpop.permute.xlu0 %11594
        %11596 = vrot.lane.b32.xlu0 %v11102, 72
        %v11597 = vpop.permute.xlu0 %11596
        %11598 = vrot.lane.b32.xlu0 %v11103, 72
        %v11599 = vpop.permute.xlu0 %11598
        %11600 = vrot.lane.b32.xlu0 %v11104, 72
        %v11601 = vpop.permute.xlu0 %11600
        %11602 = vrot.lane.b32.xlu0 %v11105, 72
        %v11603 = vpop.permute.xlu0 %11602
        %11604 = vrot.lane.b32.xlu0 %v11106, 72
        %v11605 = vpop.permute.xlu0 %11604
        %11606 = vrot.lane.b32.xlu0 %v11107, 72
        %v11607 = vpop.permute.xlu0 %11606
        %11608 = vrot.lane.b32.xlu0 %v11108, 72
        %v11609 = vpop.permute.xlu0 %11608
        %11610 = vrot.lane.b32.xlu0 %v11109, 72
        %v11611 = vpop.permute.xlu0 %11610
        %11612 = vrot.lane.b32.xlu0 %v11110, 72
        %v11613 = vpop.permute.xlu0 %11612
        %11614 = vrot.lane.b32.xlu0 %v11111, 72
        %v11615 = vpop.permute.xlu0 %11614
        %11616 = vrot.lane.b32.xlu0 %v11112, 72
        %v11617 = vpop.permute.xlu0 %11616
        %11618 = vrot.lane.b32.xlu0 %v11113, 72
        %v11619 = vpop.permute.xlu0 %11618
        %11620 = vrot.lane.b32.xlu0 %v11114, 72
        %v11621 = vpop.permute.xlu0 %11620
        %11622 = vrot.lane.b32.xlu0 %v11115, 72
        %v11623 = vpop.permute.xlu0 %11622
        %11624 = vrot.lane.b32.xlu0 %v11116, 72
        %v11625 = vpop.permute.xlu0 %11624
        %11626 = vrot.lane.b32.xlu0 %v11117, 72
        %v11627 = vpop.permute.xlu0 %11626
        %11628 = vrot.lane.b32.xlu0 %v11118, 72
        %v11629 = vpop.permute.xlu0 %11628
        %11630 = vrot.lane.b32.xlu0 %v11119, 72
        %v11631 = vpop.permute.xlu0 %11630
        %11696 = vrot.lane.b32.xlu0 %v11120, 96
        %v11697 = vpop.permute.xlu0 %11696
        %11698 = vrot.lane.b32.xlu0 %v11121, 96
        %v11699 = vpop.permute.xlu0 %11698
        %11700 = vrot.lane.b32.xlu0 %v11122, 96
        %v11701 = vpop.permute.xlu0 %11700
        %11702 = vrot.lane.b32.xlu0 %v11123, 96
        %v11703 = vpop.permute.xlu0 %11702
        %11704 = vrot.lane.b32.xlu0 %v11124, 96
        %v11705 = vpop.permute.xlu0 %11704
        %11706 = vrot.lane.b32.xlu0 %v11125, 96
        %v11707 = vpop.permute.xlu0 %11706
        %11708 = vrot.lane.b32.xlu0 %v11126, 96
        %v11709 = vpop.permute.xlu0 %11708
        %11710 = vrot.lane.b32.xlu0 %v11127, 96
        %v11711 = vpop.permute.xlu0 %11710
        %11712 = vrot.lane.b32.xlu0 %v11128, 96
        %v11713 = vpop.permute.xlu0 %11712
        %11714 = vrot.lane.b32.xlu0 %v11129, 96
        %v11715 = vpop.permute.xlu0 %11714
        %11716 = vrot.lane.b32.xlu0 %v11130, 96
        %v11717 = vpop.permute.xlu0 %11716
        %11718 = vrot.lane.b32.xlu0 %v11131, 96
        %v11719 = vpop.permute.xlu0 %11718
        %11720 = vrot.lane.b32.xlu0 %v11132, 96
        %v11721 = vpop.permute.xlu0 %11720
        %11722 = vrot.lane.b32.xlu0 %v11133, 96
        %v11723 = vpop.permute.xlu0 %11722
        %11724 = vrot.lane.b32.xlu0 %v11134, 96
        %v11725 = vpop.permute.xlu0 %11724
        %11726 = vrot.lane.b32.xlu0 %v11135, 96
        %v11727 = vpop.permute.xlu0 %11726
        %11728 = vrot.lane.b32.xlu0 %v11136, 96
        %v11729 = vpop.permute.xlu0 %11728
        %11730 = vrot.lane.b32.xlu0 %v11137, 96
        %v11731 = vpop.permute.xlu0 %11730
        %11732 = vrot.lane.b32.xlu0 %v11138, 96
        %v11733 = vpop.permute.xlu0 %11732
        %11734 = vrot.lane.b32.xlu0 %v11139, 96
        %v11735 = vpop.permute.xlu0 %11734
        %11736 = vrot.lane.b32.xlu0 %v11140, 96
        %v11737 = vpop.permute.xlu0 %11736
        %11738 = vrot.lane.b32.xlu0 %v11141, 96
        %v11739 = vpop.permute.xlu0 %11738
        %11740 = vrot.lane.b32.xlu0 %v11142, 96
        %v11741 = vpop.permute.xlu0 %11740
        %11742 = vrot.lane.b32.xlu0 %v11143, 96
        %v11743 = vpop.permute.xlu0 %11742
        %11744 = vrot.lane.b32.xlu0 %v11144, 96
        %v11745 = vpop.permute.xlu0 %11744
        %11746 = vrot.lane.b32.xlu0 %v11145, 96
        %v11747 = vpop.permute.xlu0 %11746
        %11748 = vrot.lane.b32.xlu0 %v11146, 96
        %v11749 = vpop.permute.xlu0 %11748
        %11750 = vrot.lane.b32.xlu0 %v11147, 96
        %v11751 = vpop.permute.xlu0 %11750
        %11752 = vrot.lane.b32.xlu0 %v11148, 96
        %v11753 = vpop.permute.xlu0 %11752
        %11754 = vrot.lane.b32.xlu0 %v11149, 96
        %v11755 = vpop.permute.xlu0 %11754
        %11756 = vrot.lane.b32.xlu0 %v11150, 96
        %v11757 = vpop.permute.xlu0 %11756
        %11758 = vrot.lane.b32.xlu0 %v11151, 96
        %v11759 = vpop.permute.xlu0 %11758
        %11824 = vrot.lane.b32.xlu0 %v11152, 120
        %v11825 = vpop.permute.xlu0 %11824
        %11826 = vrot.lane.b32.xlu0 %v11153, 120
        %v11827 = vpop.permute.xlu0 %11826
        %11828 = vrot.lane.b32.xlu0 %v11154, 120
        %v11829 = vpop.permute.xlu0 %11828
        %11830 = vrot.lane.b32.xlu0 %v11155, 120
        %v11831 = vpop.permute.xlu0 %11830
        %11832 = vrot.lane.b32.xlu0 %v11156, 120
        %v11833 = vpop.permute.xlu0 %11832
        %11834 = vrot.lane.b32.xlu0 %v11157, 120
        %v11835 = vpop.permute.xlu0 %11834
        %11836 = vrot.lane.b32.xlu0 %v11158, 120
        %v11837 = vpop.permute.xlu0 %11836
        %11838 = vrot.lane.b32.xlu0 %v11159, 120
        %v11839 = vpop.permute.xlu0 %11838
        %11840 = vrot.lane.b32.xlu0 %v11160, 120
        %v11841 = vpop.permute.xlu0 %11840
        %11842 = vrot.lane.b32.xlu0 %v11161, 120
        %v11843 = vpop.permute.xlu0 %11842
        %11844 = vrot.lane.b32.xlu0 %v11162, 120
        %v11845 = vpop.permute.xlu0 %11844
        %11846 = vrot.lane.b32.xlu0 %v11163, 120
        %v11847 = vpop.permute.xlu0 %11846
        %11848 = vrot.lane.b32.xlu0 %v11164, 120
        %v11849 = vpop.permute.xlu0 %11848
        %11850 = vrot.lane.b32.xlu0 %v11165, 120
        %v11851 = vpop.permute.xlu0 %11850
        %11852 = vrot.lane.b32.xlu0 %v11166, 120
        %v11853 = vpop.permute.xlu0 %11852
        %11854 = vrot.lane.b32.xlu0 %v11167, 120
        %v11855 = vpop.permute.xlu0 %11854
        %11856 = vrot.lane.b32.xlu0 %v11168, 120
        %v11857 = vpop.permute.xlu0 %11856
        %11858 = vrot.lane.b32.xlu0 %v11169, 120
        %v11859 = vpop.permute.xlu0 %11858
        %11860 = vrot.lane.b32.xlu0 %v11170, 120
        %v11861 = vpop.permute.xlu0 %11860
        %11862 = vrot.lane.b32.xlu0 %v11171, 120
        %v11863 = vpop.permute.xlu0 %11862
        %11864 = vrot.lane.b32.xlu0 %v11172, 120
        %v11865 = vpop.permute.xlu0 %11864
        %11866 = vrot.lane.b32.xlu0 %v11173, 120
        %v11867 = vpop.permute.xlu0 %11866
        %11868 = vrot.lane.b32.xlu0 %v11174, 120
        %v11869 = vpop.permute.xlu0 %11868
        %11870 = vrot.lane.b32.xlu0 %v11175, 120
        %v11871 = vpop.permute.xlu0 %11870
        %11872 = vrot.lane.b32.xlu0 %v11176, 120
        %v11873 = vpop.permute.xlu0 %11872
        %11874 = vrot.lane.b32.xlu0 %v11177, 120
        %v11875 = vpop.permute.xlu0 %11874
        %11876 = vrot.lane.b32.xlu0 %v11178, 120
        %v11877 = vpop.permute.xlu0 %11876
        %11878 = vrot.lane.b32.xlu0 %v11179, 120
        %v11879 = vpop.permute.xlu0 %11878
        %11880 = vrot.lane.b32.xlu0 %v11180, 120
        %v11881 = vpop.permute.xlu0 %11880
        %11882 = vrot.lane.b32.xlu0 %v11181, 120
        %v11883 = vpop.permute.xlu0 %11882
        %11884 = vrot.lane.b32.xlu0 %v11182, 120
        %v11885 = vpop.permute.xlu0 %11884
        %11886 = vrot.lane.b32.xlu0 %v11183, 120
        %v11887 = vpop.permute.xlu0 %11886
        %11952 = vrot.lane.b32.xlu0 %v11184, 16
        %v11953 = vpop.permute.xlu0 %11952
        %11954 = vrot.lane.b32.xlu0 %v11185, 16
        %v11955 = vpop.permute.xlu0 %11954
        %11956 = vrot.lane.b32.xlu0 %v11186, 16
        %v11957 = vpop.permute.xlu0 %11956
        %11958 = vrot.lane.b32.xlu0 %v11187, 16
        %v11959 = vpop.permute.xlu0 %11958
        %11960 = vrot.lane.b32.xlu0 %v11188, 16
        %v11961 = vpop.permute.xlu0 %11960
        %11962 = vrot.lane.b32.xlu0 %v11189, 16
        %v11963 = vpop.permute.xlu0 %11962
        %11964 = vrot.lane.b32.xlu0 %v11190, 16
        %v11965 = vpop.permute.xlu0 %11964
        %11966 = vrot.lane.b32.xlu0 %v11191, 16
        %v11967 = vpop.permute.xlu0 %11966
        %11968 = vrot.lane.b32.xlu0 %v11192, 16
        %v11969 = vpop.permute.xlu0 %11968
        %11970 = vrot.lane.b32.xlu0 %v11193, 16
        %v11971 = vpop.permute.xlu0 %11970
        %11972 = vrot.lane.b32.xlu0 %v11194, 16
        %v11973 = vpop.permute.xlu0 %11972
        %11974 = vrot.lane.b32.xlu0 %v11195, 16
        %v11975 = vpop.permute.xlu0 %11974
        %11976 = vrot.lane.b32.xlu0 %v11196, 16
        %v11977 = vpop.permute.xlu0 %11976
        %11978 = vrot.lane.b32.xlu0 %v11197, 16
        %v11979 = vpop.permute.xlu0 %11978
        %11980 = vrot.lane.b32.xlu0 %v11198, 16
        %v11981 = vpop.permute.xlu0 %11980
        %11982 = vrot.lane.b32.xlu0 %v11199, 16
        %v11983 = vpop.permute.xlu0 %11982
        %11984 = vrot.lane.b32.xlu0 %v11200, 16
        %v11985 = vpop.permute.xlu0 %11984
        %11986 = vrot.lane.b32.xlu0 %v11201, 16
        %v11987 = vpop.permute.xlu0 %11986
        %11988 = vrot.lane.b32.xlu0 %v11202, 16
        %v11989 = vpop.permute.xlu0 %11988
        %11990 = vrot.lane.b32.xlu0 %v11203, 16
        %v11991 = vpop.permute.xlu0 %11990
        %11992 = vrot.lane.b32.xlu0 %v11204, 16
        %v11993 = vpop.permute.xlu0 %11992
        %11994 = vrot.lane.b32.xlu0 %v11205, 16
        %v11995 = vpop.permute.xlu0 %11994
        %11996 = vrot.lane.b32.xlu0 %v11206, 16
        %v11997 = vpop.permute.xlu0 %11996
        %11998 = vrot.lane.b32.xlu0 %v11207, 16
        %v11999 = vpop.permute.xlu0 %11998
        %12000 = vrot.lane.b32.xlu0 %v11208, 16
        %v12001 = vpop.permute.xlu0 %12000
        %12002 = vrot.lane.b32.xlu0 %v11209, 16
        %v12003 = vpop.permute.xlu0 %12002
        %12004 = vrot.lane.b32.xlu0 %v11210, 16
        %v12005 = vpop.permute.xlu0 %12004
        %12006 = vrot.lane.b32.xlu0 %v11211, 16
        %v12007 = vpop.permute.xlu0 %12006
        %12008 = vrot.lane.b32.xlu0 %v11212, 16
        %v12009 = vpop.permute.xlu0 %12008
        %12010 = vrot.lane.b32.xlu0 %v11213, 16
        %v12011 = vpop.permute.xlu0 %12010
        %12012 = vrot.lane.b32.xlu0 %v11214, 16
        %v12013 = vpop.permute.xlu0 %12012
        %12014 = vrot.lane.b32.xlu0 %v11215, 16
        %v12015 = vpop.permute.xlu0 %12014
        %12080 = vrot.lane.b32.xlu0 %v11216, 40
        %v12081 = vpop.permute.xlu0 %12080
        %12082 = vrot.lane.b32.xlu0 %v11217, 40
        %v12083 = vpop.permute.xlu0 %12082
        %12084 = vrot.lane.b32.xlu0 %v11218, 40
        %v12085 = vpop.permute.xlu0 %12084
        %12086 = vrot.lane.b32.xlu0 %v11219, 40
        %v12087 = vpop.permute.xlu0 %12086
        %12088 = vrot.lane.b32.xlu0 %v11220, 40
        %v12089 = vpop.permute.xlu0 %12088
        %12090 = vrot.lane.b32.xlu0 %v11221, 40
        %v12091 = vpop.permute.xlu0 %12090
        %12092 = vrot.lane.b32.xlu0 %v11222, 40
        %v12093 = vpop.permute.xlu0 %12092
        %12094 = vrot.lane.b32.xlu0 %v11223, 40
        %v12095 = vpop.permute.xlu0 %12094
        %12096 = vrot.lane.b32.xlu0 %v11224, 40
        %v12097 = vpop.permute.xlu0 %12096
        %12098 = vrot.lane.b32.xlu0 %v11225, 40
        %v12099 = vpop.permute.xlu0 %12098
        %12100 = vrot.lane.b32.xlu0 %v11226, 40
        %v12101 = vpop.permute.xlu0 %12100
        %12102 = vrot.lane.b32.xlu0 %v11227, 40
        %v12103 = vpop.permute.xlu0 %12102
        %12104 = vrot.lane.b32.xlu0 %v11228, 40
        %v12105 = vpop.permute.xlu0 %12104
        %12106 = vrot.lane.b32.xlu0 %v11229, 40
        %v12107 = vpop.permute.xlu0 %12106
        %12108 = vrot.lane.b32.xlu0 %v11230, 40
        %v12109 = vpop.permute.xlu0 %12108
        %12110 = vrot.lane.b32.xlu0 %v11231, 40
        %v12111 = vpop.permute.xlu0 %12110
        %12112 = vrot.lane.b32.xlu0 %v11232, 40
        %v12113 = vpop.permute.xlu0 %12112
        %12114 = vrot.lane.b32.xlu0 %v11233, 40
        %v12115 = vpop.permute.xlu0 %12114
        %12116 = vrot.lane.b32.xlu0 %v11234, 40
        %v12117 = vpop.permute.xlu0 %12116
        %12118 = vrot.lane.b32.xlu0 %v11235, 40
        %v12119 = vpop.permute.xlu0 %12118
        %12120 = vrot.lane.b32.xlu0 %v11236, 40
        %v12121 = vpop.permute.xlu0 %12120
        %12122 = vrot.lane.b32.xlu0 %v11237, 40
        %v12123 = vpop.permute.xlu0 %12122
        %12124 = vrot.lane.b32.xlu0 %v11238, 40
        %v12125 = vpop.permute.xlu0 %12124
        %12126 = vrot.lane.b32.xlu0 %v11239, 40
        %v12127 = vpop.permute.xlu0 %12126
        %12128 = vrot.lane.b32.xlu0 %v11240, 40
        %v12129 = vpop.permute.xlu0 %12128
        %12130 = vrot.lane.b32.xlu0 %v11241, 40
        %v12131 = vpop.permute.xlu0 %12130
        %12132 = vrot.lane.b32.xlu0 %v11242, 40
        %v12133 = vpop.permute.xlu0 %12132
        %12134 = vrot.lane.b32.xlu0 %v11243, 40
        %v12135 = vpop.permute.xlu0 %12134
        %12136 = vrot.lane.b32.xlu0 %v11244, 40
        %v12137 = vpop.permute.xlu0 %12136
        %12138 = vrot.lane.b32.xlu0 %v11245, 40
        %v12139 = vpop.permute.xlu0 %12138
        %12140 = vrot.lane.b32.xlu0 %v11246, 40
        %v12141 = vpop.permute.xlu0 %12140
        %12142 = vrot.lane.b32.xlu0 %v11247, 40
        %v12143 = vpop.permute.xlu0 %12142
        %12208 = vrot.lane.b32.xlu0 %v11248, 64
        %v12209 = vpop.permute.xlu0 %12208
        %12210 = vrot.lane.b32.xlu0 %v11249, 64
        %v12211 = vpop.permute.xlu0 %12210
        %12212 = vrot.lane.b32.xlu0 %v11250, 64
        %v12213 = vpop.permute.xlu0 %12212
        %12214 = vrot.lane.b32.xlu0 %v11251, 64
        %v12215 = vpop.permute.xlu0 %12214
        %12216 = vrot.lane.b32.xlu0 %v11252, 64
        %v12217 = vpop.permute.xlu0 %12216
        %12218 = vrot.lane.b32.xlu0 %v11253, 64
        %v12219 = vpop.permute.xlu0 %12218
        %12220 = vrot.lane.b32.xlu0 %v11254, 64
        %v12221 = vpop.permute.xlu0 %12220
        %12222 = vrot.lane.b32.xlu0 %v11255, 64
        %v12223 = vpop.permute.xlu0 %12222
        %12224 = vrot.lane.b32.xlu0 %v11256, 64
        %v12225 = vpop.permute.xlu0 %12224
        %12226 = vrot.lane.b32.xlu0 %v11257, 64
        %v12227 = vpop.permute.xlu0 %12226
        %12228 = vrot.lane.b32.xlu0 %v11258, 64
        %v12229 = vpop.permute.xlu0 %12228
        %12230 = vrot.lane.b32.xlu0 %v11259, 64
        %v12231 = vpop.permute.xlu0 %12230
        %12232 = vrot.lane.b32.xlu0 %v11260, 64
        %v12233 = vpop.permute.xlu0 %12232
        %12234 = vrot.lane.b32.xlu0 %v11261, 64
        %v12235 = vpop.permute.xlu0 %12234
        %12236 = vrot.lane.b32.xlu0 %v11262, 64
        %v12237 = vpop.permute.xlu0 %12236
        %12238 = vrot.lane.b32.xlu0 %v11263, 64
        %v12239 = vpop.permute.xlu0 %12238
        %12240 = vrot.lane.b32.xlu0 %v11264, 64
        %v12241 = vpop.permute.xlu0 %12240
        %12242 = vrot.lane.b32.xlu0 %v11265, 64
        %v12243 = vpop.permute.xlu0 %12242
        %12244 = vrot.lane.b32.xlu0 %v11266, 64
        %v12245 = vpop.permute.xlu0 %12244
        %12246 = vrot.lane.b32.xlu0 %v11267, 64
        %v12247 = vpop.permute.xlu0 %12246
        %12248 = vrot.lane.b32.xlu0 %v11268, 64
        %v12249 = vpop.permute.xlu0 %12248
        %12250 = vrot.lane.b32.xlu0 %v11269, 64
        %v12251 = vpop.permute.xlu0 %12250
        %12252 = vrot.lane.b32.xlu0 %v11270, 64
        %v12253 = vpop.permute.xlu0 %12252
        %12254 = vrot.lane.b32.xlu0 %v11271, 64
        %v12255 = vpop.permute.xlu0 %12254
        %12256 = vrot.lane.b32.xlu0 %v11272, 64
        %v12257 = vpop.permute.xlu0 %12256
        %12258 = vrot.lane.b32.xlu0 %v11273, 64
        %v12259 = vpop.permute.xlu0 %12258
        %12260 = vrot.lane.b32.xlu0 %v11274, 64
        %v12261 = vpop.permute.xlu0 %12260
        %12262 = vrot.lane.b32.xlu0 %v11275, 64
        %v12263 = vpop.permute.xlu0 %12262
        %12264 = vrot.lane.b32.xlu0 %v11276, 64
        %v12265 = vpop.permute.xlu0 %12264
        %12266 = vrot.lane.b32.xlu0 %v11277, 64
        %v12267 = vpop.permute.xlu0 %12266
        %12268 = vrot.lane.b32.xlu0 %v11278, 64
        %v12269 = vpop.permute.xlu0 %12268
        %12270 = vrot.lane.b32.xlu0 %v11279, 64
        %v12271 = vpop.permute.xlu0 %12270
        %v12304 = vsel %vm304, %v10992, %v11313
        %v12305 = vsel %vm304, %v10993, %v11315
        %v12306 = vsel %vm304, %v10994, %v11317
        %v12307 = vsel %vm304, %v10995, %v11319
        %v12308 = vsel %vm304, %v10996, %v11321
        %v12309 = vsel %vm304, %v10997, %v11323
        %v12310 = vsel %vm304, %v10998, %v11325
        %v12311 = vsel %vm304, %v10999, %v11327
        %v12312 = vsel %vm304, %v11000, %v11329
        %v12313 = vsel %vm304, %v11001, %v11331
        %v12314 = vsel %vm304, %v11002, %v11333
        %v12315 = vsel %vm304, %v11003, %v11335
        %v12316 = vsel %vm304, %v11004, %v11337
        %v12317 = vsel %vm304, %v11005, %v11339
        %v12318 = vsel %vm304, %v11006, %v11341
        %v12319 = vsel %vm304, %v11007, %v11343
        %v12320 = vsel %vm304, %v11008, %v11345
        %v12321 = vsel %vm304, %v11009, %v11347
        %v12322 = vsel %vm304, %v11010, %v11349
        %v12323 = vsel %vm304, %v11011, %v11351
        %v12324 = vsel %vm304, %v11012, %v11353
        %v12325 = vsel %vm304, %v11013, %v11355
        %v12326 = vsel %vm304, %v11014, %v11357
        %v12327 = vsel %vm304, %v11015, %v11359
        %v12328 = vsel %vm304, %v11016, %v11361
        %v12329 = vsel %vm304, %v11017, %v11363
        %v12330 = vsel %vm304, %v11018, %v11365
        %v12331 = vsel %vm304, %v11019, %v11367
        %v12332 = vsel %vm304, %v11020, %v11369
        %v12333 = vsel %vm304, %v11021, %v11371
        %v12334 = vsel %vm304, %v11022, %v11373
        %v12335 = vsel %vm304, %v11023, %v11375
        %v12336 = vsel %vm4067, %v12304, %v11441
        %v12337 = vsel %vm4067, %v12305, %v11443
        %v12338 = vsel %vm4067, %v12306, %v11445
        %v12339 = vsel %vm4067, %v12307, %v11447
        %v12340 = vsel %vm4067, %v12308, %v11449
        %v12341 = vsel %vm4067, %v12309, %v11451
        %v12342 = vsel %vm4067, %v12310, %v11453
        %v12343 = vsel %vm4067, %v12311, %v11455
        %v12344 = vsel %vm4067, %v12312, %v11457
        %v12345 = vsel %vm4067, %v12313, %v11459
        %v12346 = vsel %vm4067, %v12314, %v11461
        %v12347 = vsel %vm4067, %v12315, %v11463
        %v12348 = vsel %vm4067, %v12316, %v11465
        %v12349 = vsel %vm4067, %v12317, %v11467
        %v12350 = vsel %vm4067, %v12318, %v11469
        %v12351 = vsel %vm4067, %v12319, %v11471
        %v12352 = vsel %vm4067, %v12320, %v11473
        %v12353 = vsel %vm4067, %v12321, %v11475
        %v12354 = vsel %vm4067, %v12322, %v11477
        %v12355 = vsel %vm4067, %v12323, %v11479
        %v12356 = vsel %vm4067, %v12324, %v11481
        %v12357 = vsel %vm4067, %v12325, %v11483
        %v12358 = vsel %vm4067, %v12326, %v11485
        %v12359 = vsel %vm4067, %v12327, %v11487
        %v12360 = vsel %vm4067, %v12328, %v11489
        %v12361 = vsel %vm4067, %v12329, %v11491
        %v12362 = vsel %vm4067, %v12330, %v11493
        %v12363 = vsel %vm4067, %v12331, %v11495
        %v12364 = vsel %vm4067, %v12332, %v11497
        %v12365 = vsel %vm4067, %v12333, %v11499
        %v12366 = vsel %vm4067, %v12334, %v11501
        %v12367 = vsel %vm4067, %v12335, %v11503
        %v12368 = vsel %vm4179, %v12336, %v11569
        %v12369 = vsel %vm4179, %v12337, %v11571
        %v12370 = vsel %vm4179, %v12338, %v11573
        %v12371 = vsel %vm4179, %v12339, %v11575
        %v12372 = vsel %vm4179, %v12340, %v11577
        %v12373 = vsel %vm4179, %v12341, %v11579
        %v12374 = vsel %vm4179, %v12342, %v11581
        %v12375 = vsel %vm4179, %v12343, %v11583
        %v12376 = vsel %vm4179, %v12344, %v11585
        %v12377 = vsel %vm4179, %v12345, %v11587
        %v12378 = vsel %vm4179, %v12346, %v11589
        %v12379 = vsel %vm4179, %v12347, %v11591
        %v12380 = vsel %vm4179, %v12348, %v11593
        %v12381 = vsel %vm4179, %v12349, %v11595
        %v12382 = vsel %vm4179, %v12350, %v11597
        %v12383 = vsel %vm4179, %v12351, %v11599
        %v12384 = vsel %vm4179, %v12352, %v11601
        %v12385 = vsel %vm4179, %v12353, %v11603
        %v12386 = vsel %vm4179, %v12354, %v11605
        %v12387 = vsel %vm4179, %v12355, %v11607
        %v12388 = vsel %vm4179, %v12356, %v11609
        %v12389 = vsel %vm4179, %v12357, %v11611
        %v12390 = vsel %vm4179, %v12358, %v11613
        %v12391 = vsel %vm4179, %v12359, %v11615
        %v12392 = vsel %vm4179, %v12360, %v11617
        %v12393 = vsel %vm4179, %v12361, %v11619
        %v12394 = vsel %vm4179, %v12362, %v11621
        %v12395 = vsel %vm4179, %v12363, %v11623
        %v12396 = vsel %vm4179, %v12364, %v11625
        %v12397 = vsel %vm4179, %v12365, %v11627
        %v12398 = vsel %vm4179, %v12366, %v11629
        %v12399 = vsel %vm4179, %v12367, %v11631
        %v12400 = vsel %vm6266, %v12368, %v11697
        %v12401 = vsel %vm6266, %v12369, %v11699
        %v12402 = vsel %vm6266, %v12370, %v11701
        %v12403 = vsel %vm6266, %v12371, %v11703
        %v12404 = vsel %vm6266, %v12372, %v11705
        %v12405 = vsel %vm6266, %v12373, %v11707
        %v12406 = vsel %vm6266, %v12374, %v11709
        %v12407 = vsel %vm6266, %v12375, %v11711
        %v12408 = vsel %vm6266, %v12376, %v11713
        %v12409 = vsel %vm6266, %v12377, %v11715
        %v12410 = vsel %vm6266, %v12378, %v11717
        %v12411 = vsel %vm6266, %v12379, %v11719
        %v12412 = vsel %vm6266, %v12380, %v11721
        %v12413 = vsel %vm6266, %v12381, %v11723
        %v12414 = vsel %vm6266, %v12382, %v11725
        %v12415 = vsel %vm6266, %v12383, %v11727
        %v12416 = vsel %vm6266, %v12384, %v11729
        %v12417 = vsel %vm6266, %v12385, %v11731
        %v12418 = vsel %vm6266, %v12386, %v11733
        %v12419 = vsel %vm6266, %v12387, %v11735
        %v12420 = vsel %vm6266, %v12388, %v11737
        %v12421 = vsel %vm6266, %v12389, %v11739
        %v12422 = vsel %vm6266, %v12390, %v11741
        %v12423 = vsel %vm6266, %v12391, %v11743
        %v12424 = vsel %vm6266, %v12392, %v11745
        %v12425 = vsel %vm6266, %v12393, %v11747
        %v12426 = vsel %vm6266, %v12394, %v11749
        %v12427 = vsel %vm6266, %v12395, %v11751
        %v12428 = vsel %vm6266, %v12396, %v11753
        %v12429 = vsel %vm6266, %v12397, %v11755
        %v12430 = vsel %vm6266, %v12398, %v11757
        %v12431 = vsel %vm6266, %v12399, %v11759
        %v12432 = vsel %vm10318, %v12400, %v11825
        %v12433 = vsel %vm10318, %v12401, %v11827
        %v12434 = vsel %vm10318, %v12402, %v11829
        %v12435 = vsel %vm10318, %v12403, %v11831
        %v12436 = vsel %vm10318, %v12404, %v11833
        %v12437 = vsel %vm10318, %v12405, %v11835
        %v12438 = vsel %vm10318, %v12406, %v11837
        %v12439 = vsel %vm10318, %v12407, %v11839
        %v12440 = vsel %vm10318, %v12408, %v11841
        %v12441 = vsel %vm10318, %v12409, %v11843
        %v12442 = vsel %vm10318, %v12410, %v11845
        %v12443 = vsel %vm10318, %v12411, %v11847
        %v12444 = vsel %vm10318, %v12412, %v11849
        %v12445 = vsel %vm10318, %v12413, %v11851
        %v12446 = vsel %vm10318, %v12414, %v11853
        %v12447 = vsel %vm10318, %v12415, %v11855
        %v12448 = vsel %vm10318, %v12416, %v11857
        %v12449 = vsel %vm10318, %v12417, %v11859
        %v12450 = vsel %vm10318, %v12418, %v11861
        %v12451 = vsel %vm10318, %v12419, %v11863
        %v12452 = vsel %vm10318, %v12420, %v11865
        %v12453 = vsel %vm10318, %v12421, %v11867
        %v12454 = vsel %vm10318, %v12422, %v11869
        %v12455 = vsel %vm10318, %v12423, %v11871
        %v12456 = vsel %vm10318, %v12424, %v11873
        %v12457 = vsel %vm10318, %v12425, %v11875
        %v12458 = vsel %vm10318, %v12426, %v11877
        %v12459 = vsel %vm10318, %v12427, %v11879
        %v12460 = vsel %vm10318, %v12428, %v11881
        %v12461 = vsel %vm10318, %v12429, %v11883
        %v12462 = vsel %vm10318, %v12430, %v11885
        %v12463 = vsel %vm10318, %v12431, %v11887
        %v12464 = vsel %vm1868, %v11825, %v11953
        %v12465 = vsel %vm1868, %v11827, %v11955
        %v12466 = vsel %vm1868, %v11829, %v11957
        %v12467 = vsel %vm1868, %v11831, %v11959
        %v12468 = vsel %vm1868, %v11833, %v11961
        %v12469 = vsel %vm1868, %v11835, %v11963
        %v12470 = vsel %vm1868, %v11837, %v11965
        %v12471 = vsel %vm1868, %v11839, %v11967
        %v12472 = vsel %vm1868, %v11841, %v11969
        %v12473 = vsel %vm1868, %v11843, %v11971
        %v12474 = vsel %vm1868, %v11845, %v11973
        %v12475 = vsel %vm1868, %v11847, %v11975
        %v12476 = vsel %vm1868, %v11849, %v11977
        %v12477 = vsel %vm1868, %v11851, %v11979
        %v12478 = vsel %vm1868, %v11853, %v11981
        %v12479 = vsel %vm1868, %v11855, %v11983
        %v12480 = vsel %vm1868, %v11857, %v11985
        %v12481 = vsel %vm1868, %v11859, %v11987
        %v12482 = vsel %vm1868, %v11861, %v11989
        %v12483 = vsel %vm1868, %v11863, %v11991
        %v12484 = vsel %vm1868, %v11865, %v11993
        %v12485 = vsel %vm1868, %v11867, %v11995
        %v12486 = vsel %vm1868, %v11869, %v11997
        %v12487 = vsel %vm1868, %v11871, %v11999
        %v12488 = vsel %vm1868, %v11873, %v12001
        %v12489 = vsel %vm1868, %v11875, %v12003
        %v12490 = vsel %vm1868, %v11877, %v12005
        %v12491 = vsel %vm1868, %v11879, %v12007
        %v12492 = vsel %vm1868, %v11881, %v12009
        %v12493 = vsel %vm1868, %v11883, %v12011
        %v12494 = vsel %vm1868, %v11885, %v12013
        %v12495 = vsel %vm1868, %v11887, %v12015
        %v12496 = vsel %vm4034, %v12464, %v12081
        %v12497 = vsel %vm4034, %v12465, %v12083
        %v12498 = vsel %vm4034, %v12466, %v12085
        %v12499 = vsel %vm4034, %v12467, %v12087
        %v12500 = vsel %vm4034, %v12468, %v12089
        %v12501 = vsel %vm4034, %v12469, %v12091
        %v12502 = vsel %vm4034, %v12470, %v12093
        %v12503 = vsel %vm4034, %v12471, %v12095
        %v12504 = vsel %vm4034, %v12472, %v12097
        %v12505 = vsel %vm4034, %v12473, %v12099
        %v12506 = vsel %vm4034, %v12474, %v12101
        %v12507 = vsel %vm4034, %v12475, %v12103
        %v12508 = vsel %vm4034, %v12476, %v12105
        %v12509 = vsel %vm4034, %v12477, %v12107
        %v12510 = vsel %vm4034, %v12478, %v12109
        %v12511 = vsel %vm4034, %v12479, %v12111
        %v12512 = vsel %vm4034, %v12480, %v12113
        %v12513 = vsel %vm4034, %v12481, %v12115
        %v12514 = vsel %vm4034, %v12482, %v12117
        %v12515 = vsel %vm4034, %v12483, %v12119
        %v12516 = vsel %vm4034, %v12484, %v12121
        %v12517 = vsel %vm4034, %v12485, %v12123
        %v12518 = vsel %vm4034, %v12486, %v12125
        %v12519 = vsel %vm4034, %v12487, %v12127
        %v12520 = vsel %vm4034, %v12488, %v12129
        %v12521 = vsel %vm4034, %v12489, %v12131
        %v12522 = vsel %vm4034, %v12490, %v12133
        %v12523 = vsel %vm4034, %v12491, %v12135
        %v12524 = vsel %vm4034, %v12492, %v12137
        %v12525 = vsel %vm4034, %v12493, %v12139
        %v12526 = vsel %vm4034, %v12494, %v12141
        %v12527 = vsel %vm4034, %v12495, %v12143
        %v12528 = vsel %vm4133, %v12496, %v12209
        %v12529 = vsel %vm4133, %v12497, %v12211
        %v12530 = vsel %vm4133, %v12498, %v12213
        %v12531 = vsel %vm4133, %v12499, %v12215
        %v12532 = vsel %vm4133, %v12500, %v12217
        %v12533 = vsel %vm4133, %v12501, %v12219
        %v12534 = vsel %vm4133, %v12502, %v12221
        %v12535 = vsel %vm4133, %v12503, %v12223
        %v12536 = vsel %vm4133, %v12504, %v12225
        %v12537 = vsel %vm4133, %v12505, %v12227
        %v12538 = vsel %vm4133, %v12506, %v12229
        %v12539 = vsel %vm4133, %v12507, %v12231
        %v12540 = vsel %vm4133, %v12508, %v12233
        %v12541 = vsel %vm4133, %v12509, %v12235
        %v12542 = vsel %vm4133, %v12510, %v12237
        %v12543 = vsel %vm4133, %v12511, %v12239
        %v12544 = vsel %vm4133, %v12512, %v12241
        %v12545 = vsel %vm4133, %v12513, %v12243
        %v12546 = vsel %vm4133, %v12514, %v12245
        %v12547 = vsel %vm4133, %v12515, %v12247
        %v12548 = vsel %vm4133, %v12516, %v12249
        %v12549 = vsel %vm4133, %v12517, %v12251
        %v12550 = vsel %vm4133, %v12518, %v12253
        %v12551 = vsel %vm4133, %v12519, %v12255
        %v12552 = vsel %vm4133, %v12520, %v12257
        %v12553 = vsel %vm4133, %v12521, %v12259
        %v12554 = vsel %vm4133, %v12522, %v12261
        %v12555 = vsel %vm4133, %v12523, %v12263
        %v12556 = vsel %vm4133, %v12524, %v12265
        %v12557 = vsel %vm4133, %v12525, %v12267
        %v12558 = vsel %vm4133, %v12526, %v12269
        %v12559 = vsel %vm4133, %v12527, %v12271
        %v12560 = vld [vmem:[%s6] sm:$0xff]
        %v12561 = vld [vmem:[%s6 + $0x8] sm:$0xff]
        %v12562 = vld [vmem:[%s6 + $0x10] sm:$0xff]
        %v12563 = vld [vmem:[%s6 + $0x18] sm:$0xff]
        %v12564 = vld [vmem:[%s6 + $0x20] sm:$0xff]
        %v12565 = vld [vmem:[%s6 + $0x28] sm:$0xff]
        %v12566 = vld [vmem:[%s6 + $0x30] sm:$0xff]
        %v12567 = vld [vmem:[%s6 + $0x38] sm:$0xff]
        %v12568 = vld [vmem:[%s6 + $0x40] sm:$0xff]
        %v12569 = vld [vmem:[%s6 + $0x48] sm:$0xff]
        %v12570 = vld [vmem:[%s6 + $0x50] sm:$0xff]
        %v12571 = vld [vmem:[%s6 + $0x58] sm:$0xff]
        %v12572 = vld [vmem:[%s6 + $0x60] sm:$0xff]
        %v12573 = vld [vmem:[%s6 + $0x68] sm:$0xff]
        %v12574 = vld [vmem:[%s6 + $0x70] sm:$0xff]
        %v12575 = vld [vmem:[%s6 + $0x78] sm:$0xff]
        %v12576 = vld [vmem:[%s6 + $0x80] sm:$0xff]
        %v12577 = vld [vmem:[%s6 + $0x88] sm:$0xff]
        %v12578 = vld [vmem:[%s6 + $0x90] sm:$0xff]
        %v12579 = vld [vmem:[%s6 + $0x98] sm:$0xff]
        %v12580 = vld [vmem:[%s6 + $0xa0] sm:$0xff]
        %v12581 = vld [vmem:[%s6 + $0xa8] sm:$0xff]
        %v12582 = vld [vmem:[%s6 + $0xb0] sm:$0xff]
        %v12583 = vld [vmem:[%s6 + $0xb8] sm:$0xff]
        %v12584 = vld [vmem:[%s6 + $0xc0] sm:$0xff]
        %v12585 = vld [vmem:[%s6 + $0xc8] sm:$0xff]
        %v12586 = vld [vmem:[%s6 + $0xd0] sm:$0xff]
        %v12587 = vlaneseq
        %v12588 = vshrl.u32 %v12587, 7
        %v12589 = vsub.s32 5, %v12588
        %v12590 = vrot.slane %v456, %v12589
        %vm12591 = vcmask 719872
        %v12593 = vsel %vm12591, %v12528, 0
        %v12596 = vsel %vm12591, %v12529, 0
        %v12599 = vsel %vm12591, %v12530, 0
        %v12602 = vsel %vm12591, %v12531, 0
        %v12605 = vsel %vm12591, %v12532, 0
        %v12608 = vsel %vm12591, %v12533, 0
        %v12611 = vsel %vm12591, %v12534, 0
        %v12614 = vsel %vm12591, %v12535, 0
        %v12617 = vsel %vm12591, %v12536, 0
        %v12620 = vsel %vm12591, %v12537, 0
        %v12623 = vsel %vm12591, %v12538, 0
        %v12626 = vsel %vm12591, %v12539, 0
        %v12629 = vsel %vm12591, %v12540, 0
        %v12632 = vsel %vm12591, %v12541, 0
        %v12635 = vsel %vm12591, %v12542, 0
        %v12638 = vsel %vm12591, %v12543, 0
        %v12641 = vsel %vm12591, %v12544, 0
        %v12644 = vsel %vm12591, %v12545, 0
        %v12647 = vsel %vm12591, %v12546, 0
        %v12650 = vsel %vm12591, %v12547, 0
        %v12653 = vsel %vm12591, %v12548, 0
        %v12656 = vsel %vm12591, %v12549, 0
        %v12659 = vsel %vm12591, %v12550, 0
        %v12662 = vsel %vm12591, %v12551, 0
        %v12665 = vsel %vm12591, %v12552, 0
        %v12668 = vsel %vm12591, %v12553, 0
        %v12671 = vsel %vm12591, %v12554, 0
        %v12674 = vsel %vm12591, %v12555, 0
        %v12677 = vsel %vm12591, %v12556, 0
        %v12680 = vsel %vm12591, %v12557, 0
        %v12683 = vsel %vm12591, %v12558, 0
        %v12686 = vsel %vm12591, %v12559, 0
        %12688 = vmatprep.subr.mxu0 0.0
        %12689 = vmatpush1.msra.mxu0 %v12575
        %12690 = vmatprep.subr.mxu0 0.0
        %12691 = vmatpush1.msra.mxu0 %v12574
        %12692 = vmatprep.subr.mxu0 0.0
        %12693 = vmatpush1.msra.mxu0 %v12573
        %12694 = vmatprep.subr.mxu0 0.0
        %12695 = vmatpush1.msra.mxu0 %v12572
        %12696 = vmatprep.subr.mxu0 0.0
        %12697 = vmatpush1.msra.mxu0 %v12571
        %12698 = vmatprep.subr.mxu0 0.0
        %12699 = vmatpush1.msra.mxu0 %v12570
        %12700 = vmatprep.subr.mxu0 0.0
        %12701 = vmatpush1.msra.mxu0 %v12569
        %12702 = vmatprep.subr.mxu0 0.0
        %12703 = vmatpush1.msra.mxu0 %v12568
        %12704 = vmatprep.subr.mxu0 0.0
        %12705 = vmatpush1.msra.mxu0 %v12567
        %12706 = vmatprep.subr.mxu0 0.0
        %12707 = vmatpush1.msra.mxu0 %v12566
        %12708 = vmatprep.subr.mxu0 0.0
        %12709 = vmatpush1.msra.mxu0 %v12565
        %12710 = vmatprep.subr.mxu0 0.0
        %12711 = vmatpush1.msra.mxu0 %v12564
        %12712 = vmatprep.subr.mxu0 0.0
        %12713 = vmatpush1.msra.mxu0 %v12563
        %12714 = vmatprep.subr.mxu0 0.0
        %12715 = vmatpush1.msra.mxu0 %v12562
        %12716 = vmatprep.subr.mxu0 0.0
        %12717 = vmatpush1.msra.mxu0 %v12561
        %12718 = vmatprep.subr.mxu0 0.0
        %12719 = vmatpush1.msra.mxu0 %v12560
        %12720 = vmatprep.subr.mxu0 0.0
        %12721 = vmatpush2.msra.mxu0 0.0
        %12722 = vmatprep.subr.mxu0 0.0
        %12723 = vmatpush2.msra.mxu0 0.0
        %12724 = vmatprep.subr.mxu0 0.0
        %12725 = vmatpush2.msra.mxu0 0.0
        %12726 = vmatprep.subr.mxu0 0.0
        %12727 = vmatpush2.msra.mxu0 0.0
        %12728 = vmatprep.subr.mxu0 0.0
        %12729 = vmatpush2.msra.mxu0 0.0
        %12730 = vmatprep.subr.mxu0 0.0
        %12731 = vmatpush2.msra.mxu0 %v12586
        %12732 = vmatprep.subr.mxu0 0.0
        %12733 = vmatpush2.msra.mxu0 %v12585
        %12734 = vmatprep.subr.mxu0 0.0
        %12735 = vmatpush2.msra.mxu0 %v12584
        %12736 = vmatprep.subr.mxu0 0.0
        %12737 = vmatpush2.msra.mxu0 %v12583
        %12738 = vmatprep.subr.mxu0 0.0
        %12739 = vmatpush2.msra.mxu0 %v12582
        %12740 = vmatprep.subr.mxu0 0.0
        %12741 = vmatpush2.msra.mxu0 %v12581
        %12742 = vmatprep.subr.mxu0 0.0
        %12743 = vmatpush2.msra.mxu0 %v12580
        %12744 = vmatprep.subr.mxu0 0.0
        %12745 = vmatpush2.msra.mxu0 %v12579
        %12746 = vmatprep.subr.mxu0 0.0
        %12747 = vmatpush2.msra.mxu0 %v12578
        %12748 = vmatprep.subr.mxu0 0.0
        %12749 = vmatpush2.msra.mxu0 %v12577
        %12750 = vmatprep.subr.mxu0 0.0
        %12751 = vmatpush2.msra.mxu0 %v12576
        %12752 = vmatprep.mubr.f32.mxu0 %v12593
        %12753 = vmatmul.mubr.f32.gmra.mxu0 %v12432
        %v12754 = vpop.f32.mrf.mxu0
        %v12755 = vadd.f32 %v12590, %v12754
        %v12756 = vpop.f32.mrf.mxu0
        %12757 = vmatprep.mubr.f32.mxu0 %v12596
        %12758 = vmatmul.mubr.f32.gmra.mxu0 %v12433
        %v12759 = vpop.f32.mrf.mxu0
        %v12760 = vadd.f32 %v12590, %v12759
        %v12761 = vpop.f32.mrf.mxu0
        %12762 = vmatprep.mubr.f32.mxu0 %v12599
        %12763 = vmatmul.mubr.f32.gmra.mxu0 %v12434
        %v12764 = vpop.f32.mrf.mxu0
        %v12765 = vadd.f32 %v12590, %v12764
        %v12766 = vpop.f32.mrf.mxu0
        %12767 = vmatprep.mubr.f32.mxu0 %v12602
        %12768 = vmatmul.mubr.f32.gmra.mxu0 %v12435
        %v12769 = vpop.f32.mrf.mxu0
        %v12770 = vadd.f32 %v12590, %v12769
        %v12771 = vpop.f32.mrf.mxu0
        %12772 = vmatprep.mubr.f32.mxu0 %v12605
        %12773 = vmatmul.mubr.f32.gmra.mxu0 %v12436
        %v12774 = vpop.f32.mrf.mxu0
        %v12775 = vadd.f32 %v12590, %v12774
        %v12776 = vpop.f32.mrf.mxu0
        %12777 = vmatprep.mubr.f32.mxu0 %v12608
        %12778 = vmatmul.mubr.f32.gmra.mxu0 %v12437
        %v12779 = vpop.f32.mrf.mxu0
        %v12780 = vadd.f32 %v12590, %v12779
        %v12781 = vpop.f32.mrf.mxu0
        %12782 = vmatprep.mubr.f32.mxu0 %v12611
        %12783 = vmatmul.mubr.f32.gmra.mxu0 %v12438
        %v12784 = vpop.f32.mrf.mxu0
        %v12785 = vadd.f32 %v12590, %v12784
        %v12786 = vpop.f32.mrf.mxu0
        %12787 = vmatprep.mubr.f32.mxu0 %v12614
        %12788 = vmatmul.mubr.f32.gmra.mxu0 %v12439
        %v12789 = vpop.f32.mrf.mxu0
        %v12790 = vadd.f32 %v12590, %v12789
        %v12791 = vpop.f32.mrf.mxu0
        %12792 = vmatprep.mubr.f32.mxu0 %v12617
        %12793 = vmatmul.mubr.f32.gmra.mxu0 %v12440
        %v12794 = vpop.f32.mrf.mxu0
        %v12795 = vadd.f32 %v12590, %v12794
        %v12796 = vpop.f32.mrf.mxu0
        %12797 = vmatprep.mubr.f32.mxu0 %v12620
        %12798 = vmatmul.mubr.f32.gmra.mxu0 %v12441
        %v12799 = vpop.f32.mrf.mxu0
        %v12800 = vadd.f32 %v12590, %v12799
        %v12801 = vpop.f32.mrf.mxu0
        %12802 = vmatprep.mubr.f32.mxu0 %v12623
        %12803 = vmatmul.mubr.f32.gmra.mxu0 %v12442
        %v12804 = vpop.f32.mrf.mxu0
        %v12805 = vadd.f32 %v12590, %v12804
        %v12806 = vpop.f32.mrf.mxu0
        %12807 = vmatprep.mubr.f32.mxu0 %v12626
        %12808 = vmatmul.mubr.f32.gmra.mxu0 %v12443
        %v12809 = vpop.f32.mrf.mxu0
        %v12810 = vadd.f32 %v12590, %v12809
        %v12811 = vpop.f32.mrf.mxu0
        %12812 = vmatprep.mubr.f32.mxu0 %v12629
        %12813 = vmatmul.mubr.f32.gmra.mxu0 %v12444
        %v12814 = vpop.f32.mrf.mxu0
        %v12815 = vadd.f32 %v12590, %v12814
        %v12816 = vpop.f32.mrf.mxu0
        %12817 = vmatprep.mubr.f32.mxu0 %v12632
        %12818 = vmatmul.mubr.f32.gmra.mxu0 %v12445
        %v12819 = vpop.f32.mrf.mxu0
        %v12820 = vadd.f32 %v12590, %v12819
        %v12821 = vpop.f32.mrf.mxu0
        %12822 = vmatprep.mubr.f32.mxu0 %v12635
        %12823 = vmatmul.mubr.f32.gmra.mxu0 %v12446
        %v12824 = vpop.f32.mrf.mxu0
        %v12825 = vadd.f32 %v12590, %v12824
        %v12826 = vpop.f32.mrf.mxu0
        %12827 = vmatprep.mubr.f32.mxu0 %v12638
        %12828 = vmatmul.mubr.f32.gmra.mxu0 %v12447
        %v12829 = vpop.f32.mrf.mxu0
        %v12830 = vadd.f32 %v12590, %v12829
        %v12831 = vpop.f32.mrf.mxu0
        %12832 = vmatprep.mubr.f32.mxu0 %v12641
        %12833 = vmatmul.mubr.f32.gmra.mxu0 %v12448
        %v12834 = vpop.f32.mrf.mxu0
        %v12835 = vadd.f32 %v12590, %v12834
        %v12836 = vpop.f32.mrf.mxu0
        %12837 = vmatprep.mubr.f32.mxu0 %v12644
        %12838 = vmatmul.mubr.f32.gmra.mxu0 %v12449
        %v12839 = vpop.f32.mrf.mxu0
        %v12840 = vadd.f32 %v12590, %v12839
        %v12841 = vpop.f32.mrf.mxu0
        %12842 = vmatprep.mubr.f32.mxu0 %v12647
        %12843 = vmatmul.mubr.f32.gmra.mxu0 %v12450
        %v12844 = vpop.f32.mrf.mxu0
        %v12845 = vadd.f32 %v12590, %v12844
        %v12846 = vpop.f32.mrf.mxu0
        %12847 = vmatprep.mubr.f32.mxu0 %v12650
        %12848 = vmatmul.mubr.f32.gmra.mxu0 %v12451
        %v12849 = vpop.f32.mrf.mxu0
        %v12850 = vadd.f32 %v12590, %v12849
        %v12851 = vpop.f32.mrf.mxu0
        %12852 = vmatprep.mubr.f32.mxu0 %v12653
        %12853 = vmatmul.mubr.f32.gmra.mxu0 %v12452
        %v12854 = vpop.f32.mrf.mxu0
        %v12855 = vadd.f32 %v12590, %v12854
        %v12856 = vpop.f32.mrf.mxu0
        %12857 = vmatprep.mubr.f32.mxu0 %v12656
        %12858 = vmatmul.mubr.f32.gmra.mxu0 %v12453
        %v12859 = vpop.f32.mrf.mxu0
        %v12860 = vadd.f32 %v12590, %v12859
        %v12861 = vpop.f32.mrf.mxu0
        %12862 = vmatprep.mubr.f32.mxu0 %v12659
        %12863 = vmatmul.mubr.f32.gmra.mxu0 %v12454
        %v12864 = vpop.f32.mrf.mxu0
        %v12865 = vadd.f32 %v12590, %v12864
        %v12866 = vpop.f32.mrf.mxu0
        %12867 = vmatprep.mubr.f32.mxu0 %v12662
        %12868 = vmatmul.mubr.f32.gmra.mxu0 %v12455
        %v12869 = vpop.f32.mrf.mxu0
        %v12870 = vadd.f32 %v12590, %v12869
        %v12871 = vpop.f32.mrf.mxu0
        %12872 = vmatprep.mubr.f32.mxu0 %v12665
        %12873 = vmatmul.mubr.f32.gmra.mxu0 %v12456
        %v12874 = vpop.f32.mrf.mxu0
        %v12875 = vadd.f32 %v12590, %v12874
        %v12876 = vpop.f32.mrf.mxu0
        %12877 = vmatprep.mubr.f32.mxu0 %v12668
        %12878 = vmatmul.mubr.f32.gmra.mxu0 %v12457
        %v12879 = vpop.f32.mrf.mxu0
        %v12880 = vadd.f32 %v12590, %v12879
        %v12881 = vpop.f32.mrf.mxu0
        %12882 = vmatprep.mubr.f32.mxu0 %v12671
        %12883 = vmatmul.mubr.f32.gmra.mxu0 %v12458
        %v12884 = vpop.f32.mrf.mxu0
        %v12885 = vadd.f32 %v12590, %v12884
        %v12886 = vpop.f32.mrf.mxu0
        %12887 = vmatprep.mubr.f32.mxu0 %v12674
        %12888 = vmatmul.mubr.f32.gmra.mxu0 %v12459
        %v12889 = vpop.f32.mrf.mxu0
        %v12890 = vadd.f32 %v12590, %v12889
        %v12891 = vpop.f32.mrf.mxu0
        %12892 = vmatprep.mubr.f32.mxu0 %v12677
        %12893 = vmatmul.mubr.f32.gmra.mxu0 %v12460
        %v12894 = vpop.f32.mrf.mxu0
        %v12895 = vadd.f32 %v12590, %v12894
        %v12896 = vpop.f32.mrf.mxu0
        %12897 = vmatprep.mubr.f32.mxu0 %v12680
        %12898 = vmatmul.mubr.f32.gmra.mxu0 %v12461
        %v12899 = vpop.f32.mrf.mxu0
        %v12900 = vadd.f32 %v12590, %v12899
        %v12901 = vpop.f32.mrf.mxu0
        %12902 = vmatprep.mubr.f32.mxu0 %v12683
        %12903 = vmatmul.mubr.f32.gmra.mxu0 %v12462
        %v12904 = vpop.f32.mrf.mxu0
        %v12905 = vadd.f32 %v12590, %v12904
        %v12906 = vpop.f32.mrf.mxu0
        %12907 = vmatprep.mubr.f32.mxu0 %v12686
        %12908 = vmatmul.mubr.f32.gmra.mxu0 %v12463
        %v12909 = vpop.f32.mrf.mxu0
        %v12910 = vadd.f32 %v12590, %v12909
        %v12911 = vpop.f32.mrf.mxu0
        %12912 = vdwg.mxu0
        %v12913 = vmax.f32 %v12755, 0.0
        %v12914 = vmax.f32 %v12760, 0.0
        %v12915 = vmax.f32 %v12765, 0.0
        %v12916 = vmax.f32 %v12770, 0.0
        %v12917 = vmax.f32 %v12775, 0.0
        %v12918 = vmax.f32 %v12780, 0.0
        %v12919 = vmax.f32 %v12785, 0.0
        %v12920 = vmax.f32 %v12790, 0.0
        %v12921 = vmax.f32 %v12795, 0.0
        %v12922 = vmax.f32 %v12800, 0.0
        %v12923 = vmax.f32 %v12805, 0.0
        %v12924 = vmax.f32 %v12810, 0.0
        %v12925 = vmax.f32 %v12815, 0.0
        %v12926 = vmax.f32 %v12820, 0.0
        %v12927 = vmax.f32 %v12825, 0.0
        %v12928 = vmax.f32 %v12830, 0.0
        %v12929 = vmax.f32 %v12835, 0.0
        %v12930 = vmax.f32 %v12840, 0.0
        %v12931 = vmax.f32 %v12845, 0.0
        %v12932 = vmax.f32 %v12850, 0.0
        %v12933 = vmax.f32 %v12855, 0.0
        %v12934 = vmax.f32 %v12860, 0.0
        %v12935 = vmax.f32 %v12865, 0.0
        %v12936 = vmax.f32 %v12870, 0.0
        %v12937 = vmax.f32 %v12875, 0.0
        %v12938 = vmax.f32 %v12880, 0.0
        %v12939 = vmax.f32 %v12885, 0.0
        %v12940 = vmax.f32 %v12890, 0.0
        %v12941 = vmax.f32 %v12895, 0.0
        %v12942 = vmax.f32 %v12900, 0.0
        %v12943 = vmax.f32 %v12905, 0.0
        %v12944 = vmax.f32 %v12910, 0.0
        %12977 = vrot.lane.b32.xlu0 %v12913, 24
        %v12978 = vpop.permute.xlu0 %12977
        %12979 = vrot.lane.b32.xlu0 %v12914, 24
        %v12980 = vpop.permute.xlu0 %12979
        %12981 = vrot.lane.b32.xlu0 %v12915, 24
        %v12982 = vpop.permute.xlu0 %12981
        %12983 = vrot.lane.b32.xlu0 %v12916, 24
        %v12984 = vpop.permute.xlu0 %12983
        %12985 = vrot.lane.b32.xlu0 %v12917, 24
        %v12986 = vpop.permute.xlu0 %12985
        %12987 = vrot.lane.b32.xlu0 %v12918, 24
        %v12988 = vpop.permute.xlu0 %12987
        %12989 = vrot.lane.b32.xlu0 %v12919, 24
        %v12990 = vpop.permute.xlu0 %12989
        %12991 = vrot.lane.b32.xlu0 %v12920, 24
        %v12992 = vpop.permute.xlu0 %12991
        %12993 = vrot.lane.b32.xlu0 %v12921, 24
        %v12994 = vpop.permute.xlu0 %12993
        %12995 = vrot.lane.b32.xlu0 %v12922, 24
        %v12996 = vpop.permute.xlu0 %12995
        %12997 = vrot.lane.b32.xlu0 %v12923, 24
        %v12998 = vpop.permute.xlu0 %12997
        %12999 = vrot.lane.b32.xlu0 %v12924, 24
        %v13000 = vpop.permute.xlu0 %12999
        %13001 = vrot.lane.b32.xlu0 %v12925, 24
        %v13002 = vpop.permute.xlu0 %13001
        %13003 = vrot.lane.b32.xlu0 %v12926, 24
        %v13004 = vpop.permute.xlu0 %13003
        %13005 = vrot.lane.b32.xlu0 %v12927, 24
        %v13006 = vpop.permute.xlu0 %13005
        %13007 = vrot.lane.b32.xlu0 %v12928, 24
        %v13008 = vpop.permute.xlu0 %13007
        %13009 = vrot.lane.b32.xlu0 %v12929, 24
        %v13010 = vpop.permute.xlu0 %13009
        %13011 = vrot.lane.b32.xlu0 %v12930, 24
        %v13012 = vpop.permute.xlu0 %13011
        %13013 = vrot.lane.b32.xlu0 %v12931, 24
        %v13014 = vpop.permute.xlu0 %13013
        %13015 = vrot.lane.b32.xlu0 %v12932, 24
        %v13016 = vpop.permute.xlu0 %13015
        %13017 = vrot.lane.b32.xlu0 %v12933, 24
        %v13018 = vpop.permute.xlu0 %13017
        %13019 = vrot.lane.b32.xlu0 %v12934, 24
        %v13020 = vpop.permute.xlu0 %13019
        %13021 = vrot.lane.b32.xlu0 %v12935, 24
        %v13022 = vpop.permute.xlu0 %13021
        %13023 = vrot.lane.b32.xlu0 %v12936, 24
        %v13024 = vpop.permute.xlu0 %13023
        %13025 = vrot.lane.b32.xlu0 %v12937, 24
        %v13026 = vpop.permute.xlu0 %13025
        %13027 = vrot.lane.b32.xlu0 %v12938, 24
        %v13028 = vpop.permute.xlu0 %13027
        %13029 = vrot.lane.b32.xlu0 %v12939, 24
        %v13030 = vpop.permute.xlu0 %13029
        %13031 = vrot.lane.b32.xlu0 %v12940, 24
        %v13032 = vpop.permute.xlu0 %13031
        %13033 = vrot.lane.b32.xlu0 %v12941, 24
        %v13034 = vpop.permute.xlu0 %13033
        %13035 = vrot.lane.b32.xlu0 %v12942, 24
        %v13036 = vpop.permute.xlu0 %13035
        %13037 = vrot.lane.b32.xlu0 %v12943, 24
        %v13038 = vpop.permute.xlu0 %13037
        %13039 = vrot.lane.b32.xlu0 %v12944, 24
        %v13040 = vpop.permute.xlu0 %13039
        %vm13073 = vcmask 228544
        %13074 = vst.msk [vmem:[%s298] sm:$0xff] %vm13073, %v12978
        %13075 = vst.msk [vmem:[%s298 + $0x8] sm:$0xff] %vm13073, %v12980
        %13076 = vst.msk [vmem:[%s298 + $0x10] sm:$0xff] %vm13073, %v12982
        %13077 = vst.msk [vmem:[%s298 + $0x18] sm:$0xff] %vm13073, %v12984
        %13078 = vst.msk [vmem:[%s298 + $0x20] sm:$0xff] %vm13073, %v12986
        %13079 = vst.msk [vmem:[%s298 + $0x28] sm:$0xff] %vm13073, %v12988
        %13080 = vst.msk [vmem:[%s298 + $0x30] sm:$0xff] %vm13073, %v12990
        %13081 = vst.msk [vmem:[%s298 + $0x38] sm:$0xff] %vm13073, %v12992
        %13082 = vst.msk [vmem:[%s298 + $0x40] sm:$0xff] %vm13073, %v12994
        %13083 = vst.msk [vmem:[%s298 + $0x48] sm:$0xff] %vm13073, %v12996
        %13084 = vst.msk [vmem:[%s298 + $0x50] sm:$0xff] %vm13073, %v12998
        %13085 = vst.msk [vmem:[%s298 + $0x58] sm:$0xff] %vm13073, %v13000
        %13086 = vst.msk [vmem:[%s298 + $0x60] sm:$0xff] %vm13073, %v13002
        %13087 = vst.msk [vmem:[%s298 + $0x68] sm:$0xff] %vm13073, %v13004
        %13088 = vst.msk [vmem:[%s298 + $0x70] sm:$0xff] %vm13073, %v13006
        %13089 = vst.msk [vmem:[%s298 + $0x78] sm:$0xff] %vm13073, %v13008
        %13090 = vst.msk [vmem:[%s298 + $0x80] sm:$0xff] %vm13073, %v13010
        %13091 = vst.msk [vmem:[%s298 + $0x88] sm:$0xff] %vm13073, %v13012
        %13092 = vst.msk [vmem:[%s298 + $0x90] sm:$0xff] %vm13073, %v13014
        %13093 = vst.msk [vmem:[%s298 + $0x98] sm:$0xff] %vm13073, %v13016
        %13094 = vst.msk [vmem:[%s298 + $0xa0] sm:$0xff] %vm13073, %v13018
        %13095 = vst.msk [vmem:[%s298 + $0xa8] sm:$0xff] %vm13073, %v13020
        %13096 = vst.msk [vmem:[%s298 + $0xb0] sm:$0xff] %vm13073, %v13022
        %13097 = vst.msk [vmem:[%s298 + $0xb8] sm:$0xff] %vm13073, %v13024
        %13098 = vst.msk [vmem:[%s298 + $0xc0] sm:$0xff] %vm13073, %v13026
        %13099 = vst.msk [vmem:[%s298 + $0xc8] sm:$0xff] %vm13073, %v13028
        %13100 = vst.msk [vmem:[%s298 + $0xd0] sm:$0xff] %vm13073, %v13030
        %13101 = vst.msk [vmem:[%s298 + $0xd8] sm:$0xff] %vm13073, %v13032
        %13102 = vst.msk [vmem:[%s298 + $0xe0] sm:$0xff] %vm13073, %v13034
        %13103 = vst.msk [vmem:[%s298 + $0xe8] sm:$0xff] %vm13073, %v13036
        %13104 = vst.msk [vmem:[%s298 + $0xf0] sm:$0xff] %vm13073, %v13038
        %13105 = vst.msk [vmem:[%s298 + $0xf8] sm:$0xff] %vm13073, %v13040
        %s13106 = sand.u32 %s203, 1
        %s13107 = scalar_lea.sflag [#allocation4], %s13106
        %s13108 = sand.u32 %s203, 1
        %s13109 = smul.addr %s13108, 256
        %s13110 = scalar_lea.vmem [#allocation3], %s13109
        // Predicated region
        $region53: #{tpu_custom_call.1} parent=51 // pred_check
          %p13111 = pneg %p213
        $region54: #{tpu_custom_call.1} parent=51 // pred_check_branch
          %13113 = sbr.rel (%p13111) target = $region56
        $region55: #{tpu_custom_call.1} parent=51 // pred_region
          %s13115 = ssub.s32 4096, 4096
          %13116 = vsyncadd %s13107, %s13115
          %s13117 = smul.addr %s22, 32
          %s13118 = smul.addr %s13117, 128
          %s13119 = scalar_lea.hbm %s8, %s13118
          %s13120 = sshll.u32 %s13110, 4
          %s13121 = int_to_ptr.vmem [resolvable:$true] %s13120
          %13126 = dma.vmem_to_hbm [thread:$0]  %s13121, 4096, %s13119, %s13107, 128, 128, 8
        $region56: #{tpu_custom_call.1} parent=51 // pred_fallthru
          _
      $region52: #{tpu_custom_call.1} parent=5 // pred_fallthru
        _
      %p13127 = scmp.le.s32.totalorder 2, %s17
      // Predicated region
      $region57: #{tpu_custom_call.1} parent=5 // pred_check
        %p13128 = pneg %p13127
      $region58: #{tpu_custom_call.1} parent=5 // pred_check_branch
        %13130 = sbr.rel (%p13128) target = $region60
      $region59: #{tpu_custom_call.1} parent=5 // pred_region
        %s13131 = ssub.s32 %s17, 2
        // Predicated region
        $region61: #{tpu_custom_call.1} parent=59 // pred_check
          %p13132 = pneg %p219
        $region62: #{tpu_custom_call.1} parent=59 // pred_check_branch
          %13134 = sbr.rel (%p13132) target = $region64
        $region63: #{tpu_custom_call.1} parent=59 // pred_region
          %s13135 = sand.u32 %s204, 1
          %s13136 = scalar_lea.sflag [#allocation4], %s13135
          %s13137 = sand.u32 %s204, 1
          %s13138 = smul.addr %s13137, 256
          %s13139 = scalar_lea.vmem [#allocation3], %s13138
          %13140 = dma.done %s13136, 4096
        $region64: #{tpu_custom_call.1} parent=59 // pred_fallthru
          _
      $region60: #{tpu_custom_call.1} parent=5 // pred_fallthru
        _
    $region6: #{tpu_custom_call.1} parent=1 // loop_footer
      %s21 = sadd.s32 1, %s17
    $region7: #{tpu_custom_call.1} parent=1 // loop_footer_branch
      %16 = sbr.rel target = $region3
    $region8: #{tpu_custom_call.1} parent=1 // loop_exit
      _
    %13141 = vsyncpa [#allocation4], 1
    %s13142 = scalar_lea.sflag [#allocation4], 1
    %13143 = vsyncpa %s13142, 1

</llo_original>
